<compile_context>
chip_gen: v7x
topology: tpu7x:2x2x1
jax: 0.10.0
libtpu: 0.0.40
codegen_flags: <defaults>
</compile_context>

<pallas_src>
import functools

import jax
import jax.numpy as jnp
from jax.experimental import pallas as pl
from jax.experimental.pallas import tpu as pltpu


# ----------------------------- Pallas kernels ------------------------------
def _conv_block_kernel(pp_ref, w1_ref, b1_ref, w2_ref, b2_ref, mask_ref, sel_ref,
                       out_ref, *, chid, wg, ng):
    """Fused conv3x3+ReLU -> conv3x3+ReLU -> maxpool2x2 -> scatter, one image per grid step.

    pp_ref:   (cin, ng)    zero-padded input, flattened row-major with row stride wg
    w*_ref:   (9, chid, k) conv taps, k-index = dy*3 + dx
    b*_ref:   (chid, 1)
    mask_ref: (1, ng)      1.0 at interior (image) positions, 0.0 on the padding ring
    sel_ref:  (ng, ng_out) 0/1 matrix scattering pooled pixels into the output layout
    out_ref:  (chid, ng_out)
    """
    taps = [(dy - 1) * wg + (dx - 1) for dy in range(3) for dx in range(3)]

    def shifted(x, delta):
        # value of x at flat position (g + delta) via a lane rotation; roll wrap-around only
        # ever lands on padding-ring positions, which are masked / never selected.
        return x if delta == 0 else pltpu.roll(x, shift=(-delta) % ng, axis=1)

    def conv3x3(x, w_ref, b_ref):
        k_in = x.shape[0]
        acc = jnp.zeros((chid, ng), jnp.float32)
        for k, delta in enumerate(taps):
            xk = shifted(x, delta)                    # (k_in, ng)
            wk = w_ref[k]                             # (chid, k_in)
            if k_in == 1:
                acc = acc + wk * xk                   # outer product on the VPU (f32)
            else:
                # bf16 MXU matmul, f32 accumulation.
                acc = acc + jnp.dot(wk.astype(jnp.bfloat16), xk.astype(jnp.bfloat16),
                                    preferred_element_type=jnp.float32)
        return jnp.maximum(acc + b_ref[...], 0.0)

    mask = mask_ref[...]                               # (1, ng)
    h1 = conv3x3(pp_ref[...], w1_ref, b1_ref) * mask   # mask => zero padding for conv2
    h2 = conv3x3(h1, w2_ref, b2_ref)

    # 2x2 max-pool: max over the window {g, g+1, g+wg, g+wg+1}.
    pooled = h2
    for delta in (1, wg, wg + 1):
        pooled = jnp.maximum(pooled, shifted(h2, delta))

    # Gather the kept pixels and scatter them into the next stage's layout (exact, f32 MXU).
    out_ref[...] = jnp.dot(pooled, sel_ref[...],
                           preferred_element_type=jnp.float32).astype(out_ref.dtype)


def _linear_kernel(x_ref, w_ref, b_ref, o_ref):
    acc = jnp.dot(x_ref[...].astype(jnp.bfloat16), w_ref[...].astype(jnp.bfloat16),
                  preferred_element_type=jnp.float32)
    o_ref[...] = acc + b_ref[...]


# ------------------------------ pallas_call wrappers -------------------------
def conv_block(pp, w1, b1, w2, b2, mask, sel, *, wg):
    n, cin, ng = pp.shape
    chid = w1.shape[1]
    ng_out = sel.shape[1]
    kernel = functools.partial(_conv_block_kernel, chid=chid, wg=wg, ng=ng)
    return pl.pallas_call(
        kernel,
        out_shape=jax.ShapeDtypeStruct((n, chid, ng_out), jnp.float32),
        grid=(n,),
        in_specs=[
            pl.BlockSpec((None, cin, ng), lambda i: (i, 0, 0)),   # per-image input
            pl.BlockSpec((9, chid, cin), lambda i: (0, 0, 0)),    # weights: VMEM resident
            pl.BlockSpec((chid, 1), lambda i: (0, 0)),
            pl.BlockSpec((9, chid, chid), lambda i: (0, 0, 0)),
            pl.BlockSpec((chid, 1), lambda i: (0, 0)),
            pl.BlockSpec((1, ng), lambda i: (0, 0)),
            pl.BlockSpec((ng, ng_out), lambda i: (0, 0)),
        ],
        out_specs=pl.BlockSpec((None, chid, ng_out), lambda i: (i, 0, 0)),
        compiler_params=pltpu.CompilerParams(dimension_semantics=("parallel",)),
    )(pp, w1, b1, w2, b2, mask, sel)


def linear(x, w, b, *, tile_m=512):
    m, k = x.shape
    _, f = w.shape
    tm = m if m <= tile_m else tile_m
    return pl.pallas_call(
        _linear_kernel,
        out_shape=jax.ShapeDtypeStruct((m, f), jnp.float32),
        grid=(pl.cdiv(m, tm),),
        in_specs=[
            pl.BlockSpec((tm, k), lambda i: (i, 0)),
            pl.BlockSpec((k, f), lambda i: (0, 0)),
            pl.BlockSpec((1, f), lambda i: (0, 0)),
        ],
        out_specs=pl.BlockSpec((tm, f), lambda i: (i, 0)),
        compiler_params=pltpu.CompilerParams(dimension_semantics=("parallel",)),
    )(x, w, b.reshape(1, f))


# ------------------------- layout constants (wrapper side) -------------------
def _conv_taps(w_oihw):
    # PyTorch OIHW -> (9, Cout, Cin), tap index k = dy*3 + dx.
    cout, cin = w_oihw.shape[0], w_oihw.shape[1]
    return jnp.transpose(w_oihw, (2, 3, 0, 1)).reshape(9, cout, cin)


def _interior_mask(h, w, ring, hg, wg):
    m = jnp.zeros((hg, wg), jnp.float32).at[ring:ring + h, ring:ring + w].set(1.0)
    return m.reshape(1, hg * wg)


def _pool_scatter(h_out, w_out, ring_in, wg_in, ng_in, ring_out, wg_out, ng_out):
    # pooled pixel (i, j): 2x2 window anchored at grid-in (2i+ring_in, 2j+ring_in);
    # destination grid-out (i+ring_out, j+ring_out), flattened with row stride wg_out.
    ii, jj = jnp.meshgrid(jnp.arange(h_out), jnp.arange(w_out), indexing="ij")
    src = ((2 * ii + ring_in) * wg_in + (2 * jj + ring_in)).reshape(-1)
    dst = ((ii + ring_out) * wg_out + (jj + ring_out)).reshape(-1)
    return jnp.zeros((ng_in, ng_out), jnp.float32).at[src, dst].set(1.0)


# ------------------------------- model forward --------------------------------
def fashion_mnist_model_v2(x_nchw, params):
    n, cin, h, w = x_nchw.shape           # expects 28x28 (two 2x2 pools -> 7x7)
    chid = params["conv1_1"][0].shape[0]
    n_cls = params["fc"][0].shape[0]

    # Block 1 on a 32x32 grid (zero ring of 2 -> 1024 lanes); block 2 on 16x16 (ring of 1 -> 256).
    r1, hg1, wg1 = 2, h + 4, w + 4
    ng1 = hg1 * wg1
    h2, w2 = h // 2, w // 2
    r2, hg2, wg2 = 1, h2 + 2, w2 + 2
    ng2 = hg2 * wg2
    h3, w3 = h2 // 2, w2 // 2

    pp1 = jnp.pad(x_nchw, ((0, 0), (0, 0), (r1, r1), (r1, r1))).reshape(n, cin, ng1)
    mask1 = _interior_mask(h, w, r1, hg1, wg1)
    sel1 = _pool_scatter(h2, w2, r1, wg1, ng1, r2, wg2, ng2)        # scatter into block-2 layout
    mask2 = _interior_mask(h2, w2, r2, hg2, wg2)
    sel2 = _pool_scatter(h3, w3, r2, wg2, ng2, 0, w3, h3 * w3)      # gather to dense (c, h, w)

    (w11, b11), (w12, b12) = params["conv1_1"], params["conv1_2"]
    (w21, b21), (w22, b22) = params["conv2_1"], params["conv2_2"]

    y1 = conv_block(pp1, _conv_taps(w11), b11.reshape(-1, 1),
                    _conv_taps(w12), b12.reshape(-1, 1), mask1, sel1, wg=wg1)   # (n, C, 256)
    y2 = conv_block(y1, _conv_taps(w21), b21.reshape(-1, 1),
                    _conv_taps(w22), b22.reshape(-1, 1), mask2, sel2, wg=wg2)   # (n, C, 49)

    feat = y2.reshape(n, chid * h3 * w3)             # == nn.Flatten on NCHW: (c, h, w) order
    w_fc, b_fc = params["fc"]                        # PyTorch layout (out, in)
    f_pad = ((n_cls + 127) // 128) * 128             # lane-dense FC output, slice afterwards
    w_eff = jnp.zeros((w_fc.shape[1], f_pad), jnp.float32).at[:, :n_cls].set(w_fc.T)
    b_eff = jnp.zeros((f_pad,), jnp.float32).at[:n_cls].set(b_fc)
    return linear(feat, w_eff, b_eff)[:, :n_cls]     # (n, n_cls)


# ------------------------------ pure-JAX reference ----------------------------
def _reference_forward(x, params):
    def conv_relu(x, w, b):
        y = jax.lax.conv_general_dilated(
            x, w, window_strides=(1, 1), padding=((1, 1), (1, 1)),
            dimension_numbers=("NCHW", "OIHW", "NCHW"))
        return jax.nn.relu(y + b[None, :, None, None])

    def pool(x):
        return jax.lax.reduce_window(x, -jnp.inf, jax.lax.max,
                                     (1, 1, 2, 2), (1, 1, 2, 2), "VALID")

    x = pool(conv_relu(conv_relu(x, *params["conv1_1"]), *params["conv1_2"]))
    x = pool(conv_relu(conv_relu(x, *params["conv2_1"]), *params["conv2_2"]))
    w, b = params["fc"]
    return x.reshape(x.shape[0], -1) @ w.T + b


# ----------------------------- Param init -------------------------------------
def init_params(key, input_shape, hidden_units, output_shape):
    ks = jax.random.split(key, 5)

    def conv_p(k, cin, cout):
        kw, kb = jax.random.split(k)
        bound = 1.0 / (cin * 9) ** 0.5
        w = jax.random.uniform(kw, (cout, cin, 3, 3), jnp.float32, -bound, bound)
        b = jax.random.uniform(kb, (cout,), jnp.float32, -bound, bound)
        return w, b

    def lin_p(k, fin, fout):
        kw, kb = jax.random.split(k)
        bound = 1.0 / fin ** 0.5
        w = jax.random.uniform(kw, (fout, fin), jnp.float32, -bound, bound)
        b = jax.random.uniform(kb, (fout,), jnp.float32, -bound, bound)
        return w, b

    return {
        "conv1_1": conv_p(ks[0], input_shape, hidden_units),
        "conv1_2": conv_p(ks[1], hidden_units, hidden_units),
        "conv2_1": conv_p(ks[2], hidden_units, hidden_units),
        "conv2_2": conv_p(ks[3], hidden_units, hidden_units),
        "fc": lin_p(ks[4], hidden_units * 7 * 7, output_shape),
    }


# --------------------------------- Main ----------------------------------------
if __name__ == "__main__":
    key = jax.random.PRNGKey(0)
    k_x, k_p = jax.random.split(key)

    batch, in_channels, hidden_units, num_classes = 2, 1, 8, 10
    # spatial size must be 28 so that two 2x2 maxpools yield 7x7 (hidden*7*7 Linear).
    x = jax.random.normal(k_x, (batch, in_channels, 28, 28), jnp.float32)
    params = init_params(k_p, in_channels, hidden_units, num_classes)

    fwd = jax.jit(fashion_mnist_model_v2)
    logits = fwd(x, params)
    jax.block_until_ready(logits)

    assert logits.shape == (batch, num_classes), logits.shape
    assert logits.dtype == jnp.float32

    # Correctness check vs a pure-JAX (XLA) reference; loose tolerance covers bf16 matmuls.
    ref = _reference_forward(x, params)
    err = float(jnp.max(jnp.abs(logits - ref)))
    assert err < 5e-2, f"mismatch vs reference: max abs err {err}"
    print("KERNEL_OK")
</pallas_src>

<mosaic_0001>
module attributes {stable_mosaic.version = 11 : i64} {
  func.func @_conv_block_kernel(%arg0: i32, %arg1: memref<1x1x1024xf32, #tpu.memory_space<vmem>>, %arg2: memref<9x8x1xf32, #tpu.memory_space<vmem>>, %arg3: memref<8x1xf32, #tpu.memory_space<vmem>>, %arg4: memref<9x8x8xf32, #tpu.memory_space<vmem>>, %arg5: memref<8x1xf32, #tpu.memory_space<vmem>>, %arg6: memref<1x1024xf32, #tpu.memory_space<vmem>>, %arg7: memref<1024x256xf32, #tpu.memory_space<vmem>>, %arg8: memref<1x8x256xf32, #tpu.memory_space<vmem>>) attributes {dimension_semantics = [#tpu.dimension_semantics<parallel>], iteration_bounds = array<i64: 2>, scalar_prefetch = 0 : i64, scratch_operands = 0 : i64, tpu.core_type = #tpu.core_type<tc>, window_params = [{transform_indices = @transform_0, window_bounds = array<i64: 1, 1, 1024>}, {pipeline_mode = #tpu.pipeline_mode<synchronous>, transform_indices = @transform_1, window_bounds = array<i64: 9, 8, 1>}, {pipeline_mode = #tpu.pipeline_mode<synchronous>, transform_indices = @transform_2, window_bounds = array<i64: 8, 1>}, {pipeline_mode = #tpu.pipeline_mode<synchronous>, transform_indices = @transform_3, window_bounds = array<i64: 9, 8, 8>}, {pipeline_mode = #tpu.pipeline_mode<synchronous>, transform_indices = @transform_4, window_bounds = array<i64: 8, 1>}, {pipeline_mode = #tpu.pipeline_mode<synchronous>, transform_indices = @transform_5, window_bounds = array<i64: 1, 1024>}, {pipeline_mode = #tpu.pipeline_mode<synchronous>, transform_indices = @transform_6, window_bounds = array<i64: 1024, 256>}, {transform_indices = @transform_7, window_bounds = array<i64: 1, 8, 256>}]} {
    %c0 = arith.constant 0 : index
    %c0_0 = arith.constant 0 : index
    %0 = vector.load %arg6[%c0, %c0_0] : memref<1x1024xf32, #tpu.memory_space<vmem>>, vector<1x1024xf32>
    %c0_1 = arith.constant 0 : index
    %c0_2 = arith.constant 0 : index
    %c0_3 = arith.constant 0 : index
    %1 = vector.load %arg1[%c0_1, %c0_2, %c0_3] : memref<1x1x1024xf32, #tpu.memory_space<vmem>>, vector<1x1x1024xf32>
    %2 = vector.shape_cast %1 : vector<1x1x1024xf32> to vector<1x1024xf32>
    %cst = arith.constant 0.000000e+00 : f32
    %3 = vector.broadcast %cst : f32 to vector<8x1024xf32>
    %c33_i32 = arith.constant 33 : i32
    %4 = tpu.dynamic_rotate %2 by %c33_i32 dim 1 : vector<1x1024xf32>, i32 -> vector<1x1024xf32>
    %c0_4 = arith.constant 0 : index
    %c0_5 = arith.constant 0 : index
    %c0_6 = arith.constant 0 : index
    %5 = vector.load %arg2[%c0_4, %c0_5, %c0_6] : memref<9x8x1xf32, #tpu.memory_space<vmem>>, vector<1x8x1xf32>
    %6 = vector.shape_cast %5 : vector<1x8x1xf32> to vector<8x1xf32>
    %7 = vector.broadcast %6 : vector<8x1xf32> to vector<8x1024xf32>
    %8 = vector.broadcast %4 : vector<1x1024xf32> to vector<8x1024xf32>
    %9 = arith.mulf %7, %8 : vector<8x1024xf32>
    %10 = arith.addf %3, %9 : vector<8x1024xf32>
    %c32_i32 = arith.constant 32 : i32
    %11 = tpu.dynamic_rotate %2 by %c32_i32 dim 1 : vector<1x1024xf32>, i32 -> vector<1x1024xf32>
    %c1 = arith.constant 1 : index
    %c0_7 = arith.constant 0 : index
    %c0_8 = arith.constant 0 : index
    %12 = vector.load %arg2[%c1, %c0_7, %c0_8] : memref<9x8x1xf32, #tpu.memory_space<vmem>>, vector<1x8x1xf32>
    %13 = vector.shape_cast %12 : vector<1x8x1xf32> to vector<8x1xf32>
    %14 = vector.broadcast %13 : vector<8x1xf32> to vector<8x1024xf32>
    %15 = vector.broadcast %11 : vector<1x1024xf32> to vector<8x1024xf32>
    %16 = arith.mulf %14, %15 : vector<8x1024xf32>
    %17 = arith.addf %10, %16 : vector<8x1024xf32>
    %c31_i32 = arith.constant 31 : i32
    %18 = tpu.dynamic_rotate %2 by %c31_i32 dim 1 : vector<1x1024xf32>, i32 -> vector<1x1024xf32>
    %c2 = arith.constant 2 : index
    %c0_9 = arith.constant 0 : index
    %c0_10 = arith.constant 0 : index
    %19 = vector.load %arg2[%c2, %c0_9, %c0_10] : memref<9x8x1xf32, #tpu.memory_space<vmem>>, vector<1x8x1xf32>
    %20 = vector.shape_cast %19 : vector<1x8x1xf32> to vector<8x1xf32>
    %21 = vector.broadcast %20 : vector<8x1xf32> to vector<8x1024xf32>
    %22 = vector.broadcast %18 : vector<1x1024xf32> to vector<8x1024xf32>
    %23 = arith.mulf %21, %22 : vector<8x1024xf32>
    %24 = arith.addf %17, %23 : vector<8x1024xf32>
    %c1_i32 = arith.constant 1 : i32
    %25 = tpu.dynamic_rotate %2 by %c1_i32 dim 1 : vector<1x1024xf32>, i32 -> vector<1x1024xf32>
    %c3 = arith.constant 3 : index
    %c0_11 = arith.constant 0 : index
    %c0_12 = arith.constant 0 : index
    %26 = vector.load %arg2[%c3, %c0_11, %c0_12] : memref<9x8x1xf32, #tpu.memory_space<vmem>>, vector<1x8x1xf32>
    %27 = vector.shape_cast %26 : vector<1x8x1xf32> to vector<8x1xf32>
    %28 = vector.broadcast %27 : vector<8x1xf32> to vector<8x1024xf32>
    %29 = vector.broadcast %25 : vector<1x1024xf32> to vector<8x1024xf32>
    %30 = arith.mulf %28, %29 : vector<8x1024xf32>
    %31 = arith.addf %24, %30 : vector<8x1024xf32>
    %c4 = arith.constant 4 : index
    %c0_13 = arith.constant 0 : index
    %c0_14 = arith.constant 0 : index
    %32 = vector.load %arg2[%c4, %c0_13, %c0_14] : memref<9x8x1xf32, #tpu.memory_space<vmem>>, vector<1x8x1xf32>
    %33 = vector.shape_cast %32 : vector<1x8x1xf32> to vector<8x1xf32>
    %34 = vector.broadcast %33 : vector<8x1xf32> to vector<8x1024xf32>
    %35 = vector.broadcast %2 : vector<1x1024xf32> to vector<8x1024xf32>
    %36 = arith.mulf %34, %35 : vector<8x1024xf32>
    %37 = arith.addf %31, %36 : vector<8x1024xf32>
    %c1023_i32 = arith.constant 1023 : i32
    %38 = tpu.dynamic_rotate %2 by %c1023_i32 dim 1 : vector<1x1024xf32>, i32 -> vector<1x1024xf32>
    %c5 = arith.constant 5 : index
    %c0_15 = arith.constant 0 : index
    %c0_16 = arith.constant 0 : index
    %39 = vector.load %arg2[%c5, %c0_15, %c0_16] : memref<9x8x1xf32, #tpu.memory_space<vmem>>, vector<1x8x1xf32>
    %40 = vector.shape_cast %39 : vector<1x8x1xf32> to vector<8x1xf32>
    %41 = vector.broadcast %40 : vector<8x1xf32> to vector<8x1024xf32>
    %42 = vector.broadcast %38 : vector<1x1024xf32> to vector<8x1024xf32>
    %43 = arith.mulf %41, %42 : vector<8x1024xf32>
    %44 = arith.addf %37, %43 : vector<8x1024xf32>
    %c993_i32 = arith.constant 993 : i32
    %45 = tpu.dynamic_rotate %2 by %c993_i32 dim 1 : vector<1x1024xf32>, i32 -> vector<1x1024xf32>
    %c6 = arith.constant 6 : index
    %c0_17 = arith.constant 0 : index
    %c0_18 = arith.constant 0 : index
    %46 = vector.load %arg2[%c6, %c0_17, %c0_18] : memref<9x8x1xf32, #tpu.memory_space<vmem>>, vector<1x8x1xf32>
    %47 = vector.shape_cast %46 : vector<1x8x1xf32> to vector<8x1xf32>
    %48 = vector.broadcast %47 : vector<8x1xf32> to vector<8x1024xf32>
    %49 = vector.broadcast %45 : vector<1x1024xf32> to vector<8x1024xf32>
    %50 = arith.mulf %48, %49 : vector<8x1024xf32>
    %51 = arith.addf %44, %50 : vector<8x1024xf32>
    %c992_i32 = arith.constant 992 : i32
    %52 = tpu.dynamic_rotate %2 by %c992_i32 dim 1 : vector<1x1024xf32>, i32 -> vector<1x1024xf32>
    %c7 = arith.constant 7 : index
    %c0_19 = arith.constant 0 : index
    %c0_20 = arith.constant 0 : index
    %53 = vector.load %arg2[%c7, %c0_19, %c0_20] : memref<9x8x1xf32, #tpu.memory_space<vmem>>, vector<1x8x1xf32>
    %54 = vector.shape_cast %53 : vector<1x8x1xf32> to vector<8x1xf32>
    %55 = vector.broadcast %54 : vector<8x1xf32> to vector<8x1024xf32>
    %56 = vector.broadcast %52 : vector<1x1024xf32> to vector<8x1024xf32>
    %57 = arith.mulf %55, %56 : vector<8x1024xf32>
    %58 = arith.addf %51, %57 : vector<8x1024xf32>
    %c991_i32 = arith.constant 991 : i32
    %59 = tpu.dynamic_rotate %2 by %c991_i32 dim 1 : vector<1x1024xf32>, i32 -> vector<1x1024xf32>
    %c8 = arith.constant 8 : index
    %c0_21 = arith.constant 0 : index
    %c0_22 = arith.constant 0 : index
    %60 = vector.load %arg2[%c8, %c0_21, %c0_22] : memref<9x8x1xf32, #tpu.memory_space<vmem>>, vector<1x8x1xf32>
    %61 = vector.shape_cast %60 : vector<1x8x1xf32> to vector<8x1xf32>
    %62 = vector.broadcast %61 : vector<8x1xf32> to vector<8x1024xf32>
    %63 = vector.broadcast %59 : vector<1x1024xf32> to vector<8x1024xf32>
    %64 = arith.mulf %62, %63 : vector<8x1024xf32>
    %65 = arith.addf %58, %64 : vector<8x1024xf32>
    %c0_23 = arith.constant 0 : index
    %c0_24 = arith.constant 0 : index
    %66 = vector.load %arg3[%c0_23, %c0_24] : memref<8x1xf32, #tpu.memory_space<vmem>>, vector<8x1xf32>
    %67 = vector.broadcast %66 : vector<8x1xf32> to vector<8x1024xf32>
    %68 = arith.addf %65, %67 : vector<8x1024xf32>
    %cst_25 = arith.constant 0.000000e+00 : f32
    %69 = vector.broadcast %cst_25 : f32 to vector<8x1024xf32>
    %70 = arith.maximumf %68, %69 : vector<8x1024xf32>
    %71 = vector.broadcast %0 : vector<1x1024xf32> to vector<8x1024xf32>
    %72 = arith.mulf %70, %71 : vector<8x1024xf32>
    %cst_26 = arith.constant 0.000000e+00 : f32
    %73 = vector.broadcast %cst_26 : f32 to vector<8x1024xf32>
    %c33_i32_27 = arith.constant 33 : i32
    %74 = tpu.dynamic_rotate %72 by %c33_i32_27 dim 1 : vector<8x1024xf32>, i32 -> vector<8x1024xf32>
    %c0_28 = arith.constant 0 : index
    %c0_29 = arith.constant 0 : index
    %c0_30 = arith.constant 0 : index
    %75 = vector.load %arg4[%c0_28, %c0_29, %c0_30] : memref<9x8x8xf32, #tpu.memory_space<vmem>>, vector<1x8x8xf32>
    %76 = vector.shape_cast %75 : vector<1x8x8xf32> to vector<8x8xf32>
    %77 = arith.truncf %76 : vector<8x8xf32> to vector<8x8xbf16>
    %78 = arith.truncf %74 : vector<8x1024xf32> to vector<8x1024xbf16>
    %cst_31 = arith.constant dense<0.000000e+00> : vector<8x1024xf32>
    %79 = tpu.matmul %77, %78, %cst_31 {dimension_numbers = #tpu.dot_dimension_numbers<[1], [0], [0], [1], [0, 0, 1, 1], [], []>} : vector<8x8xbf16>, vector<8x1024xbf16>, vector<8x1024xf32> -> vector<8x1024xf32>
    %80 = arith.addf %73, %79 : vector<8x1024xf32>
    %c32_i32_32 = arith.constant 32 : i32
    %81 = tpu.dynamic_rotate %72 by %c32_i32_32 dim 1 : vector<8x1024xf32>, i32 -> vector<8x1024xf32>
    %c1_33 = arith.constant 1 : index
    %c0_34 = arith.constant 0 : index
    %c0_35 = arith.constant 0 : index
    %82 = vector.load %arg4[%c1_33, %c0_34, %c0_35] : memref<9x8x8xf32, #tpu.memory_space<vmem>>, vector<1x8x8xf32>
    %83 = vector.shape_cast %82 : vector<1x8x8xf32> to vector<8x8xf32>
    %84 = arith.truncf %83 : vector<8x8xf32> to vector<8x8xbf16>
    %85 = arith.truncf %81 : vector<8x1024xf32> to vector<8x1024xbf16>
    %cst_36 = arith.constant dense<0.000000e+00> : vector<8x1024xf32>
    %86 = tpu.matmul %84, %85, %cst_36 {dimension_numbers = #tpu.dot_dimension_numbers<[1], [0], [0], [1], [0, 0, 1, 1], [], []>} : vector<8x8xbf16>, vector<8x1024xbf16>, vector<8x1024xf32> -> vector<8x1024xf32>
    %87 = arith.addf %80, %86 : vector<8x1024xf32>
    %c31_i32_37 = arith.constant 31 : i32
    %88 = tpu.dynamic_rotate %72 by %c31_i32_37 dim 1 : vector<8x1024xf32>, i32 -> vector<8x1024xf32>
    %c2_38 = arith.constant 2 : index
    %c0_39 = arith.constant 0 : index
    %c0_40 = arith.constant 0 : index
    %89 = vector.load %arg4[%c2_38, %c0_39, %c0_40] : memref<9x8x8xf32, #tpu.memory_space<vmem>>, vector<1x8x8xf32>
    %90 = vector.shape_cast %89 : vector<1x8x8xf32> to vector<8x8xf32>
    %91 = arith.truncf %90 : vector<8x8xf32> to vector<8x8xbf16>
    %92 = arith.truncf %88 : vector<8x1024xf32> to vector<8x1024xbf16>
    %cst_41 = arith.constant dense<0.000000e+00> : vector<8x1024xf32>
    %93 = tpu.matmul %91, %92, %cst_41 {dimension_numbers = #tpu.dot_dimension_numbers<[1], [0], [0], [1], [0, 0, 1, 1], [], []>} : vector<8x8xbf16>, vector<8x1024xbf16>, vector<8x1024xf32> -> vector<8x1024xf32>
    %94 = arith.addf %87, %93 : vector<8x1024xf32>
    %c1_i32_42 = arith.constant 1 : i32
    %95 = tpu.dynamic_rotate %72 by %c1_i32_42 dim 1 : vector<8x1024xf32>, i32 -> vector<8x1024xf32>
    %c3_43 = arith.constant 3 : index
    %c0_44 = arith.constant 0 : index
    %c0_45 = arith.constant 0 : index
    %96 = vector.load %arg4[%c3_43, %c0_44, %c0_45] : memref<9x8x8xf32, #tpu.memory_space<vmem>>, vector<1x8x8xf32>
    %97 = vector.shape_cast %96 : vector<1x8x8xf32> to vector<8x8xf32>
    %98 = arith.truncf %97 : vector<8x8xf32> to vector<8x8xbf16>
    %99 = arith.truncf %95 : vector<8x1024xf32> to vector<8x1024xbf16>
    %cst_46 = arith.constant dense<0.000000e+00> : vector<8x1024xf32>
    %100 = tpu.matmul %98, %99, %cst_46 {dimension_numbers = #tpu.dot_dimension_numbers<[1], [0], [0], [1], [0, 0, 1, 1], [], []>} : vector<8x8xbf16>, vector<8x1024xbf16>, vector<8x1024xf32> -> vector<8x1024xf32>
    %101 = arith.addf %94, %100 : vector<8x1024xf32>
    %c4_47 = arith.constant 4 : index
    %c0_48 = arith.constant 0 : index
    %c0_49 = arith.constant 0 : index
    %102 = vector.load %arg4[%c4_47, %c0_48, %c0_49] : memref<9x8x8xf32, #tpu.memory_space<vmem>>, vector<1x8x8xf32>
    %103 = vector.shape_cast %102 : vector<1x8x8xf32> to vector<8x8xf32>
    %104 = arith.truncf %103 : vector<8x8xf32> to vector<8x8xbf16>
    %105 = arith.truncf %72 : vector<8x1024xf32> to vector<8x1024xbf16>
    %cst_50 = arith.constant dense<0.000000e+00> : vector<8x1024xf32>
    %106 = tpu.matmul %104, %105, %cst_50 {dimension_numbers = #tpu.dot_dimension_numbers<[1], [0], [0], [1], [0, 0, 1, 1], [], []>} : vector<8x8xbf16>, vector<8x1024xbf16>, vector<8x1024xf32> -> vector<8x1024xf32>
    %107 = arith.addf %101, %106 : vector<8x1024xf32>
    %c1023_i32_51 = arith.constant 1023 : i32
    %108 = tpu.dynamic_rotate %72 by %c1023_i32_51 dim 1 : vector<8x1024xf32>, i32 -> vector<8x1024xf32>
    %c5_52 = arith.constant 5 : index
    %c0_53 = arith.constant 0 : index
    %c0_54 = arith.constant 0 : index
    %109 = vector.load %arg4[%c5_52, %c0_53, %c0_54] : memref<9x8x8xf32, #tpu.memory_space<vmem>>, vector<1x8x8xf32>
    %110 = vector.shape_cast %109 : vector<1x8x8xf32> to vector<8x8xf32>
    %111 = arith.truncf %110 : vector<8x8xf32> to vector<8x8xbf16>
    %112 = arith.truncf %108 : vector<8x1024xf32> to vector<8x1024xbf16>
    %cst_55 = arith.constant dense<0.000000e+00> : vector<8x1024xf32>
    %113 = tpu.matmul %111, %112, %cst_55 {dimension_numbers = #tpu.dot_dimension_numbers<[1], [0], [0], [1], [0, 0, 1, 1], [], []>} : vector<8x8xbf16>, vector<8x1024xbf16>, vector<8x1024xf32> -> vector<8x1024xf32>
    %114 = arith.addf %107, %113 : vector<8x1024xf32>
    %c993_i32_56 = arith.constant 993 : i32
    %115 = tpu.dynamic_rotate %72 by %c993_i32_56 dim 1 : vector<8x1024xf32>, i32 -> vector<8x1024xf32>
    %c6_57 = arith.constant 6 : index
    %c0_58 = arith.constant 0 : index
    %c0_59 = arith.constant 0 : index
    %116 = vector.load %arg4[%c6_57, %c0_58, %c0_59] : memref<9x8x8xf32, #tpu.memory_space<vmem>>, vector<1x8x8xf32>
    %117 = vector.shape_cast %116 : vector<1x8x8xf32> to vector<8x8xf32>
    %118 = arith.truncf %117 : vector<8x8xf32> to vector<8x8xbf16>
    %119 = arith.truncf %115 : vector<8x1024xf32> to vector<8x1024xbf16>
    %cst_60 = arith.constant dense<0.000000e+00> : vector<8x1024xf32>
    %120 = tpu.matmul %118, %119, %cst_60 {dimension_numbers = #tpu.dot_dimension_numbers<[1], [0], [0], [1], [0, 0, 1, 1], [], []>} : vector<8x8xbf16>, vector<8x1024xbf16>, vector<8x1024xf32> -> vector<8x1024xf32>
    %121 = arith.addf %114, %120 : vector<8x1024xf32>
    %c992_i32_61 = arith.constant 992 : i32
    %122 = tpu.dynamic_rotate %72 by %c992_i32_61 dim 1 : vector<8x1024xf32>, i32 -> vector<8x1024xf32>
    %c7_62 = arith.constant 7 : index
    %c0_63 = arith.constant 0 : index
    %c0_64 = arith.constant 0 : index
    %123 = vector.load %arg4[%c7_62, %c0_63, %c0_64] : memref<9x8x8xf32, #tpu.memory_space<vmem>>, vector<1x8x8xf32>
    %124 = vector.shape_cast %123 : vector<1x8x8xf32> to vector<8x8xf32>
    %125 = arith.truncf %124 : vector<8x8xf32> to vector<8x8xbf16>
    %126 = arith.truncf %122 : vector<8x1024xf32> to vector<8x1024xbf16>
    %cst_65 = arith.constant dense<0.000000e+00> : vector<8x1024xf32>
    %127 = tpu.matmul %125, %126, %cst_65 {dimension_numbers = #tpu.dot_dimension_numbers<[1], [0], [0], [1], [0, 0, 1, 1], [], []>} : vector<8x8xbf16>, vector<8x1024xbf16>, vector<8x1024xf32> -> vector<8x1024xf32>
    %128 = arith.addf %121, %127 : vector<8x1024xf32>
    %c991_i32_66 = arith.constant 991 : i32
    %129 = tpu.dynamic_rotate %72 by %c991_i32_66 dim 1 : vector<8x1024xf32>, i32 -> vector<8x1024xf32>
    %c8_67 = arith.constant 8 : index
    %c0_68 = arith.constant 0 : index
    %c0_69 = arith.constant 0 : index
    %130 = vector.load %arg4[%c8_67, %c0_68, %c0_69] : memref<9x8x8xf32, #tpu.memory_space<vmem>>, vector<1x8x8xf32>
    %131 = vector.shape_cast %130 : vector<1x8x8xf32> to vector<8x8xf32>
    %132 = arith.truncf %131 : vector<8x8xf32> to vector<8x8xbf16>
    %133 = arith.truncf %129 : vector<8x1024xf32> to vector<8x1024xbf16>
    %cst_70 = arith.constant dense<0.000000e+00> : vector<8x1024xf32>
    %134 = tpu.matmul %132, %133, %cst_70 {dimension_numbers = #tpu.dot_dimension_numbers<[1], [0], [0], [1], [0, 0, 1, 1], [], []>} : vector<8x8xbf16>, vector<8x1024xbf16>, vector<8x1024xf32> -> vector<8x1024xf32>
    %135 = arith.addf %128, %134 : vector<8x1024xf32>
    %c0_71 = arith.constant 0 : index
    %c0_72 = arith.constant 0 : index
    %136 = vector.load %arg5[%c0_71, %c0_72] : memref<8x1xf32, #tpu.memory_space<vmem>>, vector<8x1xf32>
    %137 = vector.broadcast %136 : vector<8x1xf32> to vector<8x1024xf32>
    %138 = arith.addf %135, %137 : vector<8x1024xf32>
    %cst_73 = arith.constant 0.000000e+00 : f32
    %139 = vector.broadcast %cst_73 : f32 to vector<8x1024xf32>
    %140 = arith.maximumf %138, %139 : vector<8x1024xf32>
    %c1023_i32_74 = arith.constant 1023 : i32
    %141 = tpu.dynamic_rotate %140 by %c1023_i32_74 dim 1 : vector<8x1024xf32>, i32 -> vector<8x1024xf32>
    %142 = arith.maximumf %140, %141 : vector<8x1024xf32>
    %c992_i32_75 = arith.constant 992 : i32
    %143 = tpu.dynamic_rotate %140 by %c992_i32_75 dim 1 : vector<8x1024xf32>, i32 -> vector<8x1024xf32>
    %144 = arith.maximumf %142, %143 : vector<8x1024xf32>
    %c991_i32_76 = arith.constant 991 : i32
    %145 = tpu.dynamic_rotate %140 by %c991_i32_76 dim 1 : vector<8x1024xf32>, i32 -> vector<8x1024xf32>
    %146 = arith.maximumf %144, %145 : vector<8x1024xf32>
    %c0_77 = arith.constant 0 : index
    %c0_78 = arith.constant 0 : index
    %147 = vector.load %arg7[%c0_77, %c0_78] : memref<1024x256xf32, #tpu.memory_space<vmem>>, vector<1024x256xf32>
    %cst_79 = arith.constant dense<0.000000e+00> : vector<8x256xf32>
    %148 = tpu.matmul %146, %147, %cst_79 {dimension_numbers = #tpu.dot_dimension_numbers<[1], [0], [0], [1], [0, 0, 1, 1], [], []>} : vector<8x1024xf32>, vector<1024x256xf32>, vector<8x256xf32> -> vector<8x256xf32>
    %c0_80 = arith.constant 0 : index
    %c0_81 = arith.constant 0 : index
    %c0_82 = arith.constant 0 : index
    %149 = vector.load %arg8[%c0_80, %c0_81, %c0_82] : memref<1x8x256xf32, #tpu.memory_space<vmem>>, vector<1x8x256xf32>
    %150 = vector.shape_cast %149 : vector<1x8x256xf32> to vector<8x256xf32>
    %151 = vector.shape_cast %148 : vector<8x256xf32> to vector<1x8x256xf32>
    tpu.vector_store %arg8[%c0_80, %c0_81, %c0_82], %151 {strides = array<i32>} : memref<1x8x256xf32, #tpu.memory_space<vmem>>, vector<1x8x256xf32>,
    return
  }
  func.func @transform_0(%arg0: i32) -> (i32, i32, i32) {
    %c0_i32 = arith.constant 0 : i32
    %c0_i32_0 = arith.constant 0 : i32
    %c0_i32_1 = arith.constant 0 : i32
    return %arg0, %c0_i32, %c0_i32_0 : i32, i32, i32
  }
  func.func @transform_1(%arg0: i32) -> (i32, i32, i32) {
    %c0_i32 = arith.constant 0 : i32
    %c0_i32_0 = arith.constant 0 : i32
    %c0_i32_1 = arith.constant 0 : i32
    %c0_i32_2 = arith.constant 0 : i32
    return %c0_i32, %c0_i32_0, %c0_i32_1 : i32, i32, i32
  }
  func.func @transform_2(%arg0: i32) -> (i32, i32) {
    %c0_i32 = arith.constant 0 : i32
    %c0_i32_0 = arith.constant 0 : i32
    %c0_i32_1 = arith.constant 0 : i32
    return %c0_i32, %c0_i32_0 : i32, i32
  }
  func.func @transform_3(%arg0: i32) -> (i32, i32, i32) {
    %c0_i32 = arith.constant 0 : i32
    %c0_i32_0 = arith.constant 0 : i32
    %c0_i32_1 = arith.constant 0 : i32
    %c0_i32_2 = arith.constant 0 : i32
    return %c0_i32, %c0_i32_0, %c0_i32_1 : i32, i32, i32
  }
  func.func @transform_4(%arg0: i32) -> (i32, i32) {
    %c0_i32 = arith.constant 0 : i32
    %c0_i32_0 = arith.constant 0 : i32
    %c0_i32_1 = arith.constant 0 : i32
    return %c0_i32, %c0_i32_0 : i32, i32
  }
  func.func @transform_5(%arg0: i32) -> (i32, i32) {
    %c0_i32 = arith.constant 0 : i32
    %c0_i32_0 = arith.constant 0 : i32
    %c0_i32_1 = arith.constant 0 : i32
    return %c0_i32, %c0_i32_0 : i32, i32
  }
  func.func @transform_6(%arg0: i32) -> (i32, i32) {
    %c0_i32 = arith.constant 0 : i32
    %c0_i32_0 = arith.constant 0 : i32
    %c0_i32_1 = arith.constant 0 : i32
    return %c0_i32, %c0_i32_0 : i32, i32
  }
  func.func @transform_7(%arg0: i32) -> (i32, i32, i32) {
    %c0_i32 = arith.constant 0 : i32
    %c0_i32_0 = arith.constant 0 : i32
    %c0_i32_1 = arith.constant 0 : i32
    return %arg0, %c0_i32, %c0_i32_0 : i32, i32, i32
  }
}

module attributes {stable_mosaic.version = 11 : i64} {
  func.func @_conv_block_kernel(%arg0: i32, %arg1: memref<1x8x256xf32, #tpu.memory_space<vmem>>, %arg2: memref<9x8x8xf32, #tpu.memory_space<vmem>>, %arg3: memref<8x1xf32, #tpu.memory_space<vmem>>, %arg4: memref<9x8x8xf32, #tpu.memory_space<vmem>>, %arg5: memref<8x1xf32, #tpu.memory_space<vmem>>, %arg6: memref<1x256xf32, #tpu.memory_space<vmem>>, %arg7: memref<256x49xf32, #tpu.memory_space<vmem>>, %arg8: memref<1x8x49xf32, #tpu.memory_space<vmem>>) attributes {dimension_semantics = [#tpu.dimension_semantics<parallel>], iteration_bounds = array<i64: 2>, scalar_prefetch = 0 : i64, scratch_operands = 0 : i64, tpu.core_type = #tpu.core_type<tc>, window_params = [{transform_indices = @transform_0, window_bounds = array<i64: 1, 8, 256>}, {pipeline_mode = #tpu.pipeline_mode<synchronous>, transform_indices = @transform_1, window_bounds = array<i64: 9, 8, 8>}, {pipeline_mode = #tpu.pipeline_mode<synchronous>, transform_indices = @transform_2, window_bounds = array<i64: 8, 1>}, {pipeline_mode = #tpu.pipeline_mode<synchronous>, transform_indices = @transform_3, window_bounds = array<i64: 9, 8, 8>}, {pipeline_mode = #tpu.pipeline_mode<synchronous>, transform_indices = @transform_4, window_bounds = array<i64: 8, 1>}, {pipeline_mode = #tpu.pipeline_mode<synchronous>, transform_indices = @transform_5, window_bounds = array<i64: 1, 256>}, {pipeline_mode = #tpu.pipeline_mode<synchronous>, transform_indices = @transform_6, window_bounds = array<i64: 256, 49>}, {transform_indices = @transform_7, window_bounds = array<i64: 1, 8, 49>}]} {
    %c0 = arith.constant 0 : index
    %c0_0 = arith.constant 0 : index
    %0 = vector.load %arg6[%c0, %c0_0] : memref<1x256xf32, #tpu.memory_space<vmem>>, vector<1x256xf32>
    %c0_1 = arith.constant 0 : index
    %c0_2 = arith.constant 0 : index
    %c0_3 = arith.constant 0 : index
    %1 = vector.load %arg1[%c0_1, %c0_2, %c0_3] : memref<1x8x256xf32, #tpu.memory_space<vmem>>, vector<1x8x256xf32>
    %2 = vector.shape_cast %1 : vector<1x8x256xf32> to vector<8x256xf32>
    %cst = arith.constant 0.000000e+00 : f32
    %3 = vector.broadcast %cst : f32 to vector<8x256xf32>
    %c17_i32 = arith.constant 17 : i32
    %4 = tpu.dynamic_rotate %2 by %c17_i32 dim 1 : vector<8x256xf32>, i32 -> vector<8x256xf32>
    %c0_4 = arith.constant 0 : index
    %c0_5 = arith.constant 0 : index
    %c0_6 = arith.constant 0 : index
    %5 = vector.load %arg2[%c0_4, %c0_5, %c0_6] : memref<9x8x8xf32, #tpu.memory_space<vmem>>, vector<1x8x8xf32>
    %6 = vector.shape_cast %5 : vector<1x8x8xf32> to vector<8x8xf32>
    %7 = arith.truncf %6 : vector<8x8xf32> to vector<8x8xbf16>
    %8 = arith.truncf %4 : vector<8x256xf32> to vector<8x256xbf16>
    %cst_7 = arith.constant dense<0.000000e+00> : vector<8x256xf32>
    %9 = tpu.matmul %7, %8, %cst_7 {dimension_numbers = #tpu.dot_dimension_numbers<[1], [0], [0], [1], [0, 0, 1, 1], [], []>} : vector<8x8xbf16>, vector<8x256xbf16>, vector<8x256xf32> -> vector<8x256xf32>
    %10 = arith.addf %3, %9 : vector<8x256xf32>
    %c16_i32 = arith.constant 16 : i32
    %11 = tpu.dynamic_rotate %2 by %c16_i32 dim 1 : vector<8x256xf32>, i32 -> vector<8x256xf32>
    %c1 = arith.constant 1 : index
    %c0_8 = arith.constant 0 : index
    %c0_9 = arith.constant 0 : index
    %12 = vector.load %arg2[%c1, %c0_8, %c0_9] : memref<9x8x8xf32, #tpu.memory_space<vmem>>, vector<1x8x8xf32>
    %13 = vector.shape_cast %12 : vector<1x8x8xf32> to vector<8x8xf32>
    %14 = arith.truncf %13 : vector<8x8xf32> to vector<8x8xbf16>
    %15 = arith.truncf %11 : vector<8x256xf32> to vector<8x256xbf16>
    %cst_10 = arith.constant dense<0.000000e+00> : vector<8x256xf32>
    %16 = tpu.matmul %14, %15, %cst_10 {dimension_numbers = #tpu.dot_dimension_numbers<[1], [0], [0], [1], [0, 0, 1, 1], [], []>} : vector<8x8xbf16>, vector<8x256xbf16>, vector<8x256xf32> -> vector<8x256xf32>
    %17 = arith.addf %10, %16 : vector<8x256xf32>
    %c15_i32 = arith.constant 15 : i32
    %18 = tpu.dynamic_rotate %2 by %c15_i32 dim 1 : vector<8x256xf32>, i32 -> vector<8x256xf32>
    %c2 = arith.constant 2 : index
    %c0_11 = arith.constant 0 : index
    %c0_12 = arith.constant 0 : index
    %19 = vector.load %arg2[%c2, %c0_11, %c0_12] : memref<9x8x8xf32, #tpu.memory_space<vmem>>, vector<1x8x8xf32>
    %20 = vector.shape_cast %19 : vector<1x8x8xf32> to vector<8x8xf32>
    %21 = arith.truncf %20 : vector<8x8xf32> to vector<8x8xbf16>
    %22 = arith.truncf %18 : vector<8x256xf32> to vector<8x256xbf16>
    %cst_13 = arith.constant dense<0.000000e+00> : vector<8x256xf32>
    %23 = tpu.matmul %21, %22, %cst_13 {dimension_numbers = #tpu.dot_dimension_numbers<[1], [0], [0], [1], [0, 0, 1, 1], [], []>} : vector<8x8xbf16>, vector<8x256xbf16>, vector<8x256xf32> -> vector<8x256xf32>
    %24 = arith.addf %17, %23 : vector<8x256xf32>
    %c1_i32 = arith.constant 1 : i32
    %25 = tpu.dynamic_rotate %2 by %c1_i32 dim 1 : vector<8x256xf32>, i32 -> vector<8x256xf32>
    %c3 = arith.constant 3 : index
    %c0_14 = arith.constant 0 : index
    %c0_15 = arith.constant 0 : index
    %26 = vector.load %arg2[%c3, %c0_14, %c0_15] : memref<9x8x8xf32, #tpu.memory_space<vmem>>, vector<1x8x8xf32>
    %27 = vector.shape_cast %26 : vector<1x8x8xf32> to vector<8x8xf32>
    %28 = arith.truncf %27 : vector<8x8xf32> to vector<8x8xbf16>
    %29 = arith.truncf %25 : vector<8x256xf32> to vector<8x256xbf16>
    %cst_16 = arith.constant dense<0.000000e+00> : vector<8x256xf32>
    %30 = tpu.matmul %28, %29, %cst_16 {dimension_numbers = #tpu.dot_dimension_numbers<[1], [0], [0], [1], [0, 0, 1, 1], [], []>} : vector<8x8xbf16>, vector<8x256xbf16>, vector<8x256xf32> -> vector<8x256xf32>
    %31 = arith.addf %24, %30 : vector<8x256xf32>
    %c4 = arith.constant 4 : index
    %c0_17 = arith.constant 0 : index
    %c0_18 = arith.constant 0 : index
    %32 = vector.load %arg2[%c4, %c0_17, %c0_18] : memref<9x8x8xf32, #tpu.memory_space<vmem>>, vector<1x8x8xf32>
    %33 = vector.shape_cast %32 : vector<1x8x8xf32> to vector<8x8xf32>
    %34 = arith.truncf %33 : vector<8x8xf32> to vector<8x8xbf16>
    %35 = arith.truncf %2 : vector<8x256xf32> to vector<8x256xbf16>
    %cst_19 = arith.constant dense<0.000000e+00> : vector<8x256xf32>
    %36 = tpu.matmul %34, %35, %cst_19 {dimension_numbers = #tpu.dot_dimension_numbers<[1], [0], [0], [1], [0, 0, 1, 1], [], []>} : vector<8x8xbf16>, vector<8x256xbf16>, vector<8x256xf32> -> vector<8x256xf32>
    %37 = arith.addf %31, %36 : vector<8x256xf32>
    %c255_i32 = arith.constant 255 : i32
    %38 = tpu.dynamic_rotate %2 by %c255_i32 dim 1 : vector<8x256xf32>, i32 -> vector<8x256xf32>
    %c5 = arith.constant 5 : index
    %c0_20 = arith.constant 0 : index
    %c0_21 = arith.constant 0 : index
    %39 = vector.load %arg2[%c5, %c0_20, %c0_21] : memref<9x8x8xf32, #tpu.memory_space<vmem>>, vector<1x8x8xf32>
    %40 = vector.shape_cast %39 : vector<1x8x8xf32> to vector<8x8xf32>
    %41 = arith.truncf %40 : vector<8x8xf32> to vector<8x8xbf16>
    %42 = arith.truncf %38 : vector<8x256xf32> to vector<8x256xbf16>
    %cst_22 = arith.constant dense<0.000000e+00> : vector<8x256xf32>
    %43 = tpu.matmul %41, %42, %cst_22 {dimension_numbers = #tpu.dot_dimension_numbers<[1], [0], [0], [1], [0, 0, 1, 1], [], []>} : vector<8x8xbf16>, vector<8x256xbf16>, vector<8x256xf32> -> vector<8x256xf32>
    %44 = arith.addf %37, %43 : vector<8x256xf32>
    %c241_i32 = arith.constant 241 : i32
    %45 = tpu.dynamic_rotate %2 by %c241_i32 dim 1 : vector<8x256xf32>, i32 -> vector<8x256xf32>
    %c6 = arith.constant 6 : index
    %c0_23 = arith.constant 0 : index
    %c0_24 = arith.constant 0 : index
    %46 = vector.load %arg2[%c6, %c0_23, %c0_24] : memref<9x8x8xf32, #tpu.memory_space<vmem>>, vector<1x8x8xf32>
    %47 = vector.shape_cast %46 : vector<1x8x8xf32> to vector<8x8xf32>
    %48 = arith.truncf %47 : vector<8x8xf32> to vector<8x8xbf16>
    %49 = arith.truncf %45 : vector<8x256xf32> to vector<8x256xbf16>
    %cst_25 = arith.constant dense<0.000000e+00> : vector<8x256xf32>
    %50 = tpu.matmul %48, %49, %cst_25 {dimension_numbers = #tpu.dot_dimension_numbers<[1], [0], [0], [1], [0, 0, 1, 1], [], []>} : vector<8x8xbf16>, vector<8x256xbf16>, vector<8x256xf32> -> vector<8x256xf32>
    %51 = arith.addf %44, %50 : vector<8x256xf32>
    %c240_i32 = arith.constant 240 : i32
    %52 = tpu.dynamic_rotate %2 by %c240_i32 dim 1 : vector<8x256xf32>, i32 -> vector<8x256xf32>
    %c7 = arith.constant 7 : index
    %c0_26 = arith.constant 0 : index
    %c0_27 = arith.constant 0 : index
    %53 = vector.load %arg2[%c7, %c0_26, %c0_27] : memref<9x8x8xf32, #tpu.memory_space<vmem>>, vector<1x8x8xf32>
    %54 = vector.shape_cast %53 : vector<1x8x8xf32> to vector<8x8xf32>
    %55 = arith.truncf %54 : vector<8x8xf32> to vector<8x8xbf16>
    %56 = arith.truncf %52 : vector<8x256xf32> to vector<8x256xbf16>
    %cst_28 = arith.constant dense<0.000000e+00> : vector<8x256xf32>
    %57 = tpu.matmul %55, %56, %cst_28 {dimension_numbers = #tpu.dot_dimension_numbers<[1], [0], [0], [1], [0, 0, 1, 1], [], []>} : vector<8x8xbf16>, vector<8x256xbf16>, vector<8x256xf32> -> vector<8x256xf32>
    %58 = arith.addf %51, %57 : vector<8x256xf32>
    %c239_i32 = arith.constant 239 : i32
    %59 = tpu.dynamic_rotate %2 by %c239_i32 dim 1 : vector<8x256xf32>, i32 -> vector<8x256xf32>
    %c8 = arith.constant 8 : index
    %c0_29 = arith.constant 0 : index
    %c0_30 = arith.constant 0 : index
    %60 = vector.load %arg2[%c8, %c0_29, %c0_30] : memref<9x8x8xf32, #tpu.memory_space<vmem>>, vector<1x8x8xf32>
    %61 = vector.shape_cast %60 : vector<1x8x8xf32> to vector<8x8xf32>
    %62 = arith.truncf %61 : vector<8x8xf32> to vector<8x8xbf16>
    %63 = arith.truncf %59 : vector<8x256xf32> to vector<8x256xbf16>
    %cst_31 = arith.constant dense<0.000000e+00> : vector<8x256xf32>
    %64 = tpu.matmul %62, %63, %cst_31 {dimension_numbers = #tpu.dot_dimension_numbers<[1], [0], [0], [1], [0, 0, 1, 1], [], []>} : vector<8x8xbf16>, vector<8x256xbf16>, vector<8x256xf32> -> vector<8x256xf32>
    %65 = arith.addf %58, %64 : vector<8x256xf32>
    %c0_32 = arith.constant 0 : index
    %c0_33 = arith.constant 0 : index
    %66 = vector.load %arg3[%c0_32, %c0_33] : memref<8x1xf32, #tpu.memory_space<vmem>>, vector<8x1xf32>
    %67 = vector.broadcast %66 : vector<8x1xf32> to vector<8x256xf32>
    %68 = arith.addf %65, %67 : vector<8x256xf32>
    %cst_34 = arith.constant 0.000000e+00 : f32
    %69 = vector.broadcast %cst_34 : f32 to vector<8x256xf32>
    %70 = arith.maximumf %68, %69 : vector<8x256xf32>
    %71 = vector.broadcast %0 : vector<1x256xf32> to vector<8x256xf32>
    %72 = arith.mulf %70, %71 : vector<8x256xf32>
    %cst_35 = arith.constant 0.000000e+00 : f32
    %73 = vector.broadcast %cst_35 : f32 to vector<8x256xf32>
    %c17_i32_36 = arith.constant 17 : i32
    %74 = tpu.dynamic_rotate %72 by %c17_i32_36 dim 1 : vector<8x256xf32>, i32 -> vector<8x256xf32>
    %c0_37 = arith.constant 0 : index
    %c0_38 = arith.constant 0 : index
    %c0_39 = arith.constant 0 : index
    %75 = vector.load %arg4[%c0_37, %c0_38, %c0_39] : memref<9x8x8xf32, #tpu.memory_space<vmem>>, vector<1x8x8xf32>
    %76 = vector.shape_cast %75 : vector<1x8x8xf32> to vector<8x8xf32>
    %77 = arith.truncf %76 : vector<8x8xf32> to vector<8x8xbf16>
    %78 = arith.truncf %74 : vector<8x256xf32> to vector<8x256xbf16>
    %cst_40 = arith.constant dense<0.000000e+00> : vector<8x256xf32>
    %79 = tpu.matmul %77, %78, %cst_40 {dimension_numbers = #tpu.dot_dimension_numbers<[1], [0], [0], [1], [0, 0, 1, 1], [], []>} : vector<8x8xbf16>, vector<8x256xbf16>, vector<8x256xf32> -> vector<8x256xf32>
    %80 = arith.addf %73, %79 : vector<8x256xf32>
    %c16_i32_41 = arith.constant 16 : i32
    %81 = tpu.dynamic_rotate %72 by %c16_i32_41 dim 1 : vector<8x256xf32>, i32 -> vector<8x256xf32>
    %c1_42 = arith.constant 1 : index
    %c0_43 = arith.constant 0 : index
    %c0_44 = arith.constant 0 : index
    %82 = vector.load %arg4[%c1_42, %c0_43, %c0_44] : memref<9x8x8xf32, #tpu.memory_space<vmem>>, vector<1x8x8xf32>
    %83 = vector.shape_cast %82 : vector<1x8x8xf32> to vector<8x8xf32>
    %84 = arith.truncf %83 : vector<8x8xf32> to vector<8x8xbf16>
    %85 = arith.truncf %81 : vector<8x256xf32> to vector<8x256xbf16>
    %cst_45 = arith.constant dense<0.000000e+00> : vector<8x256xf32>
    %86 = tpu.matmul %84, %85, %cst_45 {dimension_numbers = #tpu.dot_dimension_numbers<[1], [0], [0], [1], [0, 0, 1, 1], [], []>} : vector<8x8xbf16>, vector<8x256xbf16>, vector<8x256xf32> -> vector<8x256xf32>
    %87 = arith.addf %80, %86 : vector<8x256xf32>
    %c15_i32_46 = arith.constant 15 : i32
    %88 = tpu.dynamic_rotate %72 by %c15_i32_46 dim 1 : vector<8x256xf32>, i32 -> vector<8x256xf32>
    %c2_47 = arith.constant 2 : index
    %c0_48 = arith.constant 0 : index
    %c0_49 = arith.constant 0 : index
    %89 = vector.load %arg4[%c2_47, %c0_48, %c0_49] : memref<9x8x8xf32, #tpu.memory_space<vmem>>, vector<1x8x8xf32>
    %90 = vector.shape_cast %89 : vector<1x8x8xf32> to vector<8x8xf32>
    %91 = arith.truncf %90 : vector<8x8xf32> to vector<8x8xbf16>
    %92 = arith.truncf %88 : vector<8x256xf32> to vector<8x256xbf16>
    %cst_50 = arith.constant dense<0.000000e+00> : vector<8x256xf32>
    %93 = tpu.matmul %91, %92, %cst_50 {dimension_numbers = #tpu.dot_dimension_numbers<[1], [0], [0], [1], [0, 0, 1, 1], [], []>} : vector<8x8xbf16>, vector<8x256xbf16>, vector<8x256xf32> -> vector<8x256xf32>
    %94 = arith.addf %87, %93 : vector<8x256xf32>
    %c1_i32_51 = arith.constant 1 : i32
    %95 = tpu.dynamic_rotate %72 by %c1_i32_51 dim 1 : vector<8x256xf32>, i32 -> vector<8x256xf32>
    %c3_52 = arith.constant 3 : index
    %c0_53 = arith.constant 0 : index
    %c0_54 = arith.constant 0 : index
    %96 = vector.load %arg4[%c3_52, %c0_53, %c0_54] : memref<9x8x8xf32, #tpu.memory_space<vmem>>, vector<1x8x8xf32>
    %97 = vector.shape_cast %96 : vector<1x8x8xf32> to vector<8x8xf32>
    %98 = arith.truncf %97 : vector<8x8xf32> to vector<8x8xbf16>
    %99 = arith.truncf %95 : vector<8x256xf32> to vector<8x256xbf16>
    %cst_55 = arith.constant dense<0.000000e+00> : vector<8x256xf32>
    %100 = tpu.matmul %98, %99, %cst_55 {dimension_numbers = #tpu.dot_dimension_numbers<[1], [0], [0], [1], [0, 0, 1, 1], [], []>} : vector<8x8xbf16>, vector<8x256xbf16>, vector<8x256xf32> -> vector<8x256xf32>
    %101 = arith.addf %94, %100 : vector<8x256xf32>
    %c4_56 = arith.constant 4 : index
    %c0_57 = arith.constant 0 : index
    %c0_58 = arith.constant 0 : index
    %102 = vector.load %arg4[%c4_56, %c0_57, %c0_58] : memref<9x8x8xf32, #tpu.memory_space<vmem>>, vector<1x8x8xf32>
    %103 = vector.shape_cast %102 : vector<1x8x8xf32> to vector<8x8xf32>
    %104 = arith.truncf %103 : vector<8x8xf32> to vector<8x8xbf16>
    %105 = arith.truncf %72 : vector<8x256xf32> to vector<8x256xbf16>
    %cst_59 = arith.constant dense<0.000000e+00> : vector<8x256xf32>
    %106 = tpu.matmul %104, %105, %cst_59 {dimension_numbers = #tpu.dot_dimension_numbers<[1], [0], [0], [1], [0, 0, 1, 1], [], []>} : vector<8x8xbf16>, vector<8x256xbf16>, vector<8x256xf32> -> vector<8x256xf32>
    %107 = arith.addf %101, %106 : vector<8x256xf32>
    %c255_i32_60 = arith.constant 255 : i32
    %108 = tpu.dynamic_rotate %72 by %c255_i32_60 dim 1 : vector<8x256xf32>, i32 -> vector<8x256xf32>
    %c5_61 = arith.constant 5 : index
    %c0_62 = arith.constant 0 : index
    %c0_63 = arith.constant 0 : index
    %109 = vector.load %arg4[%c5_61, %c0_62, %c0_63] : memref<9x8x8xf32, #tpu.memory_space<vmem>>, vector<1x8x8xf32>
    %110 = vector.shape_cast %109 : vector<1x8x8xf32> to vector<8x8xf32>
    %111 = arith.truncf %110 : vector<8x8xf32> to vector<8x8xbf16>
    %112 = arith.truncf %108 : vector<8x256xf32> to vector<8x256xbf16>
    %cst_64 = arith.constant dense<0.000000e+00> : vector<8x256xf32>
    %113 = tpu.matmul %111, %112, %cst_64 {dimension_numbers = #tpu.dot_dimension_numbers<[1], [0], [0], [1], [0, 0, 1, 1], [], []>} : vector<8x8xbf16>, vector<8x256xbf16>, vector<8x256xf32> -> vector<8x256xf32>
    %114 = arith.addf %107, %113 : vector<8x256xf32>
    %c241_i32_65 = arith.constant 241 : i32
    %115 = tpu.dynamic_rotate %72 by %c241_i32_65 dim 1 : vector<8x256xf32>, i32 -> vector<8x256xf32>
    %c6_66 = arith.constant 6 : index
    %c0_67 = arith.constant 0 : index
    %c0_68 = arith.constant 0 : index
    %116 = vector.load %arg4[%c6_66, %c0_67, %c0_68] : memref<9x8x8xf32, #tpu.memory_space<vmem>>, vector<1x8x8xf32>
    %117 = vector.shape_cast %116 : vector<1x8x8xf32> to vector<8x8xf32>
    %118 = arith.truncf %117 : vector<8x8xf32> to vector<8x8xbf16>
    %119 = arith.truncf %115 : vector<8x256xf32> to vector<8x256xbf16>
    %cst_69 = arith.constant dense<0.000000e+00> : vector<8x256xf32>
    %120 = tpu.matmul %118, %119, %cst_69 {dimension_numbers = #tpu.dot_dimension_numbers<[1], [0], [0], [1], [0, 0, 1, 1], [], []>} : vector<8x8xbf16>, vector<8x256xbf16>, vector<8x256xf32> -> vector<8x256xf32>
    %121 = arith.addf %114, %120 : vector<8x256xf32>
    %c240_i32_70 = arith.constant 240 : i32
    %122 = tpu.dynamic_rotate %72 by %c240_i32_70 dim 1 : vector<8x256xf32>, i32 -> vector<8x256xf32>
    %c7_71 = arith.constant 7 : index
    %c0_72 = arith.constant 0 : index
    %c0_73 = arith.constant 0 : index
    %123 = vector.load %arg4[%c7_71, %c0_72, %c0_73] : memref<9x8x8xf32, #tpu.memory_space<vmem>>, vector<1x8x8xf32>
    %124 = vector.shape_cast %123 : vector<1x8x8xf32> to vector<8x8xf32>
    %125 = arith.truncf %124 : vector<8x8xf32> to vector<8x8xbf16>
    %126 = arith.truncf %122 : vector<8x256xf32> to vector<8x256xbf16>
    %cst_74 = arith.constant dense<0.000000e+00> : vector<8x256xf32>
    %127 = tpu.matmul %125, %126, %cst_74 {dimension_numbers = #tpu.dot_dimension_numbers<[1], [0], [0], [1], [0, 0, 1, 1], [], []>} : vector<8x8xbf16>, vector<8x256xbf16>, vector<8x256xf32> -> vector<8x256xf32>
    %128 = arith.addf %121, %127 : vector<8x256xf32>
    %c239_i32_75 = arith.constant 239 : i32
    %129 = tpu.dynamic_rotate %72 by %c239_i32_75 dim 1 : vector<8x256xf32>, i32 -> vector<8x256xf32>
    %c8_76 = arith.constant 8 : index
    %c0_77 = arith.constant 0 : index
    %c0_78 = arith.constant 0 : index
    %130 = vector.load %arg4[%c8_76, %c0_77, %c0_78] : memref<9x8x8xf32, #tpu.memory_space<vmem>>, vector<1x8x8xf32>
    %131 = vector.shape_cast %130 : vector<1x8x8xf32> to vector<8x8xf32>
    %132 = arith.truncf %131 : vector<8x8xf32> to vector<8x8xbf16>
    %133 = arith.truncf %129 : vector<8x256xf32> to vector<8x256xbf16>
    %cst_79 = arith.constant dense<0.000000e+00> : vector<8x256xf32>
    %134 = tpu.matmul %132, %133, %cst_79 {dimension_numbers = #tpu.dot_dimension_numbers<[1], [0], [0], [1], [0, 0, 1, 1], [], []>} : vector<8x8xbf16>, vector<8x256xbf16>, vector<8x256xf32> -> vector<8x256xf32>
    %135 = arith.addf %128, %134 : vector<8x256xf32>
    %c0_80 = arith.constant 0 : index
    %c0_81 = arith.constant 0 : index
    %136 = vector.load %arg5[%c0_80, %c0_81] : memref<8x1xf32, #tpu.memory_space<vmem>>, vector<8x1xf32>
    %137 = vector.broadcast %136 : vector<8x1xf32> to vector<8x256xf32>
    %138 = arith.addf %135, %137 : vector<8x256xf32>
    %cst_82 = arith.constant 0.000000e+00 : f32
    %139 = vector.broadcast %cst_82 : f32 to vector<8x256xf32>
    %140 = arith.maximumf %138, %139 : vector<8x256xf32>
    %c255_i32_83 = arith.constant 255 : i32
    %141 = tpu.dynamic_rotate %140 by %c255_i32_83 dim 1 : vector<8x256xf32>, i32 -> vector<8x256xf32>
    %142 = arith.maximumf %140, %141 : vector<8x256xf32>
    %c240_i32_84 = arith.constant 240 : i32
    %143 = tpu.dynamic_rotate %140 by %c240_i32_84 dim 1 : vector<8x256xf32>, i32 -> vector<8x256xf32>
    %144 = arith.maximumf %142, %143 : vector<8x256xf32>
    %c239_i32_85 = arith.constant 239 : i32
    %145 = tpu.dynamic_rotate %140 by %c239_i32_85 dim 1 : vector<8x256xf32>, i32 -> vector<8x256xf32>
    %146 = arith.maximumf %144, %145 : vector<8x256xf32>
    %c0_86 = arith.constant 0 : index
    %c0_87 = arith.constant 0 : index
    %147 = vector.load %arg7[%c0_86, %c0_87] : memref<256x49xf32, #tpu.memory_space<vmem>>, vector<256x49xf32>
    %cst_88 = arith.constant dense<0.000000e+00> : vector<8x49xf32>
    %148 = tpu.matmul %146, %147, %cst_88 {dimension_numbers = #tpu.dot_dimension_numbers<[1], [0], [0], [1], [0, 0, 1, 1], [], []>} : vector<8x256xf32>, vector<256x49xf32>, vector<8x49xf32> -> vector<8x49xf32>
    %c0_89 = arith.constant 0 : index
    %c0_90 = arith.constant 0 : index
    %c0_91 = arith.constant 0 : index
    %149 = vector.load %arg8[%c0_89, %c0_90, %c0_91] : memref<1x8x49xf32, #tpu.memory_space<vmem>>, vector<1x8x49xf32>
    %150 = vector.shape_cast %149 : vector<1x8x49xf32> to vector<8x49xf32>
    %151 = vector.shape_cast %148 : vector<8x49xf32> to vector<1x8x49xf32>
    tpu.vector_store %arg8[%c0_89, %c0_90, %c0_91], %151 {strides = array<i32>} : memref<1x8x49xf32, #tpu.memory_space<vmem>>, vector<1x8x49xf32>,
    return
  }
  func.func @transform_0(%arg0: i32) -> (i32, i32, i32) {
    %c0_i32 = arith.constant 0 : i32
    %c0_i32_0 = arith.constant 0 : i32
    %c0_i32_1 = arith.constant 0 : i32
    return %arg0, %c0_i32, %c0_i32_0 : i32, i32, i32
  }
  func.func @transform_1(%arg0: i32) -> (i32, i32, i32) {
    %c0_i32 = arith.constant 0 : i32
    %c0_i32_0 = arith.constant 0 : i32
    %c0_i32_1 = arith.constant 0 : i32
    %c0_i32_2 = arith.constant 0 : i32
    return %c0_i32, %c0_i32_0, %c0_i32_1 : i32, i32, i32
  }
  func.func @transform_2(%arg0: i32) -> (i32, i32) {
    %c0_i32 = arith.constant 0 : i32
    %c0_i32_0 = arith.constant 0 : i32
    %c0_i32_1 = arith.constant 0 : i32
    return %c0_i32, %c0_i32_0 : i32, i32
  }
  func.func @transform_3(%arg0: i32) -> (i32, i32, i32) {
    %c0_i32 = arith.constant 0 : i32
    %c0_i32_0 = arith.constant 0 : i32
    %c0_i32_1 = arith.constant 0 : i32
    %c0_i32_2 = arith.constant 0 : i32
    return %c0_i32, %c0_i32_0, %c0_i32_1 : i32, i32, i32
  }
  func.func @transform_4(%arg0: i32) -> (i32, i32) {
    %c0_i32 = arith.constant 0 : i32
    %c0_i32_0 = arith.constant 0 : i32
    %c0_i32_1 = arith.constant 0 : i32
    return %c0_i32, %c0_i32_0 : i32, i32
  }
  func.func @transform_5(%arg0: i32) -> (i32, i32) {
    %c0_i32 = arith.constant 0 : i32
    %c0_i32_0 = arith.constant 0 : i32
    %c0_i32_1 = arith.constant 0 : i32
    return %c0_i32, %c0_i32_0 : i32, i32
  }
  func.func @transform_6(%arg0: i32) -> (i32, i32) {
    %c0_i32 = arith.constant 0 : i32
    %c0_i32_0 = arith.constant 0 : i32
    %c0_i32_1 = arith.constant 0 : i32
    return %c0_i32, %c0_i32_0 : i32, i32
  }
  func.func @transform_7(%arg0: i32) -> (i32, i32, i32) {
    %c0_i32 = arith.constant 0 : i32
    %c0_i32_0 = arith.constant 0 : i32
    %c0_i32_1 = arith.constant 0 : i32
    return %arg0, %c0_i32, %c0_i32_0 : i32, i32, i32
  }
}

module attributes {stable_mosaic.version = 11 : i64} {
  func.func @_linear_kernel(%arg0: i32, %arg1: memref<2x392xf32, #tpu.memory_space<vmem>>, %arg2: memref<392x128xf32, #tpu.memory_space<vmem>>, %arg3: memref<1x128xf32, #tpu.memory_space<vmem>>, %arg4: memref<2x128xf32, #tpu.memory_space<vmem>>) attributes {dimension_semantics = [#tpu.dimension_semantics<parallel>], iteration_bounds = array<i64: 1>, scalar_prefetch = 0 : i64, scratch_operands = 0 : i64, tpu.core_type = #tpu.core_type<tc>, window_params = [{transform_indices = @transform_0, window_bounds = array<i64: 2, 392>}, {pipeline_mode = #tpu.pipeline_mode<synchronous>, transform_indices = @transform_1, window_bounds = array<i64: 392, 128>}, {pipeline_mode = #tpu.pipeline_mode<synchronous>, transform_indices = @transform_2, window_bounds = array<i64: 1, 128>}, {transform_indices = @transform_3, window_bounds = array<i64: 2, 128>}]} {
    %c0 = arith.constant 0 : index
    %c0_0 = arith.constant 0 : index
    %0 = vector.load %arg1[%c0, %c0_0] : memref<2x392xf32, #tpu.memory_space<vmem>>, vector<2x392xf32>
    %1 = arith.truncf %0 : vector<2x392xf32> to vector<2x392xbf16>
    %c0_1 = arith.constant 0 : index
    %c0_2 = arith.constant 0 : index
    %2 = vector.load %arg2[%c0_1, %c0_2] : memref<392x128xf32, #tpu.memory_space<vmem>>, vector<392x128xf32>
    %3 = arith.truncf %2 : vector<392x128xf32> to vector<392x128xbf16>
    %cst = arith.constant dense<0.000000e+00> : vector<2x128xf32>
    %4 = tpu.matmul %1, %3, %cst {dimension_numbers = #tpu.dot_dimension_numbers<[1], [0], [0], [1], [0, 0, 1, 1], [], []>} : vector<2x392xbf16>, vector<392x128xbf16>, vector<2x128xf32> -> vector<2x128xf32>
    %c0_3 = arith.constant 0 : index
    %c0_4 = arith.constant 0 : index
    %5 = vector.load %arg3[%c0_3, %c0_4] : memref<1x128xf32, #tpu.memory_space<vmem>>, vector<1x128xf32>
    %6 = vector.broadcast %5 : vector<1x128xf32> to vector<2x128xf32>
    %7 = arith.addf %4, %6 : vector<2x128xf32>
    %c0_5 = arith.constant 0 : index
    %c0_6 = arith.constant 0 : index
    %8 = vector.load %arg4[%c0_5, %c0_6] : memref<2x128xf32, #tpu.memory_space<vmem>>, vector<2x128xf32>
    tpu.vector_store %arg4[%c0_5, %c0_6], %7 {strides = array<i32>} : memref<2x128xf32, #tpu.memory_space<vmem>>, vector<2x128xf32>,
    return
  }
  func.func @transform_0(%arg0: i32) -> (i32, i32) {
    %c0_i32 = arith.constant 0 : i32
    %c0_i32_0 = arith.constant 0 : i32
    return %arg0, %c0_i32 : i32, i32
  }
  func.func @transform_1(%arg0: i32) -> (i32, i32) {
    %c0_i32 = arith.constant 0 : i32
    %c0_i32_0 = arith.constant 0 : i32
    %c0_i32_1 = arith.constant 0 : i32
    return %c0_i32, %c0_i32_0 : i32, i32
  }
  func.func @transform_2(%arg0: i32) -> (i32, i32) {
    %c0_i32 = arith.constant 0 : i32
    %c0_i32_0 = arith.constant 0 : i32
    %c0_i32_1 = arith.constant 0 : i32
    return %c0_i32, %c0_i32_0 : i32, i32
  }
  func.func @transform_3(%arg0: i32) -> (i32, i32) {
    %c0_i32 = arith.constant 0 : i32
    %c0_i32_0 = arith.constant 0 : i32
    return %arg0, %c0_i32 : i32, i32
  }
}

</mosaic_0001>

<llo_original>
// kernel: fashion_mnist_model_v2.4
$region0: #{fashion_mnist_model_v2.4}
  #allocation0 [shape = 'u32[]', space=smem, size = 0x4, offset = 0x4, fixed_abs, tag = 'smem constant byte address 0x4 - core index']
  #allocation1 [shape = 'u32[144,128]{1,0:T(1,128)}', space=vmem, size = 0x12000, scoped, tag = 'internal scratch']
  %s0 = inlined_call_operand.vmem [shape: f32[2,8,256], index: 0, kind: input, shape index: {}]
  %s1 = inlined_call_operand.vmem [shape: f32[9,8,8], index: 1, kind: input, shape index: {}]
  %s2 = inlined_call_operand.vmem [shape: f32[8,1], index: 2, kind: input, shape index: {}]
  %s3 = inlined_call_operand.vmem [shape: f32[9,8,8], index: 3, kind: input, shape index: {}]
  %s4 = inlined_call_operand.vmem [shape: f32[8,1], index: 4, kind: input, shape index: {}]
  %s5 = inlined_call_operand.vmem [shape: f32[1,256], index: 5, kind: input, shape index: {}]
  %s6 = inlined_call_operand.vmem [shape: f32[256,49], index: 6, kind: input, shape index: {}]
  %s7 = inlined_call_operand.vmem [shape: f32[2,8,49], index: 7, kind: output, shape index: {}]
  %s8 = sld [smem:[#allocation0]]
  $region61: #{fashion_mnist_model_v2.4} parent=0
    _
  %s10 = ssub.s32 1, %s8
  %s11 = scalar_select 0, %s10, %s8
  loop: start=0, step=1, limit=4
  $region2: #{fashion_mnist_model_v2.4} parent=0 // loop_pre_header
    _
  $region3: #{fashion_mnist_model_v2.4} parent=0 // loop_header
    %s13 = sphi 0, %s17
    %p14 = scmp.ge.s32.totalorder %s13, 4
    %s23 = sphi 0, %s25
    %s26 = sphi 0, %s23
    %s27 = sphi 0, %s26
    %s43 = sphi 0, %s27
    %s47 = sphi 0, %s47
    %s49 = sphi 0, %s47
    %s50 = sphi 0, %s49
    %s64 = sphi 0, %s50
    %s68 = sphi 0, %s68
    %s70 = sphi 0, %s68
    %s71 = sphi 0, %s70
    %s85 = sphi 0, %s71
    %s89 = sphi 0, %s89
    %s91 = sphi 0, %s89
    %s92 = sphi 0, %s91
    %s106 = sphi 0, %s92
    %s110 = sphi 0, %s110
    %s112 = sphi 0, %s110
    %s113 = sphi 0, %s112
    %s127 = sphi 0, %s113
    %s131 = sphi 0, %s131
    %s133 = sphi 0, %s131
    %s134 = sphi 0, %s133
    %s148 = sphi 0, %s134
    %s152 = sphi 0, %s152
    %s154 = sphi 0, %s152
    %s155 = sphi 0, %s154
    %s169 = sphi 0, %s155
    %s175 = sphi 0, %s177
    %s178 = sphi 0, %s175
    %s179 = sphi 0, %s178
    %s195 = sphi 0, %s179
  $region4: #{fashion_mnist_model_v2.4} parent=0 // loop_header_branch
    %16 = sbr.rel (%p14) target = $region8
  $region5: #{fashion_mnist_model_v2.4} parent=0 // loop_body
    %s18 = ssub.s32 %s13, 1
    %s19 = ssub.s32 %s13, 2
    %s20 = sadd.s32 %s13, 1
    %s21 = ssub.s32 %s13, %s20
    %p22 = scmp.eq.s32.totalorder %s21, 0
    %s24 = sadd.s32 %s23, 1
    %s25 = scalar_select %p22, %s23, %s24
    %p28 = pneg %p22
    %p29 = scmp.eq.s32.totalorder %s13, 1
    %p30 = por %p28, %p29
    %p31 = scmp.ne.s32.totalorder %s23, %s26
    %p32 = scmp.eq.s32.totalorder %s13, 0
    %p33 = por %p31, %p32
    %p34 = scmp.ne.s32.totalorder %s23, %s26
    %p35 = scmp.eq.s32.totalorder %s18, 1
    %p36 = por %p34, %p35
    %p37 = scmp.ne.s32.totalorder %s26, %s27
    %p38 = scmp.eq.s32.totalorder %s18, 0
    %p39 = por %p37, %p38
    %p40 = scmp.ne.s32.totalorder %s26, %s27
    %p41 = scmp.eq.s32.totalorder %s19, 1
    %p42 = por %p40, %p41
    %p44 = scmp.ne.s32.totalorder %s27, %s43
    %p45 = scmp.eq.s32.totalorder %s19, 0
    %p46 = por %p44, %p45
    %s48 = sadd.s32 %s47, 1
    %p51 = scmp.eq.s32.totalorder %s13, 1
    %p52 = scmp.ne.s32.totalorder %s47, %s49
    %p53 = scmp.eq.s32.totalorder %s13, 0
    %p54 = por %p52, %p53
    %p55 = scmp.ne.s32.totalorder %s47, %s49
    %p56 = scmp.eq.s32.totalorder %s18, 1
    %p57 = por %p55, %p56
    %p58 = scmp.ne.s32.totalorder %s49, %s50
    %p59 = scmp.eq.s32.totalorder %s18, 0
    %p60 = por %p58, %p59
    %p61 = scmp.ne.s32.totalorder %s49, %s50
    %p62 = scmp.eq.s32.totalorder %s19, 1
    %p63 = por %p61, %p62
    %p65 = scmp.ne.s32.totalorder %s50, %s64
    %p66 = scmp.eq.s32.totalorder %s19, 0
    %p67 = por %p65, %p66
    %s69 = sadd.s32 %s68, 1
    %p72 = scmp.eq.s32.totalorder %s13, 1
    %p73 = scmp.ne.s32.totalorder %s68, %s70
    %p74 = scmp.eq.s32.totalorder %s13, 0
    %p75 = por %p73, %p74
    %p76 = scmp.ne.s32.totalorder %s68, %s70
    %p77 = scmp.eq.s32.totalorder %s18, 1
    %p78 = por %p76, %p77
    %p79 = scmp.ne.s32.totalorder %s70, %s71
    %p80 = scmp.eq.s32.totalorder %s18, 0
    %p81 = por %p79, %p80
    %p82 = scmp.ne.s32.totalorder %s70, %s71
    %p83 = scmp.eq.s32.totalorder %s19, 1
    %p84 = por %p82, %p83
    %p86 = scmp.ne.s32.totalorder %s71, %s85
    %p87 = scmp.eq.s32.totalorder %s19, 0
    %p88 = por %p86, %p87
    %s90 = sadd.s32 %s89, 1
    %p93 = scmp.eq.s32.totalorder %s13, 1
    %p94 = scmp.ne.s32.totalorder %s89, %s91
    %p95 = scmp.eq.s32.totalorder %s13, 0
    %p96 = por %p94, %p95
    %p97 = scmp.ne.s32.totalorder %s89, %s91
    %p98 = scmp.eq.s32.totalorder %s18, 1
    %p99 = por %p97, %p98
    %p100 = scmp.ne.s32.totalorder %s91, %s92
    %p101 = scmp.eq.s32.totalorder %s18, 0
    %p102 = por %p100, %p101
    %p103 = scmp.ne.s32.totalorder %s91, %s92
    %p104 = scmp.eq.s32.totalorder %s19, 1
    %p105 = por %p103, %p104
    %p107 = scmp.ne.s32.totalorder %s92, %s106
    %p108 = scmp.eq.s32.totalorder %s19, 0
    %p109 = por %p107, %p108
    %s111 = sadd.s32 %s110, 1
    %p114 = scmp.eq.s32.totalorder %s13, 1
    %p115 = scmp.ne.s32.totalorder %s110, %s112
    %p116 = scmp.eq.s32.totalorder %s13, 0
    %p117 = por %p115, %p116
    %p118 = scmp.ne.s32.totalorder %s110, %s112
    %p119 = scmp.eq.s32.totalorder %s18, 1
    %p120 = por %p118, %p119
    %p121 = scmp.ne.s32.totalorder %s112, %s113
    %p122 = scmp.eq.s32.totalorder %s18, 0
    %p123 = por %p121, %p122
    %p124 = scmp.ne.s32.totalorder %s112, %s113
    %p125 = scmp.eq.s32.totalorder %s19, 1
    %p126 = por %p124, %p125
    %p128 = scmp.ne.s32.totalorder %s113, %s127
    %p129 = scmp.eq.s32.totalorder %s19, 0
    %p130 = por %p128, %p129
    %s132 = sadd.s32 %s131, 1
    %p135 = scmp.eq.s32.totalorder %s13, 1
    %p136 = scmp.ne.s32.totalorder %s131, %s133
    %p137 = scmp.eq.s32.totalorder %s13, 0
    %p138 = por %p136, %p137
    %p139 = scmp.ne.s32.totalorder %s131, %s133
    %p140 = scmp.eq.s32.totalorder %s18, 1
    %p141 = por %p139, %p140
    %p142 = scmp.ne.s32.totalorder %s133, %s134
    %p143 = scmp.eq.s32.totalorder %s18, 0
    %p144 = por %p142, %p143
    %p145 = scmp.ne.s32.totalorder %s133, %s134
    %p146 = scmp.eq.s32.totalorder %s19, 1
    %p147 = por %p145, %p146
    %p149 = scmp.ne.s32.totalorder %s134, %s148
    %p150 = scmp.eq.s32.totalorder %s19, 0
    %p151 = por %p149, %p150
    %s153 = sadd.s32 %s152, 1
    %p156 = scmp.eq.s32.totalorder %s13, 1
    %p157 = scmp.ne.s32.totalorder %s152, %s154
    %p158 = scmp.eq.s32.totalorder %s13, 0
    %p159 = por %p157, %p158
    %p160 = scmp.ne.s32.totalorder %s152, %s154
    %p161 = scmp.eq.s32.totalorder %s18, 1
    %p162 = por %p160, %p161
    %p163 = scmp.ne.s32.totalorder %s154, %s155
    %p164 = scmp.eq.s32.totalorder %s18, 0
    %p165 = por %p163, %p164
    %p166 = scmp.ne.s32.totalorder %s154, %s155
    %p167 = scmp.eq.s32.totalorder %s19, 1
    %p168 = por %p166, %p167
    %p170 = scmp.ne.s32.totalorder %s155, %s169
    %p171 = scmp.eq.s32.totalorder %s19, 0
    %p172 = por %p170, %p171
    %s173 = ssub.s32 %s13, %s20
    %p174 = scmp.eq.s32.totalorder %s173, 0
    %s176 = sadd.s32 %s175, 1
    %s177 = scalar_select %p174, %s175, %s176
    %p180 = pneg %p174
    %p181 = scmp.eq.s32.totalorder %s13, 1
    %p182 = por %p180, %p181
    %p183 = scmp.ne.s32.totalorder %s175, %s178
    %p184 = scmp.eq.s32.totalorder %s13, 0
    %p185 = por %p183, %p184
    %p186 = scmp.ne.s32.totalorder %s175, %s178
    %p187 = scmp.eq.s32.totalorder %s18, 1
    %p188 = por %p186, %p187
    %p189 = scmp.ne.s32.totalorder %s178, %s179
    %p190 = scmp.eq.s32.totalorder %s18, 0
    %p191 = por %p189, %p190
    %p192 = scmp.ne.s32.totalorder %s178, %s179
    %p193 = scmp.eq.s32.totalorder %s19, 1
    %p194 = por %p192, %p193
    %p196 = scmp.ne.s32.totalorder %s179, %s195
    %p197 = scmp.eq.s32.totalorder %s19, 0
    %p198 = por %p196, %p197
    %p199 = scmp.le.s32.totalorder 1, %s13
    %p200 = scmp.lt.s32.totalorder %s13, 3
    %p201 = pnand %p199, %p200
    %p202 = pneg %p201
    // Predicated region
    $region9: #{fashion_mnist_model_v2.4} parent=5 // pred_check
      _
    $region10: #{fashion_mnist_model_v2.4} parent=5 // pred_check_branch
      %204 = sbr.rel (%p201) target = $region12
    $region11: #{fashion_mnist_model_v2.4} parent=5 // pred_region
      %s205 = ssub.s32 %s13, 1
      // Predicated region
      $region13: #{fashion_mnist_model_v2.4} parent=11 // pred_check
        %p206 = pneg %p60
      $region14: #{fashion_mnist_model_v2.4} parent=11 // pred_check_branch
        %208 = sbr.rel (%p206) target = $region16
      $region15: #{fashion_mnist_model_v2.4} parent=11 // pred_region
        _
      $region16: #{fashion_mnist_model_v2.4} parent=11 // pred_fallthru
        _
      // Predicated region
      $region17: #{fashion_mnist_model_v2.4} parent=11 // pred_check
        %p209 = pneg %p81
      $region18: #{fashion_mnist_model_v2.4} parent=11 // pred_check_branch
        %211 = sbr.rel (%p209) target = $region20
      $region19: #{fashion_mnist_model_v2.4} parent=11 // pred_region
        _
      $region20: #{fashion_mnist_model_v2.4} parent=11 // pred_fallthru
        _
      // Predicated region
      $region21: #{fashion_mnist_model_v2.4} parent=11 // pred_check
        %p212 = pneg %p102
      $region22: #{fashion_mnist_model_v2.4} parent=11 // pred_check_branch
        %214 = sbr.rel (%p212) target = $region24
      $region23: #{fashion_mnist_model_v2.4} parent=11 // pred_region
        _
      $region24: #{fashion_mnist_model_v2.4} parent=11 // pred_fallthru
        _
      // Predicated region
      $region25: #{fashion_mnist_model_v2.4} parent=11 // pred_check
        %p215 = pneg %p123
      $region26: #{fashion_mnist_model_v2.4} parent=11 // pred_check_branch
        %217 = sbr.rel (%p215) target = $region28
      $region27: #{fashion_mnist_model_v2.4} parent=11 // pred_region
        _
      $region28: #{fashion_mnist_model_v2.4} parent=11 // pred_fallthru
        _
      // Predicated region
      $region29: #{fashion_mnist_model_v2.4} parent=11 // pred_check
        %p218 = pneg %p144
      $region30: #{fashion_mnist_model_v2.4} parent=11 // pred_check_branch
        %220 = sbr.rel (%p218) target = $region32
      $region31: #{fashion_mnist_model_v2.4} parent=11 // pred_region
        _
      $region32: #{fashion_mnist_model_v2.4} parent=11 // pred_fallthru
        _
      // Predicated region
      $region33: #{fashion_mnist_model_v2.4} parent=11 // pred_check
        %p221 = pneg %p165
      $region34: #{fashion_mnist_model_v2.4} parent=11 // pred_check_branch
        %223 = sbr.rel (%p221) target = $region36
      $region35: #{fashion_mnist_model_v2.4} parent=11 // pred_region
        _
      $region36: #{fashion_mnist_model_v2.4} parent=11 // pred_fallthru
        _
    $region12: #{fashion_mnist_model_v2.4} parent=5 // pred_fallthru
      _
    %p224 = scmp.lt.s32.totalorder %s13, 2
    // Predicated region
    $region37: #{fashion_mnist_model_v2.4} parent=5 // pred_check
      %p225 = pneg %p224
    $region38: #{fashion_mnist_model_v2.4} parent=5 // pred_check_branch
      %227 = sbr.rel (%p225) target = $region40
    $region39: #{fashion_mnist_model_v2.4} parent=5 // pred_region
      // Predicated region
      $region41: #{fashion_mnist_model_v2.4} parent=39 // pred_check
        %p228 = pneg %p33
      $region42: #{fashion_mnist_model_v2.4} parent=39 // pred_check_branch
        %230 = sbr.rel (%p228) target = $region44
      $region43: #{fashion_mnist_model_v2.4} parent=39 // pred_region
        %p231 = scmp.lt.s32.totalorder %s13, 1
        %s232 = scalar_select %p231, %s13, 1
        %s233 = smul.addr %s232, 2
        %s234 = smul.addr %s233, 8
        %s235 = scalar_lea.vmem %s0, %s234
      $region44: #{fashion_mnist_model_v2.4} parent=39 // pred_fallthru
        _
    $region40: #{fashion_mnist_model_v2.4} parent=5 // pred_fallthru
      _
    %p236 = scmp.le.s32.totalorder 1, %s13
    %p237 = scmp.lt.s32.totalorder %s13, 3
    %p238 = pnand %p236, %p237
    %p239 = pneg %p238
    // Predicated region
    $region45: #{fashion_mnist_model_v2.4} parent=5 // pred_check
      _
    $region46: #{fashion_mnist_model_v2.4} parent=5 // pred_check_branch
      %241 = sbr.rel (%p238) target = $region48
    $region47: #{fashion_mnist_model_v2.4} parent=5 // pred_region
      %s242 = ssub.s32 %s13, 1
      %p243 = scmp.lt.s32.totalorder %s18, 1
      %s244 = scalar_select %p243, %s18, 1
      %s245 = smul.addr %s244, 2
      %s246 = smul.addr %s245, 8
      %s247 = scalar_lea.vmem %s0, %s246
      %p248 = pneg %p39
      %p249 = pneg %p36
      %p250 = pneg %p60
      %p251 = pneg %p57
      %p252 = pneg %p81
      %p253 = pneg %p78
      %p254 = pneg %p102
      %p255 = pneg %p99
      %p256 = pneg %p123
      %p257 = pneg %p120
      %p258 = pneg %p144
      %p259 = pneg %p141
      %p260 = pneg %p165
      %p261 = pneg %p162
      %p262 = pneg %p191
      %p263 = pneg %p188
      %p264 = scmp.lt.s32.totalorder %s18, 1
      %s265 = scalar_select %p264, %s18, 1
      %s266 = smul.addr %s265, 8
      %s267 = scalar_lea.vmem %s7, %s266
      %p268 = scmp.lt.s32.totalorder %s18, 1
      %s269 = scalar_select %p268, %s18, 1
      %s270 = smul.addr %s269, 2
      %s271 = smul.addr %s270, 8
      %s272 = scalar_lea.vmem %s0, %s271
      %p273 = scmp.lt.s32.totalorder %s18, 1
      %s274 = scalar_select %p273, %s18, 1
      %s275 = smul.addr %s274, 8
      %s276 = scalar_lea.vmem %s7, %s275
      %v278 = vld [vmem:[%s5] sm:$0x3]
      %v279 = vld [vmem:[%s272] sm:$0xff]
      %v280 = vld [vmem:[%s272 + $0x8] sm:$0xff]
      %281 = vrot.lane.b32.xlu0 %v279, 17
      %v282 = vpop.permute.xlu0 %281
      %283 = vrot.lane.b32.xlu0 %v280, 17
      %v284 = vpop.permute.xlu0 %283
      %v285 = vlaneseq
      %v286 = vand.u32 %v285, 127
      %vm287 = vcmp.lt.s32.totalorder %v286, 17
      %v288 = vsel %vm287, %v282, %v284
      %v289 = vsel %vm287, %v284, %v282
      %v290 = vld [vmem:[%s1] sm:$0xff]
      %v291 = vpack.c.bf16 %v290, %v290
      %v292 = vpack.c.bf16 %v289, %v289
      %v293 = vpack.c.bf16 %v288, %v288
      %294 = vrot.lane.b32.xlu0 %v279, 16
      %v295 = vpop.permute.xlu0 %294
      %296 = vrot.lane.b32.xlu0 %v280, 16
      %v297 = vpop.permute.xlu0 %296
      %vm298 = vcmp.lt.s32.totalorder %v286, 16
      %v299 = vsel %vm298, %v295, %v297
      %v300 = vsel %vm298, %v297, %v295
      %s301 = scalar_lea.vmem %s1, 8
      %v302 = vld [vmem:[%s301] sm:$0xff]
      %v303 = vpack.c.bf16 %v302, %v302
      %v304 = vpack.c.bf16 %v300, %v300
      %v305 = vpack.c.bf16 %v299, %v299
      %vm306 = vcmask 64512
      %v308 = vsel %vm306, %v303, 0
      %vm310 = vcmask 1043456
      %v312 = vsel %vm310, %v304, 0
      %v315 = vsel %vm310, %v305, 0
      %317 = vmatprep.subr.bf16.mxu0 %v315
      %318 = vmatpush1.bf16.msra.mxu0 %v312
      %319 = vmatprep.subr.bf16.mxu0 0
      %320 = vmatpush1.bf16.msra.mxu0 0
      %321 = vmatprep.subr.bf16.mxu0 0
      %322 = vmatpush1.bf16.msra.mxu0 0
      %323 = vmatprep.subr.bf16.mxu0 0
      %324 = vmatpush1.bf16.msra.mxu0 0
      %325 = vmatprep.subr.bf16.mxu0 0
      %326 = vmatpush1.bf16.msra.mxu0 0
      %327 = vmatprep.subr.bf16.mxu0 0
      %328 = vmatpush1.bf16.msra.mxu0 0
      %329 = vmatprep.subr.bf16.mxu0 0
      %330 = vmatpush1.bf16.msra.mxu0 0
      %331 = vmatprep.subr.bf16.mxu0 0
      %332 = vmatpush1.bf16.msra.mxu0 0
      %333 = vmatprep.subr.bf16.mxu0 0
      %334 = vmatpush1.bf16.msra.mxu0 0
      %335 = vmatprep.subr.bf16.mxu0 0
      %336 = vmatpush1.bf16.msra.mxu0 0
      %337 = vmatprep.subr.bf16.mxu0 0
      %338 = vmatpush1.bf16.msra.mxu0 0
      %339 = vmatprep.subr.bf16.mxu0 0
      %340 = vmatpush1.bf16.msra.mxu0 0
      %341 = vmatprep.subr.bf16.mxu0 0
      %342 = vmatpush1.bf16.msra.mxu0 0
      %343 = vmatprep.subr.bf16.mxu0 0
      %344 = vmatpush1.bf16.msra.mxu0 0
      %345 = vmatprep.subr.bf16.mxu0 0
      %346 = vmatpush1.bf16.msra.mxu0 0
      %347 = vmatprep.subr.bf16.mxu0 0
      %348 = vmatpush1.bf16.msra.mxu0 0
      %349 = vmatprep.mubr.bf16.mxu0 0
      %350 = vmatmul.mubr.bf16.gmra.mrb[0].mxu0 %v308
      %v351 = vpop.f32.mrb[0].mxu0
      %v352 = vadd.f32 0.0, %v351
      %v353 = vpop.f32.mrb[0].mxu0
      %v354 = vadd.f32 0.0, %v353
      %v355 = vpop.f32.mrb[0].mxu0
      %v356 = vpop.f32.mrb[0].mxu0
      %357 = vdwg.mxu0
      %v359 = vsel %vm306, %v291, 0
      %v362 = vsel %vm310, %v292, 0
      %v365 = vsel %vm310, %v293, 0
      %367 = vmatprep.subr.bf16.mxu0 %v365
      %368 = vmatpush1.bf16.msra.mxu0 %v362
      %369 = vmatprep.subr.bf16.mxu0 0
      %370 = vmatpush1.bf16.msra.mxu0 0
      %371 = vmatprep.subr.bf16.mxu0 0
      %372 = vmatpush1.bf16.msra.mxu0 0
      %373 = vmatprep.subr.bf16.mxu0 0
      %374 = vmatpush1.bf16.msra.mxu0 0
      %375 = vmatprep.subr.bf16.mxu0 0
      %376 = vmatpush1.bf16.msra.mxu0 0
      %377 = vmatprep.subr.bf16.mxu0 0
      %378 = vmatpush1.bf16.msra.mxu0 0
      %379 = vmatprep.subr.bf16.mxu0 0
      %380 = vmatpush1.bf16.msra.mxu0 0
      %381 = vmatprep.subr.bf16.mxu0 0
      %382 = vmatpush1.bf16.msra.mxu0 0
      %383 = vmatprep.subr.bf16.mxu0 0
      %384 = vmatpush1.bf16.msra.mxu0 0
      %385 = vmatprep.subr.bf16.mxu0 0
      %386 = vmatpush1.bf16.msra.mxu0 0
      %387 = vmatprep.subr.bf16.mxu0 0
      %388 = vmatpush1.bf16.msra.mxu0 0
      %389 = vmatprep.subr.bf16.mxu0 0
      %390 = vmatpush1.bf16.msra.mxu0 0
      %391 = vmatprep.subr.bf16.mxu0 0
      %392 = vmatpush1.bf16.msra.mxu0 0
      %393 = vmatprep.subr.bf16.mxu0 0
      %394 = vmatpush1.bf16.msra.mxu0 0
      %395 = vmatprep.subr.bf16.mxu0 0
      %396 = vmatpush1.bf16.msra.mxu0 0
      %397 = vmatprep.subr.bf16.mxu0 0
      %398 = vmatpush1.bf16.msra.mxu0 0
      %399 = vmatprep.mubr.bf16.mxu0 0
      %400 = vmatmul.mubr.bf16.gmra.mrb[0].mxu0 %v359
      %v401 = vpop.f32.mrb[0].mxu0
      %v402 = vadd.f32 %v352, %v401
      %v403 = vpop.f32.mrb[0].mxu0
      %v404 = vadd.f32 %v354, %v403
      %v405 = vpop.f32.mrb[0].mxu0
      %v406 = vpop.f32.mrb[0].mxu0
      %407 = vdwg.mxu0
      %408 = vrot.lane.b32.xlu0 %v279, 15
      %v409 = vpop.permute.xlu0 %408
      %410 = vrot.lane.b32.xlu0 %v280, 15
      %v411 = vpop.permute.xlu0 %410
      %vm412 = vcmp.lt.s32.totalorder %v286, 15
      %v413 = vsel %vm412, %v409, %v411
      %v414 = vsel %vm412, %v411, %v409
      %s415 = scalar_lea.vmem %s1, 16
      %v416 = vld [vmem:[%s415] sm:$0xff]
      %v417 = vpack.c.bf16 %v416, %v416
      %v418 = vpack.c.bf16 %v414, %v414
      %v419 = vpack.c.bf16 %v413, %v413
      %v421 = vsel %vm306, %v417, 0
      %v424 = vsel %vm310, %v418, 0
      %v427 = vsel %vm310, %v419, 0
      %429 = vmatprep.subr.bf16.mxu0 %v427
      %430 = vmatpush1.bf16.msra.mxu0 %v424
      %431 = vmatprep.subr.bf16.mxu0 0
      %432 = vmatpush1.bf16.msra.mxu0 0
      %433 = vmatprep.subr.bf16.mxu0 0
      %434 = vmatpush1.bf16.msra.mxu0 0
      %435 = vmatprep.subr.bf16.mxu0 0
      %436 = vmatpush1.bf16.msra.mxu0 0
      %437 = vmatprep.subr.bf16.mxu0 0
      %438 = vmatpush1.bf16.msra.mxu0 0
      %439 = vmatprep.subr.bf16.mxu0 0
      %440 = vmatpush1.bf16.msra.mxu0 0
      %441 = vmatprep.subr.bf16.mxu0 0
      %442 = vmatpush1.bf16.msra.mxu0 0
      %443 = vmatprep.subr.bf16.mxu0 0
      %444 = vmatpush1.bf16.msra.mxu0 0
      %445 = vmatprep.subr.bf16.mxu0 0
      %446 = vmatpush1.bf16.msra.mxu0 0
      %447 = vmatprep.subr.bf16.mxu0 0
      %448 = vmatpush1.bf16.msra.mxu0 0
      %449 = vmatprep.subr.bf16.mxu0 0
      %450 = vmatpush1.bf16.msra.mxu0 0
      %451 = vmatprep.subr.bf16.mxu0 0
      %452 = vmatpush1.bf16.msra.mxu0 0
      %453 = vmatprep.subr.bf16.mxu0 0
      %454 = vmatpush1.bf16.msra.mxu0 0
      %455 = vmatprep.subr.bf16.mxu0 0
      %456 = vmatpush1.bf16.msra.mxu0 0
      %457 = vmatprep.subr.bf16.mxu0 0
      %458 = vmatpush1.bf16.msra.mxu0 0
      %459 = vmatprep.subr.bf16.mxu0 0
      %460 = vmatpush1.bf16.msra.mxu0 0
      %461 = vmatprep.mubr.bf16.mxu0 0
      %462 = vmatmul.mubr.bf16.gmra.mrb[0].mxu0 %v421
      %v463 = vpop.f32.mrb[0].mxu0
      %v464 = vadd.f32 0.0, %v463
      %v465 = vpop.f32.mrb[0].mxu0
      %v466 = vadd.f32 0.0, %v465
      %v467 = vpop.f32.mrb[0].mxu0
      %v468 = vpop.f32.mrb[0].mxu0
      %469 = vdwg.mxu0
      %v470 = vadd.f32 %v402, %v464
      %v471 = vadd.f32 %v404, %v466
      %472 = vrot.lane.b32.xlu0 %v279, 1
      %v473 = vpop.permute.xlu0 %472
      %474 = vrot.lane.b32.xlu0 %v280, 1
      %v475 = vpop.permute.xlu0 %474
      %vm476 = vcmp.lt.s32.totalorder %v286, 1
      %v477 = vsel %vm476, %v473, %v475
      %v478 = vsel %vm476, %v475, %v473
      %s479 = scalar_lea.vmem %s1, 24
      %v480 = vld [vmem:[%s479] sm:$0xff]
      %v481 = vpack.c.bf16 %v480, %v480
      %v482 = vpack.c.bf16 %v478, %v478
      %v483 = vpack.c.bf16 %v477, %v477
      %v485 = vsel %vm306, %v481, 0
      %v488 = vsel %vm310, %v482, 0
      %v491 = vsel %vm310, %v483, 0
      %493 = vmatprep.subr.bf16.mxu0 %v491
      %494 = vmatpush1.bf16.msra.mxu0 %v488
      %495 = vmatprep.subr.bf16.mxu0 0
      %496 = vmatpush1.bf16.msra.mxu0 0
      %497 = vmatprep.subr.bf16.mxu0 0
      %498 = vmatpush1.bf16.msra.mxu0 0
      %499 = vmatprep.subr.bf16.mxu0 0
      %500 = vmatpush1.bf16.msra.mxu0 0
      %501 = vmatprep.subr.bf16.mxu0 0
      %502 = vmatpush1.bf16.msra.mxu0 0
      %503 = vmatprep.subr.bf16.mxu0 0
      %504 = vmatpush1.bf16.msra.mxu0 0
      %505 = vmatprep.subr.bf16.mxu0 0
      %506 = vmatpush1.bf16.msra.mxu0 0
      %507 = vmatprep.subr.bf16.mxu0 0
      %508 = vmatpush1.bf16.msra.mxu0 0
      %509 = vmatprep.subr.bf16.mxu0 0
      %510 = vmatpush1.bf16.msra.mxu0 0
      %511 = vmatprep.subr.bf16.mxu0 0
      %512 = vmatpush1.bf16.msra.mxu0 0
      %513 = vmatprep.subr.bf16.mxu0 0
      %514 = vmatpush1.bf16.msra.mxu0 0
      %515 = vmatprep.subr.bf16.mxu0 0
      %516 = vmatpush1.bf16.msra.mxu0 0
      %517 = vmatprep.subr.bf16.mxu0 0
      %518 = vmatpush1.bf16.msra.mxu0 0
      %519 = vmatprep.subr.bf16.mxu0 0
      %520 = vmatpush1.bf16.msra.mxu0 0
      %521 = vmatprep.subr.bf16.mxu0 0
      %522 = vmatpush1.bf16.msra.mxu0 0
      %523 = vmatprep.subr.bf16.mxu0 0
      %524 = vmatpush1.bf16.msra.mxu0 0
      %525 = vmatprep.mubr.bf16.mxu0 0
      %526 = vmatmul.mubr.bf16.gmra.mrb[0].mxu0 %v485
      %v527 = vpop.f32.mrb[0].mxu0
      %v528 = vadd.f32 0.0, %v527
      %v529 = vpop.f32.mrb[0].mxu0
      %v530 = vadd.f32 0.0, %v529
      %v531 = vpop.f32.mrb[0].mxu0
      %v532 = vpop.f32.mrb[0].mxu0
      %533 = vdwg.mxu0
      %v534 = vadd.f32 %v470, %v528
      %v535 = vadd.f32 %v471, %v530
      %s536 = scalar_lea.vmem %s1, 32
      %v537 = vld [vmem:[%s536] sm:$0xff]
      %v538 = vpack.c.bf16 %v537, %v537
      %v539 = vpack.c.bf16 %v279, %v279
      %v540 = vpack.c.bf16 %v280, %v280
      %v542 = vsel %vm306, %v538, 0
      %v545 = vsel %vm310, %v539, 0
      %v548 = vsel %vm310, %v540, 0
      %550 = vmatprep.subr.bf16.mxu0 %v548
      %551 = vmatpush1.bf16.msra.mxu0 %v545
      %552 = vmatprep.subr.bf16.mxu0 0
      %553 = vmatpush1.bf16.msra.mxu0 0
      %554 = vmatprep.subr.bf16.mxu0 0
      %555 = vmatpush1.bf16.msra.mxu0 0
      %556 = vmatprep.subr.bf16.mxu0 0
      %557 = vmatpush1.bf16.msra.mxu0 0
      %558 = vmatprep.subr.bf16.mxu0 0
      %559 = vmatpush1.bf16.msra.mxu0 0
      %560 = vmatprep.subr.bf16.mxu0 0
      %561 = vmatpush1.bf16.msra.mxu0 0
      %562 = vmatprep.subr.bf16.mxu0 0
      %563 = vmatpush1.bf16.msra.mxu0 0
      %564 = vmatprep.subr.bf16.mxu0 0
      %565 = vmatpush1.bf16.msra.mxu0 0
      %566 = vmatprep.subr.bf16.mxu0 0
      %567 = vmatpush1.bf16.msra.mxu0 0
      %568 = vmatprep.subr.bf16.mxu0 0
      %569 = vmatpush1.bf16.msra.mxu0 0
      %570 = vmatprep.subr.bf16.mxu0 0
      %571 = vmatpush1.bf16.msra.mxu0 0
      %572 = vmatprep.subr.bf16.mxu0 0
      %573 = vmatpush1.bf16.msra.mxu0 0
      %574 = vmatprep.subr.bf16.mxu0 0
      %575 = vmatpush1.bf16.msra.mxu0 0
      %576 = vmatprep.subr.bf16.mxu0 0
      %577 = vmatpush1.bf16.msra.mxu0 0
      %578 = vmatprep.subr.bf16.mxu0 0
      %579 = vmatpush1.bf16.msra.mxu0 0
      %580 = vmatprep.subr.bf16.mxu0 0
      %581 = vmatpush1.bf16.msra.mxu0 0
      %582 = vmatprep.mubr.bf16.mxu0 0
      %583 = vmatmul.mubr.bf16.gmra.mrb[0].mxu0 %v542
      %v584 = vpop.f32.mrb[0].mxu0
      %v585 = vadd.f32 0.0, %v584
      %v586 = vpop.f32.mrb[0].mxu0
      %v587 = vadd.f32 0.0, %v586
      %v588 = vpop.f32.mrb[0].mxu0
      %v589 = vpop.f32.mrb[0].mxu0
      %590 = vdwg.mxu0
      %v591 = vadd.f32 %v534, %v585
      %v592 = vadd.f32 %v535, %v587
      %593 = vrot.lane.b32.xlu0 %v279, 127
      %v594 = vpop.permute.xlu0 %593
      %595 = vrot.lane.b32.xlu0 %v280, 127
      %v596 = vpop.permute.xlu0 %595
      %vm597 = vcmp.lt.s32.totalorder %v286, 127
      %v598 = vsel %vm597, %v594, %v596
      %v599 = vsel %vm597, %v596, %v594
      %s600 = scalar_lea.vmem %s1, 40
      %v601 = vld [vmem:[%s600] sm:$0xff]
      %v602 = vpack.c.bf16 %v601, %v601
      %v603 = vpack.c.bf16 %v598, %v598
      %v604 = vpack.c.bf16 %v599, %v599
      %v606 = vsel %vm306, %v602, 0
      %v609 = vsel %vm310, %v603, 0
      %v612 = vsel %vm310, %v604, 0
      %614 = vmatprep.subr.bf16.mxu0 %v612
      %615 = vmatpush1.bf16.msra.mxu0 %v609
      %616 = vmatprep.subr.bf16.mxu0 0
      %617 = vmatpush1.bf16.msra.mxu0 0
      %618 = vmatprep.subr.bf16.mxu0 0
      %619 = vmatpush1.bf16.msra.mxu0 0
      %620 = vmatprep.subr.bf16.mxu0 0
      %621 = vmatpush1.bf16.msra.mxu0 0
      %622 = vmatprep.subr.bf16.mxu0 0
      %623 = vmatpush1.bf16.msra.mxu0 0
      %624 = vmatprep.subr.bf16.mxu0 0
      %625 = vmatpush1.bf16.msra.mxu0 0
      %626 = vmatprep.subr.bf16.mxu0 0
      %627 = vmatpush1.bf16.msra.mxu0 0
      %628 = vmatprep.subr.bf16.mxu0 0
      %629 = vmatpush1.bf16.msra.mxu0 0
      %630 = vmatprep.subr.bf16.mxu0 0
      %631 = vmatpush1.bf16.msra.mxu0 0
      %632 = vmatprep.subr.bf16.mxu0 0
      %633 = vmatpush1.bf16.msra.mxu0 0
      %634 = vmatprep.subr.bf16.mxu0 0
      %635 = vmatpush1.bf16.msra.mxu0 0
      %636 = vmatprep.subr.bf16.mxu0 0
      %637 = vmatpush1.bf16.msra.mxu0 0
      %638 = vmatprep.subr.bf16.mxu0 0
      %639 = vmatpush1.bf16.msra.mxu0 0
      %640 = vmatprep.subr.bf16.mxu0 0
      %641 = vmatpush1.bf16.msra.mxu0 0
      %642 = vmatprep.subr.bf16.mxu0 0
      %643 = vmatpush1.bf16.msra.mxu0 0
      %644 = vmatprep.subr.bf16.mxu0 0
      %645 = vmatpush1.bf16.msra.mxu0 0
      %646 = vmatprep.mubr.bf16.mxu0 0
      %647 = vmatmul.mubr.bf16.gmra.mrb[0].mxu0 %v606
      %v648 = vpop.f32.mrb[0].mxu0
      %v649 = vadd.f32 0.0, %v648
      %v650 = vpop.f32.mrb[0].mxu0
      %v651 = vadd.f32 0.0, %v650
      %v652 = vpop.f32.mrb[0].mxu0
      %v653 = vpop.f32.mrb[0].mxu0
      %654 = vdwg.mxu0
      %v655 = vadd.f32 %v591, %v649
      %v656 = vadd.f32 %v592, %v651
      %657 = vrot.lane.b32.xlu0 %v279, 113
      %v658 = vpop.permute.xlu0 %657
      %659 = vrot.lane.b32.xlu0 %v280, 113
      %v660 = vpop.permute.xlu0 %659
      %vm661 = vcmp.lt.s32.totalorder %v286, 113
      %v662 = vsel %vm661, %v658, %v660
      %v663 = vsel %vm661, %v660, %v658
      %s664 = scalar_lea.vmem %s1, 48
      %v665 = vld [vmem:[%s664] sm:$0xff]
      %v666 = vpack.c.bf16 %v665, %v665
      %v667 = vpack.c.bf16 %v662, %v662
      %v668 = vpack.c.bf16 %v663, %v663
      %v670 = vsel %vm306, %v666, 0
      %v673 = vsel %vm310, %v667, 0
      %v676 = vsel %vm310, %v668, 0
      %678 = vmatprep.subr.bf16.mxu0 %v676
      %679 = vmatpush1.bf16.msra.mxu0 %v673
      %680 = vmatprep.subr.bf16.mxu0 0
      %681 = vmatpush1.bf16.msra.mxu0 0
      %682 = vmatprep.subr.bf16.mxu0 0
      %683 = vmatpush1.bf16.msra.mxu0 0
      %684 = vmatprep.subr.bf16.mxu0 0
      %685 = vmatpush1.bf16.msra.mxu0 0
      %686 = vmatprep.subr.bf16.mxu0 0
      %687 = vmatpush1.bf16.msra.mxu0 0
      %688 = vmatprep.subr.bf16.mxu0 0
      %689 = vmatpush1.bf16.msra.mxu0 0
      %690 = vmatprep.subr.bf16.mxu0 0
      %691 = vmatpush1.bf16.msra.mxu0 0
      %692 = vmatprep.subr.bf16.mxu0 0
      %693 = vmatpush1.bf16.msra.mxu0 0
      %694 = vmatprep.subr.bf16.mxu0 0
      %695 = vmatpush1.bf16.msra.mxu0 0
      %696 = vmatprep.subr.bf16.mxu0 0
      %697 = vmatpush1.bf16.msra.mxu0 0
      %698 = vmatprep.subr.bf16.mxu0 0
      %699 = vmatpush1.bf16.msra.mxu0 0
      %700 = vmatprep.subr.bf16.mxu0 0
      %701 = vmatpush1.bf16.msra.mxu0 0
      %702 = vmatprep.subr.bf16.mxu0 0
      %703 = vmatpush1.bf16.msra.mxu0 0
      %704 = vmatprep.subr.bf16.mxu0 0
      %705 = vmatpush1.bf16.msra.mxu0 0
      %706 = vmatprep.subr.bf16.mxu0 0
      %707 = vmatpush1.bf16.msra.mxu0 0
      %708 = vmatprep.subr.bf16.mxu0 0
      %709 = vmatpush1.bf16.msra.mxu0 0
      %710 = vmatprep.mubr.bf16.mxu0 0
      %711 = vmatmul.mubr.bf16.gmra.mrb[0].mxu0 %v670
      %v712 = vpop.f32.mrb[0].mxu0
      %v713 = vadd.f32 0.0, %v712
      %v714 = vpop.f32.mrb[0].mxu0
      %v715 = vadd.f32 0.0, %v714
      %v716 = vpop.f32.mrb[0].mxu0
      %v717 = vpop.f32.mrb[0].mxu0
      %718 = vdwg.mxu0
      %v719 = vadd.f32 %v655, %v713
      %v720 = vadd.f32 %v656, %v715
      %721 = vrot.lane.b32.xlu0 %v279, 112
      %v722 = vpop.permute.xlu0 %721
      %723 = vrot.lane.b32.xlu0 %v280, 112
      %v724 = vpop.permute.xlu0 %723
      %vm725 = vcmp.lt.s32.totalorder %v286, 112
      %v726 = vsel %vm725, %v722, %v724
      %v727 = vsel %vm725, %v724, %v722
      %s728 = scalar_lea.vmem %s1, 56
      %v729 = vld [vmem:[%s728] sm:$0xff]
      %v730 = vpack.c.bf16 %v729, %v729
      %v731 = vpack.c.bf16 %v726, %v726
      %v732 = vpack.c.bf16 %v727, %v727
      %v734 = vsel %vm306, %v730, 0
      %v737 = vsel %vm310, %v731, 0
      %v740 = vsel %vm310, %v732, 0
      %742 = vmatprep.subr.bf16.mxu0 %v740
      %743 = vmatpush1.bf16.msra.mxu0 %v737
      %744 = vmatprep.subr.bf16.mxu0 0
      %745 = vmatpush1.bf16.msra.mxu0 0
      %746 = vmatprep.subr.bf16.mxu0 0
      %747 = vmatpush1.bf16.msra.mxu0 0
      %748 = vmatprep.subr.bf16.mxu0 0
      %749 = vmatpush1.bf16.msra.mxu0 0
      %750 = vmatprep.subr.bf16.mxu0 0
      %751 = vmatpush1.bf16.msra.mxu0 0
      %752 = vmatprep.subr.bf16.mxu0 0
      %753 = vmatpush1.bf16.msra.mxu0 0
      %754 = vmatprep.subr.bf16.mxu0 0
      %755 = vmatpush1.bf16.msra.mxu0 0
      %756 = vmatprep.subr.bf16.mxu0 0
      %757 = vmatpush1.bf16.msra.mxu0 0
      %758 = vmatprep.subr.bf16.mxu0 0
      %759 = vmatpush1.bf16.msra.mxu0 0
      %760 = vmatprep.subr.bf16.mxu0 0
      %761 = vmatpush1.bf16.msra.mxu0 0
      %762 = vmatprep.subr.bf16.mxu0 0
      %763 = vmatpush1.bf16.msra.mxu0 0
      %764 = vmatprep.subr.bf16.mxu0 0
      %765 = vmatpush1.bf16.msra.mxu0 0
      %766 = vmatprep.subr.bf16.mxu0 0
      %767 = vmatpush1.bf16.msra.mxu0 0
      %768 = vmatprep.subr.bf16.mxu0 0
      %769 = vmatpush1.bf16.msra.mxu0 0
      %770 = vmatprep.subr.bf16.mxu0 0
      %771 = vmatpush1.bf16.msra.mxu0 0
      %772 = vmatprep.subr.bf16.mxu0 0
      %773 = vmatpush1.bf16.msra.mxu0 0
      %774 = vmatprep.mubr.bf16.mxu0 0
      %775 = vmatmul.mubr.bf16.gmra.mrb[0].mxu0 %v734
      %v776 = vpop.f32.mrb[0].mxu0
      %v777 = vadd.f32 0.0, %v776
      %v778 = vpop.f32.mrb[0].mxu0
      %v779 = vadd.f32 0.0, %v778
      %v780 = vpop.f32.mrb[0].mxu0
      %v781 = vpop.f32.mrb[0].mxu0
      %782 = vdwg.mxu0
      %v783 = vadd.f32 %v719, %v777
      %v784 = vadd.f32 %v720, %v779
      %785 = vrot.lane.b32.xlu0 %v279, 111
      %v786 = vpop.permute.xlu0 %785
      %787 = vrot.lane.b32.xlu0 %v280, 111
      %v788 = vpop.permute.xlu0 %787
      %vm789 = vcmp.lt.s32.totalorder %v286, 111
      %v790 = vsel %vm789, %v786, %v788
      %v791 = vsel %vm789, %v788, %v786
      %s792 = scalar_lea.vmem %s1, 64
      %v793 = vld [vmem:[%s792] sm:$0xff]
      %v794 = vpack.c.bf16 %v793, %v793
      %v795 = vpack.c.bf16 %v790, %v790
      %v796 = vpack.c.bf16 %v791, %v791
      %v798 = vsel %vm306, %v794, 0
      %v801 = vsel %vm310, %v795, 0
      %v804 = vsel %vm310, %v796, 0
      %806 = vmatprep.subr.bf16.mxu0 %v804
      %807 = vmatpush1.bf16.msra.mxu0 %v801
      %808 = vmatprep.subr.bf16.mxu0 0
      %809 = vmatpush1.bf16.msra.mxu0 0
      %810 = vmatprep.subr.bf16.mxu0 0
      %811 = vmatpush1.bf16.msra.mxu0 0
      %812 = vmatprep.subr.bf16.mxu0 0
      %813 = vmatpush1.bf16.msra.mxu0 0
      %814 = vmatprep.subr.bf16.mxu0 0
      %815 = vmatpush1.bf16.msra.mxu0 0
      %816 = vmatprep.subr.bf16.mxu0 0
      %817 = vmatpush1.bf16.msra.mxu0 0
      %818 = vmatprep.subr.bf16.mxu0 0
      %819 = vmatpush1.bf16.msra.mxu0 0
      %820 = vmatprep.subr.bf16.mxu0 0
      %821 = vmatpush1.bf16.msra.mxu0 0
      %822 = vmatprep.subr.bf16.mxu0 0
      %823 = vmatpush1.bf16.msra.mxu0 0
      %824 = vmatprep.subr.bf16.mxu0 0
      %825 = vmatpush1.bf16.msra.mxu0 0
      %826 = vmatprep.subr.bf16.mxu0 0
      %827 = vmatpush1.bf16.msra.mxu0 0
      %828 = vmatprep.subr.bf16.mxu0 0
      %829 = vmatpush1.bf16.msra.mxu0 0
      %830 = vmatprep.subr.bf16.mxu0 0
      %831 = vmatpush1.bf16.msra.mxu0 0
      %832 = vmatprep.subr.bf16.mxu0 0
      %833 = vmatpush1.bf16.msra.mxu0 0
      %834 = vmatprep.subr.bf16.mxu0 0
      %835 = vmatpush1.bf16.msra.mxu0 0
      %836 = vmatprep.subr.bf16.mxu0 0
      %837 = vmatpush1.bf16.msra.mxu0 0
      %838 = vmatprep.mubr.bf16.mxu0 0
      %839 = vmatmul.mubr.bf16.gmra.mrb[0].mxu0 %v798
      %v840 = vpop.f32.mrb[0].mxu0
      %v841 = vadd.f32 0.0, %v840
      %v842 = vpop.f32.mrb[0].mxu0
      %v843 = vadd.f32 0.0, %v842
      %v844 = vpop.f32.mrb[0].mxu0
      %v845 = vpop.f32.mrb[0].mxu0
      %846 = vdwg.mxu0
      %v847 = vadd.f32 %v783, %v841
      %v848 = vadd.f32 %v784, %v843
      %v849 = vld [vmem:[%s2] sm:$0xff]
      %851 = vset.pattern.permute.xlu0 0
      %852 = vperm.xlu0 %851, %v849
      %v853 = vpop.permute.xlu0 %852
      %v855 = vadd.f32 %v847, %v853
      %v856 = vadd.f32 %v848, %v853
      %v857 = vmax.f32 %v855, 0.0
      %v858 = vmax.f32 %v856, 0.0
      %v860 = vlaneseq
      %v861 = vshrl.u32 %v860, 7
      %v862 = vsub.s32 0, %v861
      %v863 = vrot.slane %v278, %v862
      %v864 = vlaneseq
      %v865 = vshrl.u32 %v864, 7
      %v866 = vsub.s32 1, %v865
      %v867 = vrot.slane %v278, %v866
      %v870 = vmul.f32 %v857, %v863
      %v871 = vmul.f32 %v858, %v867
      %872 = vrot.lane.b32.xlu0 %v870, 17
      %v873 = vpop.permute.xlu0 %872
      %874 = vrot.lane.b32.xlu0 %v871, 17
      %v875 = vpop.permute.xlu0 %874
      %v876 = vsel %vm287, %v873, %v875
      %v877 = vsel %vm287, %v875, %v873
      %v878 = vld [vmem:[%s3] sm:$0xff]
      %v879 = vpack.c.bf16 %v878, %v878
      %v880 = vpack.c.bf16 %v877, %v877
      %v881 = vpack.c.bf16 %v876, %v876
      %882 = vrot.lane.b32.xlu0 %v870, 16
      %v883 = vpop.permute.xlu0 %882
      %884 = vrot.lane.b32.xlu0 %v871, 16
      %v885 = vpop.permute.xlu0 %884
      %v886 = vsel %vm298, %v883, %v885
      %v887 = vsel %vm298, %v885, %v883
      %s888 = scalar_lea.vmem %s3, 8
      %v889 = vld [vmem:[%s888] sm:$0xff]
      %v890 = vpack.c.bf16 %v889, %v889
      %v891 = vpack.c.bf16 %v887, %v887
      %v892 = vpack.c.bf16 %v886, %v886
      %v894 = vsel %vm306, %v890, 0
      %v897 = vsel %vm310, %v891, 0
      %v900 = vsel %vm310, %v892, 0
      %902 = vmatprep.subr.bf16.mxu0 %v900
      %903 = vmatpush1.bf16.msra.mxu0 %v897
      %904 = vmatprep.subr.bf16.mxu0 0
      %905 = vmatpush1.bf16.msra.mxu0 0
      %906 = vmatprep.subr.bf16.mxu0 0
      %907 = vmatpush1.bf16.msra.mxu0 0
      %908 = vmatprep.subr.bf16.mxu0 0
      %909 = vmatpush1.bf16.msra.mxu0 0
      %910 = vmatprep.subr.bf16.mxu0 0
      %911 = vmatpush1.bf16.msra.mxu0 0
      %912 = vmatprep.subr.bf16.mxu0 0
      %913 = vmatpush1.bf16.msra.mxu0 0
      %914 = vmatprep.subr.bf16.mxu0 0
      %915 = vmatpush1.bf16.msra.mxu0 0
      %916 = vmatprep.subr.bf16.mxu0 0
      %917 = vmatpush1.bf16.msra.mxu0 0
      %918 = vmatprep.subr.bf16.mxu0 0
      %919 = vmatpush1.bf16.msra.mxu0 0
      %920 = vmatprep.subr.bf16.mxu0 0
      %921 = vmatpush1.bf16.msra.mxu0 0
      %922 = vmatprep.subr.bf16.mxu0 0
      %923 = vmatpush1.bf16.msra.mxu0 0
      %924 = vmatprep.subr.bf16.mxu0 0
      %925 = vmatpush1.bf16.msra.mxu0 0
      %926 = vmatprep.subr.bf16.mxu0 0
      %927 = vmatpush1.bf16.msra.mxu0 0
      %928 = vmatprep.subr.bf16.mxu0 0
      %929 = vmatpush1.bf16.msra.mxu0 0
      %930 = vmatprep.subr.bf16.mxu0 0
      %931 = vmatpush1.bf16.msra.mxu0 0
      %932 = vmatprep.subr.bf16.mxu0 0
      %933 = vmatpush1.bf16.msra.mxu0 0
      %934 = vmatprep.mubr.bf16.mxu0 0
      %935 = vmatmul.mubr.bf16.gmra.mrb[0].mxu0 %v894
      %v936 = vpop.f32.mrb[0].mxu0
      %v937 = vadd.f32 0.0, %v936
      %v938 = vpop.f32.mrb[0].mxu0
      %v939 = vadd.f32 0.0, %v938
      %v940 = vpop.f32.mrb[0].mxu0
      %v941 = vpop.f32.mrb[0].mxu0
      %942 = vdwg.mxu0
      %v944 = vsel %vm306, %v879, 0
      %v947 = vsel %vm310, %v880, 0
      %v950 = vsel %vm310, %v881, 0
      %952 = vmatprep.subr.bf16.mxu0 %v950
      %953 = vmatpush1.bf16.msra.mxu0 %v947
      %954 = vmatprep.subr.bf16.mxu0 0
      %955 = vmatpush1.bf16.msra.mxu0 0
      %956 = vmatprep.subr.bf16.mxu0 0
      %957 = vmatpush1.bf16.msra.mxu0 0
      %958 = vmatprep.subr.bf16.mxu0 0
      %959 = vmatpush1.bf16.msra.mxu0 0
      %960 = vmatprep.subr.bf16.mxu0 0
      %961 = vmatpush1.bf16.msra.mxu0 0
      %962 = vmatprep.subr.bf16.mxu0 0
      %963 = vmatpush1.bf16.msra.mxu0 0
      %964 = vmatprep.subr.bf16.mxu0 0
      %965 = vmatpush1.bf16.msra.mxu0 0
      %966 = vmatprep.subr.bf16.mxu0 0
      %967 = vmatpush1.bf16.msra.mxu0 0
      %968 = vmatprep.subr.bf16.mxu0 0
      %969 = vmatpush1.bf16.msra.mxu0 0
      %970 = vmatprep.subr.bf16.mxu0 0
      %971 = vmatpush1.bf16.msra.mxu0 0
      %972 = vmatprep.subr.bf16.mxu0 0
      %973 = vmatpush1.bf16.msra.mxu0 0
      %974 = vmatprep.subr.bf16.mxu0 0
      %975 = vmatpush1.bf16.msra.mxu0 0
      %976 = vmatprep.subr.bf16.mxu0 0
      %977 = vmatpush1.bf16.msra.mxu0 0
      %978 = vmatprep.subr.bf16.mxu0 0
      %979 = vmatpush1.bf16.msra.mxu0 0
      %980 = vmatprep.subr.bf16.mxu0 0
      %981 = vmatpush1.bf16.msra.mxu0 0
      %982 = vmatprep.subr.bf16.mxu0 0
      %983 = vmatpush1.bf16.msra.mxu0 0
      %984 = vmatprep.mubr.bf16.mxu0 0
      %985 = vmatmul.mubr.bf16.gmra.mrb[0].mxu0 %v944
      %v986 = vpop.f32.mrb[0].mxu0
      %v987 = vadd.f32 %v937, %v986
      %v988 = vpop.f32.mrb[0].mxu0
      %v989 = vadd.f32 %v939, %v988
      %v990 = vpop.f32.mrb[0].mxu0
      %v991 = vpop.f32.mrb[0].mxu0
      %992 = vdwg.mxu0
      %993 = vrot.lane.b32.xlu0 %v870, 15
      %v994 = vpop.permute.xlu0 %993
      %995 = vrot.lane.b32.xlu0 %v871, 15
      %v996 = vpop.permute.xlu0 %995
      %v997 = vsel %vm412, %v994, %v996
      %v998 = vsel %vm412, %v996, %v994
      %s999 = scalar_lea.vmem %s3, 16
      %v1000 = vld [vmem:[%s999] sm:$0xff]
      %v1001 = vpack.c.bf16 %v1000, %v1000
      %v1002 = vpack.c.bf16 %v998, %v998
      %v1003 = vpack.c.bf16 %v997, %v997
      %v1005 = vsel %vm306, %v1001, 0
      %v1008 = vsel %vm310, %v1002, 0
      %v1011 = vsel %vm310, %v1003, 0
      %1013 = vmatprep.subr.bf16.mxu0 %v1011
      %1014 = vmatpush1.bf16.msra.mxu0 %v1008
      %1015 = vmatprep.subr.bf16.mxu0 0
      %1016 = vmatpush1.bf16.msra.mxu0 0
      %1017 = vmatprep.subr.bf16.mxu0 0
      %1018 = vmatpush1.bf16.msra.mxu0 0
      %1019 = vmatprep.subr.bf16.mxu0 0
      %1020 = vmatpush1.bf16.msra.mxu0 0
      %1021 = vmatprep.subr.bf16.mxu0 0
      %1022 = vmatpush1.bf16.msra.mxu0 0
      %1023 = vmatprep.subr.bf16.mxu0 0
      %1024 = vmatpush1.bf16.msra.mxu0 0
      %1025 = vmatprep.subr.bf16.mxu0 0
      %1026 = vmatpush1.bf16.msra.mxu0 0
      %1027 = vmatprep.subr.bf16.mxu0 0
      %1028 = vmatpush1.bf16.msra.mxu0 0
      %1029 = vmatprep.subr.bf16.mxu0 0
      %1030 = vmatpush1.bf16.msra.mxu0 0
      %1031 = vmatprep.subr.bf16.mxu0 0
      %1032 = vmatpush1.bf16.msra.mxu0 0
      %1033 = vmatprep.subr.bf16.mxu0 0
      %1034 = vmatpush1.bf16.msra.mxu0 0
      %1035 = vmatprep.subr.bf16.mxu0 0
      %1036 = vmatpush1.bf16.msra.mxu0 0
      %1037 = vmatprep.subr.bf16.mxu0 0
      %1038 = vmatpush1.bf16.msra.mxu0 0
      %1039 = vmatprep.subr.bf16.mxu0 0
      %1040 = vmatpush1.bf16.msra.mxu0 0
      %1041 = vmatprep.subr.bf16.mxu0 0
      %1042 = vmatpush1.bf16.msra.mxu0 0
      %1043 = vmatprep.subr.bf16.mxu0 0
      %1044 = vmatpush1.bf16.msra.mxu0 0
      %1045 = vmatprep.mubr.bf16.mxu0 0
      %1046 = vmatmul.mubr.bf16.gmra.mrb[0].mxu0 %v1005
      %v1047 = vpop.f32.mrb[0].mxu0
      %v1048 = vadd.f32 0.0, %v1047
      %v1049 = vpop.f32.mrb[0].mxu0
      %v1050 = vadd.f32 0.0, %v1049
      %v1051 = vpop.f32.mrb[0].mxu0
      %v1052 = vpop.f32.mrb[0].mxu0
      %1053 = vdwg.mxu0
      %v1054 = vadd.f32 %v987, %v1048
      %v1055 = vadd.f32 %v989, %v1050
      %1056 = vrot.lane.b32.xlu0 %v870, 1
      %v1057 = vpop.permute.xlu0 %1056
      %1058 = vrot.lane.b32.xlu0 %v871, 1
      %v1059 = vpop.permute.xlu0 %1058
      %v1060 = vsel %vm476, %v1057, %v1059
      %v1061 = vsel %vm476, %v1059, %v1057
      %s1062 = scalar_lea.vmem %s3, 24
      %v1063 = vld [vmem:[%s1062] sm:$0xff]
      %v1064 = vpack.c.bf16 %v1063, %v1063
      %v1065 = vpack.c.bf16 %v1061, %v1061
      %v1066 = vpack.c.bf16 %v1060, %v1060
      %v1068 = vsel %vm306, %v1064, 0
      %v1071 = vsel %vm310, %v1065, 0
      %v1074 = vsel %vm310, %v1066, 0
      %1076 = vmatprep.subr.bf16.mxu0 %v1074
      %1077 = vmatpush1.bf16.msra.mxu0 %v1071
      %1078 = vmatprep.subr.bf16.mxu0 0
      %1079 = vmatpush1.bf16.msra.mxu0 0
      %1080 = vmatprep.subr.bf16.mxu0 0
      %1081 = vmatpush1.bf16.msra.mxu0 0
      %1082 = vmatprep.subr.bf16.mxu0 0
      %1083 = vmatpush1.bf16.msra.mxu0 0
      %1084 = vmatprep.subr.bf16.mxu0 0
      %1085 = vmatpush1.bf16.msra.mxu0 0
      %1086 = vmatprep.subr.bf16.mxu0 0
      %1087 = vmatpush1.bf16.msra.mxu0 0
      %1088 = vmatprep.subr.bf16.mxu0 0
      %1089 = vmatpush1.bf16.msra.mxu0 0
      %1090 = vmatprep.subr.bf16.mxu0 0
      %1091 = vmatpush1.bf16.msra.mxu0 0
      %1092 = vmatprep.subr.bf16.mxu0 0
      %1093 = vmatpush1.bf16.msra.mxu0 0
      %1094 = vmatprep.subr.bf16.mxu0 0
      %1095 = vmatpush1.bf16.msra.mxu0 0
      %1096 = vmatprep.subr.bf16.mxu0 0
      %1097 = vmatpush1.bf16.msra.mxu0 0
      %1098 = vmatprep.subr.bf16.mxu0 0
      %1099 = vmatpush1.bf16.msra.mxu0 0
      %1100 = vmatprep.subr.bf16.mxu0 0
      %1101 = vmatpush1.bf16.msra.mxu0 0
      %1102 = vmatprep.subr.bf16.mxu0 0
      %1103 = vmatpush1.bf16.msra.mxu0 0
      %1104 = vmatprep.subr.bf16.mxu0 0
      %1105 = vmatpush1.bf16.msra.mxu0 0
      %1106 = vmatprep.subr.bf16.mxu0 0
      %1107 = vmatpush1.bf16.msra.mxu0 0
      %1108 = vmatprep.mubr.bf16.mxu0 0
      %1109 = vmatmul.mubr.bf16.gmra.mrb[0].mxu0 %v1068
      %v1110 = vpop.f32.mrb[0].mxu0
      %v1111 = vadd.f32 0.0, %v1110
      %v1112 = vpop.f32.mrb[0].mxu0
      %v1113 = vadd.f32 0.0, %v1112
      %v1114 = vpop.f32.mrb[0].mxu0
      %v1115 = vpop.f32.mrb[0].mxu0
      %1116 = vdwg.mxu0
      %v1117 = vadd.f32 %v1054, %v1111
      %v1118 = vadd.f32 %v1055, %v1113
      %s1119 = scalar_lea.vmem %s3, 32
      %v1120 = vld [vmem:[%s1119] sm:$0xff]
      %v1121 = vpack.c.bf16 %v1120, %v1120
      %v1122 = vpack.c.bf16 %v870, %v870
      %v1123 = vpack.c.bf16 %v871, %v871
      %v1125 = vsel %vm306, %v1121, 0
      %v1128 = vsel %vm310, %v1122, 0
      %v1131 = vsel %vm310, %v1123, 0
      %1133 = vmatprep.subr.bf16.mxu0 %v1131
      %1134 = vmatpush1.bf16.msra.mxu0 %v1128
      %1135 = vmatprep.subr.bf16.mxu0 0
      %1136 = vmatpush1.bf16.msra.mxu0 0
      %1137 = vmatprep.subr.bf16.mxu0 0
      %1138 = vmatpush1.bf16.msra.mxu0 0
      %1139 = vmatprep.subr.bf16.mxu0 0
      %1140 = vmatpush1.bf16.msra.mxu0 0
      %1141 = vmatprep.subr.bf16.mxu0 0
      %1142 = vmatpush1.bf16.msra.mxu0 0
      %1143 = vmatprep.subr.bf16.mxu0 0
      %1144 = vmatpush1.bf16.msra.mxu0 0
      %1145 = vmatprep.subr.bf16.mxu0 0
      %1146 = vmatpush1.bf16.msra.mxu0 0
      %1147 = vmatprep.subr.bf16.mxu0 0
      %1148 = vmatpush1.bf16.msra.mxu0 0
      %1149 = vmatprep.subr.bf16.mxu0 0
      %1150 = vmatpush1.bf16.msra.mxu0 0
      %1151 = vmatprep.subr.bf16.mxu0 0
      %1152 = vmatpush1.bf16.msra.mxu0 0
      %1153 = vmatprep.subr.bf16.mxu0 0
      %1154 = vmatpush1.bf16.msra.mxu0 0
      %1155 = vmatprep.subr.bf16.mxu0 0
      %1156 = vmatpush1.bf16.msra.mxu0 0
      %1157 = vmatprep.subr.bf16.mxu0 0
      %1158 = vmatpush1.bf16.msra.mxu0 0
      %1159 = vmatprep.subr.bf16.mxu0 0
      %1160 = vmatpush1.bf16.msra.mxu0 0
      %1161 = vmatprep.subr.bf16.mxu0 0
      %1162 = vmatpush1.bf16.msra.mxu0 0
      %1163 = vmatprep.subr.bf16.mxu0 0
      %1164 = vmatpush1.bf16.msra.mxu0 0
      %1165 = vmatprep.mubr.bf16.mxu0 0
      %1166 = vmatmul.mubr.bf16.gmra.mrb[0].mxu0 %v1125
      %v1167 = vpop.f32.mrb[0].mxu0
      %v1168 = vadd.f32 0.0, %v1167
      %v1169 = vpop.f32.mrb[0].mxu0
      %v1170 = vadd.f32 0.0, %v1169
      %v1171 = vpop.f32.mrb[0].mxu0
      %v1172 = vpop.f32.mrb[0].mxu0
      %1173 = vdwg.mxu0
      %v1174 = vadd.f32 %v1117, %v1168
      %v1175 = vadd.f32 %v1118, %v1170
      %1176 = vrot.lane.b32.xlu0 %v870, 127
      %v1177 = vpop.permute.xlu0 %1176
      %1178 = vrot.lane.b32.xlu0 %v871, 127
      %v1179 = vpop.permute.xlu0 %1178
      %v1180 = vsel %vm597, %v1177, %v1179
      %v1181 = vsel %vm597, %v1179, %v1177
      %s1182 = scalar_lea.vmem %s3, 40
      %v1183 = vld [vmem:[%s1182] sm:$0xff]
      %v1184 = vpack.c.bf16 %v1183, %v1183
      %v1185 = vpack.c.bf16 %v1180, %v1180
      %v1186 = vpack.c.bf16 %v1181, %v1181
      %v1188 = vsel %vm306, %v1184, 0
      %v1191 = vsel %vm310, %v1185, 0
      %v1194 = vsel %vm310, %v1186, 0
      %1196 = vmatprep.subr.bf16.mxu0 %v1194
      %1197 = vmatpush1.bf16.msra.mxu0 %v1191
      %1198 = vmatprep.subr.bf16.mxu0 0
      %1199 = vmatpush1.bf16.msra.mxu0 0
      %1200 = vmatprep.subr.bf16.mxu0 0
      %1201 = vmatpush1.bf16.msra.mxu0 0
      %1202 = vmatprep.subr.bf16.mxu0 0
      %1203 = vmatpush1.bf16.msra.mxu0 0
      %1204 = vmatprep.subr.bf16.mxu0 0
      %1205 = vmatpush1.bf16.msra.mxu0 0
      %1206 = vmatprep.subr.bf16.mxu0 0
      %1207 = vmatpush1.bf16.msra.mxu0 0
      %1208 = vmatprep.subr.bf16.mxu0 0
      %1209 = vmatpush1.bf16.msra.mxu0 0
      %1210 = vmatprep.subr.bf16.mxu0 0
      %1211 = vmatpush1.bf16.msra.mxu0 0
      %1212 = vmatprep.subr.bf16.mxu0 0
      %1213 = vmatpush1.bf16.msra.mxu0 0
      %1214 = vmatprep.subr.bf16.mxu0 0
      %1215 = vmatpush1.bf16.msra.mxu0 0
      %1216 = vmatprep.subr.bf16.mxu0 0
      %1217 = vmatpush1.bf16.msra.mxu0 0
      %1218 = vmatprep.subr.bf16.mxu0 0
      %1219 = vmatpush1.bf16.msra.mxu0 0
      %1220 = vmatprep.subr.bf16.mxu0 0
      %1221 = vmatpush1.bf16.msra.mxu0 0
      %1222 = vmatprep.subr.bf16.mxu0 0
      %1223 = vmatpush1.bf16.msra.mxu0 0
      %1224 = vmatprep.subr.bf16.mxu0 0
      %1225 = vmatpush1.bf16.msra.mxu0 0
      %1226 = vmatprep.subr.bf16.mxu0 0
      %1227 = vmatpush1.bf16.msra.mxu0 0
      %1228 = vmatprep.mubr.bf16.mxu0 0
      %1229 = vmatmul.mubr.bf16.gmra.mrb[0].mxu0 %v1188
      %v1230 = vpop.f32.mrb[0].mxu0
      %v1231 = vadd.f32 0.0, %v1230
      %v1232 = vpop.f32.mrb[0].mxu0
      %v1233 = vadd.f32 0.0, %v1232
      %v1234 = vpop.f32.mrb[0].mxu0
      %v1235 = vpop.f32.mrb[0].mxu0
      %1236 = vdwg.mxu0
      %v1237 = vadd.f32 %v1174, %v1231
      %v1238 = vadd.f32 %v1175, %v1233
      %1239 = vrot.lane.b32.xlu0 %v870, 113
      %v1240 = vpop.permute.xlu0 %1239
      %1241 = vrot.lane.b32.xlu0 %v871, 113
      %v1242 = vpop.permute.xlu0 %1241
      %v1243 = vsel %vm661, %v1240, %v1242
      %v1244 = vsel %vm661, %v1242, %v1240
      %s1245 = scalar_lea.vmem %s3, 48
      %v1246 = vld [vmem:[%s1245] sm:$0xff]
      %v1247 = vpack.c.bf16 %v1246, %v1246
      %v1248 = vpack.c.bf16 %v1243, %v1243
      %v1249 = vpack.c.bf16 %v1244, %v1244
      %v1251 = vsel %vm306, %v1247, 0
      %v1254 = vsel %vm310, %v1248, 0
      %v1257 = vsel %vm310, %v1249, 0
      %1259 = vmatprep.subr.bf16.mxu0 %v1257
      %1260 = vmatpush1.bf16.msra.mxu0 %v1254
      %1261 = vmatprep.subr.bf16.mxu0 0
      %1262 = vmatpush1.bf16.msra.mxu0 0
      %1263 = vmatprep.subr.bf16.mxu0 0
      %1264 = vmatpush1.bf16.msra.mxu0 0
      %1265 = vmatprep.subr.bf16.mxu0 0
      %1266 = vmatpush1.bf16.msra.mxu0 0
      %1267 = vmatprep.subr.bf16.mxu0 0
      %1268 = vmatpush1.bf16.msra.mxu0 0
      %1269 = vmatprep.subr.bf16.mxu0 0
      %1270 = vmatpush1.bf16.msra.mxu0 0
      %1271 = vmatprep.subr.bf16.mxu0 0
      %1272 = vmatpush1.bf16.msra.mxu0 0
      %1273 = vmatprep.subr.bf16.mxu0 0
      %1274 = vmatpush1.bf16.msra.mxu0 0
      %1275 = vmatprep.subr.bf16.mxu0 0
      %1276 = vmatpush1.bf16.msra.mxu0 0
      %1277 = vmatprep.subr.bf16.mxu0 0
      %1278 = vmatpush1.bf16.msra.mxu0 0
      %1279 = vmatprep.subr.bf16.mxu0 0
      %1280 = vmatpush1.bf16.msra.mxu0 0
      %1281 = vmatprep.subr.bf16.mxu0 0
      %1282 = vmatpush1.bf16.msra.mxu0 0
      %1283 = vmatprep.subr.bf16.mxu0 0
      %1284 = vmatpush1.bf16.msra.mxu0 0
      %1285 = vmatprep.subr.bf16.mxu0 0
      %1286 = vmatpush1.bf16.msra.mxu0 0
      %1287 = vmatprep.subr.bf16.mxu0 0
      %1288 = vmatpush1.bf16.msra.mxu0 0
      %1289 = vmatprep.subr.bf16.mxu0 0
      %1290 = vmatpush1.bf16.msra.mxu0 0
      %1291 = vmatprep.mubr.bf16.mxu0 0
      %1292 = vmatmul.mubr.bf16.gmra.mrb[0].mxu0 %v1251
      %v1293 = vpop.f32.mrb[0].mxu0
      %v1294 = vadd.f32 0.0, %v1293
      %v1295 = vpop.f32.mrb[0].mxu0
      %v1296 = vadd.f32 0.0, %v1295
      %v1297 = vpop.f32.mrb[0].mxu0
      %v1298 = vpop.f32.mrb[0].mxu0
      %1299 = vdwg.mxu0
      %v1300 = vadd.f32 %v1237, %v1294
      %v1301 = vadd.f32 %v1238, %v1296
      %1302 = vrot.lane.b32.xlu0 %v870, 112
      %v1303 = vpop.permute.xlu0 %1302
      %1304 = vrot.lane.b32.xlu0 %v871, 112
      %v1305 = vpop.permute.xlu0 %1304
      %v1306 = vsel %vm725, %v1303, %v1305
      %v1307 = vsel %vm725, %v1305, %v1303
      %s1308 = scalar_lea.vmem %s3, 56
      %v1309 = vld [vmem:[%s1308] sm:$0xff]
      %v1310 = vpack.c.bf16 %v1309, %v1309
      %v1311 = vpack.c.bf16 %v1306, %v1306
      %v1312 = vpack.c.bf16 %v1307, %v1307
      %v1314 = vsel %vm306, %v1310, 0
      %v1317 = vsel %vm310, %v1311, 0
      %v1320 = vsel %vm310, %v1312, 0
      %1322 = vmatprep.subr.bf16.mxu0 %v1320
      %1323 = vmatpush1.bf16.msra.mxu0 %v1317
      %1324 = vmatprep.subr.bf16.mxu0 0
      %1325 = vmatpush1.bf16.msra.mxu0 0
      %1326 = vmatprep.subr.bf16.mxu0 0
      %1327 = vmatpush1.bf16.msra.mxu0 0
      %1328 = vmatprep.subr.bf16.mxu0 0
      %1329 = vmatpush1.bf16.msra.mxu0 0
      %1330 = vmatprep.subr.bf16.mxu0 0
      %1331 = vmatpush1.bf16.msra.mxu0 0
      %1332 = vmatprep.subr.bf16.mxu0 0
      %1333 = vmatpush1.bf16.msra.mxu0 0
      %1334 = vmatprep.subr.bf16.mxu0 0
      %1335 = vmatpush1.bf16.msra.mxu0 0
      %1336 = vmatprep.subr.bf16.mxu0 0
      %1337 = vmatpush1.bf16.msra.mxu0 0
      %1338 = vmatprep.subr.bf16.mxu0 0
      %1339 = vmatpush1.bf16.msra.mxu0 0
      %1340 = vmatprep.subr.bf16.mxu0 0
      %1341 = vmatpush1.bf16.msra.mxu0 0
      %1342 = vmatprep.subr.bf16.mxu0 0
      %1343 = vmatpush1.bf16.msra.mxu0 0
      %1344 = vmatprep.subr.bf16.mxu0 0
      %1345 = vmatpush1.bf16.msra.mxu0 0
      %1346 = vmatprep.subr.bf16.mxu0 0
      %1347 = vmatpush1.bf16.msra.mxu0 0
      %1348 = vmatprep.subr.bf16.mxu0 0
      %1349 = vmatpush1.bf16.msra.mxu0 0
      %1350 = vmatprep.subr.bf16.mxu0 0
      %1351 = vmatpush1.bf16.msra.mxu0 0
      %1352 = vmatprep.subr.bf16.mxu0 0
      %1353 = vmatpush1.bf16.msra.mxu0 0
      %1354 = vmatprep.mubr.bf16.mxu0 0
      %1355 = vmatmul.mubr.bf16.gmra.mrb[0].mxu0 %v1314
      %v1356 = vpop.f32.mrb[0].mxu0
      %v1357 = vadd.f32 0.0, %v1356
      %v1358 = vpop.f32.mrb[0].mxu0
      %v1359 = vadd.f32 0.0, %v1358
      %v1360 = vpop.f32.mrb[0].mxu0
      %v1361 = vpop.f32.mrb[0].mxu0
      %1362 = vdwg.mxu0
      %v1363 = vadd.f32 %v1300, %v1357
      %v1364 = vadd.f32 %v1301, %v1359
      %1365 = vrot.lane.b32.xlu0 %v870, 111
      %v1366 = vpop.permute.xlu0 %1365
      %1367 = vrot.lane.b32.xlu0 %v871, 111
      %v1368 = vpop.permute.xlu0 %1367
      %v1369 = vsel %vm789, %v1366, %v1368
      %v1370 = vsel %vm789, %v1368, %v1366
      %s1371 = scalar_lea.vmem %s3, 64
      %v1372 = vld [vmem:[%s1371] sm:$0xff]
      %v1373 = vpack.c.bf16 %v1372, %v1372
      %v1374 = vpack.c.bf16 %v1369, %v1369
      %v1375 = vpack.c.bf16 %v1370, %v1370
      %v1377 = vsel %vm306, %v1373, 0
      %v1380 = vsel %vm310, %v1374, 0
      %v1383 = vsel %vm310, %v1375, 0
      %1385 = vmatprep.subr.bf16.mxu0 %v1383
      %1386 = vmatpush1.bf16.msra.mxu0 %v1380
      %1387 = vmatprep.subr.bf16.mxu0 0
      %1388 = vmatpush1.bf16.msra.mxu0 0
      %1389 = vmatprep.subr.bf16.mxu0 0
      %1390 = vmatpush1.bf16.msra.mxu0 0
      %1391 = vmatprep.subr.bf16.mxu0 0
      %1392 = vmatpush1.bf16.msra.mxu0 0
      %1393 = vmatprep.subr.bf16.mxu0 0
      %1394 = vmatpush1.bf16.msra.mxu0 0
      %1395 = vmatprep.subr.bf16.mxu0 0
      %1396 = vmatpush1.bf16.msra.mxu0 0
      %1397 = vmatprep.subr.bf16.mxu0 0
      %1398 = vmatpush1.bf16.msra.mxu0 0
      %1399 = vmatprep.subr.bf16.mxu0 0
      %1400 = vmatpush1.bf16.msra.mxu0 0
      %1401 = vmatprep.subr.bf16.mxu0 0
      %1402 = vmatpush1.bf16.msra.mxu0 0
      %1403 = vmatprep.subr.bf16.mxu0 0
      %1404 = vmatpush1.bf16.msra.mxu0 0
      %1405 = vmatprep.subr.bf16.mxu0 0
      %1406 = vmatpush1.bf16.msra.mxu0 0
      %1407 = vmatprep.subr.bf16.mxu0 0
      %1408 = vmatpush1.bf16.msra.mxu0 0
      %1409 = vmatprep.subr.bf16.mxu0 0
      %1410 = vmatpush1.bf16.msra.mxu0 0
      %1411 = vmatprep.subr.bf16.mxu0 0
      %1412 = vmatpush1.bf16.msra.mxu0 0
      %1413 = vmatprep.subr.bf16.mxu0 0
      %1414 = vmatpush1.bf16.msra.mxu0 0
      %1415 = vmatprep.subr.bf16.mxu0 0
      %1416 = vmatpush1.bf16.msra.mxu0 0
      %1417 = vmatprep.mubr.bf16.mxu0 0
      %1418 = vmatmul.mubr.bf16.gmra.mrb[0].mxu0 %v1377
      %v1419 = vpop.f32.mrb[0].mxu0
      %v1420 = vadd.f32 0.0, %v1419
      %v1421 = vpop.f32.mrb[0].mxu0
      %v1422 = vadd.f32 0.0, %v1421
      %v1423 = vpop.f32.mrb[0].mxu0
      %v1424 = vpop.f32.mrb[0].mxu0
      %1425 = vdwg.mxu0
      %v1426 = vadd.f32 %v1363, %v1420
      %v1427 = vadd.f32 %v1364, %v1422
      %v1428 = vld [vmem:[%s4] sm:$0xff]
      %1430 = vset.pattern.permute.xlu0 0
      %1431 = vperm.xlu0 %1430, %v1428
      %v1432 = vpop.permute.xlu0 %1431
      %v1434 = vadd.f32 %v1426, %v1432
      %v1435 = vadd.f32 %v1427, %v1432
      %v1436 = vmax.f32 %v1434, 0.0
      %v1437 = vmax.f32 %v1435, 0.0
      %1438 = vrot.lane.b32.xlu0 %v1436, 127
      %v1439 = vpop.permute.xlu0 %1438
      %1440 = vrot.lane.b32.xlu0 %v1437, 127
      %v1441 = vpop.permute.xlu0 %1440
      %v1442 = vsel %vm597, %v1439, %v1441
      %v1443 = vsel %vm597, %v1441, %v1439
      %v1444 = vmax.f32 %v1436, %v1442
      %v1445 = vmax.f32 %v1437, %v1443
      %1446 = vrot.lane.b32.xlu0 %v1436, 112
      %v1447 = vpop.permute.xlu0 %1446
      %1448 = vrot.lane.b32.xlu0 %v1437, 112
      %v1449 = vpop.permute.xlu0 %1448
      %v1450 = vsel %vm725, %v1447, %v1449
      %v1451 = vsel %vm725, %v1449, %v1447
      %v1452 = vmax.f32 %v1444, %v1450
      %v1453 = vmax.f32 %v1445, %v1451
      %1454 = vrot.lane.b32.xlu0 %v1436, 111
      %v1455 = vpop.permute.xlu0 %1454
      %1456 = vrot.lane.b32.xlu0 %v1437, 111
      %v1457 = vpop.permute.xlu0 %1456
      %v1458 = vsel %vm789, %v1455, %v1457
      %v1459 = vsel %vm789, %v1457, %v1455
      %v1460 = vmax.f32 %v1452, %v1458
      %v1461 = vmax.f32 %v1453, %v1459
      %v1462 = vld [vmem:[%s6] sm:$0xff]
      %v1463 = vld [vmem:[%s6 + $0x8] sm:$0xff]
      %v1464 = vld [vmem:[%s6 + $0x10] sm:$0xff]
      %v1465 = vld [vmem:[%s6 + $0x18] sm:$0xff]
      %v1466 = vld [vmem:[%s6 + $0x20] sm:$0xff]
      %v1467 = vld [vmem:[%s6 + $0x28] sm:$0xff]
      %v1468 = vld [vmem:[%s6 + $0x30] sm:$0xff]
      %v1469 = vld [vmem:[%s6 + $0x38] sm:$0xff]
      %v1470 = vld [vmem:[%s6 + $0x40] sm:$0xff]
      %v1471 = vld [vmem:[%s6 + $0x48] sm:$0xff]
      %v1472 = vld [vmem:[%s6 + $0x50] sm:$0xff]
      %v1473 = vld [vmem:[%s6 + $0x58] sm:$0xff]
      %v1474 = vld [vmem:[%s6 + $0x60] sm:$0xff]
      %v1475 = vld [vmem:[%s6 + $0x68] sm:$0xff]
      %v1476 = vld [vmem:[%s6 + $0x70] sm:$0xff]
      %v1477 = vld [vmem:[%s6 + $0x78] sm:$0xff]
      %v1478 = vld [vmem:[%s6 + $0x80] sm:$0xff]
      %v1479 = vld [vmem:[%s6 + $0x88] sm:$0xff]
      %v1480 = vld [vmem:[%s6 + $0x90] sm:$0xff]
      %v1481 = vld [vmem:[%s6 + $0x98] sm:$0xff]
      %v1482 = vld [vmem:[%s6 + $0xa0] sm:$0xff]
      %v1483 = vld [vmem:[%s6 + $0xa8] sm:$0xff]
      %v1484 = vld [vmem:[%s6 + $0xb0] sm:$0xff]
      %v1485 = vld [vmem:[%s6 + $0xb8] sm:$0xff]
      %v1486 = vld [vmem:[%s6 + $0xc0] sm:$0xff]
      %v1487 = vld [vmem:[%s6 + $0xc8] sm:$0xff]
      %v1488 = vld [vmem:[%s6 + $0xd0] sm:$0xff]
      %v1489 = vld [vmem:[%s6 + $0xd8] sm:$0xff]
      %v1490 = vld [vmem:[%s6 + $0xe0] sm:$0xff]
      %v1491 = vld [vmem:[%s6 + $0xe8] sm:$0xff]
      %v1492 = vld [vmem:[%s6 + $0xf0] sm:$0xff]
      %v1493 = vld [vmem:[%s6 + $0xf8] sm:$0xff]
      %1494 = vmatprep.subr.mxu0 0.0
      %1495 = vmatpush1.msra.mxu0 %v1462
      %1496 = vmatprep.subr.mxu0 0.0
      %1497 = vmatpush1.msra.mxu0 %v1463
      %1498 = vmatprep.subr.mxu0 0.0
      %1499 = vmatpush1.msra.mxu0 %v1464
      %1500 = vmatprep.subr.mxu0 0.0
      %1501 = vmatpush1.msra.mxu0 %v1465
      %1502 = vmatprep.subr.mxu0 0.0
      %1503 = vmatpush1.msra.mxu0 %v1466
      %1504 = vmatprep.subr.mxu0 0.0
      %1505 = vmatpush1.msra.mxu0 %v1467
      %1506 = vmatprep.subr.mxu0 0.0
      %1507 = vmatpush1.msra.mxu0 %v1468
      %1508 = vmatprep.subr.mxu0 0.0
      %1509 = vmatpush1.msra.mxu0 %v1469
      %1510 = vmatprep.subr.mxu0 0.0
      %1511 = vmatpush1.msra.mxu0 %v1470
      %1512 = vmatprep.subr.mxu0 0.0
      %1513 = vmatpush1.msra.mxu0 %v1471
      %1514 = vmatprep.subr.mxu0 0.0
      %1515 = vmatpush1.msra.mxu0 %v1472
      %1516 = vmatprep.subr.mxu0 0.0
      %1517 = vmatpush1.msra.mxu0 %v1473
      %1518 = vmatprep.subr.mxu0 0.0
      %1519 = vmatpush1.msra.mxu0 %v1474
      %1520 = vmatprep.subr.mxu0 0.0
      %1521 = vmatpush1.msra.mxu0 %v1475
      %1522 = vmatprep.subr.mxu0 0.0
      %1523 = vmatpush1.msra.mxu0 %v1476
      %1524 = vmatprep.subr.mxu0 0.0
      %1525 = vmatpush1.msra.mxu0 %v1477
      %1526 = vmatprep.subr.mxu0 0.0
      %1527 = vmatpush1.msra.mxu0 %v1478
      %1528 = vmatprep.subr.mxu0 0.0
      %1529 = vmatpush1.msra.mxu0 %v1479
      %1530 = vmatprep.subr.mxu0 0.0
      %1531 = vmatpush1.msra.mxu0 %v1480
      %1532 = vmatprep.subr.mxu0 0.0
      %1533 = vmatpush1.msra.mxu0 %v1481
      %1534 = vmatprep.subr.mxu0 0.0
      %1535 = vmatpush1.msra.mxu0 %v1482
      %1536 = vmatprep.subr.mxu0 0.0
      %1537 = vmatpush1.msra.mxu0 %v1483
      %1538 = vmatprep.subr.mxu0 0.0
      %1539 = vmatpush1.msra.mxu0 %v1484
      %1540 = vmatprep.subr.mxu0 0.0
      %1541 = vmatpush1.msra.mxu0 %v1485
      %1542 = vmatprep.subr.mxu0 0.0
      %1543 = vmatpush1.msra.mxu0 %v1486
      %1544 = vmatprep.subr.mxu0 0.0
      %1545 = vmatpush1.msra.mxu0 %v1487
      %1546 = vmatprep.subr.mxu0 0.0
      %1547 = vmatpush1.msra.mxu0 %v1488
      %1548 = vmatprep.subr.mxu0 0.0
      %1549 = vmatpush1.msra.mxu0 %v1489
      %1550 = vmatprep.subr.mxu0 0.0
      %1551 = vmatpush1.msra.mxu0 %v1490
      %1552 = vmatprep.subr.mxu0 0.0
      %1553 = vmatpush1.msra.mxu0 %v1491
      %1554 = vmatprep.subr.mxu0 0.0
      %1555 = vmatpush1.msra.mxu0 %v1492
      %1556 = vmatprep.subr.mxu0 0.0
      %1557 = vmatpush1.msra.mxu0 %v1493
      %1558 = vmatprep.mubr.f32.mxu0 %v1461
      %1559 = vmatmul.mubr.f32.gmra.mrb[0].mxu0 %v1460
      %v1560 = vpop.f32.mrb[0].mxu0
      %v1561 = vadd.f32 0.0, %v1560
      %v1562 = vpop.f32.mrb[0].mxu0
      %1563 = vdwg.mxu0
      %vm1564 = vcmask 400384
      %1565 = vst.msk [vmem:[%s276] sm:$0xff] %vm1564, %v1561
      %p1566 = scmp.lt.s32.totalorder %s18, 1
      %s1567 = scalar_select %p1566, %s18, 1
      %s1568 = smul.addr %s1567, 8
      %s1569 = scalar_lea.vmem %s7, %s1568
      // Predicated region
      $region49: #{fashion_mnist_model_v2.4} parent=47 // pred_check
        %p1570 = pneg %p188
      $region50: #{fashion_mnist_model_v2.4} parent=47 // pred_check_branch
        %1572 = sbr.rel (%p1570) target = $region52
      $region51: #{fashion_mnist_model_v2.4} parent=47 // pred_region
        _
      $region52: #{fashion_mnist_model_v2.4} parent=47 // pred_fallthru
        _
    $region48: #{fashion_mnist_model_v2.4} parent=5 // pred_fallthru
      _
    %p1573 = scmp.le.s32.totalorder 2, %s13
    // Predicated region
    $region53: #{fashion_mnist_model_v2.4} parent=5 // pred_check
      %p1574 = pneg %p1573
    $region54: #{fashion_mnist_model_v2.4} parent=5 // pred_check_branch
      %1576 = sbr.rel (%p1574) target = $region56
    $region55: #{fashion_mnist_model_v2.4} parent=5 // pred_region
      %s1577 = ssub.s32 %s13, 2
      // Predicated region
      $region57: #{fashion_mnist_model_v2.4} parent=55 // pred_check
        %p1578 = pneg %p194
      $region58: #{fashion_mnist_model_v2.4} parent=55 // pred_check_branch
        %1580 = sbr.rel (%p1578) target = $region60
      $region59: #{fashion_mnist_model_v2.4} parent=55 // pred_region
        %p1581 = scmp.lt.s32.totalorder %s19, 1
        %s1582 = scalar_select %p1581, %s19, 1
        %s1583 = smul.addr %s1582, 8
        %s1584 = scalar_lea.vmem %s7, %s1583
      $region60: #{fashion_mnist_model_v2.4} parent=55 // pred_fallthru
        _
    $region56: #{fashion_mnist_model_v2.4} parent=5 // pred_fallthru
      _
  $region6: #{fashion_mnist_model_v2.4} parent=0 // loop_footer
    %s17 = sadd.s32 1, %s13
  $region7: #{fashion_mnist_model_v2.4} parent=0 // loop_footer_branch
    %12 = sbr.rel target = $region3
  $region8: #{fashion_mnist_model_v2.4} parent=0 // loop_exit
    _

// kernel: fashion_mnist_model_v2.5
$region0: #{fashion_mnist_model_v2.5}
  #allocation0 [shape = 'u32[]', space=smem, size = 0x4, offset = 0x4, fixed_abs, tag = 'smem constant byte address 0x4 - core index']
  #allocation1 [shape = 'u32[144,128]{1,0:T(1,128)}', space=vmem, size = 0x12000, scoped, tag = 'internal scratch']
  %s0 = inlined_call_operand.vmem [shape: f32[2,392], index: 0, kind: input, shape index: {}]
  %s1 = inlined_call_operand.vmem [shape: f32[392,128], index: 1, kind: input, shape index: {}]
  %s2 = inlined_call_operand.vmem [shape: f32[1,128], index: 2, kind: input, shape index: {}]
  %s3 = inlined_call_operand.hbm [shape: f32[2,128], index: 3, kind: output, shape index: {}]
  %s4 = sld [smem:[#allocation0]]
  $region22: #{fashion_mnist_model_v2.5} parent=0
    _
  %s6 = ssub.s32 1, %s4
  %s7 = scalar_select 0, %s6, %s4
  $region1: #{fashion_mnist_model_v2.5} parent=0
    #allocation2 [shape = 'u8[1024]{0}', space=vmem, size = 0x400, scoped, tag = 'output window, operand 0, single buffered']
    #allocation3 [shape = 's32[1]{0}', space=sflag, size = 0x4, scoped, tag = 'scoped memory for fashion_mnist_model_v2.5']
    %8 = vsyncpa [#allocation3], 0
    // Predicated region
    $region2: #{fashion_mnist_model_v2.5} parent=1 // pred_check
      _
    $region3: #{fashion_mnist_model_v2.5} parent=1 // pred_check_branch
      %10 = sbr.rel (0) target = $region5
    $region4: #{fashion_mnist_model_v2.5} parent=1 // pred_region
      _
    $region5: #{fashion_mnist_model_v2.5} parent=1 // pred_fallthru
      _
    // Predicated region
    $region6: #{fashion_mnist_model_v2.5} parent=1 // pred_check
      _
    $region7: #{fashion_mnist_model_v2.5} parent=1 // pred_check_branch
      %12 = sbr.rel (0) target = $region9
    $region8: #{fashion_mnist_model_v2.5} parent=1 // pred_region
      _
    $region9: #{fashion_mnist_model_v2.5} parent=1 // pred_fallthru
      _
    // Predicated region
    $region10: #{fashion_mnist_model_v2.5} parent=1 // pred_check
      _
    $region11: #{fashion_mnist_model_v2.5} parent=1 // pred_check_branch
      %14 = sbr.rel (0) target = $region13
    $region12: #{fashion_mnist_model_v2.5} parent=1 // pred_region
      _
    $region13: #{fashion_mnist_model_v2.5} parent=1 // pred_fallthru
      _
    %v16 = vld [vmem:[%s0] sm:$0xff]
    %v18 = vcombine.high %v16, %v16
    %v20 = vunpack.c.l.s4 1983009808
    %v21 = vunpack.c.0.s8 %v20
    %v22 = vlaneseq
    %v23 = vshrl.u32 %v22, 7
    %v24 = vsub.s32 %v21, %v23
    %v25 = vrot.slane %v16, %v24
    %v27 = vunpack.c.l.s4 1983009808
    %v28 = vunpack.c.0.s8 %v27
    %v29 = vlaneseq
    %v30 = vshrl.u32 %v29, 7
    %v31 = vsub.s32 %v28, %v30
    %v32 = vrot.slane %v18, %v31
    %v33 = vcombine.high %v25, %v25
    %v34 = vcombine.high %v32, %v32
    %v39 = vpack.c.bf16 %v25, %v25
    %v40 = vpack.c.bf16 %v33, %v33
    %v41 = vpack.c.bf16 %v32, %v32
    %v42 = vpack.c.bf16 %v34, %v34
    %v43 = vld [vmem:[%s1] sm:$0xff]
    %v44 = vld [vmem:[%s1 + $0x8] sm:$0xff]
    %v45 = vld [vmem:[%s1 + $0x10] sm:$0xff]
    %v46 = vld [vmem:[%s1 + $0x18] sm:$0xff]
    %v47 = vld [vmem:[%s1 + $0x20] sm:$0xff]
    %v48 = vld [vmem:[%s1 + $0x28] sm:$0xff]
    %v49 = vld [vmem:[%s1 + $0x30] sm:$0xff]
    %v50 = vld [vmem:[%s1 + $0x38] sm:$0xff]
    %v51 = vld [vmem:[%s1 + $0x40] sm:$0xff]
    %v52 = vld [vmem:[%s1 + $0x48] sm:$0xff]
    %v53 = vld [vmem:[%s1 + $0x50] sm:$0xff]
    %v54 = vld [vmem:[%s1 + $0x58] sm:$0xff]
    %v55 = vld [vmem:[%s1 + $0x60] sm:$0xff]
    %v56 = vld [vmem:[%s1 + $0x68] sm:$0xff]
    %v57 = vld [vmem:[%s1 + $0x70] sm:$0xff]
    %v58 = vld [vmem:[%s1 + $0x78] sm:$0xff]
    %v59 = vld [vmem:[%s1 + $0x80] sm:$0xff]
    %v60 = vld [vmem:[%s1 + $0x88] sm:$0xff]
    %v61 = vld [vmem:[%s1 + $0x90] sm:$0xff]
    %v62 = vld [vmem:[%s1 + $0x98] sm:$0xff]
    %v63 = vld [vmem:[%s1 + $0xa0] sm:$0xff]
    %v64 = vld [vmem:[%s1 + $0xa8] sm:$0xff]
    %v65 = vld [vmem:[%s1 + $0xb0] sm:$0xff]
    %v66 = vld [vmem:[%s1 + $0xb8] sm:$0xff]
    %v67 = vld [vmem:[%s1 + $0xc0] sm:$0xff]
    %v68 = vld [vmem:[%s1 + $0xc8] sm:$0xff]
    %v69 = vld [vmem:[%s1 + $0xd0] sm:$0xff]
    %v70 = vld [vmem:[%s1 + $0xd8] sm:$0xff]
    %v71 = vld [vmem:[%s1 + $0xe0] sm:$0xff]
    %v72 = vld [vmem:[%s1 + $0xe8] sm:$0xff]
    %v73 = vld [vmem:[%s1 + $0xf0] sm:$0xff]
    %v74 = vld [vmem:[%s1 + $0xf8] sm:$0xff]
    %v75 = vld [vmem:[%s1 + $0x100] sm:$0xff]
    %v76 = vld [vmem:[%s1 + $0x108] sm:$0xff]
    %v77 = vld [vmem:[%s1 + $0x110] sm:$0xff]
    %v78 = vld [vmem:[%s1 + $0x118] sm:$0xff]
    %v79 = vld [vmem:[%s1 + $0x120] sm:$0xff]
    %v80 = vld [vmem:[%s1 + $0x128] sm:$0xff]
    %v81 = vld [vmem:[%s1 + $0x130] sm:$0xff]
    %v82 = vld [vmem:[%s1 + $0x138] sm:$0xff]
    %v83 = vld [vmem:[%s1 + $0x140] sm:$0xff]
    %v84 = vld [vmem:[%s1 + $0x148] sm:$0xff]
    %v85 = vld [vmem:[%s1 + $0x150] sm:$0xff]
    %v86 = vld [vmem:[%s1 + $0x158] sm:$0xff]
    %v87 = vld [vmem:[%s1 + $0x160] sm:$0xff]
    %v88 = vld [vmem:[%s1 + $0x168] sm:$0xff]
    %v89 = vld [vmem:[%s1 + $0x170] sm:$0xff]
    %v90 = vld [vmem:[%s1 + $0x178] sm:$0xff]
    %v91 = vld [vmem:[%s1 + $0x180] sm:$0xff]
    %v92 = vpack.c.bf16 %v44, %v43
    %v93 = vpack.c.bf16 %v46, %v45
    %v94 = vpack.c.bf16 %v48, %v47
    %v95 = vpack.c.bf16 %v50, %v49
    %v96 = vpack.c.bf16 %v52, %v51
    %v97 = vpack.c.bf16 %v54, %v53
    %v98 = vpack.c.bf16 %v56, %v55
    %v99 = vpack.c.bf16 %v58, %v57
    %v100 = vpack.c.bf16 %v60, %v59
    %v101 = vpack.c.bf16 %v62, %v61
    %v102 = vpack.c.bf16 %v64, %v63
    %v103 = vpack.c.bf16 %v66, %v65
    %v104 = vpack.c.bf16 %v68, %v67
    %v105 = vpack.c.bf16 %v70, %v69
    %v106 = vpack.c.bf16 %v72, %v71
    %v107 = vpack.c.bf16 %v74, %v73
    %v108 = vpack.c.bf16 %v76, %v75
    %v109 = vpack.c.bf16 %v78, %v77
    %v110 = vpack.c.bf16 %v80, %v79
    %v111 = vpack.c.bf16 %v82, %v81
    %v112 = vpack.c.bf16 %v84, %v83
    %v113 = vpack.c.bf16 %v86, %v85
    %v114 = vpack.c.bf16 %v88, %v87
    %v115 = vpack.c.bf16 %v90, %v89
    %v116 = vpack.c.bf16 %v91, %v91
    %v117 = vld [vmem:[%s2] sm:$0x1]
    %v119 = vlaneseq
    %v120 = vshrl.u32 %v119, 7
    %v121 = vsub.s32 0, %v120
    %v122 = vrot.slane %v117, %v121
    %vm124 = vcmask 64512
    %v126 = vsel %vm124, %v42, 0
    %vm128 = vcmask 1043456
    %v130 = vsel %vm128, %v116, 0
    %132 = vmatprep.subr.bf16.mxu0 0
    %133 = vmatpush1.bf16.msra.mxu0 %v92
    %134 = vmatprep.subr.bf16.mxu0 0
    %135 = vmatpush1.bf16.msra.mxu0 %v93
    %136 = vmatprep.subr.bf16.mxu0 0
    %137 = vmatpush1.bf16.msra.mxu0 %v94
    %138 = vmatprep.subr.bf16.mxu0 0
    %139 = vmatpush1.bf16.msra.mxu0 %v95
    %140 = vmatprep.subr.bf16.mxu0 0
    %141 = vmatpush1.bf16.msra.mxu0 %v96
    %142 = vmatprep.subr.bf16.mxu0 0
    %143 = vmatpush1.bf16.msra.mxu0 %v97
    %144 = vmatprep.subr.bf16.mxu0 0
    %145 = vmatpush1.bf16.msra.mxu0 %v98
    %146 = vmatprep.subr.bf16.mxu0 0
    %147 = vmatpush1.bf16.msra.mxu0 %v99
    %148 = vmatprep.subr.bf16.mxu0 0
    %149 = vmatpush1.bf16.msra.mxu0 %v100
    %150 = vmatprep.subr.bf16.mxu0 0
    %151 = vmatpush1.bf16.msra.mxu0 %v101
    %152 = vmatprep.subr.bf16.mxu0 0
    %153 = vmatpush1.bf16.msra.mxu0 %v102
    %154 = vmatprep.subr.bf16.mxu0 0
    %155 = vmatpush1.bf16.msra.mxu0 %v103
    %156 = vmatprep.subr.bf16.mxu0 0
    %157 = vmatpush1.bf16.msra.mxu0 %v104
    %158 = vmatprep.subr.bf16.mxu0 0
    %159 = vmatpush1.bf16.msra.mxu0 %v105
    %160 = vmatprep.subr.bf16.mxu0 0
    %161 = vmatpush1.bf16.msra.mxu0 %v106
    %162 = vmatprep.subr.bf16.mxu0 0
    %163 = vmatpush1.bf16.msra.mxu0 %v107
    %164 = vmatprep.mubr.bf16.mxu0 %v40
    %165 = vmatmul.mubr.bf16.gmra.mrb[0].mxu0 %v39
    %v166 = vpop.f32.mrb[0].mxu0
    %v167 = vadd.f32 %v122, %v166
    %v168 = vpop.f32.mrb[0].mxu0
    %v169 = vpop.f32.mrb[0].mxu0
    %v170 = vpop.f32.mrb[0].mxu0
    %171 = vdwg.mxu0
    %172 = vmatprep.subr.bf16.mxu0 0
    %173 = vmatpush1.bf16.msra.mxu0 %v108
    %174 = vmatprep.subr.bf16.mxu0 0
    %175 = vmatpush1.bf16.msra.mxu0 %v109
    %176 = vmatprep.subr.bf16.mxu0 0
    %177 = vmatpush1.bf16.msra.mxu0 %v110
    %178 = vmatprep.subr.bf16.mxu0 0
    %179 = vmatpush1.bf16.msra.mxu0 %v111
    %180 = vmatprep.subr.bf16.mxu0 0
    %181 = vmatpush1.bf16.msra.mxu0 %v112
    %182 = vmatprep.subr.bf16.mxu0 0
    %183 = vmatpush1.bf16.msra.mxu0 %v113
    %184 = vmatprep.subr.bf16.mxu0 0
    %185 = vmatpush1.bf16.msra.mxu0 %v114
    %186 = vmatprep.subr.bf16.mxu0 0
    %187 = vmatpush1.bf16.msra.mxu0 %v115
    %188 = vmatprep.subr.bf16.mxu0 0
    %189 = vmatpush1.bf16.msra.mxu0 %v130
    %190 = vmatprep.subr.bf16.mxu0 0
    %191 = vmatpush1.bf16.msra.mxu0 0
    %192 = vmatprep.subr.bf16.mxu0 0
    %193 = vmatpush1.bf16.msra.mxu0 0
    %194 = vmatprep.subr.bf16.mxu0 0
    %195 = vmatpush1.bf16.msra.mxu0 0
    %196 = vmatprep.subr.bf16.mxu0 0
    %197 = vmatpush1.bf16.msra.mxu0 0
    %198 = vmatprep.subr.bf16.mxu0 0
    %199 = vmatpush1.bf16.msra.mxu0 0
    %200 = vmatprep.subr.bf16.mxu0 0
    %201 = vmatpush1.bf16.msra.mxu0 0
    %202 = vmatprep.subr.bf16.mxu0 0
    %203 = vmatpush1.bf16.msra.mxu0 0
    %204 = vmatprep.mubr.bf16.mxu0 %v126
    %205 = vmatmul.mubr.bf16.gmra.mrb[0].mxu0 %v41
    %v206 = vpop.f32.mrb[0].mxu0
    %v207 = vadd.f32 %v167, %v206
    %v208 = vpop.f32.mrb[0].mxu0
    %v209 = vpop.f32.mrb[0].mxu0
    %v210 = vpop.f32.mrb[0].mxu0
    %211 = vdwg.mxu0
    %212 = vst [vmem:[#allocation2] sm:$0x3] %v207
    // Predicated region
    $region14: #{fashion_mnist_model_v2.5} parent=1 // pred_check
      _
    $region15: #{fashion_mnist_model_v2.5} parent=1 // pred_check_branch
      %214 = sbr.rel (0) target = $region17
    $region16: #{fashion_mnist_model_v2.5} parent=1 // pred_region
      %s216 = ssub.s32 32, 32
      %217 = vsyncadd [#allocation3], %s216
      %s219 = sshll.u32 [#allocation2], 4
      %s220 = int_to_ptr.vmem [resolvable:$true] %s219
      %222 = dma.vmem_to_hbm [thread:$0]  %s220, 32, %s3, [#allocation3]
    $region17: #{fashion_mnist_model_v2.5} parent=1 // pred_fallthru
      _
    // Predicated region
    $region18: #{fashion_mnist_model_v2.5} parent=1 // pred_check
      _
    $region19: #{fashion_mnist_model_v2.5} parent=1 // pred_check_branch
      %224 = sbr.rel (0) target = $region21
    $region20: #{fashion_mnist_model_v2.5} parent=1 // pred_region
      %225 = dma.done [#allocation3], 32
    $region21: #{fashion_mnist_model_v2.5} parent=1 // pred_fallthru
      _
    %226 = vsyncpa [#allocation3], 1

// kernel: fashion_mnist_model_v2.3
$region0: #{fashion_mnist_model_v2.3}
  #allocation0 [shape = 'u32[]', space=smem, size = 0x4, offset = 0x4, fixed_abs, tag = 'smem constant byte address 0x4 - core index']
  #allocation1 [shape = 'u32[144,128]{1,0:T(1,128)}', space=vmem, size = 0x12000, scoped, tag = 'internal scratch']
  %s0 = inlined_call_operand.vmem [shape: f32[2,1,1024], index: 0, kind: input, shape index: {}]
  %s1 = inlined_call_operand.vmem [shape: f32[9,8,1], index: 1, kind: input, shape index: {}]
  %s2 = inlined_call_operand.vmem [shape: f32[8,1], index: 2, kind: input, shape index: {}]
  %s3 = inlined_call_operand.vmem [shape: f32[9,8,8], index: 3, kind: input, shape index: {}]
  %s4 = inlined_call_operand.vmem [shape: f32[8,1], index: 4, kind: input, shape index: {}]
  %s5 = inlined_call_operand.vmem [shape: f32[1,1024], index: 5, kind: input, shape index: {}]
  %s6 = inlined_call_operand.vmem [shape: f32[1024,256], index: 6, kind: input, shape index: {}]
  %s7 = inlined_call_operand.vmem [shape: f32[2,8,256], index: 7, kind: output, shape index: {}]
  %s8 = sld [smem:[#allocation0]]
  $region61: #{fashion_mnist_model_v2.3} parent=0
    _
  %s10 = ssub.s32 1, %s8
  %s11 = scalar_select 0, %s10, %s8
  loop: start=0, step=1, limit=4
  $region2: #{fashion_mnist_model_v2.3} parent=0 // loop_pre_header
    _
  $region3: #{fashion_mnist_model_v2.3} parent=0 // loop_header
    %s13 = sphi 0, %s17
    %p14 = scmp.ge.s32.totalorder %s13, 4
    %s23 = sphi 0, %s25
    %s26 = sphi 0, %s23
    %s27 = sphi 0, %s26
    %s43 = sphi 0, %s27
    %s47 = sphi 0, %s47
    %s49 = sphi 0, %s47
    %s50 = sphi 0, %s49
    %s64 = sphi 0, %s50
    %s68 = sphi 0, %s68
    %s70 = sphi 0, %s68
    %s71 = sphi 0, %s70
    %s85 = sphi 0, %s71
    %s89 = sphi 0, %s89
    %s91 = sphi 0, %s89
    %s92 = sphi 0, %s91
    %s106 = sphi 0, %s92
    %s110 = sphi 0, %s110
    %s112 = sphi 0, %s110
    %s113 = sphi 0, %s112
    %s127 = sphi 0, %s113
    %s131 = sphi 0, %s131
    %s133 = sphi 0, %s131
    %s134 = sphi 0, %s133
    %s148 = sphi 0, %s134
    %s152 = sphi 0, %s152
    %s154 = sphi 0, %s152
    %s155 = sphi 0, %s154
    %s169 = sphi 0, %s155
    %s175 = sphi 0, %s177
    %s178 = sphi 0, %s175
    %s179 = sphi 0, %s178
    %s195 = sphi 0, %s179
  $region4: #{fashion_mnist_model_v2.3} parent=0 // loop_header_branch
    %16 = sbr.rel (%p14) target = $region8
  $region5: #{fashion_mnist_model_v2.3} parent=0 // loop_body
    %s18 = ssub.s32 %s13, 1
    %s19 = ssub.s32 %s13, 2
    %s20 = sadd.s32 %s13, 1
    %s21 = ssub.s32 %s13, %s20
    %p22 = scmp.eq.s32.totalorder %s21, 0
    %s24 = sadd.s32 %s23, 1
    %s25 = scalar_select %p22, %s23, %s24
    %p28 = pneg %p22
    %p29 = scmp.eq.s32.totalorder %s13, 1
    %p30 = por %p28, %p29
    %p31 = scmp.ne.s32.totalorder %s23, %s26
    %p32 = scmp.eq.s32.totalorder %s13, 0
    %p33 = por %p31, %p32
    %p34 = scmp.ne.s32.totalorder %s23, %s26
    %p35 = scmp.eq.s32.totalorder %s18, 1
    %p36 = por %p34, %p35
    %p37 = scmp.ne.s32.totalorder %s26, %s27
    %p38 = scmp.eq.s32.totalorder %s18, 0
    %p39 = por %p37, %p38
    %p40 = scmp.ne.s32.totalorder %s26, %s27
    %p41 = scmp.eq.s32.totalorder %s19, 1
    %p42 = por %p40, %p41
    %p44 = scmp.ne.s32.totalorder %s27, %s43
    %p45 = scmp.eq.s32.totalorder %s19, 0
    %p46 = por %p44, %p45
    %s48 = sadd.s32 %s47, 1
    %p51 = scmp.eq.s32.totalorder %s13, 1
    %p52 = scmp.ne.s32.totalorder %s47, %s49
    %p53 = scmp.eq.s32.totalorder %s13, 0
    %p54 = por %p52, %p53
    %p55 = scmp.ne.s32.totalorder %s47, %s49
    %p56 = scmp.eq.s32.totalorder %s18, 1
    %p57 = por %p55, %p56
    %p58 = scmp.ne.s32.totalorder %s49, %s50
    %p59 = scmp.eq.s32.totalorder %s18, 0
    %p60 = por %p58, %p59
    %p61 = scmp.ne.s32.totalorder %s49, %s50
    %p62 = scmp.eq.s32.totalorder %s19, 1
    %p63 = por %p61, %p62
    %p65 = scmp.ne.s32.totalorder %s50, %s64
    %p66 = scmp.eq.s32.totalorder %s19, 0
    %p67 = por %p65, %p66
    %s69 = sadd.s32 %s68, 1
    %p72 = scmp.eq.s32.totalorder %s13, 1
    %p73 = scmp.ne.s32.totalorder %s68, %s70
    %p74 = scmp.eq.s32.totalorder %s13, 0
    %p75 = por %p73, %p74
    %p76 = scmp.ne.s32.totalorder %s68, %s70
    %p77 = scmp.eq.s32.totalorder %s18, 1
    %p78 = por %p76, %p77
    %p79 = scmp.ne.s32.totalorder %s70, %s71
    %p80 = scmp.eq.s32.totalorder %s18, 0
    %p81 = por %p79, %p80
    %p82 = scmp.ne.s32.totalorder %s70, %s71
    %p83 = scmp.eq.s32.totalorder %s19, 1
    %p84 = por %p82, %p83
    %p86 = scmp.ne.s32.totalorder %s71, %s85
    %p87 = scmp.eq.s32.totalorder %s19, 0
    %p88 = por %p86, %p87
    %s90 = sadd.s32 %s89, 1
    %p93 = scmp.eq.s32.totalorder %s13, 1
    %p94 = scmp.ne.s32.totalorder %s89, %s91
    %p95 = scmp.eq.s32.totalorder %s13, 0
    %p96 = por %p94, %p95
    %p97 = scmp.ne.s32.totalorder %s89, %s91
    %p98 = scmp.eq.s32.totalorder %s18, 1
    %p99 = por %p97, %p98
    %p100 = scmp.ne.s32.totalorder %s91, %s92
    %p101 = scmp.eq.s32.totalorder %s18, 0
    %p102 = por %p100, %p101
    %p103 = scmp.ne.s32.totalorder %s91, %s92
    %p104 = scmp.eq.s32.totalorder %s19, 1
    %p105 = por %p103, %p104
    %p107 = scmp.ne.s32.totalorder %s92, %s106
    %p108 = scmp.eq.s32.totalorder %s19, 0
    %p109 = por %p107, %p108
    %s111 = sadd.s32 %s110, 1
    %p114 = scmp.eq.s32.totalorder %s13, 1
    %p115 = scmp.ne.s32.totalorder %s110, %s112
    %p116 = scmp.eq.s32.totalorder %s13, 0
    %p117 = por %p115, %p116
    %p118 = scmp.ne.s32.totalorder %s110, %s112
    %p119 = scmp.eq.s32.totalorder %s18, 1
    %p120 = por %p118, %p119
    %p121 = scmp.ne.s32.totalorder %s112, %s113
    %p122 = scmp.eq.s32.totalorder %s18, 0
    %p123 = por %p121, %p122
    %p124 = scmp.ne.s32.totalorder %s112, %s113
    %p125 = scmp.eq.s32.totalorder %s19, 1
    %p126 = por %p124, %p125
    %p128 = scmp.ne.s32.totalorder %s113, %s127
    %p129 = scmp.eq.s32.totalorder %s19, 0
    %p130 = por %p128, %p129
    %s132 = sadd.s32 %s131, 1
    %p135 = scmp.eq.s32.totalorder %s13, 1
    %p136 = scmp.ne.s32.totalorder %s131, %s133
    %p137 = scmp.eq.s32.totalorder %s13, 0
    %p138 = por %p136, %p137
    %p139 = scmp.ne.s32.totalorder %s131, %s133
    %p140 = scmp.eq.s32.totalorder %s18, 1
    %p141 = por %p139, %p140
    %p142 = scmp.ne.s32.totalorder %s133, %s134
    %p143 = scmp.eq.s32.totalorder %s18, 0
    %p144 = por %p142, %p143
    %p145 = scmp.ne.s32.totalorder %s133, %s134
    %p146 = scmp.eq.s32.totalorder %s19, 1
    %p147 = por %p145, %p146
    %p149 = scmp.ne.s32.totalorder %s134, %s148
    %p150 = scmp.eq.s32.totalorder %s19, 0
    %p151 = por %p149, %p150
    %s153 = sadd.s32 %s152, 1
    %p156 = scmp.eq.s32.totalorder %s13, 1
    %p157 = scmp.ne.s32.totalorder %s152, %s154
    %p158 = scmp.eq.s32.totalorder %s13, 0
    %p159 = por %p157, %p158
    %p160 = scmp.ne.s32.totalorder %s152, %s154
    %p161 = scmp.eq.s32.totalorder %s18, 1
    %p162 = por %p160, %p161
    %p163 = scmp.ne.s32.totalorder %s154, %s155
    %p164 = scmp.eq.s32.totalorder %s18, 0
    %p165 = por %p163, %p164
    %p166 = scmp.ne.s32.totalorder %s154, %s155
    %p167 = scmp.eq.s32.totalorder %s19, 1
    %p168 = por %p166, %p167
    %p170 = scmp.ne.s32.totalorder %s155, %s169
    %p171 = scmp.eq.s32.totalorder %s19, 0
    %p172 = por %p170, %p171
    %s173 = ssub.s32 %s13, %s20
    %p174 = scmp.eq.s32.totalorder %s173, 0
    %s176 = sadd.s32 %s175, 1
    %s177 = scalar_select %p174, %s175, %s176
    %p180 = pneg %p174
    %p181 = scmp.eq.s32.totalorder %s13, 1
    %p182 = por %p180, %p181
    %p183 = scmp.ne.s32.totalorder %s175, %s178
    %p184 = scmp.eq.s32.totalorder %s13, 0
    %p185 = por %p183, %p184
    %p186 = scmp.ne.s32.totalorder %s175, %s178
    %p187 = scmp.eq.s32.totalorder %s18, 1
    %p188 = por %p186, %p187
    %p189 = scmp.ne.s32.totalorder %s178, %s179
    %p190 = scmp.eq.s32.totalorder %s18, 0
    %p191 = por %p189, %p190
    %p192 = scmp.ne.s32.totalorder %s178, %s179
    %p193 = scmp.eq.s32.totalorder %s19, 1
    %p194 = por %p192, %p193
    %p196 = scmp.ne.s32.totalorder %s179, %s195
    %p197 = scmp.eq.s32.totalorder %s19, 0
    %p198 = por %p196, %p197
    %p199 = scmp.le.s32.totalorder 1, %s13
    %p200 = scmp.lt.s32.totalorder %s13, 3
    %p201 = pnand %p199, %p200
    %p202 = pneg %p201
    // Predicated region
    $region9: #{fashion_mnist_model_v2.3} parent=5 // pred_check
      _
    $region10: #{fashion_mnist_model_v2.3} parent=5 // pred_check_branch
      %204 = sbr.rel (%p201) target = $region12
    $region11: #{fashion_mnist_model_v2.3} parent=5 // pred_region
      %s205 = ssub.s32 %s13, 1
      // Predicated region
      $region13: #{fashion_mnist_model_v2.3} parent=11 // pred_check
        %p206 = pneg %p60
      $region14: #{fashion_mnist_model_v2.3} parent=11 // pred_check_branch
        %208 = sbr.rel (%p206) target = $region16
      $region15: #{fashion_mnist_model_v2.3} parent=11 // pred_region
        _
      $region16: #{fashion_mnist_model_v2.3} parent=11 // pred_fallthru
        _
      // Predicated region
      $region17: #{fashion_mnist_model_v2.3} parent=11 // pred_check
        %p209 = pneg %p81
      $region18: #{fashion_mnist_model_v2.3} parent=11 // pred_check_branch
        %211 = sbr.rel (%p209) target = $region20
      $region19: #{fashion_mnist_model_v2.3} parent=11 // pred_region
        _
      $region20: #{fashion_mnist_model_v2.3} parent=11 // pred_fallthru
        _
      // Predicated region
      $region21: #{fashion_mnist_model_v2.3} parent=11 // pred_check
        %p212 = pneg %p102
      $region22: #{fashion_mnist_model_v2.3} parent=11 // pred_check_branch
        %214 = sbr.rel (%p212) target = $region24
      $region23: #{fashion_mnist_model_v2.3} parent=11 // pred_region
        _
      $region24: #{fashion_mnist_model_v2.3} parent=11 // pred_fallthru
        _
      // Predicated region
      $region25: #{fashion_mnist_model_v2.3} parent=11 // pred_check
        %p215 = pneg %p123
      $region26: #{fashion_mnist_model_v2.3} parent=11 // pred_check_branch
        %217 = sbr.rel (%p215) target = $region28
      $region27: #{fashion_mnist_model_v2.3} parent=11 // pred_region
        _
      $region28: #{fashion_mnist_model_v2.3} parent=11 // pred_fallthru
        _
      // Predicated region
      $region29: #{fashion_mnist_model_v2.3} parent=11 // pred_check
        %p218 = pneg %p144
      $region30: #{fashion_mnist_model_v2.3} parent=11 // pred_check_branch
        %220 = sbr.rel (%p218) target = $region32
      $region31: #{fashion_mnist_model_v2.3} parent=11 // pred_region
        _
      $region32: #{fashion_mnist_model_v2.3} parent=11 // pred_fallthru
        _
      // Predicated region
      $region33: #{fashion_mnist_model_v2.3} parent=11 // pred_check
        %p221 = pneg %p165
      $region34: #{fashion_mnist_model_v2.3} parent=11 // pred_check_branch
        %223 = sbr.rel (%p221) target = $region36
      $region35: #{fashion_mnist_model_v2.3} parent=11 // pred_region
        _
      $region36: #{fashion_mnist_model_v2.3} parent=11 // pred_fallthru
        _
    $region12: #{fashion_mnist_model_v2.3} parent=5 // pred_fallthru
      _
    %p224 = scmp.lt.s32.totalorder %s13, 2
    // Predicated region
    $region37: #{fashion_mnist_model_v2.3} parent=5 // pred_check
      %p225 = pneg %p224
    $region38: #{fashion_mnist_model_v2.3} parent=5 // pred_check_branch
      %227 = sbr.rel (%p225) target = $region40
    $region39: #{fashion_mnist_model_v2.3} parent=5 // pred_region
      // Predicated region
      $region41: #{fashion_mnist_model_v2.3} parent=39 // pred_check
        %p228 = pneg %p33
      $region42: #{fashion_mnist_model_v2.3} parent=39 // pred_check_branch
        %230 = sbr.rel (%p228) target = $region44
      $region43: #{fashion_mnist_model_v2.3} parent=39 // pred_region
        %p231 = scmp.lt.s32.totalorder %s13, 1
        %s232 = scalar_select %p231, %s13, 1
        %s233 = smul.addr %s232, 8
        %s234 = scalar_lea.vmem %s0, %s233
      $region44: #{fashion_mnist_model_v2.3} parent=39 // pred_fallthru
        _
    $region40: #{fashion_mnist_model_v2.3} parent=5 // pred_fallthru
      _
    %p235 = scmp.le.s32.totalorder 1, %s13
    %p236 = scmp.lt.s32.totalorder %s13, 3
    %p237 = pnand %p235, %p236
    %p238 = pneg %p237
    // Predicated region
    $region45: #{fashion_mnist_model_v2.3} parent=5 // pred_check
      _
    $region46: #{fashion_mnist_model_v2.3} parent=5 // pred_check_branch
      %240 = sbr.rel (%p237) target = $region48
    $region47: #{fashion_mnist_model_v2.3} parent=5 // pred_region
      %s241 = ssub.s32 %s13, 1
      %p242 = scmp.lt.s32.totalorder %s18, 1
      %s243 = scalar_select %p242, %s18, 1
      %s244 = smul.addr %s243, 8
      %s245 = scalar_lea.vmem %s0, %s244
      %p246 = pneg %p39
      %p247 = pneg %p36
      %p248 = pneg %p60
      %p249 = pneg %p57
      %p250 = pneg %p81
      %p251 = pneg %p78
      %p252 = pneg %p102
      %p253 = pneg %p99
      %p254 = pneg %p123
      %p255 = pneg %p120
      %p256 = pneg %p144
      %p257 = pneg %p141
      %p258 = pneg %p165
      %p259 = pneg %p162
      %p260 = pneg %p191
      %p261 = pneg %p188
      %p262 = scmp.lt.s32.totalorder %s18, 1
      %s263 = scalar_select %p262, %s18, 1
      %s264 = smul.addr %s263, 2
      %s265 = smul.addr %s264, 8
      %s266 = scalar_lea.vmem %s7, %s265
      %p267 = scmp.lt.s32.totalorder %s18, 1
      %s268 = scalar_select %p267, %s18, 1
      %s269 = smul.addr %s268, 8
      %s270 = scalar_lea.vmem %s0, %s269
      %p271 = scmp.lt.s32.totalorder %s18, 1
      %s272 = scalar_select %p271, %s18, 1
      %s273 = smul.addr %s272, 2
      %s274 = smul.addr %s273, 8
      %s275 = scalar_lea.vmem %s7, %s274
      %v277 = vld [vmem:[%s5] sm:$0xff]
      %v278 = vld [vmem:[%s270] sm:$0xff]
      %v280 = vlaneseq
      %v281 = vshrl.u32 %v280, 7
      %v282 = vsub.s32 0, %v281
      %v283 = vrot.slane %v278, %v282
      %v284 = vlaneseq
      %v285 = vshrl.u32 %v284, 7
      %v286 = vsub.s32 1, %v285
      %v287 = vrot.slane %v278, %v286
      %v288 = vlaneseq
      %v289 = vshrl.u32 %v288, 7
      %v290 = vsub.s32 2, %v289
      %v291 = vrot.slane %v278, %v290
      %v292 = vlaneseq
      %v293 = vshrl.u32 %v292, 7
      %v294 = vsub.s32 3, %v293
      %v295 = vrot.slane %v278, %v294
      %v296 = vlaneseq
      %v297 = vshrl.u32 %v296, 7
      %v298 = vsub.s32 4, %v297
      %v299 = vrot.slane %v278, %v298
      %v300 = vlaneseq
      %v301 = vshrl.u32 %v300, 7
      %v302 = vsub.s32 5, %v301
      %v303 = vrot.slane %v278, %v302
      %v304 = vlaneseq
      %v305 = vshrl.u32 %v304, 7
      %v306 = vsub.s32 6, %v305
      %v307 = vrot.slane %v278, %v306
      %v308 = vlaneseq
      %v309 = vshrl.u32 %v308, 7
      %v310 = vsub.s32 7, %v309
      %v311 = vrot.slane %v278, %v310
      %320 = vrot.lane.b32.xlu0 %v283, 33
      %v321 = vpop.permute.xlu0 %320
      %322 = vrot.lane.b32.xlu0 %v287, 33
      %v323 = vpop.permute.xlu0 %322
      %324 = vrot.lane.b32.xlu0 %v291, 33
      %v325 = vpop.permute.xlu0 %324
      %326 = vrot.lane.b32.xlu0 %v295, 33
      %v327 = vpop.permute.xlu0 %326
      %328 = vrot.lane.b32.xlu0 %v299, 33
      %v329 = vpop.permute.xlu0 %328
      %330 = vrot.lane.b32.xlu0 %v303, 33
      %v331 = vpop.permute.xlu0 %330
      %332 = vrot.lane.b32.xlu0 %v307, 33
      %v333 = vpop.permute.xlu0 %332
      %334 = vrot.lane.b32.xlu0 %v311, 33
      %v335 = vpop.permute.xlu0 %334
      %v336 = vlaneseq
      %v337 = vand.u32 %v336, 127
      %vm338 = vcmp.lt.s32.totalorder %v337, 33
      %v339 = vsel %vm338, %v333, %v335
      %v340 = vsel %vm338, %v331, %v333
      %v341 = vsel %vm338, %v329, %v331
      %v342 = vsel %vm338, %v327, %v329
      %v343 = vsel %vm338, %v325, %v327
      %v344 = vsel %vm338, %v323, %v325
      %v345 = vsel %vm338, %v321, %v323
      %v346 = vsel %vm338, %v335, %v321
      %v347 = vld [vmem:[%s1] sm:$0xff]
      %349 = vset.pattern.permute.xlu0 0
      %350 = vperm.xlu0 %349, %v347
      %v351 = vpop.permute.xlu0 %350
      %v353 = vlaneseq
      %v354 = vshrl.u32 %v353, 7
      %v355 = vsub.s32 0, %v354
      %v356 = vrot.slane %v346, %v355
      %v357 = vlaneseq
      %v358 = vshrl.u32 %v357, 7
      %v359 = vsub.s32 0, %v358
      %v360 = vrot.slane %v345, %v359
      %v361 = vlaneseq
      %v362 = vshrl.u32 %v361, 7
      %v363 = vsub.s32 0, %v362
      %v364 = vrot.slane %v344, %v363
      %v365 = vlaneseq
      %v366 = vshrl.u32 %v365, 7
      %v367 = vsub.s32 0, %v366
      %v368 = vrot.slane %v343, %v367
      %v369 = vlaneseq
      %v370 = vshrl.u32 %v369, 7
      %v371 = vsub.s32 0, %v370
      %v372 = vrot.slane %v342, %v371
      %v373 = vlaneseq
      %v374 = vshrl.u32 %v373, 7
      %v375 = vsub.s32 0, %v374
      %v376 = vrot.slane %v341, %v375
      %v377 = vlaneseq
      %v378 = vshrl.u32 %v377, 7
      %v379 = vsub.s32 0, %v378
      %v380 = vrot.slane %v340, %v379
      %v381 = vlaneseq
      %v382 = vshrl.u32 %v381, 7
      %v383 = vsub.s32 0, %v382
      %v384 = vrot.slane %v339, %v383
      %v385 = vmul.f32 %v351, %v356
      %v386 = vmul.f32 %v351, %v360
      %v387 = vmul.f32 %v351, %v364
      %v388 = vmul.f32 %v351, %v368
      %v389 = vmul.f32 %v351, %v372
      %v390 = vmul.f32 %v351, %v376
      %v391 = vmul.f32 %v351, %v380
      %v392 = vmul.f32 %v351, %v384
      %v393 = vadd.f32 %v385, 0.0
      %v394 = vadd.f32 %v386, 0.0
      %v395 = vadd.f32 %v387, 0.0
      %v396 = vadd.f32 %v388, 0.0
      %v397 = vadd.f32 %v389, 0.0
      %v398 = vadd.f32 %v390, 0.0
      %v399 = vadd.f32 %v391, 0.0
      %v400 = vadd.f32 %v392, 0.0
      %401 = vrot.lane.b32.xlu0 %v283, 32
      %v402 = vpop.permute.xlu0 %401
      %403 = vrot.lane.b32.xlu0 %v287, 32
      %v404 = vpop.permute.xlu0 %403
      %405 = vrot.lane.b32.xlu0 %v291, 32
      %v406 = vpop.permute.xlu0 %405
      %407 = vrot.lane.b32.xlu0 %v295, 32
      %v408 = vpop.permute.xlu0 %407
      %409 = vrot.lane.b32.xlu0 %v299, 32
      %v410 = vpop.permute.xlu0 %409
      %411 = vrot.lane.b32.xlu0 %v303, 32
      %v412 = vpop.permute.xlu0 %411
      %413 = vrot.lane.b32.xlu0 %v307, 32
      %v414 = vpop.permute.xlu0 %413
      %415 = vrot.lane.b32.xlu0 %v311, 32
      %v416 = vpop.permute.xlu0 %415
      %vm417 = vcmp.lt.s32.totalorder %v337, 32
      %v418 = vsel %vm417, %v414, %v416
      %v419 = vsel %vm417, %v412, %v414
      %v420 = vsel %vm417, %v410, %v412
      %v421 = vsel %vm417, %v408, %v410
      %v422 = vsel %vm417, %v406, %v408
      %v423 = vsel %vm417, %v404, %v406
      %v424 = vsel %vm417, %v402, %v404
      %v425 = vsel %vm417, %v416, %v402
      %s426 = scalar_lea.vmem %s1, 8
      %v427 = vld [vmem:[%s426] sm:$0xff]
      %429 = vset.pattern.permute.xlu0 0
      %430 = vperm.xlu0 %429, %v427
      %v431 = vpop.permute.xlu0 %430
      %v433 = vlaneseq
      %v434 = vshrl.u32 %v433, 7
      %v435 = vsub.s32 0, %v434
      %v436 = vrot.slane %v425, %v435
      %v437 = vlaneseq
      %v438 = vshrl.u32 %v437, 7
      %v439 = vsub.s32 0, %v438
      %v440 = vrot.slane %v424, %v439
      %v441 = vlaneseq
      %v442 = vshrl.u32 %v441, 7
      %v443 = vsub.s32 0, %v442
      %v444 = vrot.slane %v423, %v443
      %v445 = vlaneseq
      %v446 = vshrl.u32 %v445, 7
      %v447 = vsub.s32 0, %v446
      %v448 = vrot.slane %v422, %v447
      %v449 = vlaneseq
      %v450 = vshrl.u32 %v449, 7
      %v451 = vsub.s32 0, %v450
      %v452 = vrot.slane %v421, %v451
      %v453 = vlaneseq
      %v454 = vshrl.u32 %v453, 7
      %v455 = vsub.s32 0, %v454
      %v456 = vrot.slane %v420, %v455
      %v457 = vlaneseq
      %v458 = vshrl.u32 %v457, 7
      %v459 = vsub.s32 0, %v458
      %v460 = vrot.slane %v419, %v459
      %v461 = vlaneseq
      %v462 = vshrl.u32 %v461, 7
      %v463 = vsub.s32 0, %v462
      %v464 = vrot.slane %v418, %v463
      %v465 = vmul.f32 %v431, %v436
      %v466 = vmul.f32 %v431, %v440
      %v467 = vmul.f32 %v431, %v444
      %v468 = vmul.f32 %v431, %v448
      %v469 = vmul.f32 %v431, %v452
      %v470 = vmul.f32 %v431, %v456
      %v471 = vmul.f32 %v431, %v460
      %v472 = vmul.f32 %v431, %v464
      %v473 = vadd.f32 %v393, %v465
      %v474 = vadd.f32 %v394, %v466
      %v475 = vadd.f32 %v395, %v467
      %v476 = vadd.f32 %v396, %v468
      %v477 = vadd.f32 %v397, %v469
      %v478 = vadd.f32 %v398, %v470
      %v479 = vadd.f32 %v399, %v471
      %v480 = vadd.f32 %v400, %v472
      %481 = vrot.lane.b32.xlu0 %v283, 31
      %v482 = vpop.permute.xlu0 %481
      %483 = vrot.lane.b32.xlu0 %v287, 31
      %v484 = vpop.permute.xlu0 %483
      %485 = vrot.lane.b32.xlu0 %v291, 31
      %v486 = vpop.permute.xlu0 %485
      %487 = vrot.lane.b32.xlu0 %v295, 31
      %v488 = vpop.permute.xlu0 %487
      %489 = vrot.lane.b32.xlu0 %v299, 31
      %v490 = vpop.permute.xlu0 %489
      %491 = vrot.lane.b32.xlu0 %v303, 31
      %v492 = vpop.permute.xlu0 %491
      %493 = vrot.lane.b32.xlu0 %v307, 31
      %v494 = vpop.permute.xlu0 %493
      %495 = vrot.lane.b32.xlu0 %v311, 31
      %v496 = vpop.permute.xlu0 %495
      %vm497 = vcmp.lt.s32.totalorder %v337, 31
      %v498 = vsel %vm497, %v494, %v496
      %v499 = vsel %vm497, %v492, %v494
      %v500 = vsel %vm497, %v490, %v492
      %v501 = vsel %vm497, %v488, %v490
      %v502 = vsel %vm497, %v486, %v488
      %v503 = vsel %vm497, %v484, %v486
      %v504 = vsel %vm497, %v482, %v484
      %v505 = vsel %vm497, %v496, %v482
      %s506 = scalar_lea.vmem %s1, 16
      %v507 = vld [vmem:[%s506] sm:$0xff]
      %509 = vset.pattern.permute.xlu0 0
      %510 = vperm.xlu0 %509, %v507
      %v511 = vpop.permute.xlu0 %510
      %v513 = vlaneseq
      %v514 = vshrl.u32 %v513, 7
      %v515 = vsub.s32 0, %v514
      %v516 = vrot.slane %v505, %v515
      %v517 = vlaneseq
      %v518 = vshrl.u32 %v517, 7
      %v519 = vsub.s32 0, %v518
      %v520 = vrot.slane %v504, %v519
      %v521 = vlaneseq
      %v522 = vshrl.u32 %v521, 7
      %v523 = vsub.s32 0, %v522
      %v524 = vrot.slane %v503, %v523
      %v525 = vlaneseq
      %v526 = vshrl.u32 %v525, 7
      %v527 = vsub.s32 0, %v526
      %v528 = vrot.slane %v502, %v527
      %v529 = vlaneseq
      %v530 = vshrl.u32 %v529, 7
      %v531 = vsub.s32 0, %v530
      %v532 = vrot.slane %v501, %v531
      %v533 = vlaneseq
      %v534 = vshrl.u32 %v533, 7
      %v535 = vsub.s32 0, %v534
      %v536 = vrot.slane %v500, %v535
      %v537 = vlaneseq
      %v538 = vshrl.u32 %v537, 7
      %v539 = vsub.s32 0, %v538
      %v540 = vrot.slane %v499, %v539
      %v541 = vlaneseq
      %v542 = vshrl.u32 %v541, 7
      %v543 = vsub.s32 0, %v542
      %v544 = vrot.slane %v498, %v543
      %v545 = vmul.f32 %v511, %v516
      %v546 = vmul.f32 %v511, %v520
      %v547 = vmul.f32 %v511, %v524
      %v548 = vmul.f32 %v511, %v528
      %v549 = vmul.f32 %v511, %v532
      %v550 = vmul.f32 %v511, %v536
      %v551 = vmul.f32 %v511, %v540
      %v552 = vmul.f32 %v511, %v544
      %v553 = vadd.f32 %v473, %v545
      %v554 = vadd.f32 %v474, %v546
      %v555 = vadd.f32 %v475, %v547
      %v556 = vadd.f32 %v476, %v548
      %v557 = vadd.f32 %v477, %v549
      %v558 = vadd.f32 %v478, %v550
      %v559 = vadd.f32 %v479, %v551
      %v560 = vadd.f32 %v480, %v552
      %561 = vrot.lane.b32.xlu0 %v283, 1
      %v562 = vpop.permute.xlu0 %561
      %563 = vrot.lane.b32.xlu0 %v287, 1
      %v564 = vpop.permute.xlu0 %563
      %565 = vrot.lane.b32.xlu0 %v291, 1
      %v566 = vpop.permute.xlu0 %565
      %567 = vrot.lane.b32.xlu0 %v295, 1
      %v568 = vpop.permute.xlu0 %567
      %569 = vrot.lane.b32.xlu0 %v299, 1
      %v570 = vpop.permute.xlu0 %569
      %571 = vrot.lane.b32.xlu0 %v303, 1
      %v572 = vpop.permute.xlu0 %571
      %573 = vrot.lane.b32.xlu0 %v307, 1
      %v574 = vpop.permute.xlu0 %573
      %575 = vrot.lane.b32.xlu0 %v311, 1
      %v576 = vpop.permute.xlu0 %575
      %vm577 = vcmp.lt.s32.totalorder %v337, 1
      %v578 = vsel %vm577, %v574, %v576
      %v579 = vsel %vm577, %v572, %v574
      %v580 = vsel %vm577, %v570, %v572
      %v581 = vsel %vm577, %v568, %v570
      %v582 = vsel %vm577, %v566, %v568
      %v583 = vsel %vm577, %v564, %v566
      %v584 = vsel %vm577, %v562, %v564
      %v585 = vsel %vm577, %v576, %v562
      %s586 = scalar_lea.vmem %s1, 24
      %v587 = vld [vmem:[%s586] sm:$0xff]
      %589 = vset.pattern.permute.xlu0 0
      %590 = vperm.xlu0 %589, %v587
      %v591 = vpop.permute.xlu0 %590
      %v593 = vlaneseq
      %v594 = vshrl.u32 %v593, 7
      %v595 = vsub.s32 0, %v594
      %v596 = vrot.slane %v585, %v595
      %v597 = vlaneseq
      %v598 = vshrl.u32 %v597, 7
      %v599 = vsub.s32 0, %v598
      %v600 = vrot.slane %v584, %v599
      %v601 = vlaneseq
      %v602 = vshrl.u32 %v601, 7
      %v603 = vsub.s32 0, %v602
      %v604 = vrot.slane %v583, %v603
      %v605 = vlaneseq
      %v606 = vshrl.u32 %v605, 7
      %v607 = vsub.s32 0, %v606
      %v608 = vrot.slane %v582, %v607
      %v609 = vlaneseq
      %v610 = vshrl.u32 %v609, 7
      %v611 = vsub.s32 0, %v610
      %v612 = vrot.slane %v581, %v611
      %v613 = vlaneseq
      %v614 = vshrl.u32 %v613, 7
      %v615 = vsub.s32 0, %v614
      %v616 = vrot.slane %v580, %v615
      %v617 = vlaneseq
      %v618 = vshrl.u32 %v617, 7
      %v619 = vsub.s32 0, %v618
      %v620 = vrot.slane %v579, %v619
      %v621 = vlaneseq
      %v622 = vshrl.u32 %v621, 7
      %v623 = vsub.s32 0, %v622
      %v624 = vrot.slane %v578, %v623
      %v625 = vmul.f32 %v591, %v596
      %v626 = vmul.f32 %v591, %v600
      %v627 = vmul.f32 %v591, %v604
      %v628 = vmul.f32 %v591, %v608
      %v629 = vmul.f32 %v591, %v612
      %v630 = vmul.f32 %v591, %v616
      %v631 = vmul.f32 %v591, %v620
      %v632 = vmul.f32 %v591, %v624
      %v633 = vadd.f32 %v553, %v625
      %v634 = vadd.f32 %v554, %v626
      %v635 = vadd.f32 %v555, %v627
      %v636 = vadd.f32 %v556, %v628
      %v637 = vadd.f32 %v557, %v629
      %v638 = vadd.f32 %v558, %v630
      %v639 = vadd.f32 %v559, %v631
      %v640 = vadd.f32 %v560, %v632
      %s641 = scalar_lea.vmem %s1, 32
      %v642 = vld [vmem:[%s641] sm:$0xff]
      %644 = vset.pattern.permute.xlu0 0
      %645 = vperm.xlu0 %644, %v642
      %v646 = vpop.permute.xlu0 %645
      %v648 = vmul.f32 %v646, %v283
      %v649 = vmul.f32 %v646, %v287
      %v650 = vmul.f32 %v646, %v291
      %v651 = vmul.f32 %v646, %v295
      %v652 = vmul.f32 %v646, %v299
      %v653 = vmul.f32 %v646, %v303
      %v654 = vmul.f32 %v646, %v307
      %v655 = vmul.f32 %v646, %v311
      %v656 = vadd.f32 %v633, %v648
      %v657 = vadd.f32 %v634, %v649
      %v658 = vadd.f32 %v635, %v650
      %v659 = vadd.f32 %v636, %v651
      %v660 = vadd.f32 %v637, %v652
      %v661 = vadd.f32 %v638, %v653
      %v662 = vadd.f32 %v639, %v654
      %v663 = vadd.f32 %v640, %v655
      %664 = vrot.lane.b32.xlu0 %v283, 127
      %v665 = vpop.permute.xlu0 %664
      %666 = vrot.lane.b32.xlu0 %v287, 127
      %v667 = vpop.permute.xlu0 %666
      %668 = vrot.lane.b32.xlu0 %v291, 127
      %v669 = vpop.permute.xlu0 %668
      %670 = vrot.lane.b32.xlu0 %v295, 127
      %v671 = vpop.permute.xlu0 %670
      %672 = vrot.lane.b32.xlu0 %v299, 127
      %v673 = vpop.permute.xlu0 %672
      %674 = vrot.lane.b32.xlu0 %v303, 127
      %v675 = vpop.permute.xlu0 %674
      %676 = vrot.lane.b32.xlu0 %v307, 127
      %v677 = vpop.permute.xlu0 %676
      %678 = vrot.lane.b32.xlu0 %v311, 127
      %v679 = vpop.permute.xlu0 %678
      %vm680 = vcmp.lt.s32.totalorder %v337, 127
      %v681 = vsel %vm680, %v677, %v679
      %v682 = vsel %vm680, %v675, %v677
      %v683 = vsel %vm680, %v673, %v675
      %v684 = vsel %vm680, %v671, %v673
      %v685 = vsel %vm680, %v669, %v671
      %v686 = vsel %vm680, %v667, %v669
      %v687 = vsel %vm680, %v665, %v667
      %v688 = vsel %vm680, %v679, %v665
      %s689 = scalar_lea.vmem %s1, 40
      %v690 = vld [vmem:[%s689] sm:$0xff]
      %692 = vset.pattern.permute.xlu0 0
      %693 = vperm.xlu0 %692, %v690
      %v694 = vpop.permute.xlu0 %693
      %v696 = vlaneseq
      %v697 = vshrl.u32 %v696, 7
      %v698 = vsub.s32 0, %v697
      %v699 = vrot.slane %v687, %v698
      %v700 = vlaneseq
      %v701 = vshrl.u32 %v700, 7
      %v702 = vsub.s32 0, %v701
      %v703 = vrot.slane %v686, %v702
      %v704 = vlaneseq
      %v705 = vshrl.u32 %v704, 7
      %v706 = vsub.s32 0, %v705
      %v707 = vrot.slane %v685, %v706
      %v708 = vlaneseq
      %v709 = vshrl.u32 %v708, 7
      %v710 = vsub.s32 0, %v709
      %v711 = vrot.slane %v684, %v710
      %v712 = vlaneseq
      %v713 = vshrl.u32 %v712, 7
      %v714 = vsub.s32 0, %v713
      %v715 = vrot.slane %v683, %v714
      %v716 = vlaneseq
      %v717 = vshrl.u32 %v716, 7
      %v718 = vsub.s32 0, %v717
      %v719 = vrot.slane %v682, %v718
      %v720 = vlaneseq
      %v721 = vshrl.u32 %v720, 7
      %v722 = vsub.s32 0, %v721
      %v723 = vrot.slane %v681, %v722
      %v724 = vlaneseq
      %v725 = vshrl.u32 %v724, 7
      %v726 = vsub.s32 0, %v725
      %v727 = vrot.slane %v688, %v726
      %v728 = vmul.f32 %v694, %v699
      %v729 = vmul.f32 %v694, %v703
      %v730 = vmul.f32 %v694, %v707
      %v731 = vmul.f32 %v694, %v711
      %v732 = vmul.f32 %v694, %v715
      %v733 = vmul.f32 %v694, %v719
      %v734 = vmul.f32 %v694, %v723
      %v735 = vmul.f32 %v694, %v727
      %v736 = vadd.f32 %v656, %v728
      %v737 = vadd.f32 %v657, %v729
      %v738 = vadd.f32 %v658, %v730
      %v739 = vadd.f32 %v659, %v731
      %v740 = vadd.f32 %v660, %v732
      %v741 = vadd.f32 %v661, %v733
      %v742 = vadd.f32 %v662, %v734
      %v743 = vadd.f32 %v663, %v735
      %744 = vrot.lane.b32.xlu0 %v283, 97
      %v745 = vpop.permute.xlu0 %744
      %746 = vrot.lane.b32.xlu0 %v287, 97
      %v747 = vpop.permute.xlu0 %746
      %748 = vrot.lane.b32.xlu0 %v291, 97
      %v749 = vpop.permute.xlu0 %748
      %750 = vrot.lane.b32.xlu0 %v295, 97
      %v751 = vpop.permute.xlu0 %750
      %752 = vrot.lane.b32.xlu0 %v299, 97
      %v753 = vpop.permute.xlu0 %752
      %754 = vrot.lane.b32.xlu0 %v303, 97
      %v755 = vpop.permute.xlu0 %754
      %756 = vrot.lane.b32.xlu0 %v307, 97
      %v757 = vpop.permute.xlu0 %756
      %758 = vrot.lane.b32.xlu0 %v311, 97
      %v759 = vpop.permute.xlu0 %758
      %vm760 = vcmp.lt.s32.totalorder %v337, 97
      %v761 = vsel %vm760, %v757, %v759
      %v762 = vsel %vm760, %v755, %v757
      %v763 = vsel %vm760, %v753, %v755
      %v764 = vsel %vm760, %v751, %v753
      %v765 = vsel %vm760, %v749, %v751
      %v766 = vsel %vm760, %v747, %v749
      %v767 = vsel %vm760, %v745, %v747
      %v768 = vsel %vm760, %v759, %v745
      %s769 = scalar_lea.vmem %s1, 48
      %v770 = vld [vmem:[%s769] sm:$0xff]
      %772 = vset.pattern.permute.xlu0 0
      %773 = vperm.xlu0 %772, %v770
      %v774 = vpop.permute.xlu0 %773
      %v776 = vlaneseq
      %v777 = vshrl.u32 %v776, 7
      %v778 = vsub.s32 0, %v777
      %v779 = vrot.slane %v767, %v778
      %v780 = vlaneseq
      %v781 = vshrl.u32 %v780, 7
      %v782 = vsub.s32 0, %v781
      %v783 = vrot.slane %v766, %v782
      %v784 = vlaneseq
      %v785 = vshrl.u32 %v784, 7
      %v786 = vsub.s32 0, %v785
      %v787 = vrot.slane %v765, %v786
      %v788 = vlaneseq
      %v789 = vshrl.u32 %v788, 7
      %v790 = vsub.s32 0, %v789
      %v791 = vrot.slane %v764, %v790
      %v792 = vlaneseq
      %v793 = vshrl.u32 %v792, 7
      %v794 = vsub.s32 0, %v793
      %v795 = vrot.slane %v763, %v794
      %v796 = vlaneseq
      %v797 = vshrl.u32 %v796, 7
      %v798 = vsub.s32 0, %v797
      %v799 = vrot.slane %v762, %v798
      %v800 = vlaneseq
      %v801 = vshrl.u32 %v800, 7
      %v802 = vsub.s32 0, %v801
      %v803 = vrot.slane %v761, %v802
      %v804 = vlaneseq
      %v805 = vshrl.u32 %v804, 7
      %v806 = vsub.s32 0, %v805
      %v807 = vrot.slane %v768, %v806
      %v808 = vmul.f32 %v774, %v779
      %v809 = vmul.f32 %v774, %v783
      %v810 = vmul.f32 %v774, %v787
      %v811 = vmul.f32 %v774, %v791
      %v812 = vmul.f32 %v774, %v795
      %v813 = vmul.f32 %v774, %v799
      %v814 = vmul.f32 %v774, %v803
      %v815 = vmul.f32 %v774, %v807
      %v816 = vadd.f32 %v736, %v808
      %v817 = vadd.f32 %v737, %v809
      %v818 = vadd.f32 %v738, %v810
      %v819 = vadd.f32 %v739, %v811
      %v820 = vadd.f32 %v740, %v812
      %v821 = vadd.f32 %v741, %v813
      %v822 = vadd.f32 %v742, %v814
      %v823 = vadd.f32 %v743, %v815
      %824 = vrot.lane.b32.xlu0 %v283, 96
      %v825 = vpop.permute.xlu0 %824
      %826 = vrot.lane.b32.xlu0 %v287, 96
      %v827 = vpop.permute.xlu0 %826
      %828 = vrot.lane.b32.xlu0 %v291, 96
      %v829 = vpop.permute.xlu0 %828
      %830 = vrot.lane.b32.xlu0 %v295, 96
      %v831 = vpop.permute.xlu0 %830
      %832 = vrot.lane.b32.xlu0 %v299, 96
      %v833 = vpop.permute.xlu0 %832
      %834 = vrot.lane.b32.xlu0 %v303, 96
      %v835 = vpop.permute.xlu0 %834
      %836 = vrot.lane.b32.xlu0 %v307, 96
      %v837 = vpop.permute.xlu0 %836
      %838 = vrot.lane.b32.xlu0 %v311, 96
      %v839 = vpop.permute.xlu0 %838
      %vm840 = vcmp.lt.s32.totalorder %v337, 96
      %v841 = vsel %vm840, %v837, %v839
      %v842 = vsel %vm840, %v835, %v837
      %v843 = vsel %vm840, %v833, %v835
      %v844 = vsel %vm840, %v831, %v833
      %v845 = vsel %vm840, %v829, %v831
      %v846 = vsel %vm840, %v827, %v829
      %v847 = vsel %vm840, %v825, %v827
      %v848 = vsel %vm840, %v839, %v825
      %s849 = scalar_lea.vmem %s1, 56
      %v850 = vld [vmem:[%s849] sm:$0xff]
      %852 = vset.pattern.permute.xlu0 0
      %853 = vperm.xlu0 %852, %v850
      %v854 = vpop.permute.xlu0 %853
      %v856 = vlaneseq
      %v857 = vshrl.u32 %v856, 7
      %v858 = vsub.s32 0, %v857
      %v859 = vrot.slane %v847, %v858
      %v860 = vlaneseq
      %v861 = vshrl.u32 %v860, 7
      %v862 = vsub.s32 0, %v861
      %v863 = vrot.slane %v846, %v862
      %v864 = vlaneseq
      %v865 = vshrl.u32 %v864, 7
      %v866 = vsub.s32 0, %v865
      %v867 = vrot.slane %v845, %v866
      %v868 = vlaneseq
      %v869 = vshrl.u32 %v868, 7
      %v870 = vsub.s32 0, %v869
      %v871 = vrot.slane %v844, %v870
      %v872 = vlaneseq
      %v873 = vshrl.u32 %v872, 7
      %v874 = vsub.s32 0, %v873
      %v875 = vrot.slane %v843, %v874
      %v876 = vlaneseq
      %v877 = vshrl.u32 %v876, 7
      %v878 = vsub.s32 0, %v877
      %v879 = vrot.slane %v842, %v878
      %v880 = vlaneseq
      %v881 = vshrl.u32 %v880, 7
      %v882 = vsub.s32 0, %v881
      %v883 = vrot.slane %v841, %v882
      %v884 = vlaneseq
      %v885 = vshrl.u32 %v884, 7
      %v886 = vsub.s32 0, %v885
      %v887 = vrot.slane %v848, %v886
      %v888 = vmul.f32 %v854, %v859
      %v889 = vmul.f32 %v854, %v863
      %v890 = vmul.f32 %v854, %v867
      %v891 = vmul.f32 %v854, %v871
      %v892 = vmul.f32 %v854, %v875
      %v893 = vmul.f32 %v854, %v879
      %v894 = vmul.f32 %v854, %v883
      %v895 = vmul.f32 %v854, %v887
      %v896 = vadd.f32 %v816, %v888
      %v897 = vadd.f32 %v817, %v889
      %v898 = vadd.f32 %v818, %v890
      %v899 = vadd.f32 %v819, %v891
      %v900 = vadd.f32 %v820, %v892
      %v901 = vadd.f32 %v821, %v893
      %v902 = vadd.f32 %v822, %v894
      %v903 = vadd.f32 %v823, %v895
      %904 = vrot.lane.b32.xlu0 %v283, 95
      %v905 = vpop.permute.xlu0 %904
      %906 = vrot.lane.b32.xlu0 %v287, 95
      %v907 = vpop.permute.xlu0 %906
      %908 = vrot.lane.b32.xlu0 %v291, 95
      %v909 = vpop.permute.xlu0 %908
      %910 = vrot.lane.b32.xlu0 %v295, 95
      %v911 = vpop.permute.xlu0 %910
      %912 = vrot.lane.b32.xlu0 %v299, 95
      %v913 = vpop.permute.xlu0 %912
      %914 = vrot.lane.b32.xlu0 %v303, 95
      %v915 = vpop.permute.xlu0 %914
      %916 = vrot.lane.b32.xlu0 %v307, 95
      %v917 = vpop.permute.xlu0 %916
      %918 = vrot.lane.b32.xlu0 %v311, 95
      %v919 = vpop.permute.xlu0 %918
      %vm920 = vcmp.lt.s32.totalorder %v337, 95
      %v921 = vsel %vm920, %v917, %v919
      %v922 = vsel %vm920, %v915, %v917
      %v923 = vsel %vm920, %v913, %v915
      %v924 = vsel %vm920, %v911, %v913
      %v925 = vsel %vm920, %v909, %v911
      %v926 = vsel %vm920, %v907, %v909
      %v927 = vsel %vm920, %v905, %v907
      %v928 = vsel %vm920, %v919, %v905
      %s929 = scalar_lea.vmem %s1, 64
      %v930 = vld [vmem:[%s929] sm:$0xff]
      %932 = vset.pattern.permute.xlu0 0
      %933 = vperm.xlu0 %932, %v930
      %v934 = vpop.permute.xlu0 %933
      %v936 = vlaneseq
      %v937 = vshrl.u32 %v936, 7
      %v938 = vsub.s32 0, %v937
      %v939 = vrot.slane %v927, %v938
      %v940 = vlaneseq
      %v941 = vshrl.u32 %v940, 7
      %v942 = vsub.s32 0, %v941
      %v943 = vrot.slane %v926, %v942
      %v944 = vlaneseq
      %v945 = vshrl.u32 %v944, 7
      %v946 = vsub.s32 0, %v945
      %v947 = vrot.slane %v925, %v946
      %v948 = vlaneseq
      %v949 = vshrl.u32 %v948, 7
      %v950 = vsub.s32 0, %v949
      %v951 = vrot.slane %v924, %v950
      %v952 = vlaneseq
      %v953 = vshrl.u32 %v952, 7
      %v954 = vsub.s32 0, %v953
      %v955 = vrot.slane %v923, %v954
      %v956 = vlaneseq
      %v957 = vshrl.u32 %v956, 7
      %v958 = vsub.s32 0, %v957
      %v959 = vrot.slane %v922, %v958
      %v960 = vlaneseq
      %v961 = vshrl.u32 %v960, 7
      %v962 = vsub.s32 0, %v961
      %v963 = vrot.slane %v921, %v962
      %v964 = vlaneseq
      %v965 = vshrl.u32 %v964, 7
      %v966 = vsub.s32 0, %v965
      %v967 = vrot.slane %v928, %v966
      %v968 = vmul.f32 %v934, %v939
      %v969 = vmul.f32 %v934, %v943
      %v970 = vmul.f32 %v934, %v947
      %v971 = vmul.f32 %v934, %v951
      %v972 = vmul.f32 %v934, %v955
      %v973 = vmul.f32 %v934, %v959
      %v974 = vmul.f32 %v934, %v963
      %v975 = vmul.f32 %v934, %v967
      %v976 = vadd.f32 %v896, %v968
      %v977 = vadd.f32 %v897, %v969
      %v978 = vadd.f32 %v898, %v970
      %v979 = vadd.f32 %v899, %v971
      %v980 = vadd.f32 %v900, %v972
      %v981 = vadd.f32 %v901, %v973
      %v982 = vadd.f32 %v902, %v974
      %v983 = vadd.f32 %v903, %v975
      %v984 = vld [vmem:[%s2] sm:$0xff]
      %986 = vset.pattern.permute.xlu0 0
      %987 = vperm.xlu0 %986, %v984
      %v988 = vpop.permute.xlu0 %987
      %v990 = vadd.f32 %v976, %v988
      %v991 = vadd.f32 %v977, %v988
      %v992 = vadd.f32 %v978, %v988
      %v993 = vadd.f32 %v979, %v988
      %v994 = vadd.f32 %v980, %v988
      %v995 = vadd.f32 %v981, %v988
      %v996 = vadd.f32 %v982, %v988
      %v997 = vadd.f32 %v983, %v988
      %v998 = vmax.f32 %v990, 0.0
      %v999 = vmax.f32 %v991, 0.0
      %v1000 = vmax.f32 %v992, 0.0
      %v1001 = vmax.f32 %v993, 0.0
      %v1002 = vmax.f32 %v994, 0.0
      %v1003 = vmax.f32 %v995, 0.0
      %v1004 = vmax.f32 %v996, 0.0
      %v1005 = vmax.f32 %v997, 0.0
      %v1007 = vlaneseq
      %v1008 = vshrl.u32 %v1007, 7
      %v1009 = vsub.s32 0, %v1008
      %v1010 = vrot.slane %v277, %v1009
      %v1011 = vlaneseq
      %v1012 = vshrl.u32 %v1011, 7
      %v1013 = vsub.s32 1, %v1012
      %v1014 = vrot.slane %v277, %v1013
      %v1015 = vlaneseq
      %v1016 = vshrl.u32 %v1015, 7
      %v1017 = vsub.s32 2, %v1016
      %v1018 = vrot.slane %v277, %v1017
      %v1019 = vlaneseq
      %v1020 = vshrl.u32 %v1019, 7
      %v1021 = vsub.s32 3, %v1020
      %v1022 = vrot.slane %v277, %v1021
      %v1023 = vlaneseq
      %v1024 = vshrl.u32 %v1023, 7
      %v1025 = vsub.s32 4, %v1024
      %v1026 = vrot.slane %v277, %v1025
      %v1027 = vlaneseq
      %v1028 = vshrl.u32 %v1027, 7
      %v1029 = vsub.s32 5, %v1028
      %v1030 = vrot.slane %v277, %v1029
      %v1031 = vlaneseq
      %v1032 = vshrl.u32 %v1031, 7
      %v1033 = vsub.s32 6, %v1032
      %v1034 = vrot.slane %v277, %v1033
      %v1035 = vlaneseq
      %v1036 = vshrl.u32 %v1035, 7
      %v1037 = vsub.s32 7, %v1036
      %v1038 = vrot.slane %v277, %v1037
      %v1047 = vmul.f32 %v998, %v1010
      %v1048 = vmul.f32 %v999, %v1014
      %v1049 = vmul.f32 %v1000, %v1018
      %v1050 = vmul.f32 %v1001, %v1022
      %v1051 = vmul.f32 %v1002, %v1026
      %v1052 = vmul.f32 %v1003, %v1030
      %v1053 = vmul.f32 %v1004, %v1034
      %v1054 = vmul.f32 %v1005, %v1038
      %1055 = vrot.lane.b32.xlu0 %v1047, 33
      %v1056 = vpop.permute.xlu0 %1055
      %1057 = vrot.lane.b32.xlu0 %v1048, 33
      %v1058 = vpop.permute.xlu0 %1057
      %1059 = vrot.lane.b32.xlu0 %v1049, 33
      %v1060 = vpop.permute.xlu0 %1059
      %1061 = vrot.lane.b32.xlu0 %v1050, 33
      %v1062 = vpop.permute.xlu0 %1061
      %1063 = vrot.lane.b32.xlu0 %v1051, 33
      %v1064 = vpop.permute.xlu0 %1063
      %1065 = vrot.lane.b32.xlu0 %v1052, 33
      %v1066 = vpop.permute.xlu0 %1065
      %1067 = vrot.lane.b32.xlu0 %v1053, 33
      %v1068 = vpop.permute.xlu0 %1067
      %1069 = vrot.lane.b32.xlu0 %v1054, 33
      %v1070 = vpop.permute.xlu0 %1069
      %v1071 = vsel %vm338, %v1068, %v1070
      %v1072 = vsel %vm338, %v1066, %v1068
      %v1073 = vsel %vm338, %v1064, %v1066
      %v1074 = vsel %vm338, %v1062, %v1064
      %v1075 = vsel %vm338, %v1060, %v1062
      %v1076 = vsel %vm338, %v1058, %v1060
      %v1077 = vsel %vm338, %v1056, %v1058
      %v1078 = vsel %vm338, %v1070, %v1056
      %v1079 = vld [vmem:[%s3] sm:$0xff]
      %v1080 = vpack.c.bf16 %v1079, %v1079
      %v1081 = vpack.c.bf16 %v1078, %v1078
      %v1082 = vpack.c.bf16 %v1077, %v1077
      %v1083 = vpack.c.bf16 %v1076, %v1076
      %v1084 = vpack.c.bf16 %v1075, %v1075
      %v1085 = vpack.c.bf16 %v1074, %v1074
      %v1086 = vpack.c.bf16 %v1073, %v1073
      %v1087 = vpack.c.bf16 %v1072, %v1072
      %v1088 = vpack.c.bf16 %v1071, %v1071
      %1089 = vrot.lane.b32.xlu0 %v1047, 32
      %v1090 = vpop.permute.xlu0 %1089
      %1091 = vrot.lane.b32.xlu0 %v1048, 32
      %v1092 = vpop.permute.xlu0 %1091
      %1093 = vrot.lane.b32.xlu0 %v1049, 32
      %v1094 = vpop.permute.xlu0 %1093
      %1095 = vrot.lane.b32.xlu0 %v1050, 32
      %v1096 = vpop.permute.xlu0 %1095
      %1097 = vrot.lane.b32.xlu0 %v1051, 32
      %v1098 = vpop.permute.xlu0 %1097
      %1099 = vrot.lane.b32.xlu0 %v1052, 32
      %v1100 = vpop.permute.xlu0 %1099
      %1101 = vrot.lane.b32.xlu0 %v1053, 32
      %v1102 = vpop.permute.xlu0 %1101
      %1103 = vrot.lane.b32.xlu0 %v1054, 32
      %v1104 = vpop.permute.xlu0 %1103
      %v1105 = vsel %vm417, %v1102, %v1104
      %v1106 = vsel %vm417, %v1100, %v1102
      %v1107 = vsel %vm417, %v1098, %v1100
      %v1108 = vsel %vm417, %v1096, %v1098
      %v1109 = vsel %vm417, %v1094, %v1096
      %v1110 = vsel %vm417, %v1092, %v1094
      %v1111 = vsel %vm417, %v1090, %v1092
      %v1112 = vsel %vm417, %v1104, %v1090
      %s1113 = scalar_lea.vmem %s3, 8
      %v1114 = vld [vmem:[%s1113] sm:$0xff]
      %v1115 = vpack.c.bf16 %v1114, %v1114
      %v1116 = vpack.c.bf16 %v1112, %v1112
      %v1117 = vpack.c.bf16 %v1111, %v1111
      %v1118 = vpack.c.bf16 %v1110, %v1110
      %v1119 = vpack.c.bf16 %v1109, %v1109
      %v1120 = vpack.c.bf16 %v1108, %v1108
      %v1121 = vpack.c.bf16 %v1107, %v1107
      %v1122 = vpack.c.bf16 %v1106, %v1106
      %v1123 = vpack.c.bf16 %v1105, %v1105
      %vm1124 = vcmask 64512
      %v1126 = vsel %vm1124, %v1115, 0
      %vm1128 = vcmask 1043456
      %v1130 = vsel %vm1128, %v1116, 0
      %v1133 = vsel %vm1128, %v1117, 0
      %v1136 = vsel %vm1128, %v1118, 0
      %v1139 = vsel %vm1128, %v1119, 0
      %v1142 = vsel %vm1128, %v1120, 0
      %v1145 = vsel %vm1128, %v1121, 0
      %v1148 = vsel %vm1128, %v1122, 0
      %v1151 = vsel %vm1128, %v1123, 0
      %1153 = vmatprep.subr.bf16.mxu0 %v1133
      %1154 = vmatpush1.bf16.msra.mxu0 %v1130
      %1155 = vmatprep.subr.bf16.mxu0 0
      %1156 = vmatpush1.bf16.msra.mxu0 0
      %1157 = vmatprep.subr.bf16.mxu0 0
      %1158 = vmatpush1.bf16.msra.mxu0 0
      %1159 = vmatprep.subr.bf16.mxu0 0
      %1160 = vmatpush1.bf16.msra.mxu0 0
      %1161 = vmatprep.subr.bf16.mxu0 0
      %1162 = vmatpush1.bf16.msra.mxu0 0
      %1163 = vmatprep.subr.bf16.mxu0 0
      %1164 = vmatpush1.bf16.msra.mxu0 0
      %1165 = vmatprep.subr.bf16.mxu0 0
      %1166 = vmatpush1.bf16.msra.mxu0 0
      %1167 = vmatprep.subr.bf16.mxu0 0
      %1168 = vmatpush1.bf16.msra.mxu0 0
      %1169 = vmatprep.subr.bf16.mxu0 0
      %1170 = vmatpush1.bf16.msra.mxu0 0
      %1171 = vmatprep.subr.bf16.mxu0 0
      %1172 = vmatpush1.bf16.msra.mxu0 0
      %1173 = vmatprep.subr.bf16.mxu0 0
      %1174 = vmatpush1.bf16.msra.mxu0 0
      %1175 = vmatprep.subr.bf16.mxu0 0
      %1176 = vmatpush1.bf16.msra.mxu0 0
      %1177 = vmatprep.subr.bf16.mxu0 0
      %1178 = vmatpush1.bf16.msra.mxu0 0
      %1179 = vmatprep.subr.bf16.mxu0 0
      %1180 = vmatpush1.bf16.msra.mxu0 0
      %1181 = vmatprep.subr.bf16.mxu0 0
      %1182 = vmatpush1.bf16.msra.mxu0 0
      %1183 = vmatprep.subr.bf16.mxu0 0
      %1184 = vmatpush1.bf16.msra.mxu0 0
      %1185 = vmatprep.mubr.bf16.mxu0 0
      %1186 = vmatmul.mubr.bf16.gmra.mrb[0].mxu0 %v1126
      %v1187 = vpop.f32.mrb[0].mxu0
      %v1188 = vadd.f32 0.0, %v1187
      %v1189 = vpop.f32.mrb[0].mxu0
      %v1190 = vadd.f32 0.0, %v1189
      %v1191 = vpop.f32.mrb[0].mxu0
      %v1192 = vpop.f32.mrb[0].mxu0
      %1193 = vdwg.mxu0
      %1194 = vmatprep.subr.bf16.mxu0 %v1139
      %1195 = vmatpush1.bf16.msra.mxu0 %v1136
      %1196 = vmatprep.subr.bf16.mxu0 0
      %1197 = vmatpush1.bf16.msra.mxu0 0
      %1198 = vmatprep.subr.bf16.mxu0 0
      %1199 = vmatpush1.bf16.msra.mxu0 0
      %1200 = vmatprep.subr.bf16.mxu0 0
      %1201 = vmatpush1.bf16.msra.mxu0 0
      %1202 = vmatprep.subr.bf16.mxu0 0
      %1203 = vmatpush1.bf16.msra.mxu0 0
      %1204 = vmatprep.subr.bf16.mxu0 0
      %1205 = vmatpush1.bf16.msra.mxu0 0
      %1206 = vmatprep.subr.bf16.mxu0 0
      %1207 = vmatpush1.bf16.msra.mxu0 0
      %1208 = vmatprep.subr.bf16.mxu0 0
      %1209 = vmatpush1.bf16.msra.mxu0 0
      %1210 = vmatprep.subr.bf16.mxu0 0
      %1211 = vmatpush1.bf16.msra.mxu0 0
      %1212 = vmatprep.subr.bf16.mxu0 0
      %1213 = vmatpush1.bf16.msra.mxu0 0
      %1214 = vmatprep.subr.bf16.mxu0 0
      %1215 = vmatpush1.bf16.msra.mxu0 0
      %1216 = vmatprep.subr.bf16.mxu0 0
      %1217 = vmatpush1.bf16.msra.mxu0 0
      %1218 = vmatprep.subr.bf16.mxu0 0
      %1219 = vmatpush1.bf16.msra.mxu0 0
      %1220 = vmatprep.subr.bf16.mxu0 0
      %1221 = vmatpush1.bf16.msra.mxu0 0
      %1222 = vmatprep.subr.bf16.mxu0 0
      %1223 = vmatpush1.bf16.msra.mxu0 0
      %1224 = vmatprep.subr.bf16.mxu0 0
      %1225 = vmatpush1.bf16.msra.mxu0 0
      %1226 = vmatprep.mubr.bf16.mxu0 0
      %1227 = vmatmul.mubr.bf16.gmra.mrb[0].mxu0 %v1126
      %v1228 = vpop.f32.mrb[0].mxu0
      %v1229 = vadd.f32 0.0, %v1228
      %v1230 = vpop.f32.mrb[0].mxu0
      %v1231 = vadd.f32 0.0, %v1230
      %v1232 = vpop.f32.mrb[0].mxu0
      %v1233 = vpop.f32.mrb[0].mxu0
      %1234 = vdwg.mxu0
      %1235 = vmatprep.subr.bf16.mxu0 %v1145
      %1236 = vmatpush1.bf16.msra.mxu0 %v1142
      %1237 = vmatprep.subr.bf16.mxu0 0
      %1238 = vmatpush1.bf16.msra.mxu0 0
      %1239 = vmatprep.subr.bf16.mxu0 0
      %1240 = vmatpush1.bf16.msra.mxu0 0
      %1241 = vmatprep.subr.bf16.mxu0 0
      %1242 = vmatpush1.bf16.msra.mxu0 0
      %1243 = vmatprep.subr.bf16.mxu0 0
      %1244 = vmatpush1.bf16.msra.mxu0 0
      %1245 = vmatprep.subr.bf16.mxu0 0
      %1246 = vmatpush1.bf16.msra.mxu0 0
      %1247 = vmatprep.subr.bf16.mxu0 0
      %1248 = vmatpush1.bf16.msra.mxu0 0
      %1249 = vmatprep.subr.bf16.mxu0 0
      %1250 = vmatpush1.bf16.msra.mxu0 0
      %1251 = vmatprep.subr.bf16.mxu0 0
      %1252 = vmatpush1.bf16.msra.mxu0 0
      %1253 = vmatprep.subr.bf16.mxu0 0
      %1254 = vmatpush1.bf16.msra.mxu0 0
      %1255 = vmatprep.subr.bf16.mxu0 0
      %1256 = vmatpush1.bf16.msra.mxu0 0
      %1257 = vmatprep.subr.bf16.mxu0 0
      %1258 = vmatpush1.bf16.msra.mxu0 0
      %1259 = vmatprep.subr.bf16.mxu0 0
      %1260 = vmatpush1.bf16.msra.mxu0 0
      %1261 = vmatprep.subr.bf16.mxu0 0
      %1262 = vmatpush1.bf16.msra.mxu0 0
      %1263 = vmatprep.subr.bf16.mxu0 0
      %1264 = vmatpush1.bf16.msra.mxu0 0
      %1265 = vmatprep.subr.bf16.mxu0 0
      %1266 = vmatpush1.bf16.msra.mxu0 0
      %1267 = vmatprep.mubr.bf16.mxu0 0
      %1268 = vmatmul.mubr.bf16.gmra.mrb[0].mxu0 %v1126
      %v1269 = vpop.f32.mrb[0].mxu0
      %v1270 = vadd.f32 0.0, %v1269
      %v1271 = vpop.f32.mrb[0].mxu0
      %v1272 = vadd.f32 0.0, %v1271
      %v1273 = vpop.f32.mrb[0].mxu0
      %v1274 = vpop.f32.mrb[0].mxu0
      %1275 = vdwg.mxu0
      %1276 = vmatprep.subr.bf16.mxu0 %v1151
      %1277 = vmatpush1.bf16.msra.mxu0 %v1148
      %1278 = vmatprep.subr.bf16.mxu0 0
      %1279 = vmatpush1.bf16.msra.mxu0 0
      %1280 = vmatprep.subr.bf16.mxu0 0
      %1281 = vmatpush1.bf16.msra.mxu0 0
      %1282 = vmatprep.subr.bf16.mxu0 0
      %1283 = vmatpush1.bf16.msra.mxu0 0
      %1284 = vmatprep.subr.bf16.mxu0 0
      %1285 = vmatpush1.bf16.msra.mxu0 0
      %1286 = vmatprep.subr.bf16.mxu0 0
      %1287 = vmatpush1.bf16.msra.mxu0 0
      %1288 = vmatprep.subr.bf16.mxu0 0
      %1289 = vmatpush1.bf16.msra.mxu0 0
      %1290 = vmatprep.subr.bf16.mxu0 0
      %1291 = vmatpush1.bf16.msra.mxu0 0
      %1292 = vmatprep.subr.bf16.mxu0 0
      %1293 = vmatpush1.bf16.msra.mxu0 0
      %1294 = vmatprep.subr.bf16.mxu0 0
      %1295 = vmatpush1.bf16.msra.mxu0 0
      %1296 = vmatprep.subr.bf16.mxu0 0
      %1297 = vmatpush1.bf16.msra.mxu0 0
      %1298 = vmatprep.subr.bf16.mxu0 0
      %1299 = vmatpush1.bf16.msra.mxu0 0
      %1300 = vmatprep.subr.bf16.mxu0 0
      %1301 = vmatpush1.bf16.msra.mxu0 0
      %1302 = vmatprep.subr.bf16.mxu0 0
      %1303 = vmatpush1.bf16.msra.mxu0 0
      %1304 = vmatprep.subr.bf16.mxu0 0
      %1305 = vmatpush1.bf16.msra.mxu0 0
      %1306 = vmatprep.subr.bf16.mxu0 0
      %1307 = vmatpush1.bf16.msra.mxu0 0
      %1308 = vmatprep.mubr.bf16.mxu0 0
      %1309 = vmatmul.mubr.bf16.gmra.mrb[0].mxu0 %v1126
      %v1310 = vpop.f32.mrb[0].mxu0
      %v1311 = vadd.f32 0.0, %v1310
      %v1312 = vpop.f32.mrb[0].mxu0
      %v1313 = vadd.f32 0.0, %v1312
      %v1314 = vpop.f32.mrb[0].mxu0
      %v1315 = vpop.f32.mrb[0].mxu0
      %1316 = vdwg.mxu0
      %v1318 = vsel %vm1124, %v1080, 0
      %v1321 = vsel %vm1128, %v1081, 0
      %v1324 = vsel %vm1128, %v1082, 0
      %v1327 = vsel %vm1128, %v1083, 0
      %v1330 = vsel %vm1128, %v1084, 0
      %v1333 = vsel %vm1128, %v1085, 0
      %v1336 = vsel %vm1128, %v1086, 0
      %v1339 = vsel %vm1128, %v1087, 0
      %v1342 = vsel %vm1128, %v1088, 0
      %1344 = vmatprep.subr.bf16.mxu0 %v1324
      %1345 = vmatpush1.bf16.msra.mxu0 %v1321
      %1346 = vmatprep.subr.bf16.mxu0 0
      %1347 = vmatpush1.bf16.msra.mxu0 0
      %1348 = vmatprep.subr.bf16.mxu0 0
      %1349 = vmatpush1.bf16.msra.mxu0 0
      %1350 = vmatprep.subr.bf16.mxu0 0
      %1351 = vmatpush1.bf16.msra.mxu0 0
      %1352 = vmatprep.subr.bf16.mxu0 0
      %1353 = vmatpush1.bf16.msra.mxu0 0
      %1354 = vmatprep.subr.bf16.mxu0 0
      %1355 = vmatpush1.bf16.msra.mxu0 0
      %1356 = vmatprep.subr.bf16.mxu0 0
      %1357 = vmatpush1.bf16.msra.mxu0 0
      %1358 = vmatprep.subr.bf16.mxu0 0
      %1359 = vmatpush1.bf16.msra.mxu0 0
      %1360 = vmatprep.subr.bf16.mxu0 0
      %1361 = vmatpush1.bf16.msra.mxu0 0
      %1362 = vmatprep.subr.bf16.mxu0 0
      %1363 = vmatpush1.bf16.msra.mxu0 0
      %1364 = vmatprep.subr.bf16.mxu0 0
      %1365 = vmatpush1.bf16.msra.mxu0 0
      %1366 = vmatprep.subr.bf16.mxu0 0
      %1367 = vmatpush1.bf16.msra.mxu0 0
      %1368 = vmatprep.subr.bf16.mxu0 0
      %1369 = vmatpush1.bf16.msra.mxu0 0
      %1370 = vmatprep.subr.bf16.mxu0 0
      %1371 = vmatpush1.bf16.msra.mxu0 0
      %1372 = vmatprep.subr.bf16.mxu0 0
      %1373 = vmatpush1.bf16.msra.mxu0 0
      %1374 = vmatprep.subr.bf16.mxu0 0
      %1375 = vmatpush1.bf16.msra.mxu0 0
      %1376 = vmatprep.mubr.bf16.mxu0 0
      %1377 = vmatmul.mubr.bf16.gmra.mrb[0].mxu0 %v1318
      %v1378 = vpop.f32.mrb[0].mxu0
      %v1379 = vadd.f32 %v1188, %v1378
      %v1380 = vpop.f32.mrb[0].mxu0
      %v1381 = vadd.f32 %v1190, %v1380
      %v1382 = vpop.f32.mrb[0].mxu0
      %v1383 = vpop.f32.mrb[0].mxu0
      %1384 = vdwg.mxu0
      %1385 = vmatprep.subr.bf16.mxu0 %v1330
      %1386 = vmatpush1.bf16.msra.mxu0 %v1327
      %1387 = vmatprep.subr.bf16.mxu0 0
      %1388 = vmatpush1.bf16.msra.mxu0 0
      %1389 = vmatprep.subr.bf16.mxu0 0
      %1390 = vmatpush1.bf16.msra.mxu0 0
      %1391 = vmatprep.subr.bf16.mxu0 0
      %1392 = vmatpush1.bf16.msra.mxu0 0
      %1393 = vmatprep.subr.bf16.mxu0 0
      %1394 = vmatpush1.bf16.msra.mxu0 0
      %1395 = vmatprep.subr.bf16.mxu0 0
      %1396 = vmatpush1.bf16.msra.mxu0 0
      %1397 = vmatprep.subr.bf16.mxu0 0
      %1398 = vmatpush1.bf16.msra.mxu0 0
      %1399 = vmatprep.subr.bf16.mxu0 0
      %1400 = vmatpush1.bf16.msra.mxu0 0
      %1401 = vmatprep.subr.bf16.mxu0 0
      %1402 = vmatpush1.bf16.msra.mxu0 0
      %1403 = vmatprep.subr.bf16.mxu0 0
      %1404 = vmatpush1.bf16.msra.mxu0 0
      %1405 = vmatprep.subr.bf16.mxu0 0
      %1406 = vmatpush1.bf16.msra.mxu0 0
      %1407 = vmatprep.subr.bf16.mxu0 0
      %1408 = vmatpush1.bf16.msra.mxu0 0
      %1409 = vmatprep.subr.bf16.mxu0 0
      %1410 = vmatpush1.bf16.msra.mxu0 0
      %1411 = vmatprep.subr.bf16.mxu0 0
      %1412 = vmatpush1.bf16.msra.mxu0 0
      %1413 = vmatprep.subr.bf16.mxu0 0
      %1414 = vmatpush1.bf16.msra.mxu0 0
      %1415 = vmatprep.subr.bf16.mxu0 0
      %1416 = vmatpush1.bf16.msra.mxu0 0
      %1417 = vmatprep.mubr.bf16.mxu0 0
      %1418 = vmatmul.mubr.bf16.gmra.mrb[0].mxu0 %v1318
      %v1419 = vpop.f32.mrb[0].mxu0
      %v1420 = vadd.f32 %v1229, %v1419
      %v1421 = vpop.f32.mrb[0].mxu0
      %v1422 = vadd.f32 %v1231, %v1421
      %v1423 = vpop.f32.mrb[0].mxu0
      %v1424 = vpop.f32.mrb[0].mxu0
      %1425 = vdwg.mxu0
      %1426 = vmatprep.subr.bf16.mxu0 %v1336
      %1427 = vmatpush1.bf16.msra.mxu0 %v1333
      %1428 = vmatprep.subr.bf16.mxu0 0
      %1429 = vmatpush1.bf16.msra.mxu0 0
      %1430 = vmatprep.subr.bf16.mxu0 0
      %1431 = vmatpush1.bf16.msra.mxu0 0
      %1432 = vmatprep.subr.bf16.mxu0 0
      %1433 = vmatpush1.bf16.msra.mxu0 0
      %1434 = vmatprep.subr.bf16.mxu0 0
      %1435 = vmatpush1.bf16.msra.mxu0 0
      %1436 = vmatprep.subr.bf16.mxu0 0
      %1437 = vmatpush1.bf16.msra.mxu0 0
      %1438 = vmatprep.subr.bf16.mxu0 0
      %1439 = vmatpush1.bf16.msra.mxu0 0
      %1440 = vmatprep.subr.bf16.mxu0 0
      %1441 = vmatpush1.bf16.msra.mxu0 0
      %1442 = vmatprep.subr.bf16.mxu0 0
      %1443 = vmatpush1.bf16.msra.mxu0 0
      %1444 = vmatprep.subr.bf16.mxu0 0
      %1445 = vmatpush1.bf16.msra.mxu0 0
      %1446 = vmatprep.subr.bf16.mxu0 0
      %1447 = vmatpush1.bf16.msra.mxu0 0
      %1448 = vmatprep.subr.bf16.mxu0 0
      %1449 = vmatpush1.bf16.msra.mxu0 0
      %1450 = vmatprep.subr.bf16.mxu0 0
      %1451 = vmatpush1.bf16.msra.mxu0 0
      %1452 = vmatprep.subr.bf16.mxu0 0
      %1453 = vmatpush1.bf16.msra.mxu0 0
      %1454 = vmatprep.subr.bf16.mxu0 0
      %1455 = vmatpush1.bf16.msra.mxu0 0
      %1456 = vmatprep.subr.bf16.mxu0 0
      %1457 = vmatpush1.bf16.msra.mxu0 0
      %1458 = vmatprep.mubr.bf16.mxu0 0
      %1459 = vmatmul.mubr.bf16.gmra.mrb[0].mxu0 %v1318
      %v1460 = vpop.f32.mrb[0].mxu0
      %v1461 = vadd.f32 %v1270, %v1460
      %v1462 = vpop.f32.mrb[0].mxu0
      %v1463 = vadd.f32 %v1272, %v1462
      %v1464 = vpop.f32.mrb[0].mxu0
      %v1465 = vpop.f32.mrb[0].mxu0
      %1466 = vdwg.mxu0
      %1467 = vmatprep.subr.bf16.mxu0 %v1342
      %1468 = vmatpush1.bf16.msra.mxu0 %v1339
      %1469 = vmatprep.subr.bf16.mxu0 0
      %1470 = vmatpush1.bf16.msra.mxu0 0
      %1471 = vmatprep.subr.bf16.mxu0 0
      %1472 = vmatpush1.bf16.msra.mxu0 0
      %1473 = vmatprep.subr.bf16.mxu0 0
      %1474 = vmatpush1.bf16.msra.mxu0 0
      %1475 = vmatprep.subr.bf16.mxu0 0
      %1476 = vmatpush1.bf16.msra.mxu0 0
      %1477 = vmatprep.subr.bf16.mxu0 0
      %1478 = vmatpush1.bf16.msra.mxu0 0
      %1479 = vmatprep.subr.bf16.mxu0 0
      %1480 = vmatpush1.bf16.msra.mxu0 0
      %1481 = vmatprep.subr.bf16.mxu0 0
      %1482 = vmatpush1.bf16.msra.mxu0 0
      %1483 = vmatprep.subr.bf16.mxu0 0
      %1484 = vmatpush1.bf16.msra.mxu0 0
      %1485 = vmatprep.subr.bf16.mxu0 0
      %1486 = vmatpush1.bf16.msra.mxu0 0
      %1487 = vmatprep.subr.bf16.mxu0 0
      %1488 = vmatpush1.bf16.msra.mxu0 0
      %1489 = vmatprep.subr.bf16.mxu0 0
      %1490 = vmatpush1.bf16.msra.mxu0 0
      %1491 = vmatprep.subr.bf16.mxu0 0
      %1492 = vmatpush1.bf16.msra.mxu0 0
      %1493 = vmatprep.subr.bf16.mxu0 0
      %1494 = vmatpush1.bf16.msra.mxu0 0
      %1495 = vmatprep.subr.bf16.mxu0 0
      %1496 = vmatpush1.bf16.msra.mxu0 0
      %1497 = vmatprep.subr.bf16.mxu0 0
      %1498 = vmatpush1.bf16.msra.mxu0 0
      %1499 = vmatprep.mubr.bf16.mxu0 0
      %1500 = vmatmul.mubr.bf16.gmra.mrb[0].mxu0 %v1318
      %v1501 = vpop.f32.mrb[0].mxu0
      %v1502 = vadd.f32 %v1311, %v1501
      %v1503 = vpop.f32.mrb[0].mxu0
      %v1504 = vadd.f32 %v1313, %v1503
      %v1505 = vpop.f32.mrb[0].mxu0
      %v1506 = vpop.f32.mrb[0].mxu0
      %1507 = vdwg.mxu0
      %1508 = vrot.lane.b32.xlu0 %v1047, 31
      %v1509 = vpop.permute.xlu0 %1508
      %1510 = vrot.lane.b32.xlu0 %v1048, 31
      %v1511 = vpop.permute.xlu0 %1510
      %1512 = vrot.lane.b32.xlu0 %v1049, 31
      %v1513 = vpop.permute.xlu0 %1512
      %1514 = vrot.lane.b32.xlu0 %v1050, 31
      %v1515 = vpop.permute.xlu0 %1514
      %1516 = vrot.lane.b32.xlu0 %v1051, 31
      %v1517 = vpop.permute.xlu0 %1516
      %1518 = vrot.lane.b32.xlu0 %v1052, 31
      %v1519 = vpop.permute.xlu0 %1518
      %1520 = vrot.lane.b32.xlu0 %v1053, 31
      %v1521 = vpop.permute.xlu0 %1520
      %1522 = vrot.lane.b32.xlu0 %v1054, 31
      %v1523 = vpop.permute.xlu0 %1522
      %v1524 = vsel %vm497, %v1521, %v1523
      %v1525 = vsel %vm497, %v1519, %v1521
      %v1526 = vsel %vm497, %v1517, %v1519
      %v1527 = vsel %vm497, %v1515, %v1517
      %v1528 = vsel %vm497, %v1513, %v1515
      %v1529 = vsel %vm497, %v1511, %v1513
      %v1530 = vsel %vm497, %v1509, %v1511
      %v1531 = vsel %vm497, %v1523, %v1509
      %s1532 = scalar_lea.vmem %s3, 16
      %v1533 = vld [vmem:[%s1532] sm:$0xff]
      %v1534 = vpack.c.bf16 %v1533, %v1533
      %v1535 = vpack.c.bf16 %v1531, %v1531
      %v1536 = vpack.c.bf16 %v1530, %v1530
      %v1537 = vpack.c.bf16 %v1529, %v1529
      %v1538 = vpack.c.bf16 %v1528, %v1528
      %v1539 = vpack.c.bf16 %v1527, %v1527
      %v1540 = vpack.c.bf16 %v1526, %v1526
      %v1541 = vpack.c.bf16 %v1525, %v1525
      %v1542 = vpack.c.bf16 %v1524, %v1524
      %v1544 = vsel %vm1124, %v1534, 0
      %v1547 = vsel %vm1128, %v1535, 0
      %v1550 = vsel %vm1128, %v1536, 0
      %v1553 = vsel %vm1128, %v1537, 0
      %v1556 = vsel %vm1128, %v1538, 0
      %v1559 = vsel %vm1128, %v1539, 0
      %v1562 = vsel %vm1128, %v1540, 0
      %v1565 = vsel %vm1128, %v1541, 0
      %v1568 = vsel %vm1128, %v1542, 0
      %1570 = vmatprep.subr.bf16.mxu0 %v1550
      %1571 = vmatpush1.bf16.msra.mxu0 %v1547
      %1572 = vmatprep.subr.bf16.mxu0 0
      %1573 = vmatpush1.bf16.msra.mxu0 0
      %1574 = vmatprep.subr.bf16.mxu0 0
      %1575 = vmatpush1.bf16.msra.mxu0 0
      %1576 = vmatprep.subr.bf16.mxu0 0
      %1577 = vmatpush1.bf16.msra.mxu0 0
      %1578 = vmatprep.subr.bf16.mxu0 0
      %1579 = vmatpush1.bf16.msra.mxu0 0
      %1580 = vmatprep.subr.bf16.mxu0 0
      %1581 = vmatpush1.bf16.msra.mxu0 0
      %1582 = vmatprep.subr.bf16.mxu0 0
      %1583 = vmatpush1.bf16.msra.mxu0 0
      %1584 = vmatprep.subr.bf16.mxu0 0
      %1585 = vmatpush1.bf16.msra.mxu0 0
      %1586 = vmatprep.subr.bf16.mxu0 0
      %1587 = vmatpush1.bf16.msra.mxu0 0
      %1588 = vmatprep.subr.bf16.mxu0 0
      %1589 = vmatpush1.bf16.msra.mxu0 0
      %1590 = vmatprep.subr.bf16.mxu0 0
      %1591 = vmatpush1.bf16.msra.mxu0 0
      %1592 = vmatprep.subr.bf16.mxu0 0
      %1593 = vmatpush1.bf16.msra.mxu0 0
      %1594 = vmatprep.subr.bf16.mxu0 0
      %1595 = vmatpush1.bf16.msra.mxu0 0
      %1596 = vmatprep.subr.bf16.mxu0 0
      %1597 = vmatpush1.bf16.msra.mxu0 0
      %1598 = vmatprep.subr.bf16.mxu0 0
      %1599 = vmatpush1.bf16.msra.mxu0 0
      %1600 = vmatprep.subr.bf16.mxu0 0
      %1601 = vmatpush1.bf16.msra.mxu0 0
      %1602 = vmatprep.mubr.bf16.mxu0 0
      %1603 = vmatmul.mubr.bf16.gmra.mrb[0].mxu0 %v1544
      %v1604 = vpop.f32.mrb[0].mxu0
      %v1605 = vadd.f32 0.0, %v1604
      %v1606 = vpop.f32.mrb[0].mxu0
      %v1607 = vadd.f32 0.0, %v1606
      %v1608 = vpop.f32.mrb[0].mxu0
      %v1609 = vpop.f32.mrb[0].mxu0
      %1610 = vdwg.mxu0
      %1611 = vmatprep.subr.bf16.mxu0 %v1556
      %1612 = vmatpush1.bf16.msra.mxu0 %v1553
      %1613 = vmatprep.subr.bf16.mxu0 0
      %1614 = vmatpush1.bf16.msra.mxu0 0
      %1615 = vmatprep.subr.bf16.mxu0 0
      %1616 = vmatpush1.bf16.msra.mxu0 0
      %1617 = vmatprep.subr.bf16.mxu0 0
      %1618 = vmatpush1.bf16.msra.mxu0 0
      %1619 = vmatprep.subr.bf16.mxu0 0
      %1620 = vmatpush1.bf16.msra.mxu0 0
      %1621 = vmatprep.subr.bf16.mxu0 0
      %1622 = vmatpush1.bf16.msra.mxu0 0
      %1623 = vmatprep.subr.bf16.mxu0 0
      %1624 = vmatpush1.bf16.msra.mxu0 0
      %1625 = vmatprep.subr.bf16.mxu0 0
      %1626 = vmatpush1.bf16.msra.mxu0 0
      %1627 = vmatprep.subr.bf16.mxu0 0
      %1628 = vmatpush1.bf16.msra.mxu0 0
      %1629 = vmatprep.subr.bf16.mxu0 0
      %1630 = vmatpush1.bf16.msra.mxu0 0
      %1631 = vmatprep.subr.bf16.mxu0 0
      %1632 = vmatpush1.bf16.msra.mxu0 0
      %1633 = vmatprep.subr.bf16.mxu0 0
      %1634 = vmatpush1.bf16.msra.mxu0 0
      %1635 = vmatprep.subr.bf16.mxu0 0
      %1636 = vmatpush1.bf16.msra.mxu0 0
      %1637 = vmatprep.subr.bf16.mxu0 0
      %1638 = vmatpush1.bf16.msra.mxu0 0
      %1639 = vmatprep.subr.bf16.mxu0 0
      %1640 = vmatpush1.bf16.msra.mxu0 0
      %1641 = vmatprep.subr.bf16.mxu0 0
      %1642 = vmatpush1.bf16.msra.mxu0 0
      %1643 = vmatprep.mubr.bf16.mxu0 0
      %1644 = vmatmul.mubr.bf16.gmra.mrb[0].mxu0 %v1544
      %v1645 = vpop.f32.mrb[0].mxu0
      %v1646 = vadd.f32 0.0, %v1645
      %v1647 = vpop.f32.mrb[0].mxu0
      %v1648 = vadd.f32 0.0, %v1647
      %v1649 = vpop.f32.mrb[0].mxu0
      %v1650 = vpop.f32.mrb[0].mxu0
      %1651 = vdwg.mxu0
      %1652 = vmatprep.subr.bf16.mxu0 %v1562
      %1653 = vmatpush1.bf16.msra.mxu0 %v1559
      %1654 = vmatprep.subr.bf16.mxu0 0
      %1655 = vmatpush1.bf16.msra.mxu0 0
      %1656 = vmatprep.subr.bf16.mxu0 0
      %1657 = vmatpush1.bf16.msra.mxu0 0
      %1658 = vmatprep.subr.bf16.mxu0 0
      %1659 = vmatpush1.bf16.msra.mxu0 0
      %1660 = vmatprep.subr.bf16.mxu0 0
      %1661 = vmatpush1.bf16.msra.mxu0 0
      %1662 = vmatprep.subr.bf16.mxu0 0
      %1663 = vmatpush1.bf16.msra.mxu0 0
      %1664 = vmatprep.subr.bf16.mxu0 0
      %1665 = vmatpush1.bf16.msra.mxu0 0
      %1666 = vmatprep.subr.bf16.mxu0 0
      %1667 = vmatpush1.bf16.msra.mxu0 0
      %1668 = vmatprep.subr.bf16.mxu0 0
      %1669 = vmatpush1.bf16.msra.mxu0 0
      %1670 = vmatprep.subr.bf16.mxu0 0
      %1671 = vmatpush1.bf16.msra.mxu0 0
      %1672 = vmatprep.subr.bf16.mxu0 0
      %1673 = vmatpush1.bf16.msra.mxu0 0
      %1674 = vmatprep.subr.bf16.mxu0 0
      %1675 = vmatpush1.bf16.msra.mxu0 0
      %1676 = vmatprep.subr.bf16.mxu0 0
      %1677 = vmatpush1.bf16.msra.mxu0 0
      %1678 = vmatprep.subr.bf16.mxu0 0
      %1679 = vmatpush1.bf16.msra.mxu0 0
      %1680 = vmatprep.subr.bf16.mxu0 0
      %1681 = vmatpush1.bf16.msra.mxu0 0
      %1682 = vmatprep.subr.bf16.mxu0 0
      %1683 = vmatpush1.bf16.msra.mxu0 0
      %1684 = vmatprep.mubr.bf16.mxu0 0
      %1685 = vmatmul.mubr.bf16.gmra.mrb[0].mxu0 %v1544
      %v1686 = vpop.f32.mrb[0].mxu0
      %v1687 = vadd.f32 0.0, %v1686
      %v1688 = vpop.f32.mrb[0].mxu0
      %v1689 = vadd.f32 0.0, %v1688
      %v1690 = vpop.f32.mrb[0].mxu0
      %v1691 = vpop.f32.mrb[0].mxu0
      %1692 = vdwg.mxu0
      %1693 = vmatprep.subr.bf16.mxu0 %v1568
      %1694 = vmatpush1.bf16.msra.mxu0 %v1565
      %1695 = vmatprep.subr.bf16.mxu0 0
      %1696 = vmatpush1.bf16.msra.mxu0 0
      %1697 = vmatprep.subr.bf16.mxu0 0
      %1698 = vmatpush1.bf16.msra.mxu0 0
      %1699 = vmatprep.subr.bf16.mxu0 0
      %1700 = vmatpush1.bf16.msra.mxu0 0
      %1701 = vmatprep.subr.bf16.mxu0 0
      %1702 = vmatpush1.bf16.msra.mxu0 0
      %1703 = vmatprep.subr.bf16.mxu0 0
      %1704 = vmatpush1.bf16.msra.mxu0 0
      %1705 = vmatprep.subr.bf16.mxu0 0
      %1706 = vmatpush1.bf16.msra.mxu0 0
      %1707 = vmatprep.subr.bf16.mxu0 0
      %1708 = vmatpush1.bf16.msra.mxu0 0
      %1709 = vmatprep.subr.bf16.mxu0 0
      %1710 = vmatpush1.bf16.msra.mxu0 0
      %1711 = vmatprep.subr.bf16.mxu0 0
      %1712 = vmatpush1.bf16.msra.mxu0 0
      %1713 = vmatprep.subr.bf16.mxu0 0
      %1714 = vmatpush1.bf16.msra.mxu0 0
      %1715 = vmatprep.subr.bf16.mxu0 0
      %1716 = vmatpush1.bf16.msra.mxu0 0
      %1717 = vmatprep.subr.bf16.mxu0 0
      %1718 = vmatpush1.bf16.msra.mxu0 0
      %1719 = vmatprep.subr.bf16.mxu0 0
      %1720 = vmatpush1.bf16.msra.mxu0 0
      %1721 = vmatprep.subr.bf16.mxu0 0
      %1722 = vmatpush1.bf16.msra.mxu0 0
      %1723 = vmatprep.subr.bf16.mxu0 0
      %1724 = vmatpush1.bf16.msra.mxu0 0
      %1725 = vmatprep.mubr.bf16.mxu0 0
      %1726 = vmatmul.mubr.bf16.gmra.mrb[0].mxu0 %v1544
      %v1727 = vpop.f32.mrb[0].mxu0
      %v1728 = vadd.f32 0.0, %v1727
      %v1729 = vpop.f32.mrb[0].mxu0
      %v1730 = vadd.f32 0.0, %v1729
      %v1731 = vpop.f32.mrb[0].mxu0
      %v1732 = vpop.f32.mrb[0].mxu0
      %1733 = vdwg.mxu0
      %v1734 = vadd.f32 %v1379, %v1605
      %v1735 = vadd.f32 %v1381, %v1607
      %v1736 = vadd.f32 %v1420, %v1646
      %v1737 = vadd.f32 %v1422, %v1648
      %v1738 = vadd.f32 %v1461, %v1687
      %v1739 = vadd.f32 %v1463, %v1689
      %v1740 = vadd.f32 %v1502, %v1728
      %v1741 = vadd.f32 %v1504, %v1730
      %1742 = vrot.lane.b32.xlu0 %v1047, 1
      %v1743 = vpop.permute.xlu0 %1742
      %1744 = vrot.lane.b32.xlu0 %v1048, 1
      %v1745 = vpop.permute.xlu0 %1744
      %1746 = vrot.lane.b32.xlu0 %v1049, 1
      %v1747 = vpop.permute.xlu0 %1746
      %1748 = vrot.lane.b32.xlu0 %v1050, 1
      %v1749 = vpop.permute.xlu0 %1748
      %1750 = vrot.lane.b32.xlu0 %v1051, 1
      %v1751 = vpop.permute.xlu0 %1750
      %1752 = vrot.lane.b32.xlu0 %v1052, 1
      %v1753 = vpop.permute.xlu0 %1752
      %1754 = vrot.lane.b32.xlu0 %v1053, 1
      %v1755 = vpop.permute.xlu0 %1754
      %1756 = vrot.lane.b32.xlu0 %v1054, 1
      %v1757 = vpop.permute.xlu0 %1756
      %v1758 = vsel %vm577, %v1755, %v1757
      %v1759 = vsel %vm577, %v1753, %v1755
      %v1760 = vsel %vm577, %v1751, %v1753
      %v1761 = vsel %vm577, %v1749, %v1751
      %v1762 = vsel %vm577, %v1747, %v1749
      %v1763 = vsel %vm577, %v1745, %v1747
      %v1764 = vsel %vm577, %v1743, %v1745
      %v1765 = vsel %vm577, %v1757, %v1743
      %s1766 = scalar_lea.vmem %s3, 24
      %v1767 = vld [vmem:[%s1766] sm:$0xff]
      %v1768 = vpack.c.bf16 %v1767, %v1767
      %v1769 = vpack.c.bf16 %v1765, %v1765
      %v1770 = vpack.c.bf16 %v1764, %v1764
      %v1771 = vpack.c.bf16 %v1763, %v1763
      %v1772 = vpack.c.bf16 %v1762, %v1762
      %v1773 = vpack.c.bf16 %v1761, %v1761
      %v1774 = vpack.c.bf16 %v1760, %v1760
      %v1775 = vpack.c.bf16 %v1759, %v1759
      %v1776 = vpack.c.bf16 %v1758, %v1758
      %v1778 = vsel %vm1124, %v1768, 0
      %v1781 = vsel %vm1128, %v1769, 0
      %v1784 = vsel %vm1128, %v1770, 0
      %v1787 = vsel %vm1128, %v1771, 0
      %v1790 = vsel %vm1128, %v1772, 0
      %v1793 = vsel %vm1128, %v1773, 0
      %v1796 = vsel %vm1128, %v1774, 0
      %v1799 = vsel %vm1128, %v1775, 0
      %v1802 = vsel %vm1128, %v1776, 0
      %1804 = vmatprep.subr.bf16.mxu0 %v1784
      %1805 = vmatpush1.bf16.msra.mxu0 %v1781
      %1806 = vmatprep.subr.bf16.mxu0 0
      %1807 = vmatpush1.bf16.msra.mxu0 0
      %1808 = vmatprep.subr.bf16.mxu0 0
      %1809 = vmatpush1.bf16.msra.mxu0 0
      %1810 = vmatprep.subr.bf16.mxu0 0
      %1811 = vmatpush1.bf16.msra.mxu0 0
      %1812 = vmatprep.subr.bf16.mxu0 0
      %1813 = vmatpush1.bf16.msra.mxu0 0
      %1814 = vmatprep.subr.bf16.mxu0 0
      %1815 = vmatpush1.bf16.msra.mxu0 0
      %1816 = vmatprep.subr.bf16.mxu0 0
      %1817 = vmatpush1.bf16.msra.mxu0 0
      %1818 = vmatprep.subr.bf16.mxu0 0
      %1819 = vmatpush1.bf16.msra.mxu0 0
      %1820 = vmatprep.subr.bf16.mxu0 0
      %1821 = vmatpush1.bf16.msra.mxu0 0
      %1822 = vmatprep.subr.bf16.mxu0 0
      %1823 = vmatpush1.bf16.msra.mxu0 0
      %1824 = vmatprep.subr.bf16.mxu0 0
      %1825 = vmatpush1.bf16.msra.mxu0 0
      %1826 = vmatprep.subr.bf16.mxu0 0
      %1827 = vmatpush1.bf16.msra.mxu0 0
      %1828 = vmatprep.subr.bf16.mxu0 0
      %1829 = vmatpush1.bf16.msra.mxu0 0
      %1830 = vmatprep.subr.bf16.mxu0 0
      %1831 = vmatpush1.bf16.msra.mxu0 0
      %1832 = vmatprep.subr.bf16.mxu0 0
      %1833 = vmatpush1.bf16.msra.mxu0 0
      %1834 = vmatprep.subr.bf16.mxu0 0
      %1835 = vmatpush1.bf16.msra.mxu0 0
      %1836 = vmatprep.mubr.bf16.mxu0 0
      %1837 = vmatmul.mubr.bf16.gmra.mrb[0].mxu0 %v1778
      %v1838 = vpop.f32.mrb[0].mxu0
      %v1839 = vadd.f32 0.0, %v1838
      %v1840 = vpop.f32.mrb[0].mxu0
      %v1841 = vadd.f32 0.0, %v1840
      %v1842 = vpop.f32.mrb[0].mxu0
      %v1843 = vpop.f32.mrb[0].mxu0
      %1844 = vdwg.mxu0
      %1845 = vmatprep.subr.bf16.mxu0 %v1790
      %1846 = vmatpush1.bf16.msra.mxu0 %v1787
      %1847 = vmatprep.subr.bf16.mxu0 0
      %1848 = vmatpush1.bf16.msra.mxu0 0
      %1849 = vmatprep.subr.bf16.mxu0 0
      %1850 = vmatpush1.bf16.msra.mxu0 0
      %1851 = vmatprep.subr.bf16.mxu0 0
      %1852 = vmatpush1.bf16.msra.mxu0 0
      %1853 = vmatprep.subr.bf16.mxu0 0
      %1854 = vmatpush1.bf16.msra.mxu0 0
      %1855 = vmatprep.subr.bf16.mxu0 0
      %1856 = vmatpush1.bf16.msra.mxu0 0
      %1857 = vmatprep.subr.bf16.mxu0 0
      %1858 = vmatpush1.bf16.msra.mxu0 0
      %1859 = vmatprep.subr.bf16.mxu0 0
      %1860 = vmatpush1.bf16.msra.mxu0 0
      %1861 = vmatprep.subr.bf16.mxu0 0
      %1862 = vmatpush1.bf16.msra.mxu0 0
      %1863 = vmatprep.subr.bf16.mxu0 0
      %1864 = vmatpush1.bf16.msra.mxu0 0
      %1865 = vmatprep.subr.bf16.mxu0 0
      %1866 = vmatpush1.bf16.msra.mxu0 0
      %1867 = vmatprep.subr.bf16.mxu0 0
      %1868 = vmatpush1.bf16.msra.mxu0 0
      %1869 = vmatprep.subr.bf16.mxu0 0
      %1870 = vmatpush1.bf16.msra.mxu0 0
      %1871 = vmatprep.subr.bf16.mxu0 0
      %1872 = vmatpush1.bf16.msra.mxu0 0
      %1873 = vmatprep.subr.bf16.mxu0 0
      %1874 = vmatpush1.bf16.msra.mxu0 0
      %1875 = vmatprep.subr.bf16.mxu0 0
      %1876 = vmatpush1.bf16.msra.mxu0 0
      %1877 = vmatprep.mubr.bf16.mxu0 0
      %1878 = vmatmul.mubr.bf16.gmra.mrb[0].mxu0 %v1778
      %v1879 = vpop.f32.mrb[0].mxu0
      %v1880 = vadd.f32 0.0, %v1879
      %v1881 = vpop.f32.mrb[0].mxu0
      %v1882 = vadd.f32 0.0, %v1881
      %v1883 = vpop.f32.mrb[0].mxu0
      %v1884 = vpop.f32.mrb[0].mxu0
      %1885 = vdwg.mxu0
      %1886 = vmatprep.subr.bf16.mxu0 %v1796
      %1887 = vmatpush1.bf16.msra.mxu0 %v1793
      %1888 = vmatprep.subr.bf16.mxu0 0
      %1889 = vmatpush1.bf16.msra.mxu0 0
      %1890 = vmatprep.subr.bf16.mxu0 0
      %1891 = vmatpush1.bf16.msra.mxu0 0
      %1892 = vmatprep.subr.bf16.mxu0 0
      %1893 = vmatpush1.bf16.msra.mxu0 0
      %1894 = vmatprep.subr.bf16.mxu0 0
      %1895 = vmatpush1.bf16.msra.mxu0 0
      %1896 = vmatprep.subr.bf16.mxu0 0
      %1897 = vmatpush1.bf16.msra.mxu0 0
      %1898 = vmatprep.subr.bf16.mxu0 0
      %1899 = vmatpush1.bf16.msra.mxu0 0
      %1900 = vmatprep.subr.bf16.mxu0 0
      %1901 = vmatpush1.bf16.msra.mxu0 0
      %1902 = vmatprep.subr.bf16.mxu0 0
      %1903 = vmatpush1.bf16.msra.mxu0 0
      %1904 = vmatprep.subr.bf16.mxu0 0
      %1905 = vmatpush1.bf16.msra.mxu0 0
      %1906 = vmatprep.subr.bf16.mxu0 0
      %1907 = vmatpush1.bf16.msra.mxu0 0
      %1908 = vmatprep.subr.bf16.mxu0 0
      %1909 = vmatpush1.bf16.msra.mxu0 0
      %1910 = vmatprep.subr.bf16.mxu0 0
      %1911 = vmatpush1.bf16.msra.mxu0 0
      %1912 = vmatprep.subr.bf16.mxu0 0
      %1913 = vmatpush1.bf16.msra.mxu0 0
      %1914 = vmatprep.subr.bf16.mxu0 0
      %1915 = vmatpush1.bf16.msra.mxu0 0
      %1916 = vmatprep.subr.bf16.mxu0 0
      %1917 = vmatpush1.bf16.msra.mxu0 0
      %1918 = vmatprep.mubr.bf16.mxu0 0
      %1919 = vmatmul.mubr.bf16.gmra.mrb[0].mxu0 %v1778
      %v1920 = vpop.f32.mrb[0].mxu0
      %v1921 = vadd.f32 0.0, %v1920
      %v1922 = vpop.f32.mrb[0].mxu0
      %v1923 = vadd.f32 0.0, %v1922
      %v1924 = vpop.f32.mrb[0].mxu0
      %v1925 = vpop.f32.mrb[0].mxu0
      %1926 = vdwg.mxu0
      %1927 = vmatprep.subr.bf16.mxu0 %v1802
      %1928 = vmatpush1.bf16.msra.mxu0 %v1799
      %1929 = vmatprep.subr.bf16.mxu0 0
      %1930 = vmatpush1.bf16.msra.mxu0 0
      %1931 = vmatprep.subr.bf16.mxu0 0
      %1932 = vmatpush1.bf16.msra.mxu0 0
      %1933 = vmatprep.subr.bf16.mxu0 0
      %1934 = vmatpush1.bf16.msra.mxu0 0
      %1935 = vmatprep.subr.bf16.mxu0 0
      %1936 = vmatpush1.bf16.msra.mxu0 0
      %1937 = vmatprep.subr.bf16.mxu0 0
      %1938 = vmatpush1.bf16.msra.mxu0 0
      %1939 = vmatprep.subr.bf16.mxu0 0
      %1940 = vmatpush1.bf16.msra.mxu0 0
      %1941 = vmatprep.subr.bf16.mxu0 0
      %1942 = vmatpush1.bf16.msra.mxu0 0
      %1943 = vmatprep.subr.bf16.mxu0 0
      %1944 = vmatpush1.bf16.msra.mxu0 0
      %1945 = vmatprep.subr.bf16.mxu0 0
      %1946 = vmatpush1.bf16.msra.mxu0 0
      %1947 = vmatprep.subr.bf16.mxu0 0
      %1948 = vmatpush1.bf16.msra.mxu0 0
      %1949 = vmatprep.subr.bf16.mxu0 0
      %1950 = vmatpush1.bf16.msra.mxu0 0
      %1951 = vmatprep.subr.bf16.mxu0 0
      %1952 = vmatpush1.bf16.msra.mxu0 0
      %1953 = vmatprep.subr.bf16.mxu0 0
      %1954 = vmatpush1.bf16.msra.mxu0 0
      %1955 = vmatprep.subr.bf16.mxu0 0
      %1956 = vmatpush1.bf16.msra.mxu0 0
      %1957 = vmatprep.subr.bf16.mxu0 0
      %1958 = vmatpush1.bf16.msra.mxu0 0
      %1959 = vmatprep.mubr.bf16.mxu0 0
      %1960 = vmatmul.mubr.bf16.gmra.mrb[0].mxu0 %v1778
      %v1961 = vpop.f32.mrb[0].mxu0
      %v1962 = vadd.f32 0.0, %v1961
      %v1963 = vpop.f32.mrb[0].mxu0
      %v1964 = vadd.f32 0.0, %v1963
      %v1965 = vpop.f32.mrb[0].mxu0
      %v1966 = vpop.f32.mrb[0].mxu0
      %1967 = vdwg.mxu0
      %v1968 = vadd.f32 %v1734, %v1839
      %v1969 = vadd.f32 %v1735, %v1841
      %v1970 = vadd.f32 %v1736, %v1880
      %v1971 = vadd.f32 %v1737, %v1882
      %v1972 = vadd.f32 %v1738, %v1921
      %v1973 = vadd.f32 %v1739, %v1923
      %v1974 = vadd.f32 %v1740, %v1962
      %v1975 = vadd.f32 %v1741, %v1964
      %s1976 = scalar_lea.vmem %s3, 32
      %v1977 = vld [vmem:[%s1976] sm:$0xff]
      %v1978 = vpack.c.bf16 %v1977, %v1977
      %v1979 = vpack.c.bf16 %v1047, %v1047
      %v1980 = vpack.c.bf16 %v1048, %v1048
      %v1981 = vpack.c.bf16 %v1049, %v1049
      %v1982 = vpack.c.bf16 %v1050, %v1050
      %v1983 = vpack.c.bf16 %v1051, %v1051
      %v1984 = vpack.c.bf16 %v1052, %v1052
      %v1985 = vpack.c.bf16 %v1053, %v1053
      %v1986 = vpack.c.bf16 %v1054, %v1054
      %v1988 = vsel %vm1124, %v1978, 0
      %v1991 = vsel %vm1128, %v1979, 0
      %v1994 = vsel %vm1128, %v1980, 0
      %v1997 = vsel %vm1128, %v1981, 0
      %v2000 = vsel %vm1128, %v1982, 0
      %v2003 = vsel %vm1128, %v1983, 0
      %v2006 = vsel %vm1128, %v1984, 0
      %v2009 = vsel %vm1128, %v1985, 0
      %v2012 = vsel %vm1128, %v1986, 0
      %2014 = vmatprep.subr.bf16.mxu0 %v1994
      %2015 = vmatpush1.bf16.msra.mxu0 %v1991
      %2016 = vmatprep.subr.bf16.mxu0 0
      %2017 = vmatpush1.bf16.msra.mxu0 0
      %2018 = vmatprep.subr.bf16.mxu0 0
      %2019 = vmatpush1.bf16.msra.mxu0 0
      %2020 = vmatprep.subr.bf16.mxu0 0
      %2021 = vmatpush1.bf16.msra.mxu0 0
      %2022 = vmatprep.subr.bf16.mxu0 0
      %2023 = vmatpush1.bf16.msra.mxu0 0
      %2024 = vmatprep.subr.bf16.mxu0 0
      %2025 = vmatpush1.bf16.msra.mxu0 0
      %2026 = vmatprep.subr.bf16.mxu0 0
      %2027 = vmatpush1.bf16.msra.mxu0 0
      %2028 = vmatprep.subr.bf16.mxu0 0
      %2029 = vmatpush1.bf16.msra.mxu0 0
      %2030 = vmatprep.subr.bf16.mxu0 0
      %2031 = vmatpush1.bf16.msra.mxu0 0
      %2032 = vmatprep.subr.bf16.mxu0 0
      %2033 = vmatpush1.bf16.msra.mxu0 0
      %2034 = vmatprep.subr.bf16.mxu0 0
      %2035 = vmatpush1.bf16.msra.mxu0 0
      %2036 = vmatprep.subr.bf16.mxu0 0
      %2037 = vmatpush1.bf16.msra.mxu0 0
      %2038 = vmatprep.subr.bf16.mxu0 0
      %2039 = vmatpush1.bf16.msra.mxu0 0
      %2040 = vmatprep.subr.bf16.mxu0 0
      %2041 = vmatpush1.bf16.msra.mxu0 0
      %2042 = vmatprep.subr.bf16.mxu0 0
      %2043 = vmatpush1.bf16.msra.mxu0 0
      %2044 = vmatprep.subr.bf16.mxu0 0
      %2045 = vmatpush1.bf16.msra.mxu0 0
      %2046 = vmatprep.mubr.bf16.mxu0 0
      %2047 = vmatmul.mubr.bf16.gmra.mrb[0].mxu0 %v1988
      %v2048 = vpop.f32.mrb[0].mxu0
      %v2049 = vadd.f32 0.0, %v2048
      %v2050 = vpop.f32.mrb[0].mxu0
      %v2051 = vadd.f32 0.0, %v2050
      %v2052 = vpop.f32.mrb[0].mxu0
      %v2053 = vpop.f32.mrb[0].mxu0
      %2054 = vdwg.mxu0
      %2055 = vmatprep.subr.bf16.mxu0 %v2000
      %2056 = vmatpush1.bf16.msra.mxu0 %v1997
      %2057 = vmatprep.subr.bf16.mxu0 0
      %2058 = vmatpush1.bf16.msra.mxu0 0
      %2059 = vmatprep.subr.bf16.mxu0 0
      %2060 = vmatpush1.bf16.msra.mxu0 0
      %2061 = vmatprep.subr.bf16.mxu0 0
      %2062 = vmatpush1.bf16.msra.mxu0 0
      %2063 = vmatprep.subr.bf16.mxu0 0
      %2064 = vmatpush1.bf16.msra.mxu0 0
      %2065 = vmatprep.subr.bf16.mxu0 0
      %2066 = vmatpush1.bf16.msra.mxu0 0
      %2067 = vmatprep.subr.bf16.mxu0 0
      %2068 = vmatpush1.bf16.msra.mxu0 0
      %2069 = vmatprep.subr.bf16.mxu0 0
      %2070 = vmatpush1.bf16.msra.mxu0 0
      %2071 = vmatprep.subr.bf16.mxu0 0
      %2072 = vmatpush1.bf16.msra.mxu0 0
      %2073 = vmatprep.subr.bf16.mxu0 0
      %2074 = vmatpush1.bf16.msra.mxu0 0
      %2075 = vmatprep.subr.bf16.mxu0 0
      %2076 = vmatpush1.bf16.msra.mxu0 0
      %2077 = vmatprep.subr.bf16.mxu0 0
      %2078 = vmatpush1.bf16.msra.mxu0 0
      %2079 = vmatprep.subr.bf16.mxu0 0
      %2080 = vmatpush1.bf16.msra.mxu0 0
      %2081 = vmatprep.subr.bf16.mxu0 0
      %2082 = vmatpush1.bf16.msra.mxu0 0
      %2083 = vmatprep.subr.bf16.mxu0 0
      %2084 = vmatpush1.bf16.msra.mxu0 0
      %2085 = vmatprep.subr.bf16.mxu0 0
      %2086 = vmatpush1.bf16.msra.mxu0 0
      %2087 = vmatprep.mubr.bf16.mxu0 0
      %2088 = vmatmul.mubr.bf16.gmra.mrb[0].mxu0 %v1988
      %v2089 = vpop.f32.mrb[0].mxu0
      %v2090 = vadd.f32 0.0, %v2089
      %v2091 = vpop.f32.mrb[0].mxu0
      %v2092 = vadd.f32 0.0, %v2091
      %v2093 = vpop.f32.mrb[0].mxu0
      %v2094 = vpop.f32.mrb[0].mxu0
      %2095 = vdwg.mxu0
      %2096 = vmatprep.subr.bf16.mxu0 %v2006
      %2097 = vmatpush1.bf16.msra.mxu0 %v2003
      %2098 = vmatprep.subr.bf16.mxu0 0
      %2099 = vmatpush1.bf16.msra.mxu0 0
      %2100 = vmatprep.subr.bf16.mxu0 0
      %2101 = vmatpush1.bf16.msra.mxu0 0
      %2102 = vmatprep.subr.bf16.mxu0 0
      %2103 = vmatpush1.bf16.msra.mxu0 0
      %2104 = vmatprep.subr.bf16.mxu0 0
      %2105 = vmatpush1.bf16.msra.mxu0 0
      %2106 = vmatprep.subr.bf16.mxu0 0
      %2107 = vmatpush1.bf16.msra.mxu0 0
      %2108 = vmatprep.subr.bf16.mxu0 0
      %2109 = vmatpush1.bf16.msra.mxu0 0
      %2110 = vmatprep.subr.bf16.mxu0 0
      %2111 = vmatpush1.bf16.msra.mxu0 0
      %2112 = vmatprep.subr.bf16.mxu0 0
      %2113 = vmatpush1.bf16.msra.mxu0 0
      %2114 = vmatprep.subr.bf16.mxu0 0
      %2115 = vmatpush1.bf16.msra.mxu0 0
      %2116 = vmatprep.subr.bf16.mxu0 0
      %2117 = vmatpush1.bf16.msra.mxu0 0
      %2118 = vmatprep.subr.bf16.mxu0 0
      %2119 = vmatpush1.bf16.msra.mxu0 0
      %2120 = vmatprep.subr.bf16.mxu0 0
      %2121 = vmatpush1.bf16.msra.mxu0 0
      %2122 = vmatprep.subr.bf16.mxu0 0
      %2123 = vmatpush1.bf16.msra.mxu0 0
      %2124 = vmatprep.subr.bf16.mxu0 0
      %2125 = vmatpush1.bf16.msra.mxu0 0
      %2126 = vmatprep.subr.bf16.mxu0 0
      %2127 = vmatpush1.bf16.msra.mxu0 0
      %2128 = vmatprep.mubr.bf16.mxu0 0
      %2129 = vmatmul.mubr.bf16.gmra.mrb[0].mxu0 %v1988
      %v2130 = vpop.f32.mrb[0].mxu0
      %v2131 = vadd.f32 0.0, %v2130
      %v2132 = vpop.f32.mrb[0].mxu0
      %v2133 = vadd.f32 0.0, %v2132
      %v2134 = vpop.f32.mrb[0].mxu0
      %v2135 = vpop.f32.mrb[0].mxu0
      %2136 = vdwg.mxu0
      %2137 = vmatprep.subr.bf16.mxu0 %v2012
      %2138 = vmatpush1.bf16.msra.mxu0 %v2009
      %2139 = vmatprep.subr.bf16.mxu0 0
      %2140 = vmatpush1.bf16.msra.mxu0 0
      %2141 = vmatprep.subr.bf16.mxu0 0
      %2142 = vmatpush1.bf16.msra.mxu0 0
      %2143 = vmatprep.subr.bf16.mxu0 0
      %2144 = vmatpush1.bf16.msra.mxu0 0
      %2145 = vmatprep.subr.bf16.mxu0 0
      %2146 = vmatpush1.bf16.msra.mxu0 0
      %2147 = vmatprep.subr.bf16.mxu0 0
      %2148 = vmatpush1.bf16.msra.mxu0 0
      %2149 = vmatprep.subr.bf16.mxu0 0
      %2150 = vmatpush1.bf16.msra.mxu0 0
      %2151 = vmatprep.subr.bf16.mxu0 0
      %2152 = vmatpush1.bf16.msra.mxu0 0
      %2153 = vmatprep.subr.bf16.mxu0 0
      %2154 = vmatpush1.bf16.msra.mxu0 0
      %2155 = vmatprep.subr.bf16.mxu0 0
      %2156 = vmatpush1.bf16.msra.mxu0 0
      %2157 = vmatprep.subr.bf16.mxu0 0
      %2158 = vmatpush1.bf16.msra.mxu0 0
      %2159 = vmatprep.subr.bf16.mxu0 0
      %2160 = vmatpush1.bf16.msra.mxu0 0
      %2161 = vmatprep.subr.bf16.mxu0 0
      %2162 = vmatpush1.bf16.msra.mxu0 0
      %2163 = vmatprep.subr.bf16.mxu0 0
      %2164 = vmatpush1.bf16.msra.mxu0 0
      %2165 = vmatprep.subr.bf16.mxu0 0
      %2166 = vmatpush1.bf16.msra.mxu0 0
      %2167 = vmatprep.subr.bf16.mxu0 0
      %2168 = vmatpush1.bf16.msra.mxu0 0
      %2169 = vmatprep.mubr.bf16.mxu0 0
      %2170 = vmatmul.mubr.bf16.gmra.mrb[0].mxu0 %v1988
      %v2171 = vpop.f32.mrb[0].mxu0
      %v2172 = vadd.f32 0.0, %v2171
      %v2173 = vpop.f32.mrb[0].mxu0
      %v2174 = vadd.f32 0.0, %v2173
      %v2175 = vpop.f32.mrb[0].mxu0
      %v2176 = vpop.f32.mrb[0].mxu0
      %2177 = vdwg.mxu0
      %v2178 = vadd.f32 %v1968, %v2049
      %v2179 = vadd.f32 %v1969, %v2051
      %v2180 = vadd.f32 %v1970, %v2090
      %v2181 = vadd.f32 %v1971, %v2092
      %v2182 = vadd.f32 %v1972, %v2131
      %v2183 = vadd.f32 %v1973, %v2133
      %v2184 = vadd.f32 %v1974, %v2172
      %v2185 = vadd.f32 %v1975, %v2174
      %2186 = vrot.lane.b32.xlu0 %v1047, 127
      %v2187 = vpop.permute.xlu0 %2186
      %2188 = vrot.lane.b32.xlu0 %v1048, 127
      %v2189 = vpop.permute.xlu0 %2188
      %2190 = vrot.lane.b32.xlu0 %v1049, 127
      %v2191 = vpop.permute.xlu0 %2190
      %2192 = vrot.lane.b32.xlu0 %v1050, 127
      %v2193 = vpop.permute.xlu0 %2192
      %2194 = vrot.lane.b32.xlu0 %v1051, 127
      %v2195 = vpop.permute.xlu0 %2194
      %2196 = vrot.lane.b32.xlu0 %v1052, 127
      %v2197 = vpop.permute.xlu0 %2196
      %2198 = vrot.lane.b32.xlu0 %v1053, 127
      %v2199 = vpop.permute.xlu0 %2198
      %2200 = vrot.lane.b32.xlu0 %v1054, 127
      %v2201 = vpop.permute.xlu0 %2200
      %v2202 = vsel %vm680, %v2199, %v2201
      %v2203 = vsel %vm680, %v2197, %v2199
      %v2204 = vsel %vm680, %v2195, %v2197
      %v2205 = vsel %vm680, %v2193, %v2195
      %v2206 = vsel %vm680, %v2191, %v2193
      %v2207 = vsel %vm680, %v2189, %v2191
      %v2208 = vsel %vm680, %v2187, %v2189
      %v2209 = vsel %vm680, %v2201, %v2187
      %s2210 = scalar_lea.vmem %s3, 40
      %v2211 = vld [vmem:[%s2210] sm:$0xff]
      %v2212 = vpack.c.bf16 %v2211, %v2211
      %v2213 = vpack.c.bf16 %v2208, %v2208
      %v2214 = vpack.c.bf16 %v2207, %v2207
      %v2215 = vpack.c.bf16 %v2206, %v2206
      %v2216 = vpack.c.bf16 %v2205, %v2205
      %v2217 = vpack.c.bf16 %v2204, %v2204
      %v2218 = vpack.c.bf16 %v2203, %v2203
      %v2219 = vpack.c.bf16 %v2202, %v2202
      %v2220 = vpack.c.bf16 %v2209, %v2209
      %v2222 = vsel %vm1124, %v2212, 0
      %v2225 = vsel %vm1128, %v2213, 0
      %v2228 = vsel %vm1128, %v2214, 0
      %v2231 = vsel %vm1128, %v2215, 0
      %v2234 = vsel %vm1128, %v2216, 0
      %v2237 = vsel %vm1128, %v2217, 0
      %v2240 = vsel %vm1128, %v2218, 0
      %v2243 = vsel %vm1128, %v2219, 0
      %v2246 = vsel %vm1128, %v2220, 0
      %2248 = vmatprep.subr.bf16.mxu0 %v2228
      %2249 = vmatpush1.bf16.msra.mxu0 %v2225
      %2250 = vmatprep.subr.bf16.mxu0 0
      %2251 = vmatpush1.bf16.msra.mxu0 0
      %2252 = vmatprep.subr.bf16.mxu0 0
      %2253 = vmatpush1.bf16.msra.mxu0 0
      %2254 = vmatprep.subr.bf16.mxu0 0
      %2255 = vmatpush1.bf16.msra.mxu0 0
      %2256 = vmatprep.subr.bf16.mxu0 0
      %2257 = vmatpush1.bf16.msra.mxu0 0
      %2258 = vmatprep.subr.bf16.mxu0 0
      %2259 = vmatpush1.bf16.msra.mxu0 0
      %2260 = vmatprep.subr.bf16.mxu0 0
      %2261 = vmatpush1.bf16.msra.mxu0 0
      %2262 = vmatprep.subr.bf16.mxu0 0
      %2263 = vmatpush1.bf16.msra.mxu0 0
      %2264 = vmatprep.subr.bf16.mxu0 0
      %2265 = vmatpush1.bf16.msra.mxu0 0
      %2266 = vmatprep.subr.bf16.mxu0 0
      %2267 = vmatpush1.bf16.msra.mxu0 0
      %2268 = vmatprep.subr.bf16.mxu0 0
      %2269 = vmatpush1.bf16.msra.mxu0 0
      %2270 = vmatprep.subr.bf16.mxu0 0
      %2271 = vmatpush1.bf16.msra.mxu0 0
      %2272 = vmatprep.subr.bf16.mxu0 0
      %2273 = vmatpush1.bf16.msra.mxu0 0
      %2274 = vmatprep.subr.bf16.mxu0 0
      %2275 = vmatpush1.bf16.msra.mxu0 0
      %2276 = vmatprep.subr.bf16.mxu0 0
      %2277 = vmatpush1.bf16.msra.mxu0 0
      %2278 = vmatprep.subr.bf16.mxu0 0
      %2279 = vmatpush1.bf16.msra.mxu0 0
      %2280 = vmatprep.mubr.bf16.mxu0 0
      %2281 = vmatmul.mubr.bf16.gmra.mrb[0].mxu0 %v2222
      %v2282 = vpop.f32.mrb[0].mxu0
      %v2283 = vadd.f32 0.0, %v2282
      %v2284 = vpop.f32.mrb[0].mxu0
      %v2285 = vadd.f32 0.0, %v2284
      %v2286 = vpop.f32.mrb[0].mxu0
      %v2287 = vpop.f32.mrb[0].mxu0
      %2288 = vdwg.mxu0
      %2289 = vmatprep.subr.bf16.mxu0 %v2234
      %2290 = vmatpush1.bf16.msra.mxu0 %v2231
      %2291 = vmatprep.subr.bf16.mxu0 0
      %2292 = vmatpush1.bf16.msra.mxu0 0
      %2293 = vmatprep.subr.bf16.mxu0 0
      %2294 = vmatpush1.bf16.msra.mxu0 0
      %2295 = vmatprep.subr.bf16.mxu0 0
      %2296 = vmatpush1.bf16.msra.mxu0 0
      %2297 = vmatprep.subr.bf16.mxu0 0
      %2298 = vmatpush1.bf16.msra.mxu0 0
      %2299 = vmatprep.subr.bf16.mxu0 0
      %2300 = vmatpush1.bf16.msra.mxu0 0
      %2301 = vmatprep.subr.bf16.mxu0 0
      %2302 = vmatpush1.bf16.msra.mxu0 0
      %2303 = vmatprep.subr.bf16.mxu0 0
      %2304 = vmatpush1.bf16.msra.mxu0 0
      %2305 = vmatprep.subr.bf16.mxu0 0
      %2306 = vmatpush1.bf16.msra.mxu0 0
      %2307 = vmatprep.subr.bf16.mxu0 0
      %2308 = vmatpush1.bf16.msra.mxu0 0
      %2309 = vmatprep.subr.bf16.mxu0 0
      %2310 = vmatpush1.bf16.msra.mxu0 0
      %2311 = vmatprep.subr.bf16.mxu0 0
      %2312 = vmatpush1.bf16.msra.mxu0 0
      %2313 = vmatprep.subr.bf16.mxu0 0
      %2314 = vmatpush1.bf16.msra.mxu0 0
      %2315 = vmatprep.subr.bf16.mxu0 0
      %2316 = vmatpush1.bf16.msra.mxu0 0
      %2317 = vmatprep.subr.bf16.mxu0 0
      %2318 = vmatpush1.bf16.msra.mxu0 0
      %2319 = vmatprep.subr.bf16.mxu0 0
      %2320 = vmatpush1.bf16.msra.mxu0 0
      %2321 = vmatprep.mubr.bf16.mxu0 0
      %2322 = vmatmul.mubr.bf16.gmra.mrb[0].mxu0 %v2222
      %v2323 = vpop.f32.mrb[0].mxu0
      %v2324 = vadd.f32 0.0, %v2323
      %v2325 = vpop.f32.mrb[0].mxu0
      %v2326 = vadd.f32 0.0, %v2325
      %v2327 = vpop.f32.mrb[0].mxu0
      %v2328 = vpop.f32.mrb[0].mxu0
      %2329 = vdwg.mxu0
      %2330 = vmatprep.subr.bf16.mxu0 %v2240
      %2331 = vmatpush1.bf16.msra.mxu0 %v2237
      %2332 = vmatprep.subr.bf16.mxu0 0
      %2333 = vmatpush1.bf16.msra.mxu0 0
      %2334 = vmatprep.subr.bf16.mxu0 0
      %2335 = vmatpush1.bf16.msra.mxu0 0
      %2336 = vmatprep.subr.bf16.mxu0 0
      %2337 = vmatpush1.bf16.msra.mxu0 0
      %2338 = vmatprep.subr.bf16.mxu0 0
      %2339 = vmatpush1.bf16.msra.mxu0 0
      %2340 = vmatprep.subr.bf16.mxu0 0
      %2341 = vmatpush1.bf16.msra.mxu0 0
      %2342 = vmatprep.subr.bf16.mxu0 0
      %2343 = vmatpush1.bf16.msra.mxu0 0
      %2344 = vmatprep.subr.bf16.mxu0 0
      %2345 = vmatpush1.bf16.msra.mxu0 0
      %2346 = vmatprep.subr.bf16.mxu0 0
      %2347 = vmatpush1.bf16.msra.mxu0 0
      %2348 = vmatprep.subr.bf16.mxu0 0
      %2349 = vmatpush1.bf16.msra.mxu0 0
      %2350 = vmatprep.subr.bf16.mxu0 0
      %2351 = vmatpush1.bf16.msra.mxu0 0
      %2352 = vmatprep.subr.bf16.mxu0 0
      %2353 = vmatpush1.bf16.msra.mxu0 0
      %2354 = vmatprep.subr.bf16.mxu0 0
      %2355 = vmatpush1.bf16.msra.mxu0 0
      %2356 = vmatprep.subr.bf16.mxu0 0
      %2357 = vmatpush1.bf16.msra.mxu0 0
      %2358 = vmatprep.subr.bf16.mxu0 0
      %2359 = vmatpush1.bf16.msra.mxu0 0
      %2360 = vmatprep.subr.bf16.mxu0 0
      %2361 = vmatpush1.bf16.msra.mxu0 0
      %2362 = vmatprep.mubr.bf16.mxu0 0
      %2363 = vmatmul.mubr.bf16.gmra.mrb[0].mxu0 %v2222
      %v2364 = vpop.f32.mrb[0].mxu0
      %v2365 = vadd.f32 0.0, %v2364
      %v2366 = vpop.f32.mrb[0].mxu0
      %v2367 = vadd.f32 0.0, %v2366
      %v2368 = vpop.f32.mrb[0].mxu0
      %v2369 = vpop.f32.mrb[0].mxu0
      %2370 = vdwg.mxu0
      %2371 = vmatprep.subr.bf16.mxu0 %v2246
      %2372 = vmatpush1.bf16.msra.mxu0 %v2243
      %2373 = vmatprep.subr.bf16.mxu0 0
      %2374 = vmatpush1.bf16.msra.mxu0 0
      %2375 = vmatprep.subr.bf16.mxu0 0
      %2376 = vmatpush1.bf16.msra.mxu0 0
      %2377 = vmatprep.subr.bf16.mxu0 0
      %2378 = vmatpush1.bf16.msra.mxu0 0
      %2379 = vmatprep.subr.bf16.mxu0 0
      %2380 = vmatpush1.bf16.msra.mxu0 0
      %2381 = vmatprep.subr.bf16.mxu0 0
      %2382 = vmatpush1.bf16.msra.mxu0 0
      %2383 = vmatprep.subr.bf16.mxu0 0
      %2384 = vmatpush1.bf16.msra.mxu0 0
      %2385 = vmatprep.subr.bf16.mxu0 0
      %2386 = vmatpush1.bf16.msra.mxu0 0
      %2387 = vmatprep.subr.bf16.mxu0 0
      %2388 = vmatpush1.bf16.msra.mxu0 0
      %2389 = vmatprep.subr.bf16.mxu0 0
      %2390 = vmatpush1.bf16.msra.mxu0 0
      %2391 = vmatprep.subr.bf16.mxu0 0
      %2392 = vmatpush1.bf16.msra.mxu0 0
      %2393 = vmatprep.subr.bf16.mxu0 0
      %2394 = vmatpush1.bf16.msra.mxu0 0
      %2395 = vmatprep.subr.bf16.mxu0 0
      %2396 = vmatpush1.bf16.msra.mxu0 0
      %2397 = vmatprep.subr.bf16.mxu0 0
      %2398 = vmatpush1.bf16.msra.mxu0 0
      %2399 = vmatprep.subr.bf16.mxu0 0
      %2400 = vmatpush1.bf16.msra.mxu0 0
      %2401 = vmatprep.subr.bf16.mxu0 0
      %2402 = vmatpush1.bf16.msra.mxu0 0
      %2403 = vmatprep.mubr.bf16.mxu0 0
      %2404 = vmatmul.mubr.bf16.gmra.mrb[0].mxu0 %v2222
      %v2405 = vpop.f32.mrb[0].mxu0
      %v2406 = vadd.f32 0.0, %v2405
      %v2407 = vpop.f32.mrb[0].mxu0
      %v2408 = vadd.f32 0.0, %v2407
      %v2409 = vpop.f32.mrb[0].mxu0
      %v2410 = vpop.f32.mrb[0].mxu0
      %2411 = vdwg.mxu0
      %v2412 = vadd.f32 %v2178, %v2283
      %v2413 = vadd.f32 %v2179, %v2285
      %v2414 = vadd.f32 %v2180, %v2324
      %v2415 = vadd.f32 %v2181, %v2326
      %v2416 = vadd.f32 %v2182, %v2365
      %v2417 = vadd.f32 %v2183, %v2367
      %v2418 = vadd.f32 %v2184, %v2406
      %v2419 = vadd.f32 %v2185, %v2408
      %2420 = vrot.lane.b32.xlu0 %v1047, 97
      %v2421 = vpop.permute.xlu0 %2420
      %2422 = vrot.lane.b32.xlu0 %v1048, 97
      %v2423 = vpop.permute.xlu0 %2422
      %2424 = vrot.lane.b32.xlu0 %v1049, 97
      %v2425 = vpop.permute.xlu0 %2424
      %2426 = vrot.lane.b32.xlu0 %v1050, 97
      %v2427 = vpop.permute.xlu0 %2426
      %2428 = vrot.lane.b32.xlu0 %v1051, 97
      %v2429 = vpop.permute.xlu0 %2428
      %2430 = vrot.lane.b32.xlu0 %v1052, 97
      %v2431 = vpop.permute.xlu0 %2430
      %2432 = vrot.lane.b32.xlu0 %v1053, 97
      %v2433 = vpop.permute.xlu0 %2432
      %2434 = vrot.lane.b32.xlu0 %v1054, 97
      %v2435 = vpop.permute.xlu0 %2434
      %v2436 = vsel %vm760, %v2433, %v2435
      %v2437 = vsel %vm760, %v2431, %v2433
      %v2438 = vsel %vm760, %v2429, %v2431
      %v2439 = vsel %vm760, %v2427, %v2429
      %v2440 = vsel %vm760, %v2425, %v2427
      %v2441 = vsel %vm760, %v2423, %v2425
      %v2442 = vsel %vm760, %v2421, %v2423
      %v2443 = vsel %vm760, %v2435, %v2421
      %s2444 = scalar_lea.vmem %s3, 48
      %v2445 = vld [vmem:[%s2444] sm:$0xff]
      %v2446 = vpack.c.bf16 %v2445, %v2445
      %v2447 = vpack.c.bf16 %v2442, %v2442
      %v2448 = vpack.c.bf16 %v2441, %v2441
      %v2449 = vpack.c.bf16 %v2440, %v2440
      %v2450 = vpack.c.bf16 %v2439, %v2439
      %v2451 = vpack.c.bf16 %v2438, %v2438
      %v2452 = vpack.c.bf16 %v2437, %v2437
      %v2453 = vpack.c.bf16 %v2436, %v2436
      %v2454 = vpack.c.bf16 %v2443, %v2443
      %v2456 = vsel %vm1124, %v2446, 0
      %v2459 = vsel %vm1128, %v2447, 0
      %v2462 = vsel %vm1128, %v2448, 0
      %v2465 = vsel %vm1128, %v2449, 0
      %v2468 = vsel %vm1128, %v2450, 0
      %v2471 = vsel %vm1128, %v2451, 0
      %v2474 = vsel %vm1128, %v2452, 0
      %v2477 = vsel %vm1128, %v2453, 0
      %v2480 = vsel %vm1128, %v2454, 0
      %2482 = vmatprep.subr.bf16.mxu0 %v2462
      %2483 = vmatpush1.bf16.msra.mxu0 %v2459
      %2484 = vmatprep.subr.bf16.mxu0 0
      %2485 = vmatpush1.bf16.msra.mxu0 0
      %2486 = vmatprep.subr.bf16.mxu0 0
      %2487 = vmatpush1.bf16.msra.mxu0 0
      %2488 = vmatprep.subr.bf16.mxu0 0
      %2489 = vmatpush1.bf16.msra.mxu0 0
      %2490 = vmatprep.subr.bf16.mxu0 0
      %2491 = vmatpush1.bf16.msra.mxu0 0
      %2492 = vmatprep.subr.bf16.mxu0 0
      %2493 = vmatpush1.bf16.msra.mxu0 0
      %2494 = vmatprep.subr.bf16.mxu0 0
      %2495 = vmatpush1.bf16.msra.mxu0 0
      %2496 = vmatprep.subr.bf16.mxu0 0
      %2497 = vmatpush1.bf16.msra.mxu0 0
      %2498 = vmatprep.subr.bf16.mxu0 0
      %2499 = vmatpush1.bf16.msra.mxu0 0
      %2500 = vmatprep.subr.bf16.mxu0 0
      %2501 = vmatpush1.bf16.msra.mxu0 0
      %2502 = vmatprep.subr.bf16.mxu0 0
      %2503 = vmatpush1.bf16.msra.mxu0 0
      %2504 = vmatprep.subr.bf16.mxu0 0
      %2505 = vmatpush1.bf16.msra.mxu0 0
      %2506 = vmatprep.subr.bf16.mxu0 0
      %2507 = vmatpush1.bf16.msra.mxu0 0
      %2508 = vmatprep.subr.bf16.mxu0 0
      %2509 = vmatpush1.bf16.msra.mxu0 0
      %2510 = vmatprep.subr.bf16.mxu0 0
      %2511 = vmatpush1.bf16.msra.mxu0 0
      %2512 = vmatprep.subr.bf16.mxu0 0
      %2513 = vmatpush1.bf16.msra.mxu0 0
      %2514 = vmatprep.mubr.bf16.mxu0 0
      %2515 = vmatmul.mubr.bf16.gmra.mrb[0].mxu0 %v2456
      %v2516 = vpop.f32.mrb[0].mxu0
      %v2517 = vadd.f32 0.0, %v2516
      %v2518 = vpop.f32.mrb[0].mxu0
      %v2519 = vadd.f32 0.0, %v2518
      %v2520 = vpop.f32.mrb[0].mxu0
      %v2521 = vpop.f32.mrb[0].mxu0
      %2522 = vdwg.mxu0
      %2523 = vmatprep.subr.bf16.mxu0 %v2468
      %2524 = vmatpush1.bf16.msra.mxu0 %v2465
      %2525 = vmatprep.subr.bf16.mxu0 0
      %2526 = vmatpush1.bf16.msra.mxu0 0
      %2527 = vmatprep.subr.bf16.mxu0 0
      %2528 = vmatpush1.bf16.msra.mxu0 0
      %2529 = vmatprep.subr.bf16.mxu0 0
      %2530 = vmatpush1.bf16.msra.mxu0 0
      %2531 = vmatprep.subr.bf16.mxu0 0
      %2532 = vmatpush1.bf16.msra.mxu0 0
      %2533 = vmatprep.subr.bf16.mxu0 0
      %2534 = vmatpush1.bf16.msra.mxu0 0
      %2535 = vmatprep.subr.bf16.mxu0 0
      %2536 = vmatpush1.bf16.msra.mxu0 0
      %2537 = vmatprep.subr.bf16.mxu0 0
      %2538 = vmatpush1.bf16.msra.mxu0 0
      %2539 = vmatprep.subr.bf16.mxu0 0
      %2540 = vmatpush1.bf16.msra.mxu0 0
      %2541 = vmatprep.subr.bf16.mxu0 0
      %2542 = vmatpush1.bf16.msra.mxu0 0
      %2543 = vmatprep.subr.bf16.mxu0 0
      %2544 = vmatpush1.bf16.msra.mxu0 0
      %2545 = vmatprep.subr.bf16.mxu0 0
      %2546 = vmatpush1.bf16.msra.mxu0 0
      %2547 = vmatprep.subr.bf16.mxu0 0
      %2548 = vmatpush1.bf16.msra.mxu0 0
      %2549 = vmatprep.subr.bf16.mxu0 0
      %2550 = vmatpush1.bf16.msra.mxu0 0
      %2551 = vmatprep.subr.bf16.mxu0 0
      %2552 = vmatpush1.bf16.msra.mxu0 0
      %2553 = vmatprep.subr.bf16.mxu0 0
      %2554 = vmatpush1.bf16.msra.mxu0 0
      %2555 = vmatprep.mubr.bf16.mxu0 0
      %2556 = vmatmul.mubr.bf16.gmra.mrb[0].mxu0 %v2456
      %v2557 = vpop.f32.mrb[0].mxu0
      %v2558 = vadd.f32 0.0, %v2557
      %v2559 = vpop.f32.mrb[0].mxu0
      %v2560 = vadd.f32 0.0, %v2559
      %v2561 = vpop.f32.mrb[0].mxu0
      %v2562 = vpop.f32.mrb[0].mxu0
      %2563 = vdwg.mxu0
      %2564 = vmatprep.subr.bf16.mxu0 %v2474
      %2565 = vmatpush1.bf16.msra.mxu0 %v2471
      %2566 = vmatprep.subr.bf16.mxu0 0
      %2567 = vmatpush1.bf16.msra.mxu0 0
      %2568 = vmatprep.subr.bf16.mxu0 0
      %2569 = vmatpush1.bf16.msra.mxu0 0
      %2570 = vmatprep.subr.bf16.mxu0 0
      %2571 = vmatpush1.bf16.msra.mxu0 0
      %2572 = vmatprep.subr.bf16.mxu0 0
      %2573 = vmatpush1.bf16.msra.mxu0 0
      %2574 = vmatprep.subr.bf16.mxu0 0
      %2575 = vmatpush1.bf16.msra.mxu0 0
      %2576 = vmatprep.subr.bf16.mxu0 0
      %2577 = vmatpush1.bf16.msra.mxu0 0
      %2578 = vmatprep.subr.bf16.mxu0 0
      %2579 = vmatpush1.bf16.msra.mxu0 0
      %2580 = vmatprep.subr.bf16.mxu0 0
      %2581 = vmatpush1.bf16.msra.mxu0 0
      %2582 = vmatprep.subr.bf16.mxu0 0
      %2583 = vmatpush1.bf16.msra.mxu0 0
      %2584 = vmatprep.subr.bf16.mxu0 0
      %2585 = vmatpush1.bf16.msra.mxu0 0
      %2586 = vmatprep.subr.bf16.mxu0 0
      %2587 = vmatpush1.bf16.msra.mxu0 0
      %2588 = vmatprep.subr.bf16.mxu0 0
      %2589 = vmatpush1.bf16.msra.mxu0 0
      %2590 = vmatprep.subr.bf16.mxu0 0
      %2591 = vmatpush1.bf16.msra.mxu0 0
      %2592 = vmatprep.subr.bf16.mxu0 0
      %2593 = vmatpush1.bf16.msra.mxu0 0
      %2594 = vmatprep.subr.bf16.mxu0 0
      %2595 = vmatpush1.bf16.msra.mxu0 0
      %2596 = vmatprep.mubr.bf16.mxu0 0
      %2597 = vmatmul.mubr.bf16.gmra.mrb[0].mxu0 %v2456
      %v2598 = vpop.f32.mrb[0].mxu0
      %v2599 = vadd.f32 0.0, %v2598
      %v2600 = vpop.f32.mrb[0].mxu0
      %v2601 = vadd.f32 0.0, %v2600
      %v2602 = vpop.f32.mrb[0].mxu0
      %v2603 = vpop.f32.mrb[0].mxu0
      %2604 = vdwg.mxu0
      %2605 = vmatprep.subr.bf16.mxu0 %v2480
      %2606 = vmatpush1.bf16.msra.mxu0 %v2477
      %2607 = vmatprep.subr.bf16.mxu0 0
      %2608 = vmatpush1.bf16.msra.mxu0 0
      %2609 = vmatprep.subr.bf16.mxu0 0
      %2610 = vmatpush1.bf16.msra.mxu0 0
      %2611 = vmatprep.subr.bf16.mxu0 0
      %2612 = vmatpush1.bf16.msra.mxu0 0
      %2613 = vmatprep.subr.bf16.mxu0 0
      %2614 = vmatpush1.bf16.msra.mxu0 0
      %2615 = vmatprep.subr.bf16.mxu0 0
      %2616 = vmatpush1.bf16.msra.mxu0 0
      %2617 = vmatprep.subr.bf16.mxu0 0
      %2618 = vmatpush1.bf16.msra.mxu0 0
      %2619 = vmatprep.subr.bf16.mxu0 0
      %2620 = vmatpush1.bf16.msra.mxu0 0
      %2621 = vmatprep.subr.bf16.mxu0 0
      %2622 = vmatpush1.bf16.msra.mxu0 0
      %2623 = vmatprep.subr.bf16.mxu0 0
      %2624 = vmatpush1.bf16.msra.mxu0 0
      %2625 = vmatprep.subr.bf16.mxu0 0
      %2626 = vmatpush1.bf16.msra.mxu0 0
      %2627 = vmatprep.subr.bf16.mxu0 0
      %2628 = vmatpush1.bf16.msra.mxu0 0
      %2629 = vmatprep.subr.bf16.mxu0 0
      %2630 = vmatpush1.bf16.msra.mxu0 0
      %2631 = vmatprep.subr.bf16.mxu0 0
      %2632 = vmatpush1.bf16.msra.mxu0 0
      %2633 = vmatprep.subr.bf16.mxu0 0
      %2634 = vmatpush1.bf16.msra.mxu0 0
      %2635 = vmatprep.subr.bf16.mxu0 0
      %2636 = vmatpush1.bf16.msra.mxu0 0
      %2637 = vmatprep.mubr.bf16.mxu0 0
      %2638 = vmatmul.mubr.bf16.gmra.mrb[0].mxu0 %v2456
      %v2639 = vpop.f32.mrb[0].mxu0
      %v2640 = vadd.f32 0.0, %v2639
      %v2641 = vpop.f32.mrb[0].mxu0
      %v2642 = vadd.f32 0.0, %v2641
      %v2643 = vpop.f32.mrb[0].mxu0
      %v2644 = vpop.f32.mrb[0].mxu0
      %2645 = vdwg.mxu0
      %v2646 = vadd.f32 %v2412, %v2517
      %v2647 = vadd.f32 %v2413, %v2519
      %v2648 = vadd.f32 %v2414, %v2558
      %v2649 = vadd.f32 %v2415, %v2560
      %v2650 = vadd.f32 %v2416, %v2599
      %v2651 = vadd.f32 %v2417, %v2601
      %v2652 = vadd.f32 %v2418, %v2640
      %v2653 = vadd.f32 %v2419, %v2642
      %2654 = vrot.lane.b32.xlu0 %v1047, 96
      %v2655 = vpop.permute.xlu0 %2654
      %2656 = vrot.lane.b32.xlu0 %v1048, 96
      %v2657 = vpop.permute.xlu0 %2656
      %2658 = vrot.lane.b32.xlu0 %v1049, 96
      %v2659 = vpop.permute.xlu0 %2658
      %2660 = vrot.lane.b32.xlu0 %v1050, 96
      %v2661 = vpop.permute.xlu0 %2660
      %2662 = vrot.lane.b32.xlu0 %v1051, 96
      %v2663 = vpop.permute.xlu0 %2662
      %2664 = vrot.lane.b32.xlu0 %v1052, 96
      %v2665 = vpop.permute.xlu0 %2664
      %2666 = vrot.lane.b32.xlu0 %v1053, 96
      %v2667 = vpop.permute.xlu0 %2666
      %2668 = vrot.lane.b32.xlu0 %v1054, 96
      %v2669 = vpop.permute.xlu0 %2668
      %v2670 = vsel %vm840, %v2667, %v2669
      %v2671 = vsel %vm840, %v2665, %v2667
      %v2672 = vsel %vm840, %v2663, %v2665
      %v2673 = vsel %vm840, %v2661, %v2663
      %v2674 = vsel %vm840, %v2659, %v2661
      %v2675 = vsel %vm840, %v2657, %v2659
      %v2676 = vsel %vm840, %v2655, %v2657
      %v2677 = vsel %vm840, %v2669, %v2655
      %s2678 = scalar_lea.vmem %s3, 56
      %v2679 = vld [vmem:[%s2678] sm:$0xff]
      %v2680 = vpack.c.bf16 %v2679, %v2679
      %v2681 = vpack.c.bf16 %v2676, %v2676
      %v2682 = vpack.c.bf16 %v2675, %v2675
      %v2683 = vpack.c.bf16 %v2674, %v2674
      %v2684 = vpack.c.bf16 %v2673, %v2673
      %v2685 = vpack.c.bf16 %v2672, %v2672
      %v2686 = vpack.c.bf16 %v2671, %v2671
      %v2687 = vpack.c.bf16 %v2670, %v2670
      %v2688 = vpack.c.bf16 %v2677, %v2677
      %v2690 = vsel %vm1124, %v2680, 0
      %v2693 = vsel %vm1128, %v2681, 0
      %v2696 = vsel %vm1128, %v2682, 0
      %v2699 = vsel %vm1128, %v2683, 0
      %v2702 = vsel %vm1128, %v2684, 0
      %v2705 = vsel %vm1128, %v2685, 0
      %v2708 = vsel %vm1128, %v2686, 0
      %v2711 = vsel %vm1128, %v2687, 0
      %v2714 = vsel %vm1128, %v2688, 0
      %2716 = vmatprep.subr.bf16.mxu0 %v2696
      %2717 = vmatpush1.bf16.msra.mxu0 %v2693
      %2718 = vmatprep.subr.bf16.mxu0 0
      %2719 = vmatpush1.bf16.msra.mxu0 0
      %2720 = vmatprep.subr.bf16.mxu0 0
      %2721 = vmatpush1.bf16.msra.mxu0 0
      %2722 = vmatprep.subr.bf16.mxu0 0
      %2723 = vmatpush1.bf16.msra.mxu0 0
      %2724 = vmatprep.subr.bf16.mxu0 0
      %2725 = vmatpush1.bf16.msra.mxu0 0
      %2726 = vmatprep.subr.bf16.mxu0 0
      %2727 = vmatpush1.bf16.msra.mxu0 0
      %2728 = vmatprep.subr.bf16.mxu0 0
      %2729 = vmatpush1.bf16.msra.mxu0 0
      %2730 = vmatprep.subr.bf16.mxu0 0
      %2731 = vmatpush1.bf16.msra.mxu0 0
      %2732 = vmatprep.subr.bf16.mxu0 0
      %2733 = vmatpush1.bf16.msra.mxu0 0
      %2734 = vmatprep.subr.bf16.mxu0 0
      %2735 = vmatpush1.bf16.msra.mxu0 0
      %2736 = vmatprep.subr.bf16.mxu0 0
      %2737 = vmatpush1.bf16.msra.mxu0 0
      %2738 = vmatprep.subr.bf16.mxu0 0
      %2739 = vmatpush1.bf16.msra.mxu0 0
      %2740 = vmatprep.subr.bf16.mxu0 0
      %2741 = vmatpush1.bf16.msra.mxu0 0
      %2742 = vmatprep.subr.bf16.mxu0 0
      %2743 = vmatpush1.bf16.msra.mxu0 0
      %2744 = vmatprep.subr.bf16.mxu0 0
      %2745 = vmatpush1.bf16.msra.mxu0 0
      %2746 = vmatprep.subr.bf16.mxu0 0
      %2747 = vmatpush1.bf16.msra.mxu0 0
      %2748 = vmatprep.mubr.bf16.mxu0 0
      %2749 = vmatmul.mubr.bf16.gmra.mrb[0].mxu0 %v2690
      %v2750 = vpop.f32.mrb[0].mxu0
      %v2751 = vadd.f32 0.0, %v2750
      %v2752 = vpop.f32.mrb[0].mxu0
      %v2753 = vadd.f32 0.0, %v2752
      %v2754 = vpop.f32.mrb[0].mxu0
      %v2755 = vpop.f32.mrb[0].mxu0
      %2756 = vdwg.mxu0
      %2757 = vmatprep.subr.bf16.mxu0 %v2702
      %2758 = vmatpush1.bf16.msra.mxu0 %v2699
      %2759 = vmatprep.subr.bf16.mxu0 0
      %2760 = vmatpush1.bf16.msra.mxu0 0
      %2761 = vmatprep.subr.bf16.mxu0 0
      %2762 = vmatpush1.bf16.msra.mxu0 0
      %2763 = vmatprep.subr.bf16.mxu0 0
      %2764 = vmatpush1.bf16.msra.mxu0 0
      %2765 = vmatprep.subr.bf16.mxu0 0
      %2766 = vmatpush1.bf16.msra.mxu0 0
      %2767 = vmatprep.subr.bf16.mxu0 0
      %2768 = vmatpush1.bf16.msra.mxu0 0
      %2769 = vmatprep.subr.bf16.mxu0 0
      %2770 = vmatpush1.bf16.msra.mxu0 0
      %2771 = vmatprep.subr.bf16.mxu0 0
      %2772 = vmatpush1.bf16.msra.mxu0 0
      %2773 = vmatprep.subr.bf16.mxu0 0
      %2774 = vmatpush1.bf16.msra.mxu0 0
      %2775 = vmatprep.subr.bf16.mxu0 0
      %2776 = vmatpush1.bf16.msra.mxu0 0
      %2777 = vmatprep.subr.bf16.mxu0 0
      %2778 = vmatpush1.bf16.msra.mxu0 0
      %2779 = vmatprep.subr.bf16.mxu0 0
      %2780 = vmatpush1.bf16.msra.mxu0 0
      %2781 = vmatprep.subr.bf16.mxu0 0
      %2782 = vmatpush1.bf16.msra.mxu0 0
      %2783 = vmatprep.subr.bf16.mxu0 0
      %2784 = vmatpush1.bf16.msra.mxu0 0
      %2785 = vmatprep.subr.bf16.mxu0 0
      %2786 = vmatpush1.bf16.msra.mxu0 0
      %2787 = vmatprep.subr.bf16.mxu0 0
      %2788 = vmatpush1.bf16.msra.mxu0 0
      %2789 = vmatprep.mubr.bf16.mxu0 0
      %2790 = vmatmul.mubr.bf16.gmra.mrb[0].mxu0 %v2690
      %v2791 = vpop.f32.mrb[0].mxu0
      %v2792 = vadd.f32 0.0, %v2791
      %v2793 = vpop.f32.mrb[0].mxu0
      %v2794 = vadd.f32 0.0, %v2793
      %v2795 = vpop.f32.mrb[0].mxu0
      %v2796 = vpop.f32.mrb[0].mxu0
      %2797 = vdwg.mxu0
      %2798 = vmatprep.subr.bf16.mxu0 %v2708
      %2799 = vmatpush1.bf16.msra.mxu0 %v2705
      %2800 = vmatprep.subr.bf16.mxu0 0
      %2801 = vmatpush1.bf16.msra.mxu0 0
      %2802 = vmatprep.subr.bf16.mxu0 0
      %2803 = vmatpush1.bf16.msra.mxu0 0
      %2804 = vmatprep.subr.bf16.mxu0 0
      %2805 = vmatpush1.bf16.msra.mxu0 0
      %2806 = vmatprep.subr.bf16.mxu0 0
      %2807 = vmatpush1.bf16.msra.mxu0 0
      %2808 = vmatprep.subr.bf16.mxu0 0
      %2809 = vmatpush1.bf16.msra.mxu0 0
      %2810 = vmatprep.subr.bf16.mxu0 0
      %2811 = vmatpush1.bf16.msra.mxu0 0
      %2812 = vmatprep.subr.bf16.mxu0 0
      %2813 = vmatpush1.bf16.msra.mxu0 0
      %2814 = vmatprep.subr.bf16.mxu0 0
      %2815 = vmatpush1.bf16.msra.mxu0 0
      %2816 = vmatprep.subr.bf16.mxu0 0
      %2817 = vmatpush1.bf16.msra.mxu0 0
      %2818 = vmatprep.subr.bf16.mxu0 0
      %2819 = vmatpush1.bf16.msra.mxu0 0
      %2820 = vmatprep.subr.bf16.mxu0 0
      %2821 = vmatpush1.bf16.msra.mxu0 0
      %2822 = vmatprep.subr.bf16.mxu0 0
      %2823 = vmatpush1.bf16.msra.mxu0 0
      %2824 = vmatprep.subr.bf16.mxu0 0
      %2825 = vmatpush1.bf16.msra.mxu0 0
      %2826 = vmatprep.subr.bf16.mxu0 0
      %2827 = vmatpush1.bf16.msra.mxu0 0
      %2828 = vmatprep.subr.bf16.mxu0 0
      %2829 = vmatpush1.bf16.msra.mxu0 0
      %2830 = vmatprep.mubr.bf16.mxu0 0
      %2831 = vmatmul.mubr.bf16.gmra.mrb[0].mxu0 %v2690
      %v2832 = vpop.f32.mrb[0].mxu0
      %v2833 = vadd.f32 0.0, %v2832
      %v2834 = vpop.f32.mrb[0].mxu0
      %v2835 = vadd.f32 0.0, %v2834
      %v2836 = vpop.f32.mrb[0].mxu0
      %v2837 = vpop.f32.mrb[0].mxu0
      %2838 = vdwg.mxu0
      %2839 = vmatprep.subr.bf16.mxu0 %v2714
      %2840 = vmatpush1.bf16.msra.mxu0 %v2711
      %2841 = vmatprep.subr.bf16.mxu0 0
      %2842 = vmatpush1.bf16.msra.mxu0 0
      %2843 = vmatprep.subr.bf16.mxu0 0
      %2844 = vmatpush1.bf16.msra.mxu0 0
      %2845 = vmatprep.subr.bf16.mxu0 0
      %2846 = vmatpush1.bf16.msra.mxu0 0
      %2847 = vmatprep.subr.bf16.mxu0 0
      %2848 = vmatpush1.bf16.msra.mxu0 0
      %2849 = vmatprep.subr.bf16.mxu0 0
      %2850 = vmatpush1.bf16.msra.mxu0 0
      %2851 = vmatprep.subr.bf16.mxu0 0
      %2852 = vmatpush1.bf16.msra.mxu0 0
      %2853 = vmatprep.subr.bf16.mxu0 0
      %2854 = vmatpush1.bf16.msra.mxu0 0
      %2855 = vmatprep.subr.bf16.mxu0 0
      %2856 = vmatpush1.bf16.msra.mxu0 0
      %2857 = vmatprep.subr.bf16.mxu0 0
      %2858 = vmatpush1.bf16.msra.mxu0 0
      %2859 = vmatprep.subr.bf16.mxu0 0
      %2860 = vmatpush1.bf16.msra.mxu0 0
      %2861 = vmatprep.subr.bf16.mxu0 0
      %2862 = vmatpush1.bf16.msra.mxu0 0
      %2863 = vmatprep.subr.bf16.mxu0 0
      %2864 = vmatpush1.bf16.msra.mxu0 0
      %2865 = vmatprep.subr.bf16.mxu0 0
      %2866 = vmatpush1.bf16.msra.mxu0 0
      %2867 = vmatprep.subr.bf16.mxu0 0
      %2868 = vmatpush1.bf16.msra.mxu0 0
      %2869 = vmatprep.subr.bf16.mxu0 0
      %2870 = vmatpush1.bf16.msra.mxu0 0
      %2871 = vmatprep.mubr.bf16.mxu0 0
      %2872 = vmatmul.mubr.bf16.gmra.mrb[0].mxu0 %v2690
      %v2873 = vpop.f32.mrb[0].mxu0
      %v2874 = vadd.f32 0.0, %v2873
      %v2875 = vpop.f32.mrb[0].mxu0
      %v2876 = vadd.f32 0.0, %v2875
      %v2877 = vpop.f32.mrb[0].mxu0
      %v2878 = vpop.f32.mrb[0].mxu0
      %2879 = vdwg.mxu0
      %v2880 = vadd.f32 %v2646, %v2751
      %v2881 = vadd.f32 %v2647, %v2753
      %v2882 = vadd.f32 %v2648, %v2792
      %v2883 = vadd.f32 %v2649, %v2794
      %v2884 = vadd.f32 %v2650, %v2833
      %v2885 = vadd.f32 %v2651, %v2835
      %v2886 = vadd.f32 %v2652, %v2874
      %v2887 = vadd.f32 %v2653, %v2876
      %2888 = vrot.lane.b32.xlu0 %v1047, 95
      %v2889 = vpop.permute.xlu0 %2888
      %2890 = vrot.lane.b32.xlu0 %v1048, 95
      %v2891 = vpop.permute.xlu0 %2890
      %2892 = vrot.lane.b32.xlu0 %v1049, 95
      %v2893 = vpop.permute.xlu0 %2892
      %2894 = vrot.lane.b32.xlu0 %v1050, 95
      %v2895 = vpop.permute.xlu0 %2894
      %2896 = vrot.lane.b32.xlu0 %v1051, 95
      %v2897 = vpop.permute.xlu0 %2896
      %2898 = vrot.lane.b32.xlu0 %v1052, 95
      %v2899 = vpop.permute.xlu0 %2898
      %2900 = vrot.lane.b32.xlu0 %v1053, 95
      %v2901 = vpop.permute.xlu0 %2900
      %2902 = vrot.lane.b32.xlu0 %v1054, 95
      %v2903 = vpop.permute.xlu0 %2902
      %v2904 = vsel %vm920, %v2901, %v2903
      %v2905 = vsel %vm920, %v2899, %v2901
      %v2906 = vsel %vm920, %v2897, %v2899
      %v2907 = vsel %vm920, %v2895, %v2897
      %v2908 = vsel %vm920, %v2893, %v2895
      %v2909 = vsel %vm920, %v2891, %v2893
      %v2910 = vsel %vm920, %v2889, %v2891
      %v2911 = vsel %vm920, %v2903, %v2889
      %s2912 = scalar_lea.vmem %s3, 64
      %v2913 = vld [vmem:[%s2912] sm:$0xff]
      %v2914 = vpack.c.bf16 %v2913, %v2913
      %v2915 = vpack.c.bf16 %v2910, %v2910
      %v2916 = vpack.c.bf16 %v2909, %v2909
      %v2917 = vpack.c.bf16 %v2908, %v2908
      %v2918 = vpack.c.bf16 %v2907, %v2907
      %v2919 = vpack.c.bf16 %v2906, %v2906
      %v2920 = vpack.c.bf16 %v2905, %v2905
      %v2921 = vpack.c.bf16 %v2904, %v2904
      %v2922 = vpack.c.bf16 %v2911, %v2911
      %v2924 = vsel %vm1124, %v2914, 0
      %v2927 = vsel %vm1128, %v2915, 0
      %v2930 = vsel %vm1128, %v2916, 0
      %v2933 = vsel %vm1128, %v2917, 0
      %v2936 = vsel %vm1128, %v2918, 0
      %v2939 = vsel %vm1128, %v2919, 0
      %v2942 = vsel %vm1128, %v2920, 0
      %v2945 = vsel %vm1128, %v2921, 0
      %v2948 = vsel %vm1128, %v2922, 0
      %2950 = vmatprep.subr.bf16.mxu0 %v2930
      %2951 = vmatpush1.bf16.msra.mxu0 %v2927
      %2952 = vmatprep.subr.bf16.mxu0 0
      %2953 = vmatpush1.bf16.msra.mxu0 0
      %2954 = vmatprep.subr.bf16.mxu0 0
      %2955 = vmatpush1.bf16.msra.mxu0 0
      %2956 = vmatprep.subr.bf16.mxu0 0
      %2957 = vmatpush1.bf16.msra.mxu0 0
      %2958 = vmatprep.subr.bf16.mxu0 0
      %2959 = vmatpush1.bf16.msra.mxu0 0
      %2960 = vmatprep.subr.bf16.mxu0 0
      %2961 = vmatpush1.bf16.msra.mxu0 0
      %2962 = vmatprep.subr.bf16.mxu0 0
      %2963 = vmatpush1.bf16.msra.mxu0 0
      %2964 = vmatprep.subr.bf16.mxu0 0
      %2965 = vmatpush1.bf16.msra.mxu0 0
      %2966 = vmatprep.subr.bf16.mxu0 0
      %2967 = vmatpush1.bf16.msra.mxu0 0
      %2968 = vmatprep.subr.bf16.mxu0 0
      %2969 = vmatpush1.bf16.msra.mxu0 0
      %2970 = vmatprep.subr.bf16.mxu0 0
      %2971 = vmatpush1.bf16.msra.mxu0 0
      %2972 = vmatprep.subr.bf16.mxu0 0
      %2973 = vmatpush1.bf16.msra.mxu0 0
      %2974 = vmatprep.subr.bf16.mxu0 0
      %2975 = vmatpush1.bf16.msra.mxu0 0
      %2976 = vmatprep.subr.bf16.mxu0 0
      %2977 = vmatpush1.bf16.msra.mxu0 0
      %2978 = vmatprep.subr.bf16.mxu0 0
      %2979 = vmatpush1.bf16.msra.mxu0 0
      %2980 = vmatprep.subr.bf16.mxu0 0
      %2981 = vmatpush1.bf16.msra.mxu0 0
      %2982 = vmatprep.mubr.bf16.mxu0 0
      %2983 = vmatmul.mubr.bf16.gmra.mrb[0].mxu0 %v2924
      %v2984 = vpop.f32.mrb[0].mxu0
      %v2985 = vadd.f32 0.0, %v2984
      %v2986 = vpop.f32.mrb[0].mxu0
      %v2987 = vadd.f32 0.0, %v2986
      %v2988 = vpop.f32.mrb[0].mxu0
      %v2989 = vpop.f32.mrb[0].mxu0
      %2990 = vdwg.mxu0
      %2991 = vmatprep.subr.bf16.mxu0 %v2936
      %2992 = vmatpush1.bf16.msra.mxu0 %v2933
      %2993 = vmatprep.subr.bf16.mxu0 0
      %2994 = vmatpush1.bf16.msra.mxu0 0
      %2995 = vmatprep.subr.bf16.mxu0 0
      %2996 = vmatpush1.bf16.msra.mxu0 0
      %2997 = vmatprep.subr.bf16.mxu0 0
      %2998 = vmatpush1.bf16.msra.mxu0 0
      %2999 = vmatprep.subr.bf16.mxu0 0
      %3000 = vmatpush1.bf16.msra.mxu0 0
      %3001 = vmatprep.subr.bf16.mxu0 0
      %3002 = vmatpush1.bf16.msra.mxu0 0
      %3003 = vmatprep.subr.bf16.mxu0 0
      %3004 = vmatpush1.bf16.msra.mxu0 0
      %3005 = vmatprep.subr.bf16.mxu0 0
      %3006 = vmatpush1.bf16.msra.mxu0 0
      %3007 = vmatprep.subr.bf16.mxu0 0
      %3008 = vmatpush1.bf16.msra.mxu0 0
      %3009 = vmatprep.subr.bf16.mxu0 0
      %3010 = vmatpush1.bf16.msra.mxu0 0
      %3011 = vmatprep.subr.bf16.mxu0 0
      %3012 = vmatpush1.bf16.msra.mxu0 0
      %3013 = vmatprep.subr.bf16.mxu0 0
      %3014 = vmatpush1.bf16.msra.mxu0 0
      %3015 = vmatprep.subr.bf16.mxu0 0
      %3016 = vmatpush1.bf16.msra.mxu0 0
      %3017 = vmatprep.subr.bf16.mxu0 0
      %3018 = vmatpush1.bf16.msra.mxu0 0
      %3019 = vmatprep.subr.bf16.mxu0 0
      %3020 = vmatpush1.bf16.msra.mxu0 0
      %3021 = vmatprep.subr.bf16.mxu0 0
      %3022 = vmatpush1.bf16.msra.mxu0 0
      %3023 = vmatprep.mubr.bf16.mxu0 0
      %3024 = vmatmul.mubr.bf16.gmra.mrb[0].mxu0 %v2924
      %v3025 = vpop.f32.mrb[0].mxu0
      %v3026 = vadd.f32 0.0, %v3025
      %v3027 = vpop.f32.mrb[0].mxu0
      %v3028 = vadd.f32 0.0, %v3027
      %v3029 = vpop.f32.mrb[0].mxu0
      %v3030 = vpop.f32.mrb[0].mxu0
      %3031 = vdwg.mxu0
      %3032 = vmatprep.subr.bf16.mxu0 %v2942
      %3033 = vmatpush1.bf16.msra.mxu0 %v2939
      %3034 = vmatprep.subr.bf16.mxu0 0
      %3035 = vmatpush1.bf16.msra.mxu0 0
      %3036 = vmatprep.subr.bf16.mxu0 0
      %3037 = vmatpush1.bf16.msra.mxu0 0
      %3038 = vmatprep.subr.bf16.mxu0 0
      %3039 = vmatpush1.bf16.msra.mxu0 0
      %3040 = vmatprep.subr.bf16.mxu0 0
      %3041 = vmatpush1.bf16.msra.mxu0 0
      %3042 = vmatprep.subr.bf16.mxu0 0
      %3043 = vmatpush1.bf16.msra.mxu0 0
      %3044 = vmatprep.subr.bf16.mxu0 0
      %3045 = vmatpush1.bf16.msra.mxu0 0
      %3046 = vmatprep.subr.bf16.mxu0 0
      %3047 = vmatpush1.bf16.msra.mxu0 0
      %3048 = vmatprep.subr.bf16.mxu0 0
      %3049 = vmatpush1.bf16.msra.mxu0 0
      %3050 = vmatprep.subr.bf16.mxu0 0
      %3051 = vmatpush1.bf16.msra.mxu0 0
      %3052 = vmatprep.subr.bf16.mxu0 0
      %3053 = vmatpush1.bf16.msra.mxu0 0
      %3054 = vmatprep.subr.bf16.mxu0 0
      %3055 = vmatpush1.bf16.msra.mxu0 0
      %3056 = vmatprep.subr.bf16.mxu0 0
      %3057 = vmatpush1.bf16.msra.mxu0 0
      %3058 = vmatprep.subr.bf16.mxu0 0
      %3059 = vmatpush1.bf16.msra.mxu0 0
      %3060 = vmatprep.subr.bf16.mxu0 0
      %3061 = vmatpush1.bf16.msra.mxu0 0
      %3062 = vmatprep.subr.bf16.mxu0 0
      %3063 = vmatpush1.bf16.msra.mxu0 0
      %3064 = vmatprep.mubr.bf16.mxu0 0
      %3065 = vmatmul.mubr.bf16.gmra.mrb[0].mxu0 %v2924
      %v3066 = vpop.f32.mrb[0].mxu0
      %v3067 = vadd.f32 0.0, %v3066
      %v3068 = vpop.f32.mrb[0].mxu0
      %v3069 = vadd.f32 0.0, %v3068
      %v3070 = vpop.f32.mrb[0].mxu0
      %v3071 = vpop.f32.mrb[0].mxu0
      %3072 = vdwg.mxu0
      %3073 = vmatprep.subr.bf16.mxu0 %v2948
      %3074 = vmatpush1.bf16.msra.mxu0 %v2945
      %3075 = vmatprep.subr.bf16.mxu0 0
      %3076 = vmatpush1.bf16.msra.mxu0 0
      %3077 = vmatprep.subr.bf16.mxu0 0
      %3078 = vmatpush1.bf16.msra.mxu0 0
      %3079 = vmatprep.subr.bf16.mxu0 0
      %3080 = vmatpush1.bf16.msra.mxu0 0
      %3081 = vmatprep.subr.bf16.mxu0 0
      %3082 = vmatpush1.bf16.msra.mxu0 0
      %3083 = vmatprep.subr.bf16.mxu0 0
      %3084 = vmatpush1.bf16.msra.mxu0 0
      %3085 = vmatprep.subr.bf16.mxu0 0
      %3086 = vmatpush1.bf16.msra.mxu0 0
      %3087 = vmatprep.subr.bf16.mxu0 0
      %3088 = vmatpush1.bf16.msra.mxu0 0
      %3089 = vmatprep.subr.bf16.mxu0 0
      %3090 = vmatpush1.bf16.msra.mxu0 0
      %3091 = vmatprep.subr.bf16.mxu0 0
      %3092 = vmatpush1.bf16.msra.mxu0 0
      %3093 = vmatprep.subr.bf16.mxu0 0
      %3094 = vmatpush1.bf16.msra.mxu0 0
      %3095 = vmatprep.subr.bf16.mxu0 0
      %3096 = vmatpush1.bf16.msra.mxu0 0
      %3097 = vmatprep.subr.bf16.mxu0 0
      %3098 = vmatpush1.bf16.msra.mxu0 0
      %3099 = vmatprep.subr.bf16.mxu0 0
      %3100 = vmatpush1.bf16.msra.mxu0 0
      %3101 = vmatprep.subr.bf16.mxu0 0
      %3102 = vmatpush1.bf16.msra.mxu0 0
      %3103 = vmatprep.subr.bf16.mxu0 0
      %3104 = vmatpush1.bf16.msra.mxu0 0
      %3105 = vmatprep.mubr.bf16.mxu0 0
      %3106 = vmatmul.mubr.bf16.gmra.mrb[0].mxu0 %v2924
      %v3107 = vpop.f32.mrb[0].mxu0
      %v3108 = vadd.f32 0.0, %v3107
      %v3109 = vpop.f32.mrb[0].mxu0
      %v3110 = vadd.f32 0.0, %v3109
      %v3111 = vpop.f32.mrb[0].mxu0
      %v3112 = vpop.f32.mrb[0].mxu0
      %3113 = vdwg.mxu0
      %v3114 = vadd.f32 %v2880, %v2985
      %v3115 = vadd.f32 %v2881, %v2987
      %v3116 = vadd.f32 %v2882, %v3026
      %v3117 = vadd.f32 %v2883, %v3028
      %v3118 = vadd.f32 %v2884, %v3067
      %v3119 = vadd.f32 %v2885, %v3069
      %v3120 = vadd.f32 %v2886, %v3108
      %v3121 = vadd.f32 %v2887, %v3110
      %v3122 = vld [vmem:[%s4] sm:$0xff]
      %3124 = vset.pattern.permute.xlu0 0
      %3125 = vperm.xlu0 %3124, %v3122
      %v3126 = vpop.permute.xlu0 %3125
      %v3128 = vadd.f32 %v3114, %v3126
      %v3129 = vadd.f32 %v3115, %v3126
      %v3130 = vadd.f32 %v3116, %v3126
      %v3131 = vadd.f32 %v3117, %v3126
      %v3132 = vadd.f32 %v3118, %v3126
      %v3133 = vadd.f32 %v3119, %v3126
      %v3134 = vadd.f32 %v3120, %v3126
      %v3135 = vadd.f32 %v3121, %v3126
      %v3136 = vmax.f32 %v3128, 0.0
      %v3137 = vmax.f32 %v3129, 0.0
      %v3138 = vmax.f32 %v3130, 0.0
      %v3139 = vmax.f32 %v3131, 0.0
      %v3140 = vmax.f32 %v3132, 0.0
      %v3141 = vmax.f32 %v3133, 0.0
      %v3142 = vmax.f32 %v3134, 0.0
      %v3143 = vmax.f32 %v3135, 0.0
      %3144 = vrot.lane.b32.xlu0 %v3136, 127
      %v3145 = vpop.permute.xlu0 %3144
      %3146 = vrot.lane.b32.xlu0 %v3137, 127
      %v3147 = vpop.permute.xlu0 %3146
      %3148 = vrot.lane.b32.xlu0 %v3138, 127
      %v3149 = vpop.permute.xlu0 %3148
      %3150 = vrot.lane.b32.xlu0 %v3139, 127
      %v3151 = vpop.permute.xlu0 %3150
      %3152 = vrot.lane.b32.xlu0 %v3140, 127
      %v3153 = vpop.permute.xlu0 %3152
      %3154 = vrot.lane.b32.xlu0 %v3141, 127
      %v3155 = vpop.permute.xlu0 %3154
      %3156 = vrot.lane.b32.xlu0 %v3142, 127
      %v3157 = vpop.permute.xlu0 %3156
      %3158 = vrot.lane.b32.xlu0 %v3143, 127
      %v3159 = vpop.permute.xlu0 %3158
      %v3160 = vsel %vm680, %v3157, %v3159
      %v3161 = vsel %vm680, %v3155, %v3157
      %v3162 = vsel %vm680, %v3153, %v3155
      %v3163 = vsel %vm680, %v3151, %v3153
      %v3164 = vsel %vm680, %v3149, %v3151
      %v3165 = vsel %vm680, %v3147, %v3149
      %v3166 = vsel %vm680, %v3145, %v3147
      %v3167 = vsel %vm680, %v3159, %v3145
      %v3168 = vmax.f32 %v3136, %v3166
      %v3169 = vmax.f32 %v3137, %v3165
      %v3170 = vmax.f32 %v3138, %v3164
      %v3171 = vmax.f32 %v3139, %v3163
      %v3172 = vmax.f32 %v3140, %v3162
      %v3173 = vmax.f32 %v3141, %v3161
      %v3174 = vmax.f32 %v3142, %v3160
      %v3175 = vmax.f32 %v3143, %v3167
      %3176 = vrot.lane.b32.xlu0 %v3136, 96
      %v3177 = vpop.permute.xlu0 %3176
      %3178 = vrot.lane.b32.xlu0 %v3137, 96
      %v3179 = vpop.permute.xlu0 %3178
      %3180 = vrot.lane.b32.xlu0 %v3138, 96
      %v3181 = vpop.permute.xlu0 %3180
      %3182 = vrot.lane.b32.xlu0 %v3139, 96
      %v3183 = vpop.permute.xlu0 %3182
      %3184 = vrot.lane.b32.xlu0 %v3140, 96
      %v3185 = vpop.permute.xlu0 %3184
      %3186 = vrot.lane.b32.xlu0 %v3141, 96
      %v3187 = vpop.permute.xlu0 %3186
      %3188 = vrot.lane.b32.xlu0 %v3142, 96
      %v3189 = vpop.permute.xlu0 %3188
      %3190 = vrot.lane.b32.xlu0 %v3143, 96
      %v3191 = vpop.permute.xlu0 %3190
      %v3192 = vsel %vm840, %v3189, %v3191
      %v3193 = vsel %vm840, %v3187, %v3189
      %v3194 = vsel %vm840, %v3185, %v3187
      %v3195 = vsel %vm840, %v3183, %v3185
      %v3196 = vsel %vm840, %v3181, %v3183
      %v3197 = vsel %vm840, %v3179, %v3181
      %v3198 = vsel %vm840, %v3177, %v3179
      %v3199 = vsel %vm840, %v3191, %v3177
      %v3200 = vmax.f32 %v3168, %v3198
      %v3201 = vmax.f32 %v3169, %v3197
      %v3202 = vmax.f32 %v3170, %v3196
      %v3203 = vmax.f32 %v3171, %v3195
      %v3204 = vmax.f32 %v3172, %v3194
      %v3205 = vmax.f32 %v3173, %v3193
      %v3206 = vmax.f32 %v3174, %v3192
      %v3207 = vmax.f32 %v3175, %v3199
      %3208 = vrot.lane.b32.xlu0 %v3136, 95
      %v3209 = vpop.permute.xlu0 %3208
      %3210 = vrot.lane.b32.xlu0 %v3137, 95
      %v3211 = vpop.permute.xlu0 %3210
      %3212 = vrot.lane.b32.xlu0 %v3138, 95
      %v3213 = vpop.permute.xlu0 %3212
      %3214 = vrot.lane.b32.xlu0 %v3139, 95
      %v3215 = vpop.permute.xlu0 %3214
      %3216 = vrot.lane.b32.xlu0 %v3140, 95
      %v3217 = vpop.permute.xlu0 %3216
      %3218 = vrot.lane.b32.xlu0 %v3141, 95
      %v3219 = vpop.permute.xlu0 %3218
      %3220 = vrot.lane.b32.xlu0 %v3142, 95
      %v3221 = vpop.permute.xlu0 %3220
      %3222 = vrot.lane.b32.xlu0 %v3143, 95
      %v3223 = vpop.permute.xlu0 %3222
      %v3224 = vsel %vm920, %v3221, %v3223
      %v3225 = vsel %vm920, %v3219, %v3221
      %v3226 = vsel %vm920, %v3217, %v3219
      %v3227 = vsel %vm920, %v3215, %v3217
      %v3228 = vsel %vm920, %v3213, %v3215
      %v3229 = vsel %vm920, %v3211, %v3213
      %v3230 = vsel %vm920, %v3209, %v3211
      %v3231 = vsel %vm920, %v3223, %v3209
      %v3232 = vmax.f32 %v3200, %v3230
      %v3233 = vmax.f32 %v3201, %v3229
      %v3234 = vmax.f32 %v3202, %v3228
      %v3235 = vmax.f32 %v3203, %v3227
      %v3236 = vmax.f32 %v3204, %v3226
      %v3237 = vmax.f32 %v3205, %v3225
      %v3238 = vmax.f32 %v3206, %v3224
      %v3239 = vmax.f32 %v3207, %v3231
      %v3240 = vld [vmem:[%s6] sm:$0xff]
      %v3241 = vld [vmem:[%s6 + $0x8] sm:$0xff]
      %v3242 = vld [vmem:[%s6 + $0x10] sm:$0xff]
      %v3243 = vld [vmem:[%s6 + $0x18] sm:$0xff]
      %v3244 = vld [vmem:[%s6 + $0x20] sm:$0xff]
      %v3245 = vld [vmem:[%s6 + $0x28] sm:$0xff]
      %v3246 = vld [vmem:[%s6 + $0x30] sm:$0xff]
      %v3247 = vld [vmem:[%s6 + $0x38] sm:$0xff]
      %v3248 = vld [vmem:[%s6 + $0x40] sm:$0xff]
      %v3249 = vld [vmem:[%s6 + $0x48] sm:$0xff]
      %v3250 = vld [vmem:[%s6 + $0x50] sm:$0xff]
      %v3251 = vld [vmem:[%s6 + $0x58] sm:$0xff]
      %v3252 = vld [vmem:[%s6 + $0x60] sm:$0xff]
      %v3253 = vld [vmem:[%s6 + $0x68] sm:$0xff]
      %v3254 = vld [vmem:[%s6 + $0x70] sm:$0xff]
      %v3255 = vld [vmem:[%s6 + $0x78] sm:$0xff]
      %v3256 = vld [vmem:[%s6 + $0x80] sm:$0xff]
      %v3257 = vld [vmem:[%s6 + $0x88] sm:$0xff]
      %v3258 = vld [vmem:[%s6 + $0x90] sm:$0xff]
      %v3259 = vld [vmem:[%s6 + $0x98] sm:$0xff]
      %v3260 = vld [vmem:[%s6 + $0xa0] sm:$0xff]
      %v3261 = vld [vmem:[%s6 + $0xa8] sm:$0xff]
      %v3262 = vld [vmem:[%s6 + $0xb0] sm:$0xff]
      %v3263 = vld [vmem:[%s6 + $0xb8] sm:$0xff]
      %v3264 = vld [vmem:[%s6 + $0xc0] sm:$0xff]
      %v3265 = vld [vmem:[%s6 + $0xc8] sm:$0xff]
      %v3266 = vld [vmem:[%s6 + $0xd0] sm:$0xff]
      %v3267 = vld [vmem:[%s6 + $0xd8] sm:$0xff]
      %v3268 = vld [vmem:[%s6 + $0xe0] sm:$0xff]
      %v3269 = vld [vmem:[%s6 + $0xe8] sm:$0xff]
      %v3270 = vld [vmem:[%s6 + $0xf0] sm:$0xff]
      %v3271 = vld [vmem:[%s6 + $0xf8] sm:$0xff]
      %v3272 = vld [vmem:[%s6 + $0x100] sm:$0xff]
      %v3273 = vld [vmem:[%s6 + $0x108] sm:$0xff]
      %v3274 = vld [vmem:[%s6 + $0x110] sm:$0xff]
      %v3275 = vld [vmem:[%s6 + $0x118] sm:$0xff]
      %v3276 = vld [vmem:[%s6 + $0x120] sm:$0xff]
      %v3277 = vld [vmem:[%s6 + $0x128] sm:$0xff]
      %v3278 = vld [vmem:[%s6 + $0x130] sm:$0xff]
      %v3279 = vld [vmem:[%s6 + $0x138] sm:$0xff]
      %v3280 = vld [vmem:[%s6 + $0x140] sm:$0xff]
      %v3281 = vld [vmem:[%s6 + $0x148] sm:$0xff]
      %v3282 = vld [vmem:[%s6 + $0x150] sm:$0xff]
      %v3283 = vld [vmem:[%s6 + $0x158] sm:$0xff]
      %v3284 = vld [vmem:[%s6 + $0x160] sm:$0xff]
      %v3285 = vld [vmem:[%s6 + $0x168] sm:$0xff]
      %v3286 = vld [vmem:[%s6 + $0x170] sm:$0xff]
      %v3287 = vld [vmem:[%s6 + $0x178] sm:$0xff]
      %v3288 = vld [vmem:[%s6 + $0x180] sm:$0xff]
      %v3289 = vld [vmem:[%s6 + $0x188] sm:$0xff]
      %v3290 = vld [vmem:[%s6 + $0x190] sm:$0xff]
      %v3291 = vld [vmem:[%s6 + $0x198] sm:$0xff]
      %v3292 = vld [vmem:[%s6 + $0x1a0] sm:$0xff]
      %v3293 = vld [vmem:[%s6 + $0x1a8] sm:$0xff]
      %v3294 = vld [vmem:[%s6 + $0x1b0] sm:$0xff]
      %v3295 = vld [vmem:[%s6 + $0x1b8] sm:$0xff]
      %v3296 = vld [vmem:[%s6 + $0x1c0] sm:$0xff]
      %v3297 = vld [vmem:[%s6 + $0x1c8] sm:$0xff]
      %v3298 = vld [vmem:[%s6 + $0x1d0] sm:$0xff]
      %v3299 = vld [vmem:[%s6 + $0x1d8] sm:$0xff]
      %v3300 = vld [vmem:[%s6 + $0x1e0] sm:$0xff]
      %v3301 = vld [vmem:[%s6 + $0x1e8] sm:$0xff]
      %v3302 = vld [vmem:[%s6 + $0x1f0] sm:$0xff]
      %v3303 = vld [vmem:[%s6 + $0x1f8] sm:$0xff]
      %v3304 = vld [vmem:[%s6 + $0x200] sm:$0xff]
      %v3305 = vld [vmem:[%s6 + $0x208] sm:$0xff]
      %v3306 = vld [vmem:[%s6 + $0x210] sm:$0xff]
      %v3307 = vld [vmem:[%s6 + $0x218] sm:$0xff]
      %v3308 = vld [vmem:[%s6 + $0x220] sm:$0xff]
      %v3309 = vld [vmem:[%s6 + $0x228] sm:$0xff]
      %v3310 = vld [vmem:[%s6 + $0x230] sm:$0xff]
      %v3311 = vld [vmem:[%s6 + $0x238] sm:$0xff]
      %v3312 = vld [vmem:[%s6 + $0x240] sm:$0xff]
      %v3313 = vld [vmem:[%s6 + $0x248] sm:$0xff]
      %v3314 = vld [vmem:[%s6 + $0x250] sm:$0xff]
      %v3315 = vld [vmem:[%s6 + $0x258] sm:$0xff]
      %v3316 = vld [vmem:[%s6 + $0x260] sm:$0xff]
      %v3317 = vld [vmem:[%s6 + $0x268] sm:$0xff]
      %v3318 = vld [vmem:[%s6 + $0x270] sm:$0xff]
      %v3319 = vld [vmem:[%s6 + $0x278] sm:$0xff]
      %v3320 = vld [vmem:[%s6 + $0x280] sm:$0xff]
      %v3321 = vld [vmem:[%s6 + $0x288] sm:$0xff]
      %v3322 = vld [vmem:[%s6 + $0x290] sm:$0xff]
      %v3323 = vld [vmem:[%s6 + $0x298] sm:$0xff]
      %v3324 = vld [vmem:[%s6 + $0x2a0] sm:$0xff]
      %v3325 = vld [vmem:[%s6 + $0x2a8] sm:$0xff]
      %v3326 = vld [vmem:[%s6 + $0x2b0] sm:$0xff]
      %v3327 = vld [vmem:[%s6 + $0x2b8] sm:$0xff]
      %v3328 = vld [vmem:[%s6 + $0x2c0] sm:$0xff]
      %v3329 = vld [vmem:[%s6 + $0x2c8] sm:$0xff]
      %v3330 = vld [vmem:[%s6 + $0x2d0] sm:$0xff]
      %v3331 = vld [vmem:[%s6 + $0x2d8] sm:$0xff]
      %v3332 = vld [vmem:[%s6 + $0x2e0] sm:$0xff]
      %v3333 = vld [vmem:[%s6 + $0x2e8] sm:$0xff]
      %v3334 = vld [vmem:[%s6 + $0x2f0] sm:$0xff]
      %v3335 = vld [vmem:[%s6 + $0x2f8] sm:$0xff]
      %v3336 = vld [vmem:[%s6 + $0x300] sm:$0xff]
      %v3337 = vld [vmem:[%s6 + $0x308] sm:$0xff]
      %v3338 = vld [vmem:[%s6 + $0x310] sm:$0xff]
      %v3339 = vld [vmem:[%s6 + $0x318] sm:$0xff]
      %v3340 = vld [vmem:[%s6 + $0x320] sm:$0xff]
      %v3341 = vld [vmem:[%s6 + $0x328] sm:$0xff]
      %v3342 = vld [vmem:[%s6 + $0x330] sm:$0xff]
      %v3343 = vld [vmem:[%s6 + $0x338] sm:$0xff]
      %v3344 = vld [vmem:[%s6 + $0x340] sm:$0xff]
      %v3345 = vld [vmem:[%s6 + $0x348] sm:$0xff]
      %v3346 = vld [vmem:[%s6 + $0x350] sm:$0xff]
      %v3347 = vld [vmem:[%s6 + $0x358] sm:$0xff]
      %v3348 = vld [vmem:[%s6 + $0x360] sm:$0xff]
      %v3349 = vld [vmem:[%s6 + $0x368] sm:$0xff]
      %v3350 = vld [vmem:[%s6 + $0x370] sm:$0xff]
      %v3351 = vld [vmem:[%s6 + $0x378] sm:$0xff]
      %v3352 = vld [vmem:[%s6 + $0x380] sm:$0xff]
      %v3353 = vld [vmem:[%s6 + $0x388] sm:$0xff]
      %v3354 = vld [vmem:[%s6 + $0x390] sm:$0xff]
      %v3355 = vld [vmem:[%s6 + $0x398] sm:$0xff]
      %v3356 = vld [vmem:[%s6 + $0x3a0] sm:$0xff]
      %v3357 = vld [vmem:[%s6 + $0x3a8] sm:$0xff]
      %v3358 = vld [vmem:[%s6 + $0x3b0] sm:$0xff]
      %v3359 = vld [vmem:[%s6 + $0x3b8] sm:$0xff]
      %v3360 = vld [vmem:[%s6 + $0x3c0] sm:$0xff]
      %v3361 = vld [vmem:[%s6 + $0x3c8] sm:$0xff]
      %v3362 = vld [vmem:[%s6 + $0x3d0] sm:$0xff]
      %v3363 = vld [vmem:[%s6 + $0x3d8] sm:$0xff]
      %v3364 = vld [vmem:[%s6 + $0x3e0] sm:$0xff]
      %v3365 = vld [vmem:[%s6 + $0x3e8] sm:$0xff]
      %v3366 = vld [vmem:[%s6 + $0x3f0] sm:$0xff]
      %v3367 = vld [vmem:[%s6 + $0x3f8] sm:$0xff]
      %v3368 = vld [vmem:[%s6 + $0x400] sm:$0xff]
      %v3369 = vld [vmem:[%s6 + $0x408] sm:$0xff]
      %v3370 = vld [vmem:[%s6 + $0x410] sm:$0xff]
      %v3371 = vld [vmem:[%s6 + $0x418] sm:$0xff]
      %v3372 = vld [vmem:[%s6 + $0x420] sm:$0xff]
      %v3373 = vld [vmem:[%s6 + $0x428] sm:$0xff]
      %v3374 = vld [vmem:[%s6 + $0x430] sm:$0xff]
      %v3375 = vld [vmem:[%s6 + $0x438] sm:$0xff]
      %v3376 = vld [vmem:[%s6 + $0x440] sm:$0xff]
      %v3377 = vld [vmem:[%s6 + $0x448] sm:$0xff]
      %v3378 = vld [vmem:[%s6 + $0x450] sm:$0xff]
      %v3379 = vld [vmem:[%s6 + $0x458] sm:$0xff]
      %v3380 = vld [vmem:[%s6 + $0x460] sm:$0xff]
      %v3381 = vld [vmem:[%s6 + $0x468] sm:$0xff]
      %v3382 = vld [vmem:[%s6 + $0x470] sm:$0xff]
      %v3383 = vld [vmem:[%s6 + $0x478] sm:$0xff]
      %v3384 = vld [vmem:[%s6 + $0x480] sm:$0xff]
      %v3385 = vld [vmem:[%s6 + $0x488] sm:$0xff]
      %v3386 = vld [vmem:[%s6 + $0x490] sm:$0xff]
      %v3387 = vld [vmem:[%s6 + $0x498] sm:$0xff]
      %v3388 = vld [vmem:[%s6 + $0x4a0] sm:$0xff]
      %v3389 = vld [vmem:[%s6 + $0x4a8] sm:$0xff]
      %v3390 = vld [vmem:[%s6 + $0x4b0] sm:$0xff]
      %v3391 = vld [vmem:[%s6 + $0x4b8] sm:$0xff]
      %v3392 = vld [vmem:[%s6 + $0x4c0] sm:$0xff]
      %v3393 = vld [vmem:[%s6 + $0x4c8] sm:$0xff]
      %v3394 = vld [vmem:[%s6 + $0x4d0] sm:$0xff]
      %v3395 = vld [vmem:[%s6 + $0x4d8] sm:$0xff]
      %v3396 = vld [vmem:[%s6 + $0x4e0] sm:$0xff]
      %v3397 = vld [vmem:[%s6 + $0x4e8] sm:$0xff]
      %v3398 = vld [vmem:[%s6 + $0x4f0] sm:$0xff]
      %v3399 = vld [vmem:[%s6 + $0x4f8] sm:$0xff]
      %v3400 = vld [vmem:[%s6 + $0x500] sm:$0xff]
      %v3401 = vld [vmem:[%s6 + $0x508] sm:$0xff]
      %v3402 = vld [vmem:[%s6 + $0x510] sm:$0xff]
      %v3403 = vld [vmem:[%s6 + $0x518] sm:$0xff]
      %v3404 = vld [vmem:[%s6 + $0x520] sm:$0xff]
      %v3405 = vld [vmem:[%s6 + $0x528] sm:$0xff]
      %v3406 = vld [vmem:[%s6 + $0x530] sm:$0xff]
      %v3407 = vld [vmem:[%s6 + $0x538] sm:$0xff]
      %v3408 = vld [vmem:[%s6 + $0x540] sm:$0xff]
      %v3409 = vld [vmem:[%s6 + $0x548] sm:$0xff]
      %v3410 = vld [vmem:[%s6 + $0x550] sm:$0xff]
      %v3411 = vld [vmem:[%s6 + $0x558] sm:$0xff]
      %v3412 = vld [vmem:[%s6 + $0x560] sm:$0xff]
      %v3413 = vld [vmem:[%s6 + $0x568] sm:$0xff]
      %v3414 = vld [vmem:[%s6 + $0x570] sm:$0xff]
      %v3415 = vld [vmem:[%s6 + $0x578] sm:$0xff]
      %v3416 = vld [vmem:[%s6 + $0x580] sm:$0xff]
      %v3417 = vld [vmem:[%s6 + $0x588] sm:$0xff]
      %v3418 = vld [vmem:[%s6 + $0x590] sm:$0xff]
      %v3419 = vld [vmem:[%s6 + $0x598] sm:$0xff]
      %v3420 = vld [vmem:[%s6 + $0x5a0] sm:$0xff]
      %v3421 = vld [vmem:[%s6 + $0x5a8] sm:$0xff]
      %v3422 = vld [vmem:[%s6 + $0x5b0] sm:$0xff]
      %v3423 = vld [vmem:[%s6 + $0x5b8] sm:$0xff]
      %v3424 = vld [vmem:[%s6 + $0x5c0] sm:$0xff]
      %v3425 = vld [vmem:[%s6 + $0x5c8] sm:$0xff]
      %v3426 = vld [vmem:[%s6 + $0x5d0] sm:$0xff]
      %v3427 = vld [vmem:[%s6 + $0x5d8] sm:$0xff]
      %v3428 = vld [vmem:[%s6 + $0x5e0] sm:$0xff]
      %v3429 = vld [vmem:[%s6 + $0x5e8] sm:$0xff]
      %v3430 = vld [vmem:[%s6 + $0x5f0] sm:$0xff]
      %v3431 = vld [vmem:[%s6 + $0x5f8] sm:$0xff]
      %v3432 = vld [vmem:[%s6 + $0x600] sm:$0xff]
      %v3433 = vld [vmem:[%s6 + $0x608] sm:$0xff]
      %v3434 = vld [vmem:[%s6 + $0x610] sm:$0xff]
      %v3435 = vld [vmem:[%s6 + $0x618] sm:$0xff]
      %v3436 = vld [vmem:[%s6 + $0x620] sm:$0xff]
      %v3437 = vld [vmem:[%s6 + $0x628] sm:$0xff]
      %v3438 = vld [vmem:[%s6 + $0x630] sm:$0xff]
      %v3439 = vld [vmem:[%s6 + $0x638] sm:$0xff]
      %v3440 = vld [vmem:[%s6 + $0x640] sm:$0xff]
      %v3441 = vld [vmem:[%s6 + $0x648] sm:$0xff]
      %v3442 = vld [vmem:[%s6 + $0x650] sm:$0xff]
      %v3443 = vld [vmem:[%s6 + $0x658] sm:$0xff]
      %v3444 = vld [vmem:[%s6 + $0x660] sm:$0xff]
      %v3445 = vld [vmem:[%s6 + $0x668] sm:$0xff]
      %v3446 = vld [vmem:[%s6 + $0x670] sm:$0xff]
      %v3447 = vld [vmem:[%s6 + $0x678] sm:$0xff]
      %v3448 = vld [vmem:[%s6 + $0x680] sm:$0xff]
      %v3449 = vld [vmem:[%s6 + $0x688] sm:$0xff]
      %v3450 = vld [vmem:[%s6 + $0x690] sm:$0xff]
      %v3451 = vld [vmem:[%s6 + $0x698] sm:$0xff]
      %v3452 = vld [vmem:[%s6 + $0x6a0] sm:$0xff]
      %v3453 = vld [vmem:[%s6 + $0x6a8] sm:$0xff]
      %v3454 = vld [vmem:[%s6 + $0x6b0] sm:$0xff]
      %v3455 = vld [vmem:[%s6 + $0x6b8] sm:$0xff]
      %v3456 = vld [vmem:[%s6 + $0x6c0] sm:$0xff]
      %v3457 = vld [vmem:[%s6 + $0x6c8] sm:$0xff]
      %v3458 = vld [vmem:[%s6 + $0x6d0] sm:$0xff]
      %v3459 = vld [vmem:[%s6 + $0x6d8] sm:$0xff]
      %v3460 = vld [vmem:[%s6 + $0x6e0] sm:$0xff]
      %v3461 = vld [vmem:[%s6 + $0x6e8] sm:$0xff]
      %v3462 = vld [vmem:[%s6 + $0x6f0] sm:$0xff]
      %v3463 = vld [vmem:[%s6 + $0x6f8] sm:$0xff]
      %v3464 = vld [vmem:[%s6 + $0x700] sm:$0xff]
      %v3465 = vld [vmem:[%s6 + $0x708] sm:$0xff]
      %v3466 = vld [vmem:[%s6 + $0x710] sm:$0xff]
      %v3467 = vld [vmem:[%s6 + $0x718] sm:$0xff]
      %v3468 = vld [vmem:[%s6 + $0x720] sm:$0xff]
      %v3469 = vld [vmem:[%s6 + $0x728] sm:$0xff]
      %v3470 = vld [vmem:[%s6 + $0x730] sm:$0xff]
      %v3471 = vld [vmem:[%s6 + $0x738] sm:$0xff]
      %v3472 = vld [vmem:[%s6 + $0x740] sm:$0xff]
      %v3473 = vld [vmem:[%s6 + $0x748] sm:$0xff]
      %v3474 = vld [vmem:[%s6 + $0x750] sm:$0xff]
      %v3475 = vld [vmem:[%s6 + $0x758] sm:$0xff]
      %v3476 = vld [vmem:[%s6 + $0x760] sm:$0xff]
      %v3477 = vld [vmem:[%s6 + $0x768] sm:$0xff]
      %v3478 = vld [vmem:[%s6 + $0x770] sm:$0xff]
      %v3479 = vld [vmem:[%s6 + $0x778] sm:$0xff]
      %v3480 = vld [vmem:[%s6 + $0x780] sm:$0xff]
      %v3481 = vld [vmem:[%s6 + $0x788] sm:$0xff]
      %v3482 = vld [vmem:[%s6 + $0x790] sm:$0xff]
      %v3483 = vld [vmem:[%s6 + $0x798] sm:$0xff]
      %v3484 = vld [vmem:[%s6 + $0x7a0] sm:$0xff]
      %v3485 = vld [vmem:[%s6 + $0x7a8] sm:$0xff]
      %v3486 = vld [vmem:[%s6 + $0x7b0] sm:$0xff]
      %v3487 = vld [vmem:[%s6 + $0x7b8] sm:$0xff]
      %v3488 = vld [vmem:[%s6 + $0x7c0] sm:$0xff]
      %v3489 = vld [vmem:[%s6 + $0x7c8] sm:$0xff]
      %v3490 = vld [vmem:[%s6 + $0x7d0] sm:$0xff]
      %v3491 = vld [vmem:[%s6 + $0x7d8] sm:$0xff]
      %v3492 = vld [vmem:[%s6 + $0x7e0] sm:$0xff]
      %v3493 = vld [vmem:[%s6 + $0x7e8] sm:$0xff]
      %v3494 = vld [vmem:[%s6 + $0x7f0] sm:$0xff]
      %v3495 = vld [vmem:[%s6 + $0x7f8] sm:$0xff]
      %3496 = vmatprep.subr.mxu0 %v3241
      %3497 = vmatpush1.msra.mxu0 %v3240
      %3498 = vmatprep.subr.mxu0 %v3243
      %3499 = vmatpush1.msra.mxu0 %v3242
      %3500 = vmatprep.subr.mxu0 %v3245
      %3501 = vmatpush1.msra.mxu0 %v3244
      %3502 = vmatprep.subr.mxu0 %v3247
      %3503 = vmatpush1.msra.mxu0 %v3246
      %3504 = vmatprep.subr.mxu0 %v3249
      %3505 = vmatpush1.msra.mxu0 %v3248
      %3506 = vmatprep.subr.mxu0 %v3251
      %3507 = vmatpush1.msra.mxu0 %v3250
      %3508 = vmatprep.subr.mxu0 %v3253
      %3509 = vmatpush1.msra.mxu0 %v3252
      %3510 = vmatprep.subr.mxu0 %v3255
      %3511 = vmatpush1.msra.mxu0 %v3254
      %3512 = vmatprep.subr.mxu0 %v3257
      %3513 = vmatpush1.msra.mxu0 %v3256
      %3514 = vmatprep.subr.mxu0 %v3259
      %3515 = vmatpush1.msra.mxu0 %v3258
      %3516 = vmatprep.subr.mxu0 %v3261
      %3517 = vmatpush1.msra.mxu0 %v3260
      %3518 = vmatprep.subr.mxu0 %v3263
      %3519 = vmatpush1.msra.mxu0 %v3262
      %3520 = vmatprep.subr.mxu0 %v3265
      %3521 = vmatpush1.msra.mxu0 %v3264
      %3522 = vmatprep.subr.mxu0 %v3267
      %3523 = vmatpush1.msra.mxu0 %v3266
      %3524 = vmatprep.subr.mxu0 %v3269
      %3525 = vmatpush1.msra.mxu0 %v3268
      %3526 = vmatprep.subr.mxu0 %v3271
      %3527 = vmatpush1.msra.mxu0 %v3270
      %3528 = vmatprep.subr.mxu0 %v3273
      %3529 = vmatpush1.msra.mxu0 %v3272
      %3530 = vmatprep.subr.mxu0 %v3275
      %3531 = vmatpush1.msra.mxu0 %v3274
      %3532 = vmatprep.subr.mxu0 %v3277
      %3533 = vmatpush1.msra.mxu0 %v3276
      %3534 = vmatprep.subr.mxu0 %v3279
      %3535 = vmatpush1.msra.mxu0 %v3278
      %3536 = vmatprep.subr.mxu0 %v3281
      %3537 = vmatpush1.msra.mxu0 %v3280
      %3538 = vmatprep.subr.mxu0 %v3283
      %3539 = vmatpush1.msra.mxu0 %v3282
      %3540 = vmatprep.subr.mxu0 %v3285
      %3541 = vmatpush1.msra.mxu0 %v3284
      %3542 = vmatprep.subr.mxu0 %v3287
      %3543 = vmatpush1.msra.mxu0 %v3286
      %3544 = vmatprep.subr.mxu0 %v3289
      %3545 = vmatpush1.msra.mxu0 %v3288
      %3546 = vmatprep.subr.mxu0 %v3291
      %3547 = vmatpush1.msra.mxu0 %v3290
      %3548 = vmatprep.subr.mxu0 %v3293
      %3549 = vmatpush1.msra.mxu0 %v3292
      %3550 = vmatprep.subr.mxu0 %v3295
      %3551 = vmatpush1.msra.mxu0 %v3294
      %3552 = vmatprep.subr.mxu0 %v3297
      %3553 = vmatpush1.msra.mxu0 %v3296
      %3554 = vmatprep.subr.mxu0 %v3299
      %3555 = vmatpush1.msra.mxu0 %v3298
      %3556 = vmatprep.subr.mxu0 %v3301
      %3557 = vmatpush1.msra.mxu0 %v3300
      %3558 = vmatprep.subr.mxu0 %v3303
      %3559 = vmatpush1.msra.mxu0 %v3302
      %3560 = vmatprep.mubr.f32.mxu0 %v3233
      %3561 = vmatmul.mubr.f32.gmra.mrb[0].mxu0 %v3232
      %v3562 = vpop.f32.mrb[0].mxu0
      %v3563 = vadd.f32 0.0, %v3562
      %v3564 = vpop.f32.mrb[0].mxu0
      %v3565 = vadd.f32 0.0, %v3564
      %3566 = vdwg.mxu0
      %3567 = vmatprep.subr.mxu0 %v3305
      %3568 = vmatpush1.msra.mxu0 %v3304
      %3569 = vmatprep.subr.mxu0 %v3307
      %3570 = vmatpush1.msra.mxu0 %v3306
      %3571 = vmatprep.subr.mxu0 %v3309
      %3572 = vmatpush1.msra.mxu0 %v3308
      %3573 = vmatprep.subr.mxu0 %v3311
      %3574 = vmatpush1.msra.mxu0 %v3310
      %3575 = vmatprep.subr.mxu0 %v3313
      %3576 = vmatpush1.msra.mxu0 %v3312
      %3577 = vmatprep.subr.mxu0 %v3315
      %3578 = vmatpush1.msra.mxu0 %v3314
      %3579 = vmatprep.subr.mxu0 %v3317
      %3580 = vmatpush1.msra.mxu0 %v3316
      %3581 = vmatprep.subr.mxu0 %v3319
      %3582 = vmatpush1.msra.mxu0 %v3318
      %3583 = vmatprep.subr.mxu0 %v3321
      %3584 = vmatpush1.msra.mxu0 %v3320
      %3585 = vmatprep.subr.mxu0 %v3323
      %3586 = vmatpush1.msra.mxu0 %v3322
      %3587 = vmatprep.subr.mxu0 %v3325
      %3588 = vmatpush1.msra.mxu0 %v3324
      %3589 = vmatprep.subr.mxu0 %v3327
      %3590 = vmatpush1.msra.mxu0 %v3326
      %3591 = vmatprep.subr.mxu0 %v3329
      %3592 = vmatpush1.msra.mxu0 %v3328
      %3593 = vmatprep.subr.mxu0 %v3331
      %3594 = vmatpush1.msra.mxu0 %v3330
      %3595 = vmatprep.subr.mxu0 %v3333
      %3596 = vmatpush1.msra.mxu0 %v3332
      %3597 = vmatprep.subr.mxu0 %v3335
      %3598 = vmatpush1.msra.mxu0 %v3334
      %3599 = vmatprep.subr.mxu0 %v3337
      %3600 = vmatpush1.msra.mxu0 %v3336
      %3601 = vmatprep.subr.mxu0 %v3339
      %3602 = vmatpush1.msra.mxu0 %v3338
      %3603 = vmatprep.subr.mxu0 %v3341
      %3604 = vmatpush1.msra.mxu0 %v3340
      %3605 = vmatprep.subr.mxu0 %v3343
      %3606 = vmatpush1.msra.mxu0 %v3342
      %3607 = vmatprep.subr.mxu0 %v3345
      %3608 = vmatpush1.msra.mxu0 %v3344
      %3609 = vmatprep.subr.mxu0 %v3347
      %3610 = vmatpush1.msra.mxu0 %v3346
      %3611 = vmatprep.subr.mxu0 %v3349
      %3612 = vmatpush1.msra.mxu0 %v3348
      %3613 = vmatprep.subr.mxu0 %v3351
      %3614 = vmatpush1.msra.mxu0 %v3350
      %3615 = vmatprep.subr.mxu0 %v3353
      %3616 = vmatpush1.msra.mxu0 %v3352
      %3617 = vmatprep.subr.mxu0 %v3355
      %3618 = vmatpush1.msra.mxu0 %v3354
      %3619 = vmatprep.subr.mxu0 %v3357
      %3620 = vmatpush1.msra.mxu0 %v3356
      %3621 = vmatprep.subr.mxu0 %v3359
      %3622 = vmatpush1.msra.mxu0 %v3358
      %3623 = vmatprep.subr.mxu0 %v3361
      %3624 = vmatpush1.msra.mxu0 %v3360
      %3625 = vmatprep.subr.mxu0 %v3363
      %3626 = vmatpush1.msra.mxu0 %v3362
      %3627 = vmatprep.subr.mxu0 %v3365
      %3628 = vmatpush1.msra.mxu0 %v3364
      %3629 = vmatprep.subr.mxu0 %v3367
      %3630 = vmatpush1.msra.mxu0 %v3366
      %3631 = vmatprep.mubr.f32.mxu0 %v3235
      %3632 = vmatmul.mubr.f32.gmra.mrb[0].mxu0 %v3234
      %v3633 = vpop.f32.mrb[0].mxu0
      %v3634 = vadd.f32 %v3563, %v3633
      %v3635 = vpop.f32.mrb[0].mxu0
      %v3636 = vadd.f32 %v3565, %v3635
      %3637 = vdwg.mxu0
      %3638 = vmatprep.subr.mxu0 %v3369
      %3639 = vmatpush1.msra.mxu0 %v3368
      %3640 = vmatprep.subr.mxu0 %v3371
      %3641 = vmatpush1.msra.mxu0 %v3370
      %3642 = vmatprep.subr.mxu0 %v3373
      %3643 = vmatpush1.msra.mxu0 %v3372
      %3644 = vmatprep.subr.mxu0 %v3375
      %3645 = vmatpush1.msra.mxu0 %v3374
      %3646 = vmatprep.subr.mxu0 %v3377
      %3647 = vmatpush1.msra.mxu0 %v3376
      %3648 = vmatprep.subr.mxu0 %v3379
      %3649 = vmatpush1.msra.mxu0 %v3378
      %3650 = vmatprep.subr.mxu0 %v3381
      %3651 = vmatpush1.msra.mxu0 %v3380
      %3652 = vmatprep.subr.mxu0 %v3383
      %3653 = vmatpush1.msra.mxu0 %v3382
      %3654 = vmatprep.subr.mxu0 %v3385
      %3655 = vmatpush1.msra.mxu0 %v3384
      %3656 = vmatprep.subr.mxu0 %v3387
      %3657 = vmatpush1.msra.mxu0 %v3386
      %3658 = vmatprep.subr.mxu0 %v3389
      %3659 = vmatpush1.msra.mxu0 %v3388
      %3660 = vmatprep.subr.mxu0 %v3391
      %3661 = vmatpush1.msra.mxu0 %v3390
      %3662 = vmatprep.subr.mxu0 %v3393
      %3663 = vmatpush1.msra.mxu0 %v3392
      %3664 = vmatprep.subr.mxu0 %v3395
      %3665 = vmatpush1.msra.mxu0 %v3394
      %3666 = vmatprep.subr.mxu0 %v3397
      %3667 = vmatpush1.msra.mxu0 %v3396
      %3668 = vmatprep.subr.mxu0 %v3399
      %3669 = vmatpush1.msra.mxu0 %v3398
      %3670 = vmatprep.subr.mxu0 %v3401
      %3671 = vmatpush1.msra.mxu0 %v3400
      %3672 = vmatprep.subr.mxu0 %v3403
      %3673 = vmatpush1.msra.mxu0 %v3402
      %3674 = vmatprep.subr.mxu0 %v3405
      %3675 = vmatpush1.msra.mxu0 %v3404
      %3676 = vmatprep.subr.mxu0 %v3407
      %3677 = vmatpush1.msra.mxu0 %v3406
      %3678 = vmatprep.subr.mxu0 %v3409
      %3679 = vmatpush1.msra.mxu0 %v3408
      %3680 = vmatprep.subr.mxu0 %v3411
      %3681 = vmatpush1.msra.mxu0 %v3410
      %3682 = vmatprep.subr.mxu0 %v3413
      %3683 = vmatpush1.msra.mxu0 %v3412
      %3684 = vmatprep.subr.mxu0 %v3415
      %3685 = vmatpush1.msra.mxu0 %v3414
      %3686 = vmatprep.subr.mxu0 %v3417
      %3687 = vmatpush1.msra.mxu0 %v3416
      %3688 = vmatprep.subr.mxu0 %v3419
      %3689 = vmatpush1.msra.mxu0 %v3418
      %3690 = vmatprep.subr.mxu0 %v3421
      %3691 = vmatpush1.msra.mxu0 %v3420
      %3692 = vmatprep.subr.mxu0 %v3423
      %3693 = vmatpush1.msra.mxu0 %v3422
      %3694 = vmatprep.subr.mxu0 %v3425
      %3695 = vmatpush1.msra.mxu0 %v3424
      %3696 = vmatprep.subr.mxu0 %v3427
      %3697 = vmatpush1.msra.mxu0 %v3426
      %3698 = vmatprep.subr.mxu0 %v3429
      %3699 = vmatpush1.msra.mxu0 %v3428
      %3700 = vmatprep.subr.mxu0 %v3431
      %3701 = vmatpush1.msra.mxu0 %v3430
      %3702 = vmatprep.mubr.f32.mxu0 %v3237
      %3703 = vmatmul.mubr.f32.gmra.mrb[0].mxu0 %v3236
      %v3704 = vpop.f32.mrb[0].mxu0
      %v3705 = vadd.f32 %v3634, %v3704
      %v3706 = vpop.f32.mrb[0].mxu0
      %v3707 = vadd.f32 %v3636, %v3706
      %3708 = vdwg.mxu0
      %3709 = vmatprep.subr.mxu0 %v3433
      %3710 = vmatpush1.msra.mxu0 %v3432
      %3711 = vmatprep.subr.mxu0 %v3435
      %3712 = vmatpush1.msra.mxu0 %v3434
      %3713 = vmatprep.subr.mxu0 %v3437
      %3714 = vmatpush1.msra.mxu0 %v3436
      %3715 = vmatprep.subr.mxu0 %v3439
      %3716 = vmatpush1.msra.mxu0 %v3438
      %3717 = vmatprep.subr.mxu0 %v3441
      %3718 = vmatpush1.msra.mxu0 %v3440
      %3719 = vmatprep.subr.mxu0 %v3443
      %3720 = vmatpush1.msra.mxu0 %v3442
      %3721 = vmatprep.subr.mxu0 %v3445
      %3722 = vmatpush1.msra.mxu0 %v3444
      %3723 = vmatprep.subr.mxu0 %v3447
      %3724 = vmatpush1.msra.mxu0 %v3446
      %3725 = vmatprep.subr.mxu0 %v3449
      %3726 = vmatpush1.msra.mxu0 %v3448
      %3727 = vmatprep.subr.mxu0 %v3451
      %3728 = vmatpush1.msra.mxu0 %v3450
      %3729 = vmatprep.subr.mxu0 %v3453
      %3730 = vmatpush1.msra.mxu0 %v3452
      %3731 = vmatprep.subr.mxu0 %v3455
      %3732 = vmatpush1.msra.mxu0 %v3454
      %3733 = vmatprep.subr.mxu0 %v3457
      %3734 = vmatpush1.msra.mxu0 %v3456
      %3735 = vmatprep.subr.mxu0 %v3459
      %3736 = vmatpush1.msra.mxu0 %v3458
      %3737 = vmatprep.subr.mxu0 %v3461
      %3738 = vmatpush1.msra.mxu0 %v3460
      %3739 = vmatprep.subr.mxu0 %v3463
      %3740 = vmatpush1.msra.mxu0 %v3462
      %3741 = vmatprep.subr.mxu0 %v3465
      %3742 = vmatpush1.msra.mxu0 %v3464
      %3743 = vmatprep.subr.mxu0 %v3467
      %3744 = vmatpush1.msra.mxu0 %v3466
      %3745 = vmatprep.subr.mxu0 %v3469
      %3746 = vmatpush1.msra.mxu0 %v3468
      %3747 = vmatprep.subr.mxu0 %v3471
      %3748 = vmatpush1.msra.mxu0 %v3470
      %3749 = vmatprep.subr.mxu0 %v3473
      %3750 = vmatpush1.msra.mxu0 %v3472
      %3751 = vmatprep.subr.mxu0 %v3475
      %3752 = vmatpush1.msra.mxu0 %v3474
      %3753 = vmatprep.subr.mxu0 %v3477
      %3754 = vmatpush1.msra.mxu0 %v3476
      %3755 = vmatprep.subr.mxu0 %v3479
      %3756 = vmatpush1.msra.mxu0 %v3478
      %3757 = vmatprep.subr.mxu0 %v3481
      %3758 = vmatpush1.msra.mxu0 %v3480
      %3759 = vmatprep.subr.mxu0 %v3483
      %3760 = vmatpush1.msra.mxu0 %v3482
      %3761 = vmatprep.subr.mxu0 %v3485
      %3762 = vmatpush1.msra.mxu0 %v3484
      %3763 = vmatprep.subr.mxu0 %v3487
      %3764 = vmatpush1.msra.mxu0 %v3486
      %3765 = vmatprep.subr.mxu0 %v3489
      %3766 = vmatpush1.msra.mxu0 %v3488
      %3767 = vmatprep.subr.mxu0 %v3491
      %3768 = vmatpush1.msra.mxu0 %v3490
      %3769 = vmatprep.subr.mxu0 %v3493
      %3770 = vmatpush1.msra.mxu0 %v3492
      %3771 = vmatprep.subr.mxu0 %v3495
      %3772 = vmatpush1.msra.mxu0 %v3494
      %3773 = vmatprep.mubr.f32.mxu0 %v3239
      %3774 = vmatmul.mubr.f32.gmra.mrb[0].mxu0 %v3238
      %v3775 = vpop.f32.mrb[0].mxu0
      %v3776 = vadd.f32 %v3705, %v3775
      %v3777 = vpop.f32.mrb[0].mxu0
      %v3778 = vadd.f32 %v3707, %v3777
      %3779 = vdwg.mxu0
      %3780 = vst [vmem:[%s275] sm:$0xff] %v3776
      %3781 = vst [vmem:[%s275 + $0x8] sm:$0xff] %v3778
      %p3782 = scmp.lt.s32.totalorder %s18, 1
      %s3783 = scalar_select %p3782, %s18, 1
      %s3784 = smul.addr %s3783, 2
      %s3785 = smul.addr %s3784, 8
      %s3786 = scalar_lea.vmem %s7, %s3785
      // Predicated region
      $region49: #{fashion_mnist_model_v2.3} parent=47 // pred_check
        %p3787 = pneg %p188
      $region50: #{fashion_mnist_model_v2.3} parent=47 // pred_check_branch
        %3789 = sbr.rel (%p3787) target = $region52
      $region51: #{fashion_mnist_model_v2.3} parent=47 // pred_region
        _
      $region52: #{fashion_mnist_model_v2.3} parent=47 // pred_fallthru
        _
    $region48: #{fashion_mnist_model_v2.3} parent=5 // pred_fallthru
      _
    %p3790 = scmp.le.s32.totalorder 2, %s13
    // Predicated region
    $region53: #{fashion_mnist_model_v2.3} parent=5 // pred_check
      %p3791 = pneg %p3790
    $region54: #{fashion_mnist_model_v2.3} parent=5 // pred_check_branch
      %3793 = sbr.rel (%p3791) target = $region56
    $region55: #{fashion_mnist_model_v2.3} parent=5 // pred_region
      %s3794 = ssub.s32 %s13, 2
      // Predicated region
      $region57: #{fashion_mnist_model_v2.3} parent=55 // pred_check
        %p3795 = pneg %p194
      $region58: #{fashion_mnist_model_v2.3} parent=55 // pred_check_branch
        %3797 = sbr.rel (%p3795) target = $region60
      $region59: #{fashion_mnist_model_v2.3} parent=55 // pred_region
        %p3798 = scmp.lt.s32.totalorder %s19, 1
        %s3799 = scalar_select %p3798, %s19, 1
        %s3800 = smul.addr %s3799, 2
        %s3801 = smul.addr %s3800, 8
        %s3802 = scalar_lea.vmem %s7, %s3801
      $region60: #{fashion_mnist_model_v2.3} parent=55 // pred_fallthru
        _
    $region56: #{fashion_mnist_model_v2.3} parent=5 // pred_fallthru
      _
  $region6: #{fashion_mnist_model_v2.3} parent=0 // loop_footer
    %s17 = sadd.s32 1, %s13
  $region7: #{fashion_mnist_model_v2.3} parent=0 // loop_footer_branch
    %12 = sbr.rel target = $region3
  $region8: #{fashion_mnist_model_v2.3} parent=0 // loop_exit
    _

</llo_original>
